<compile_context>
chip_gen: v7x
topology: tpu7x:2x2x1
jax: 0.10.0
libtpu: 0.0.40
codegen_flags: <defaults>
</compile_context>

<pallas_src>
import functools
import jax
import jax.numpy as jnp
from jax.experimental import pallas as pl
from jax.experimental.pallas import tpu as pltpu

GP = 128  # per-gate lane pad width (one vreg lane group)
VP = 128  # vocab lane pad width for the decoder logits lane group


def _cell_from_gates(gates, c):
    """LSTM nonlinearity from pre-summed gates (PyTorch gate order [i, f, g, o]).

    gates : (Bp, 4*GP) f32 gate-padded pre-activations (bias already included)
    c     : (Bp, GP)   f32 cell state (lanes >= H are exactly 0)
    """
    # Gate slices are exact 128-lane vreg groups -> no cross-lane relayouts.
    i_g = jax.nn.sigmoid(gates[:, 0 * GP:1 * GP])
    f_g = jax.nn.sigmoid(gates[:, 1 * GP:2 * GP])
    g_g = jnp.tanh(gates[:, 2 * GP:3 * GP])
    o_g = jax.nn.sigmoid(gates[:, 3 * GP:4 * GP])
    c_n = f_g * c + i_g * g_g
    h_n = o_g * jnp.tanh(c_n)
    return h_n, c_n


def _lstm_step(xg, h, c, wh_ref, b_ref):
    """One encoder LSTM step: xg is the precomputed x @ W_ih term (gate-padded)."""
    gates = xg + jnp.dot(h.astype(jnp.bfloat16), wh_ref[...],
                         preferred_element_type=jnp.float32) + b_ref[...]
    return _cell_from_gates(gates, c)


def rae_kernel(xemb_ref,                                   # (T, Bp, GP) bf16, E-padded
               wxf0_ref, whf0_ref, bf0_ref,                # encoder layer 0 fwd
               wxr0_ref, whr0_ref, br0_ref,                # encoder layer 0 bwd
               w1cat_ref, wh1_ref, b1_ref,                 # encoder layer 1 bwd
               ewid_ref, wcomb_ref, bcomb_ref,             # decoder (fused weights)
               logits_ref, hlast_ref):
    T, Bp, _ = xemb_ref.shape
    HID = 4 * GP

    zeros = jnp.zeros((Bp, GP), jnp.float32)

    # ---- encoder layer 0, forward direction ----
    h, c = zeros, zeros
    fwd = []
    for t in range(T):
        xg = jnp.dot(xemb_ref[t], wxf0_ref[...], preferred_element_type=jnp.float32)
        h, c = _lstm_step(xg, h, c, whf0_ref, bf0_ref)
        fwd.append(h)

    # ---- encoder layer 0, reverse direction (independent chain; scheduler overlaps) ----
    h, c = zeros, zeros
    bwd = [None] * T
    for t in range(T - 1, -1, -1):
        xg = jnp.dot(xemb_ref[t], wxr0_ref[...], preferred_element_type=jnp.float32)
        h, c = _lstm_step(xg, h, c, whr0_ref, br0_ref)
        bwd[t] = h

    # ---- encoder layer 1, reverse direction (== h[-1], c[-1] of the PyTorch encoder) ----
    # Layer-1 forward direction is never consumed by the module's outputs -> not computed.
    # Input = lane-concat(fwd, bwd) against the row-stacked split W_ih -> single dot per step.
    h1, c1 = zeros, zeros
    for t in range(T - 1, -1, -1):
        x1 = jnp.concatenate([fwd[t], bwd[t]], axis=-1).astype(jnp.bfloat16)   # (Bp, 2*GP)
        xg = jnp.dot(x1, w1cat_ref[...], preferred_element_type=jnp.float32)
        h1, c1 = _lstm_step(xg, h1, c1, wh1_ref, b1_ref)

    hlast_ref[...] = h1                       # padded (Bp, GP); wrapper slices [:B, :H]

    # ---- greedy (topk(1)) decoder loop ----
    # comb = dh @ [W_hh_dec | W_lin_pad] + [b_gates | b_lin | -1e30 pad]:
    #   comb[:, :HID]  -> hidden-gate contribution for the NEXT step (bias included)
    #   comb[:, HID:]  -> logits of the CURRENT step (full 128-lane group)
    lane_ids = jax.lax.broadcasted_iota(jnp.int32, (Bp, VP), 1)
    comb = jnp.dot(h1.astype(jnp.bfloat16), wcomb_ref[...],
                   preferred_element_type=jnp.float32) + bcomb_ref[...]
    dc = c1
    xg = jnp.zeros((Bp, HID), jnp.float32)  # decoder_input = zeros -> zero input projection
    per_step = []
    for di in range(T):
        gates = xg + comb[:, :HID]
        dh, dc = _cell_from_gates(gates, dc)
        comb = jnp.dot(dh.astype(jnp.bfloat16), wcomb_ref[...],
                       preferred_element_type=jnp.float32) + bcomb_ref[...]
        logits = comb[:, HID:HID + VP]                     # (Bp, VP) f32, pad lanes ~ -1e30
        per_step.append(logits)
        if di + 1 < T:
            # topk(1): first occurrence of the max logit (pad lanes can never win)
            mx = jnp.max(logits, axis=-1, keepdims=True)
            idx = jnp.min(jnp.where(logits == mx, lane_ids, VP), axis=-1,
                          keepdims=True)                   # (Bp, 1)
            one_hot = (lane_ids == idx).astype(jnp.bfloat16)                 # (Bp, VP)
            # embedding re-feed fused with the input projection: one_hot @ (emb @ W_ih_dec)
            xg = jnp.dot(one_hot, ewid_ref[...], preferred_element_type=jnp.float32)

    # One lane-dense (Bp, T*VP) store of full vreg lane groups.
    logits_ref[...] = jnp.concatenate(per_step, axis=-1)


# ------------------------------- packing helpers -------------------------------

def _gate_pad_cols(w_t, H):
    """(in_dim, 4H) -> (in_dim, 4*GP) with gate g occupying lanes [g*GP, g*GP+H)."""
    in_dim = w_t.shape[0]
    out = jnp.zeros((in_dim, 4 * GP), jnp.float32)
    for g in range(4):
        out = out.at[:, g * GP:g * GP + H].set(w_t[:, g * H:(g + 1) * H])
    return out


def _pad_rows(w, rows):
    return jnp.zeros((rows, w.shape[1]), w.dtype).at[:w.shape[0]].set(w)


def _pack_cell(w_ih, w_hh, b_ih, b_hh, H):
    wx = _pad_rows(_gate_pad_cols(w_ih.T, H), GP)            # (GP, 4*GP)
    wh = _pad_rows(_gate_pad_cols(w_hh.T, H), GP)            # (GP, 4*GP)
    b = _gate_pad_cols((b_ih + b_hh).reshape(1, -1), H)      # (1, 4*GP)
    return wx, wh, b


# ------------------------------- params & wrapper -------------------------------

def init_params(key, vocab_size, embed_dim=16, char_embedding_dim=4):
    H, E, V = embed_dim, char_embedding_dim, vocab_size
    names_shapes = {
        'emb': (V, E),
        # encoder layer 0 forward / reverse
        'enc_w_ih_l0': (4 * H, E), 'enc_w_hh_l0': (4 * H, H), 'enc_b_ih_l0': (4 * H,), 'enc_b_hh_l0': (4 * H,),
        'enc_w_ih_l0r': (4 * H, E), 'enc_w_hh_l0r': (4 * H, H), 'enc_b_ih_l0r': (4 * H,), 'enc_b_hh_l0r': (4 * H,),
        # encoder layer 1 forward (present in the PyTorch module but unused by its outputs) / reverse
        'enc_w_ih_l1': (4 * H, 2 * H), 'enc_w_hh_l1': (4 * H, H), 'enc_b_ih_l1': (4 * H,), 'enc_b_hh_l1': (4 * H,),
        'enc_w_ih_l1r': (4 * H, 2 * H), 'enc_w_hh_l1r': (4 * H, H), 'enc_b_ih_l1r': (4 * H,), 'enc_b_hh_l1r': (4 * H,),
        # decoder (single layer)
        'dec_w_ih': (4 * H, E), 'dec_w_hh': (4 * H, H), 'dec_b_ih': (4 * H,), 'dec_b_hh': (4 * H,),
        # output linear
        'lin_w': (V, H), 'lin_b': (V,),
    }
    keys = jax.random.split(key, len(names_shapes))
    params = {}
    for (name, shape), k in zip(names_shapes.items(), keys):
        params[name] = jax.random.uniform(k, shape, jnp.float32, -0.25, 0.25)
    return params


def recurrent_autoencoder_forward(params, x_tokens):
    B, T = x_tokens.shape
    emb = params['emb']
    V, E = emb.shape
    H = params['enc_w_hh_l0'].shape[1]
    assert H <= GP and E <= GP and V <= VP
    Bp = max(8, ((B + 7) // 8) * 8)          # fill all 8 f32 sublanes / MXU rows
    bf16 = jnp.bfloat16

    # glue: input token embedding lookup (char_embedding(x)), batch-pad + lane-pad E -> GP
    embed_x = jnp.take(emb, x_tokens, axis=0).astype(jnp.float32)          # (B, T, E)
    xemb = jnp.zeros((Bp, T, GP), jnp.float32).at[:B, :, :E].set(embed_x)  # (Bp, T, GP)
    xemb = jnp.transpose(xemb, (1, 0, 2)).astype(bf16)                     # (T, Bp, GP)

    # encoder layer 0 (fwd / rev)
    wxf0, whf0, bf0 = _pack_cell(params['enc_w_ih_l0'], params['enc_w_hh_l0'],
                                 params['enc_b_ih_l0'], params['enc_b_hh_l0'], H)
    wxr0, whr0, br0 = _pack_cell(params['enc_w_ih_l0r'], params['enc_w_hh_l0r'],
                                 params['enc_b_ih_l0r'], params['enc_b_hh_l0r'], H)
    # encoder layer 1 reverse: split W_ih into fwd/bwd column halves, row-stack them so the
    # kernel applies the lane-concat(fwd, bwd) input with a single dot per step.
    w1 = params['enc_w_ih_l1r']
    waf1 = _pad_rows(_gate_pad_cols(w1[:, :H].T, H), GP)                   # (GP, 4*GP)
    wbf1 = _pad_rows(_gate_pad_cols(w1[:, H:].T, H), GP)                   # (GP, 4*GP)
    w1cat = jnp.concatenate([waf1, wbf1], axis=0)                          # (2*GP, 4*GP)
    _, wh1, b1 = _pack_cell(w1, params['enc_w_hh_l1r'],
                            params['enc_b_ih_l1r'], params['enc_b_hh_l1r'], H)

    # decoder: fuse embedding re-feed with the input projection (exact row selection)
    wid = _gate_pad_cols(params['dec_w_ih'].T, H)                          # (E, 4*GP)
    ewid = _pad_rows(jnp.dot(emb, wid), VP)                                # (VP, 4*GP)
    _, whd, bd = _pack_cell(params['dec_w_ih'], params['dec_w_hh'],
                            params['dec_b_ih'], params['dec_b_hh'], H)
    # decoder: fuse W_hh with the output Linear (vocab padded to a full 128-lane group)
    wlin = jnp.zeros((GP, VP), jnp.float32).at[:H, :V].set(params['lin_w'].T)
    wcomb = jnp.concatenate([whd, wlin], axis=1)                           # (GP, 4*GP+VP)
    bcomb = jnp.full((1, 4 * GP + VP), -1e30, jnp.float32)                 # pad lanes lose argmax
    bcomb = bcomb.at[:, :4 * GP].set(bd)
    bcomb = bcomb.at[:, 4 * GP:4 * GP + V].set(params['lin_b'].reshape(1, -1))

    inputs = [xemb,
              wxf0.astype(bf16), whf0.astype(bf16), bf0,
              wxr0.astype(bf16), whr0.astype(bf16), br0,
              w1cat.astype(bf16), wh1.astype(bf16), b1,
              ewid.astype(bf16), wcomb.astype(bf16), bcomb]

    vmem = pl.BlockSpec(memory_space=pltpu.MemorySpace.VMEM)
    logits_pad, h_pad = pl.pallas_call(
        rae_kernel,
        out_shape=(jax.ShapeDtypeStruct((Bp, T * VP), jnp.float32),
                   jax.ShapeDtypeStruct((Bp, GP), jnp.float32)),
        in_specs=[vmem] * len(inputs),
        out_specs=(vmem, vmem),
    )(*inputs)

    logits = logits_pad[:B].reshape(B, T, VP)[:, :, :V]
    h_last = h_pad[:B, :H]
    return logits, h_last


if __name__ == "__main__":
    seq_len, vocab_size, embed_dim = 8, 32, 16
    B = 2
    key = jax.random.PRNGKey(0)
    kp, kx = jax.random.split(key)
    params = init_params(kp, vocab_size, embed_dim)
    x = jax.random.randint(kx, (B, seq_len), 0, vocab_size, dtype=jnp.int32)

    logits, h_last = jax.jit(functools.partial(recurrent_autoencoder_forward, params))(x)
    jax.block_until_ready((logits, h_last))

    assert logits.shape == (B, seq_len, vocab_size)
    assert h_last.shape == (B, embed_dim)
    assert logits.dtype == jnp.float32 and h_last.dtype == jnp.float32
    print("KERNEL_OK")
</pallas_src>

<mosaic_0001>
module attributes {stable_mosaic.version = 11 : i64} {
  func.func @rae_kernel(%arg0: memref<8x8x128xbf16, #tpu.memory_space<vmem>>, %arg1: memref<128x512xbf16, #tpu.memory_space<vmem>>, %arg2: memref<128x512xbf16, #tpu.memory_space<vmem>>, %arg3: memref<1x512xf32, #tpu.memory_space<vmem>>, %arg4: memref<128x512xbf16, #tpu.memory_space<vmem>>, %arg5: memref<128x512xbf16, #tpu.memory_space<vmem>>, %arg6: memref<1x512xf32, #tpu.memory_space<vmem>>, %arg7: memref<256x512xbf16, #tpu.memory_space<vmem>>, %arg8: memref<128x512xbf16, #tpu.memory_space<vmem>>, %arg9: memref<1x512xf32, #tpu.memory_space<vmem>>, %arg10: memref<128x512xbf16, #tpu.memory_space<vmem>>, %arg11: memref<128x640xbf16, #tpu.memory_space<vmem>>, %arg12: memref<1x640xf32, #tpu.memory_space<vmem>>, %arg13: memref<8x1024xf32, #tpu.memory_space<vmem>>, %arg14: memref<8x128xf32, #tpu.memory_space<vmem>>) attributes {dimension_semantics = [], scalar_prefetch = 0 : i64, scratch_operands = 0 : i64, tpu.core_type = #tpu.core_type<tc>} {
    %cst = arith.constant 0.000000e+00 : f32
    %0 = vector.broadcast %cst : f32 to vector<8x128xf32>
    %c0 = arith.constant 0 : index
    %c0_0 = arith.constant 0 : index
    %c0_1 = arith.constant 0 : index
    %1 = vector.load %arg0[%c0, %c0_0, %c0_1] : memref<8x8x128xbf16, #tpu.memory_space<vmem>>, vector<1x8x128xbf16>
    %2 = vector.shape_cast %1 : vector<1x8x128xbf16> to vector<8x128xbf16>
    %c0_2 = arith.constant 0 : index
    %c0_3 = arith.constant 0 : index
    %3 = vector.load %arg1[%c0_2, %c0_3] : memref<128x512xbf16, #tpu.memory_space<vmem>>, vector<128x512xbf16>
    %cst_4 = arith.constant dense<0.000000e+00> : vector<8x512xf32>
    %4 = tpu.matmul %2, %3, %cst_4 {dimension_numbers = #tpu.dot_dimension_numbers<[1], [0], [0], [1], [0, 0, 1, 1], [], []>} : vector<8x128xbf16>, vector<128x512xbf16>, vector<8x512xf32> -> vector<8x512xf32>
    %5 = arith.truncf %0 : vector<8x128xf32> to vector<8x128xbf16>
    %c0_5 = arith.constant 0 : index
    %c0_6 = arith.constant 0 : index
    %6 = vector.load %arg2[%c0_5, %c0_6] : memref<128x512xbf16, #tpu.memory_space<vmem>>, vector<128x512xbf16>
    %cst_7 = arith.constant dense<0.000000e+00> : vector<8x512xf32>
    %7 = tpu.matmul %5, %6, %cst_7 {dimension_numbers = #tpu.dot_dimension_numbers<[1], [0], [0], [1], [0, 0, 1, 1], [], []>} : vector<8x128xbf16>, vector<128x512xbf16>, vector<8x512xf32> -> vector<8x512xf32>
    %8 = arith.addf %4, %7 : vector<8x512xf32>
    %c0_8 = arith.constant 0 : index
    %c0_9 = arith.constant 0 : index
    %9 = vector.load %arg3[%c0_8, %c0_9] : memref<1x512xf32, #tpu.memory_space<vmem>>, vector<1x512xf32>
    %10 = vector.broadcast %9 : vector<1x512xf32> to vector<8x512xf32>
    %11 = arith.addf %8, %10 : vector<8x512xf32>
    %12 = vector.extract_strided_slice %11 {offsets = [0, 0], sizes = [8, 128], strides = [1, 1]} : vector<8x512xf32> to vector<8x128xf32>
    %13 = arith.negf %12 : vector<8x128xf32>
    %14 = math.exp %13 : vector<8x128xf32>
    %cst_10 = arith.constant 1.000000e+00 : f32
    %15 = vector.broadcast %cst_10 : f32 to vector<8x128xf32>
    %16 = arith.addf %15, %14 : vector<8x128xf32>
    %17 = arith.divf %15, %16 : vector<8x128xf32>
    %18 = vector.extract_strided_slice %11 {offsets = [0, 128], sizes = [8, 128], strides = [1, 1]} : vector<8x512xf32> to vector<8x128xf32>
    %19 = arith.negf %18 : vector<8x128xf32>
    %20 = math.exp %19 : vector<8x128xf32>
    %cst_11 = arith.constant 1.000000e+00 : f32
    %21 = vector.broadcast %cst_11 : f32 to vector<8x128xf32>
    %22 = arith.addf %21, %20 : vector<8x128xf32>
    %23 = arith.divf %21, %22 : vector<8x128xf32>
    %24 = vector.extract_strided_slice %11 {offsets = [0, 256], sizes = [8, 128], strides = [1, 1]} : vector<8x512xf32> to vector<8x128xf32>
    %25 = math.tanh %24 : vector<8x128xf32>
    %26 = vector.extract_strided_slice %11 {offsets = [0, 384], sizes = [8, 128], strides = [1, 1]} : vector<8x512xf32> to vector<8x128xf32>
    %27 = arith.negf %26 : vector<8x128xf32>
    %28 = math.exp %27 : vector<8x128xf32>
    %cst_12 = arith.constant 1.000000e+00 : f32
    %29 = vector.broadcast %cst_12 : f32 to vector<8x128xf32>
    %30 = arith.addf %29, %28 : vector<8x128xf32>
    %31 = arith.divf %29, %30 : vector<8x128xf32>
    %32 = arith.mulf %23, %0 : vector<8x128xf32>
    %33 = arith.mulf %17, %25 : vector<8x128xf32>
    %34 = arith.addf %32, %33 : vector<8x128xf32>
    %35 = math.tanh %34 : vector<8x128xf32>
    %36 = arith.mulf %31, %35 : vector<8x128xf32>
    %c1 = arith.constant 1 : index
    %c0_13 = arith.constant 0 : index
    %c0_14 = arith.constant 0 : index
    %37 = vector.load %arg0[%c1, %c0_13, %c0_14] : memref<8x8x128xbf16, #tpu.memory_space<vmem>>, vector<1x8x128xbf16>
    %38 = vector.shape_cast %37 : vector<1x8x128xbf16> to vector<8x128xbf16>
    %c0_15 = arith.constant 0 : index
    %c0_16 = arith.constant 0 : index
    %39 = vector.load %arg1[%c0_15, %c0_16] : memref<128x512xbf16, #tpu.memory_space<vmem>>, vector<128x512xbf16>
    %cst_17 = arith.constant dense<0.000000e+00> : vector<8x512xf32>
    %40 = tpu.matmul %38, %39, %cst_17 {dimension_numbers = #tpu.dot_dimension_numbers<[1], [0], [0], [1], [0, 0, 1, 1], [], []>} : vector<8x128xbf16>, vector<128x512xbf16>, vector<8x512xf32> -> vector<8x512xf32>
    %41 = arith.truncf %36 : vector<8x128xf32> to vector<8x128xbf16>
    %c0_18 = arith.constant 0 : index
    %c0_19 = arith.constant 0 : index
    %42 = vector.load %arg2[%c0_18, %c0_19] : memref<128x512xbf16, #tpu.memory_space<vmem>>, vector<128x512xbf16>
    %cst_20 = arith.constant dense<0.000000e+00> : vector<8x512xf32>
    %43 = tpu.matmul %41, %42, %cst_20 {dimension_numbers = #tpu.dot_dimension_numbers<[1], [0], [0], [1], [0, 0, 1, 1], [], []>} : vector<8x128xbf16>, vector<128x512xbf16>, vector<8x512xf32> -> vector<8x512xf32>
    %44 = arith.addf %40, %43 : vector<8x512xf32>
    %c0_21 = arith.constant 0 : index
    %c0_22 = arith.constant 0 : index
    %45 = vector.load %arg3[%c0_21, %c0_22] : memref<1x512xf32, #tpu.memory_space<vmem>>, vector<1x512xf32>
    %46 = vector.broadcast %45 : vector<1x512xf32> to vector<8x512xf32>
    %47 = arith.addf %44, %46 : vector<8x512xf32>
    %48 = vector.extract_strided_slice %47 {offsets = [0, 0], sizes = [8, 128], strides = [1, 1]} : vector<8x512xf32> to vector<8x128xf32>
    %49 = arith.negf %48 : vector<8x128xf32>
    %50 = math.exp %49 : vector<8x128xf32>
    %cst_23 = arith.constant 1.000000e+00 : f32
    %51 = vector.broadcast %cst_23 : f32 to vector<8x128xf32>
    %52 = arith.addf %51, %50 : vector<8x128xf32>
    %53 = arith.divf %51, %52 : vector<8x128xf32>
    %54 = vector.extract_strided_slice %47 {offsets = [0, 128], sizes = [8, 128], strides = [1, 1]} : vector<8x512xf32> to vector<8x128xf32>
    %55 = arith.negf %54 : vector<8x128xf32>
    %56 = math.exp %55 : vector<8x128xf32>
    %cst_24 = arith.constant 1.000000e+00 : f32
    %57 = vector.broadcast %cst_24 : f32 to vector<8x128xf32>
    %58 = arith.addf %57, %56 : vector<8x128xf32>
    %59 = arith.divf %57, %58 : vector<8x128xf32>
    %60 = vector.extract_strided_slice %47 {offsets = [0, 256], sizes = [8, 128], strides = [1, 1]} : vector<8x512xf32> to vector<8x128xf32>
    %61 = math.tanh %60 : vector<8x128xf32>
    %62 = vector.extract_strided_slice %47 {offsets = [0, 384], sizes = [8, 128], strides = [1, 1]} : vector<8x512xf32> to vector<8x128xf32>
    %63 = arith.negf %62 : vector<8x128xf32>
    %64 = math.exp %63 : vector<8x128xf32>
    %cst_25 = arith.constant 1.000000e+00 : f32
    %65 = vector.broadcast %cst_25 : f32 to vector<8x128xf32>
    %66 = arith.addf %65, %64 : vector<8x128xf32>
    %67 = arith.divf %65, %66 : vector<8x128xf32>
    %68 = arith.mulf %59, %34 : vector<8x128xf32>
    %69 = arith.mulf %53, %61 : vector<8x128xf32>
    %70 = arith.addf %68, %69 : vector<8x128xf32>
    %71 = math.tanh %70 : vector<8x128xf32>
    %72 = arith.mulf %67, %71 : vector<8x128xf32>
    %c2 = arith.constant 2 : index
    %c0_26 = arith.constant 0 : index
    %c0_27 = arith.constant 0 : index
    %73 = vector.load %arg0[%c2, %c0_26, %c0_27] : memref<8x8x128xbf16, #tpu.memory_space<vmem>>, vector<1x8x128xbf16>
    %74 = vector.shape_cast %73 : vector<1x8x128xbf16> to vector<8x128xbf16>
    %c0_28 = arith.constant 0 : index
    %c0_29 = arith.constant 0 : index
    %75 = vector.load %arg1[%c0_28, %c0_29] : memref<128x512xbf16, #tpu.memory_space<vmem>>, vector<128x512xbf16>
    %cst_30 = arith.constant dense<0.000000e+00> : vector<8x512xf32>
    %76 = tpu.matmul %74, %75, %cst_30 {dimension_numbers = #tpu.dot_dimension_numbers<[1], [0], [0], [1], [0, 0, 1, 1], [], []>} : vector<8x128xbf16>, vector<128x512xbf16>, vector<8x512xf32> -> vector<8x512xf32>
    %77 = arith.truncf %72 : vector<8x128xf32> to vector<8x128xbf16>
    %c0_31 = arith.constant 0 : index
    %c0_32 = arith.constant 0 : index
    %78 = vector.load %arg2[%c0_31, %c0_32] : memref<128x512xbf16, #tpu.memory_space<vmem>>, vector<128x512xbf16>
    %cst_33 = arith.constant dense<0.000000e+00> : vector<8x512xf32>
    %79 = tpu.matmul %77, %78, %cst_33 {dimension_numbers = #tpu.dot_dimension_numbers<[1], [0], [0], [1], [0, 0, 1, 1], [], []>} : vector<8x128xbf16>, vector<128x512xbf16>, vector<8x512xf32> -> vector<8x512xf32>
    %80 = arith.addf %76, %79 : vector<8x512xf32>
    %c0_34 = arith.constant 0 : index
    %c0_35 = arith.constant 0 : index
    %81 = vector.load %arg3[%c0_34, %c0_35] : memref<1x512xf32, #tpu.memory_space<vmem>>, vector<1x512xf32>
    %82 = vector.broadcast %81 : vector<1x512xf32> to vector<8x512xf32>
    %83 = arith.addf %80, %82 : vector<8x512xf32>
    %84 = vector.extract_strided_slice %83 {offsets = [0, 0], sizes = [8, 128], strides = [1, 1]} : vector<8x512xf32> to vector<8x128xf32>
    %85 = arith.negf %84 : vector<8x128xf32>
    %86 = math.exp %85 : vector<8x128xf32>
    %cst_36 = arith.constant 1.000000e+00 : f32
    %87 = vector.broadcast %cst_36 : f32 to vector<8x128xf32>
    %88 = arith.addf %87, %86 : vector<8x128xf32>
    %89 = arith.divf %87, %88 : vector<8x128xf32>
    %90 = vector.extract_strided_slice %83 {offsets = [0, 128], sizes = [8, 128], strides = [1, 1]} : vector<8x512xf32> to vector<8x128xf32>
    %91 = arith.negf %90 : vector<8x128xf32>
    %92 = math.exp %91 : vector<8x128xf32>
    %cst_37 = arith.constant 1.000000e+00 : f32
    %93 = vector.broadcast %cst_37 : f32 to vector<8x128xf32>
    %94 = arith.addf %93, %92 : vector<8x128xf32>
    %95 = arith.divf %93, %94 : vector<8x128xf32>
    %96 = vector.extract_strided_slice %83 {offsets = [0, 256], sizes = [8, 128], strides = [1, 1]} : vector<8x512xf32> to vector<8x128xf32>
    %97 = math.tanh %96 : vector<8x128xf32>
    %98 = vector.extract_strided_slice %83 {offsets = [0, 384], sizes = [8, 128], strides = [1, 1]} : vector<8x512xf32> to vector<8x128xf32>
    %99 = arith.negf %98 : vector<8x128xf32>
    %100 = math.exp %99 : vector<8x128xf32>
    %cst_38 = arith.constant 1.000000e+00 : f32
    %101 = vector.broadcast %cst_38 : f32 to vector<8x128xf32>
    %102 = arith.addf %101, %100 : vector<8x128xf32>
    %103 = arith.divf %101, %102 : vector<8x128xf32>
    %104 = arith.mulf %95, %70 : vector<8x128xf32>
    %105 = arith.mulf %89, %97 : vector<8x128xf32>
    %106 = arith.addf %104, %105 : vector<8x128xf32>
    %107 = math.tanh %106 : vector<8x128xf32>
    %108 = arith.mulf %103, %107 : vector<8x128xf32>
    %c3 = arith.constant 3 : index
    %c0_39 = arith.constant 0 : index
    %c0_40 = arith.constant 0 : index
    %109 = vector.load %arg0[%c3, %c0_39, %c0_40] : memref<8x8x128xbf16, #tpu.memory_space<vmem>>, vector<1x8x128xbf16>
    %110 = vector.shape_cast %109 : vector<1x8x128xbf16> to vector<8x128xbf16>
    %c0_41 = arith.constant 0 : index
    %c0_42 = arith.constant 0 : index
    %111 = vector.load %arg1[%c0_41, %c0_42] : memref<128x512xbf16, #tpu.memory_space<vmem>>, vector<128x512xbf16>
    %cst_43 = arith.constant dense<0.000000e+00> : vector<8x512xf32>
    %112 = tpu.matmul %110, %111, %cst_43 {dimension_numbers = #tpu.dot_dimension_numbers<[1], [0], [0], [1], [0, 0, 1, 1], [], []>} : vector<8x128xbf16>, vector<128x512xbf16>, vector<8x512xf32> -> vector<8x512xf32>
    %113 = arith.truncf %108 : vector<8x128xf32> to vector<8x128xbf16>
    %c0_44 = arith.constant 0 : index
    %c0_45 = arith.constant 0 : index
    %114 = vector.load %arg2[%c0_44, %c0_45] : memref<128x512xbf16, #tpu.memory_space<vmem>>, vector<128x512xbf16>
    %cst_46 = arith.constant dense<0.000000e+00> : vector<8x512xf32>
    %115 = tpu.matmul %113, %114, %cst_46 {dimension_numbers = #tpu.dot_dimension_numbers<[1], [0], [0], [1], [0, 0, 1, 1], [], []>} : vector<8x128xbf16>, vector<128x512xbf16>, vector<8x512xf32> -> vector<8x512xf32>
    %116 = arith.addf %112, %115 : vector<8x512xf32>
    %c0_47 = arith.constant 0 : index
    %c0_48 = arith.constant 0 : index
    %117 = vector.load %arg3[%c0_47, %c0_48] : memref<1x512xf32, #tpu.memory_space<vmem>>, vector<1x512xf32>
    %118 = vector.broadcast %117 : vector<1x512xf32> to vector<8x512xf32>
    %119 = arith.addf %116, %118 : vector<8x512xf32>
    %120 = vector.extract_strided_slice %119 {offsets = [0, 0], sizes = [8, 128], strides = [1, 1]} : vector<8x512xf32> to vector<8x128xf32>
    %121 = arith.negf %120 : vector<8x128xf32>
    %122 = math.exp %121 : vector<8x128xf32>
    %cst_49 = arith.constant 1.000000e+00 : f32
    %123 = vector.broadcast %cst_49 : f32 to vector<8x128xf32>
    %124 = arith.addf %123, %122 : vector<8x128xf32>
    %125 = arith.divf %123, %124 : vector<8x128xf32>
    %126 = vector.extract_strided_slice %119 {offsets = [0, 128], sizes = [8, 128], strides = [1, 1]} : vector<8x512xf32> to vector<8x128xf32>
    %127 = arith.negf %126 : vector<8x128xf32>
    %128 = math.exp %127 : vector<8x128xf32>
    %cst_50 = arith.constant 1.000000e+00 : f32
    %129 = vector.broadcast %cst_50 : f32 to vector<8x128xf32>
    %130 = arith.addf %129, %128 : vector<8x128xf32>
    %131 = arith.divf %129, %130 : vector<8x128xf32>
    %132 = vector.extract_strided_slice %119 {offsets = [0, 256], sizes = [8, 128], strides = [1, 1]} : vector<8x512xf32> to vector<8x128xf32>
    %133 = math.tanh %132 : vector<8x128xf32>
    %134 = vector.extract_strided_slice %119 {offsets = [0, 384], sizes = [8, 128], strides = [1, 1]} : vector<8x512xf32> to vector<8x128xf32>
    %135 = arith.negf %134 : vector<8x128xf32>
    %136 = math.exp %135 : vector<8x128xf32>
    %cst_51 = arith.constant 1.000000e+00 : f32
    %137 = vector.broadcast %cst_51 : f32 to vector<8x128xf32>
    %138 = arith.addf %137, %136 : vector<8x128xf32>
    %139 = arith.divf %137, %138 : vector<8x128xf32>
    %140 = arith.mulf %131, %106 : vector<8x128xf32>
    %141 = arith.mulf %125, %133 : vector<8x128xf32>
    %142 = arith.addf %140, %141 : vector<8x128xf32>
    %143 = math.tanh %142 : vector<8x128xf32>
    %144 = arith.mulf %139, %143 : vector<8x128xf32>
    %c4 = arith.constant 4 : index
    %c0_52 = arith.constant 0 : index
    %c0_53 = arith.constant 0 : index
    %145 = vector.load %arg0[%c4, %c0_52, %c0_53] : memref<8x8x128xbf16, #tpu.memory_space<vmem>>, vector<1x8x128xbf16>
    %146 = vector.shape_cast %145 : vector<1x8x128xbf16> to vector<8x128xbf16>
    %c0_54 = arith.constant 0 : index
    %c0_55 = arith.constant 0 : index
    %147 = vector.load %arg1[%c0_54, %c0_55] : memref<128x512xbf16, #tpu.memory_space<vmem>>, vector<128x512xbf16>
    %cst_56 = arith.constant dense<0.000000e+00> : vector<8x512xf32>
    %148 = tpu.matmul %146, %147, %cst_56 {dimension_numbers = #tpu.dot_dimension_numbers<[1], [0], [0], [1], [0, 0, 1, 1], [], []>} : vector<8x128xbf16>, vector<128x512xbf16>, vector<8x512xf32> -> vector<8x512xf32>
    %149 = arith.truncf %144 : vector<8x128xf32> to vector<8x128xbf16>
    %c0_57 = arith.constant 0 : index
    %c0_58 = arith.constant 0 : index
    %150 = vector.load %arg2[%c0_57, %c0_58] : memref<128x512xbf16, #tpu.memory_space<vmem>>, vector<128x512xbf16>
    %cst_59 = arith.constant dense<0.000000e+00> : vector<8x512xf32>
    %151 = tpu.matmul %149, %150, %cst_59 {dimension_numbers = #tpu.dot_dimension_numbers<[1], [0], [0], [1], [0, 0, 1, 1], [], []>} : vector<8x128xbf16>, vector<128x512xbf16>, vector<8x512xf32> -> vector<8x512xf32>
    %152 = arith.addf %148, %151 : vector<8x512xf32>
    %c0_60 = arith.constant 0 : index
    %c0_61 = arith.constant 0 : index
    %153 = vector.load %arg3[%c0_60, %c0_61] : memref<1x512xf32, #tpu.memory_space<vmem>>, vector<1x512xf32>
    %154 = vector.broadcast %153 : vector<1x512xf32> to vector<8x512xf32>
    %155 = arith.addf %152, %154 : vector<8x512xf32>
    %156 = vector.extract_strided_slice %155 {offsets = [0, 0], sizes = [8, 128], strides = [1, 1]} : vector<8x512xf32> to vector<8x128xf32>
    %157 = arith.negf %156 : vector<8x128xf32>
    %158 = math.exp %157 : vector<8x128xf32>
    %cst_62 = arith.constant 1.000000e+00 : f32
    %159 = vector.broadcast %cst_62 : f32 to vector<8x128xf32>
    %160 = arith.addf %159, %158 : vector<8x128xf32>
    %161 = arith.divf %159, %160 : vector<8x128xf32>
    %162 = vector.extract_strided_slice %155 {offsets = [0, 128], sizes = [8, 128], strides = [1, 1]} : vector<8x512xf32> to vector<8x128xf32>
    %163 = arith.negf %162 : vector<8x128xf32>
    %164 = math.exp %163 : vector<8x128xf32>
    %cst_63 = arith.constant 1.000000e+00 : f32
    %165 = vector.broadcast %cst_63 : f32 to vector<8x128xf32>
    %166 = arith.addf %165, %164 : vector<8x128xf32>
    %167 = arith.divf %165, %166 : vector<8x128xf32>
    %168 = vector.extract_strided_slice %155 {offsets = [0, 256], sizes = [8, 128], strides = [1, 1]} : vector<8x512xf32> to vector<8x128xf32>
    %169 = math.tanh %168 : vector<8x128xf32>
    %170 = vector.extract_strided_slice %155 {offsets = [0, 384], sizes = [8, 128], strides = [1, 1]} : vector<8x512xf32> to vector<8x128xf32>
    %171 = arith.negf %170 : vector<8x128xf32>
    %172 = math.exp %171 : vector<8x128xf32>
    %cst_64 = arith.constant 1.000000e+00 : f32
    %173 = vector.broadcast %cst_64 : f32 to vector<8x128xf32>
    %174 = arith.addf %173, %172 : vector<8x128xf32>
    %175 = arith.divf %173, %174 : vector<8x128xf32>
    %176 = arith.mulf %167, %142 : vector<8x128xf32>
    %177 = arith.mulf %161, %169 : vector<8x128xf32>
    %178 = arith.addf %176, %177 : vector<8x128xf32>
    %179 = math.tanh %178 : vector<8x128xf32>
    %180 = arith.mulf %175, %179 : vector<8x128xf32>
    %c5 = arith.constant 5 : index
    %c0_65 = arith.constant 0 : index
    %c0_66 = arith.constant 0 : index
    %181 = vector.load %arg0[%c5, %c0_65, %c0_66] : memref<8x8x128xbf16, #tpu.memory_space<vmem>>, vector<1x8x128xbf16>
    %182 = vector.shape_cast %181 : vector<1x8x128xbf16> to vector<8x128xbf16>
    %c0_67 = arith.constant 0 : index
    %c0_68 = arith.constant 0 : index
    %183 = vector.load %arg1[%c0_67, %c0_68] : memref<128x512xbf16, #tpu.memory_space<vmem>>, vector<128x512xbf16>
    %cst_69 = arith.constant dense<0.000000e+00> : vector<8x512xf32>
    %184 = tpu.matmul %182, %183, %cst_69 {dimension_numbers = #tpu.dot_dimension_numbers<[1], [0], [0], [1], [0, 0, 1, 1], [], []>} : vector<8x128xbf16>, vector<128x512xbf16>, vector<8x512xf32> -> vector<8x512xf32>
    %185 = arith.truncf %180 : vector<8x128xf32> to vector<8x128xbf16>
    %c0_70 = arith.constant 0 : index
    %c0_71 = arith.constant 0 : index
    %186 = vector.load %arg2[%c0_70, %c0_71] : memref<128x512xbf16, #tpu.memory_space<vmem>>, vector<128x512xbf16>
    %cst_72 = arith.constant dense<0.000000e+00> : vector<8x512xf32>
    %187 = tpu.matmul %185, %186, %cst_72 {dimension_numbers = #tpu.dot_dimension_numbers<[1], [0], [0], [1], [0, 0, 1, 1], [], []>} : vector<8x128xbf16>, vector<128x512xbf16>, vector<8x512xf32> -> vector<8x512xf32>
    %188 = arith.addf %184, %187 : vector<8x512xf32>
    %c0_73 = arith.constant 0 : index
    %c0_74 = arith.constant 0 : index
    %189 = vector.load %arg3[%c0_73, %c0_74] : memref<1x512xf32, #tpu.memory_space<vmem>>, vector<1x512xf32>
    %190 = vector.broadcast %189 : vector<1x512xf32> to vector<8x512xf32>
    %191 = arith.addf %188, %190 : vector<8x512xf32>
    %192 = vector.extract_strided_slice %191 {offsets = [0, 0], sizes = [8, 128], strides = [1, 1]} : vector<8x512xf32> to vector<8x128xf32>
    %193 = arith.negf %192 : vector<8x128xf32>
    %194 = math.exp %193 : vector<8x128xf32>
    %cst_75 = arith.constant 1.000000e+00 : f32
    %195 = vector.broadcast %cst_75 : f32 to vector<8x128xf32>
    %196 = arith.addf %195, %194 : vector<8x128xf32>
    %197 = arith.divf %195, %196 : vector<8x128xf32>
    %198 = vector.extract_strided_slice %191 {offsets = [0, 128], sizes = [8, 128], strides = [1, 1]} : vector<8x512xf32> to vector<8x128xf32>
    %199 = arith.negf %198 : vector<8x128xf32>
    %200 = math.exp %199 : vector<8x128xf32>
    %cst_76 = arith.constant 1.000000e+00 : f32
    %201 = vector.broadcast %cst_76 : f32 to vector<8x128xf32>
    %202 = arith.addf %201, %200 : vector<8x128xf32>
    %203 = arith.divf %201, %202 : vector<8x128xf32>
    %204 = vector.extract_strided_slice %191 {offsets = [0, 256], sizes = [8, 128], strides = [1, 1]} : vector<8x512xf32> to vector<8x128xf32>
    %205 = math.tanh %204 : vector<8x128xf32>
    %206 = vector.extract_strided_slice %191 {offsets = [0, 384], sizes = [8, 128], strides = [1, 1]} : vector<8x512xf32> to vector<8x128xf32>
    %207 = arith.negf %206 : vector<8x128xf32>
    %208 = math.exp %207 : vector<8x128xf32>
    %cst_77 = arith.constant 1.000000e+00 : f32
    %209 = vector.broadcast %cst_77 : f32 to vector<8x128xf32>
    %210 = arith.addf %209, %208 : vector<8x128xf32>
    %211 = arith.divf %209, %210 : vector<8x128xf32>
    %212 = arith.mulf %203, %178 : vector<8x128xf32>
    %213 = arith.mulf %197, %205 : vector<8x128xf32>
    %214 = arith.addf %212, %213 : vector<8x128xf32>
    %215 = math.tanh %214 : vector<8x128xf32>
    %216 = arith.mulf %211, %215 : vector<8x128xf32>
    %c6 = arith.constant 6 : index
    %c0_78 = arith.constant 0 : index
    %c0_79 = arith.constant 0 : index
    %217 = vector.load %arg0[%c6, %c0_78, %c0_79] : memref<8x8x128xbf16, #tpu.memory_space<vmem>>, vector<1x8x128xbf16>
    %218 = vector.shape_cast %217 : vector<1x8x128xbf16> to vector<8x128xbf16>
    %c0_80 = arith.constant 0 : index
    %c0_81 = arith.constant 0 : index
    %219 = vector.load %arg1[%c0_80, %c0_81] : memref<128x512xbf16, #tpu.memory_space<vmem>>, vector<128x512xbf16>
    %cst_82 = arith.constant dense<0.000000e+00> : vector<8x512xf32>
    %220 = tpu.matmul %218, %219, %cst_82 {dimension_numbers = #tpu.dot_dimension_numbers<[1], [0], [0], [1], [0, 0, 1, 1], [], []>} : vector<8x128xbf16>, vector<128x512xbf16>, vector<8x512xf32> -> vector<8x512xf32>
    %221 = arith.truncf %216 : vector<8x128xf32> to vector<8x128xbf16>
    %c0_83 = arith.constant 0 : index
    %c0_84 = arith.constant 0 : index
    %222 = vector.load %arg2[%c0_83, %c0_84] : memref<128x512xbf16, #tpu.memory_space<vmem>>, vector<128x512xbf16>
    %cst_85 = arith.constant dense<0.000000e+00> : vector<8x512xf32>
    %223 = tpu.matmul %221, %222, %cst_85 {dimension_numbers = #tpu.dot_dimension_numbers<[1], [0], [0], [1], [0, 0, 1, 1], [], []>} : vector<8x128xbf16>, vector<128x512xbf16>, vector<8x512xf32> -> vector<8x512xf32>
    %224 = arith.addf %220, %223 : vector<8x512xf32>
    %c0_86 = arith.constant 0 : index
    %c0_87 = arith.constant 0 : index
    %225 = vector.load %arg3[%c0_86, %c0_87] : memref<1x512xf32, #tpu.memory_space<vmem>>, vector<1x512xf32>
    %226 = vector.broadcast %225 : vector<1x512xf32> to vector<8x512xf32>
    %227 = arith.addf %224, %226 : vector<8x512xf32>
    %228 = vector.extract_strided_slice %227 {offsets = [0, 0], sizes = [8, 128], strides = [1, 1]} : vector<8x512xf32> to vector<8x128xf32>
    %229 = arith.negf %228 : vector<8x128xf32>
    %230 = math.exp %229 : vector<8x128xf32>
    %cst_88 = arith.constant 1.000000e+00 : f32
    %231 = vector.broadcast %cst_88 : f32 to vector<8x128xf32>
    %232 = arith.addf %231, %230 : vector<8x128xf32>
    %233 = arith.divf %231, %232 : vector<8x128xf32>
    %234 = vector.extract_strided_slice %227 {offsets = [0, 128], sizes = [8, 128], strides = [1, 1]} : vector<8x512xf32> to vector<8x128xf32>
    %235 = arith.negf %234 : vector<8x128xf32>
    %236 = math.exp %235 : vector<8x128xf32>
    %cst_89 = arith.constant 1.000000e+00 : f32
    %237 = vector.broadcast %cst_89 : f32 to vector<8x128xf32>
    %238 = arith.addf %237, %236 : vector<8x128xf32>
    %239 = arith.divf %237, %238 : vector<8x128xf32>
    %240 = vector.extract_strided_slice %227 {offsets = [0, 256], sizes = [8, 128], strides = [1, 1]} : vector<8x512xf32> to vector<8x128xf32>
    %241 = math.tanh %240 : vector<8x128xf32>
    %242 = vector.extract_strided_slice %227 {offsets = [0, 384], sizes = [8, 128], strides = [1, 1]} : vector<8x512xf32> to vector<8x128xf32>
    %243 = arith.negf %242 : vector<8x128xf32>
    %244 = math.exp %243 : vector<8x128xf32>
    %cst_90 = arith.constant 1.000000e+00 : f32
    %245 = vector.broadcast %cst_90 : f32 to vector<8x128xf32>
    %246 = arith.addf %245, %244 : vector<8x128xf32>
    %247 = arith.divf %245, %246 : vector<8x128xf32>
    %248 = arith.mulf %239, %214 : vector<8x128xf32>
    %249 = arith.mulf %233, %241 : vector<8x128xf32>
    %250 = arith.addf %248, %249 : vector<8x128xf32>
    %251 = math.tanh %250 : vector<8x128xf32>
    %252 = arith.mulf %247, %251 : vector<8x128xf32>
    %c7 = arith.constant 7 : index
    %c0_91 = arith.constant 0 : index
    %c0_92 = arith.constant 0 : index
    %253 = vector.load %arg0[%c7, %c0_91, %c0_92] : memref<8x8x128xbf16, #tpu.memory_space<vmem>>, vector<1x8x128xbf16>
    %254 = vector.shape_cast %253 : vector<1x8x128xbf16> to vector<8x128xbf16>
    %c0_93 = arith.constant 0 : index
    %c0_94 = arith.constant 0 : index
    %255 = vector.load %arg1[%c0_93, %c0_94] : memref<128x512xbf16, #tpu.memory_space<vmem>>, vector<128x512xbf16>
    %cst_95 = arith.constant dense<0.000000e+00> : vector<8x512xf32>
    %256 = tpu.matmul %254, %255, %cst_95 {dimension_numbers = #tpu.dot_dimension_numbers<[1], [0], [0], [1], [0, 0, 1, 1], [], []>} : vector<8x128xbf16>, vector<128x512xbf16>, vector<8x512xf32> -> vector<8x512xf32>
    %257 = arith.truncf %252 : vector<8x128xf32> to vector<8x128xbf16>
    %c0_96 = arith.constant 0 : index
    %c0_97 = arith.constant 0 : index
    %258 = vector.load %arg2[%c0_96, %c0_97] : memref<128x512xbf16, #tpu.memory_space<vmem>>, vector<128x512xbf16>
    %cst_98 = arith.constant dense<0.000000e+00> : vector<8x512xf32>
    %259 = tpu.matmul %257, %258, %cst_98 {dimension_numbers = #tpu.dot_dimension_numbers<[1], [0], [0], [1], [0, 0, 1, 1], [], []>} : vector<8x128xbf16>, vector<128x512xbf16>, vector<8x512xf32> -> vector<8x512xf32>
    %260 = arith.addf %256, %259 : vector<8x512xf32>
    %c0_99 = arith.constant 0 : index
    %c0_100 = arith.constant 0 : index
    %261 = vector.load %arg3[%c0_99, %c0_100] : memref<1x512xf32, #tpu.memory_space<vmem>>, vector<1x512xf32>
    %262 = vector.broadcast %261 : vector<1x512xf32> to vector<8x512xf32>
    %263 = arith.addf %260, %262 : vector<8x512xf32>
    %264 = vector.extract_strided_slice %263 {offsets = [0, 0], sizes = [8, 128], strides = [1, 1]} : vector<8x512xf32> to vector<8x128xf32>
    %265 = arith.negf %264 : vector<8x128xf32>
    %266 = math.exp %265 : vector<8x128xf32>
    %cst_101 = arith.constant 1.000000e+00 : f32
    %267 = vector.broadcast %cst_101 : f32 to vector<8x128xf32>
    %268 = arith.addf %267, %266 : vector<8x128xf32>
    %269 = arith.divf %267, %268 : vector<8x128xf32>
    %270 = vector.extract_strided_slice %263 {offsets = [0, 128], sizes = [8, 128], strides = [1, 1]} : vector<8x512xf32> to vector<8x128xf32>
    %271 = arith.negf %270 : vector<8x128xf32>
    %272 = math.exp %271 : vector<8x128xf32>
    %cst_102 = arith.constant 1.000000e+00 : f32
    %273 = vector.broadcast %cst_102 : f32 to vector<8x128xf32>
    %274 = arith.addf %273, %272 : vector<8x128xf32>
    %275 = arith.divf %273, %274 : vector<8x128xf32>
    %276 = vector.extract_strided_slice %263 {offsets = [0, 256], sizes = [8, 128], strides = [1, 1]} : vector<8x512xf32> to vector<8x128xf32>
    %277 = math.tanh %276 : vector<8x128xf32>
    %278 = vector.extract_strided_slice %263 {offsets = [0, 384], sizes = [8, 128], strides = [1, 1]} : vector<8x512xf32> to vector<8x128xf32>
    %279 = arith.negf %278 : vector<8x128xf32>
    %280 = math.exp %279 : vector<8x128xf32>
    %cst_103 = arith.constant 1.000000e+00 : f32
    %281 = vector.broadcast %cst_103 : f32 to vector<8x128xf32>
    %282 = arith.addf %281, %280 : vector<8x128xf32>
    %283 = arith.divf %281, %282 : vector<8x128xf32>
    %284 = arith.mulf %275, %250 : vector<8x128xf32>
    %285 = arith.mulf %269, %277 : vector<8x128xf32>
    %286 = arith.addf %284, %285 : vector<8x128xf32>
    %287 = math.tanh %286 : vector<8x128xf32>
    %288 = arith.mulf %283, %287 : vector<8x128xf32>
    %c7_104 = arith.constant 7 : index
    %c0_105 = arith.constant 0 : index
    %c0_106 = arith.constant 0 : index
    %289 = vector.load %arg0[%c7_104, %c0_105, %c0_106] : memref<8x8x128xbf16, #tpu.memory_space<vmem>>, vector<1x8x128xbf16>
    %290 = vector.shape_cast %289 : vector<1x8x128xbf16> to vector<8x128xbf16>
    %c0_107 = arith.constant 0 : index
    %c0_108 = arith.constant 0 : index
    %291 = vector.load %arg4[%c0_107, %c0_108] : memref<128x512xbf16, #tpu.memory_space<vmem>>, vector<128x512xbf16>
    %cst_109 = arith.constant dense<0.000000e+00> : vector<8x512xf32>
    %292 = tpu.matmul %290, %291, %cst_109 {dimension_numbers = #tpu.dot_dimension_numbers<[1], [0], [0], [1], [0, 0, 1, 1], [], []>} : vector<8x128xbf16>, vector<128x512xbf16>, vector<8x512xf32> -> vector<8x512xf32>
    %293 = arith.truncf %0 : vector<8x128xf32> to vector<8x128xbf16>
    %c0_110 = arith.constant 0 : index
    %c0_111 = arith.constant 0 : index
    %294 = vector.load %arg5[%c0_110, %c0_111] : memref<128x512xbf16, #tpu.memory_space<vmem>>, vector<128x512xbf16>
    %cst_112 = arith.constant dense<0.000000e+00> : vector<8x512xf32>
    %295 = tpu.matmul %293, %294, %cst_112 {dimension_numbers = #tpu.dot_dimension_numbers<[1], [0], [0], [1], [0, 0, 1, 1], [], []>} : vector<8x128xbf16>, vector<128x512xbf16>, vector<8x512xf32> -> vector<8x512xf32>
    %296 = arith.addf %292, %295 : vector<8x512xf32>
    %c0_113 = arith.constant 0 : index
    %c0_114 = arith.constant 0 : index
    %297 = vector.load %arg6[%c0_113, %c0_114] : memref<1x512xf32, #tpu.memory_space<vmem>>, vector<1x512xf32>
    %298 = vector.broadcast %297 : vector<1x512xf32> to vector<8x512xf32>
    %299 = arith.addf %296, %298 : vector<8x512xf32>
    %300 = vector.extract_strided_slice %299 {offsets = [0, 0], sizes = [8, 128], strides = [1, 1]} : vector<8x512xf32> to vector<8x128xf32>
    %301 = arith.negf %300 : vector<8x128xf32>
    %302 = math.exp %301 : vector<8x128xf32>
    %cst_115 = arith.constant 1.000000e+00 : f32
    %303 = vector.broadcast %cst_115 : f32 to vector<8x128xf32>
    %304 = arith.addf %303, %302 : vector<8x128xf32>
    %305 = arith.divf %303, %304 : vector<8x128xf32>
    %306 = vector.extract_strided_slice %299 {offsets = [0, 128], sizes = [8, 128], strides = [1, 1]} : vector<8x512xf32> to vector<8x128xf32>
    %307 = arith.negf %306 : vector<8x128xf32>
    %308 = math.exp %307 : vector<8x128xf32>
    %cst_116 = arith.constant 1.000000e+00 : f32
    %309 = vector.broadcast %cst_116 : f32 to vector<8x128xf32>
    %310 = arith.addf %309, %308 : vector<8x128xf32>
    %311 = arith.divf %309, %310 : vector<8x128xf32>
    %312 = vector.extract_strided_slice %299 {offsets = [0, 256], sizes = [8, 128], strides = [1, 1]} : vector<8x512xf32> to vector<8x128xf32>
    %313 = math.tanh %312 : vector<8x128xf32>
    %314 = vector.extract_strided_slice %299 {offsets = [0, 384], sizes = [8, 128], strides = [1, 1]} : vector<8x512xf32> to vector<8x128xf32>
    %315 = arith.negf %314 : vector<8x128xf32>
    %316 = math.exp %315 : vector<8x128xf32>
    %cst_117 = arith.constant 1.000000e+00 : f32
    %317 = vector.broadcast %cst_117 : f32 to vector<8x128xf32>
    %318 = arith.addf %317, %316 : vector<8x128xf32>
    %319 = arith.divf %317, %318 : vector<8x128xf32>
    %320 = arith.mulf %311, %0 : vector<8x128xf32>
    %321 = arith.mulf %305, %313 : vector<8x128xf32>
    %322 = arith.addf %320, %321 : vector<8x128xf32>
    %323 = math.tanh %322 : vector<8x128xf32>
    %324 = arith.mulf %319, %323 : vector<8x128xf32>
    %c6_118 = arith.constant 6 : index
    %c0_119 = arith.constant 0 : index
    %c0_120 = arith.constant 0 : index
    %325 = vector.load %arg0[%c6_118, %c0_119, %c0_120] : memref<8x8x128xbf16, #tpu.memory_space<vmem>>, vector<1x8x128xbf16>
    %326 = vector.shape_cast %325 : vector<1x8x128xbf16> to vector<8x128xbf16>
    %c0_121 = arith.constant 0 : index
    %c0_122 = arith.constant 0 : index
    %327 = vector.load %arg4[%c0_121, %c0_122] : memref<128x512xbf16, #tpu.memory_space<vmem>>, vector<128x512xbf16>
    %cst_123 = arith.constant dense<0.000000e+00> : vector<8x512xf32>
    %328 = tpu.matmul %326, %327, %cst_123 {dimension_numbers = #tpu.dot_dimension_numbers<[1], [0], [0], [1], [0, 0, 1, 1], [], []>} : vector<8x128xbf16>, vector<128x512xbf16>, vector<8x512xf32> -> vector<8x512xf32>
    %329 = arith.truncf %324 : vector<8x128xf32> to vector<8x128xbf16>
    %c0_124 = arith.constant 0 : index
    %c0_125 = arith.constant 0 : index
    %330 = vector.load %arg5[%c0_124, %c0_125] : memref<128x512xbf16, #tpu.memory_space<vmem>>, vector<128x512xbf16>
    %cst_126 = arith.constant dense<0.000000e+00> : vector<8x512xf32>
    %331 = tpu.matmul %329, %330, %cst_126 {dimension_numbers = #tpu.dot_dimension_numbers<[1], [0], [0], [1], [0, 0, 1, 1], [], []>} : vector<8x128xbf16>, vector<128x512xbf16>, vector<8x512xf32> -> vector<8x512xf32>
    %332 = arith.addf %328, %331 : vector<8x512xf32>
    %c0_127 = arith.constant 0 : index
    %c0_128 = arith.constant 0 : index
    %333 = vector.load %arg6[%c0_127, %c0_128] : memref<1x512xf32, #tpu.memory_space<vmem>>, vector<1x512xf32>
    %334 = vector.broadcast %333 : vector<1x512xf32> to vector<8x512xf32>
    %335 = arith.addf %332, %334 : vector<8x512xf32>
    %336 = vector.extract_strided_slice %335 {offsets = [0, 0], sizes = [8, 128], strides = [1, 1]} : vector<8x512xf32> to vector<8x128xf32>
    %337 = arith.negf %336 : vector<8x128xf32>
    %338 = math.exp %337 : vector<8x128xf32>
    %cst_129 = arith.constant 1.000000e+00 : f32
    %339 = vector.broadcast %cst_129 : f32 to vector<8x128xf32>
    %340 = arith.addf %339, %338 : vector<8x128xf32>
    %341 = arith.divf %339, %340 : vector<8x128xf32>
    %342 = vector.extract_strided_slice %335 {offsets = [0, 128], sizes = [8, 128], strides = [1, 1]} : vector<8x512xf32> to vector<8x128xf32>
    %343 = arith.negf %342 : vector<8x128xf32>
    %344 = math.exp %343 : vector<8x128xf32>
    %cst_130 = arith.constant 1.000000e+00 : f32
    %345 = vector.broadcast %cst_130 : f32 to vector<8x128xf32>
    %346 = arith.addf %345, %344 : vector<8x128xf32>
    %347 = arith.divf %345, %346 : vector<8x128xf32>
    %348 = vector.extract_strided_slice %335 {offsets = [0, 256], sizes = [8, 128], strides = [1, 1]} : vector<8x512xf32> to vector<8x128xf32>
    %349 = math.tanh %348 : vector<8x128xf32>
    %350 = vector.extract_strided_slice %335 {offsets = [0, 384], sizes = [8, 128], strides = [1, 1]} : vector<8x512xf32> to vector<8x128xf32>
    %351 = arith.negf %350 : vector<8x128xf32>
    %352 = math.exp %351 : vector<8x128xf32>
    %cst_131 = arith.constant 1.000000e+00 : f32
    %353 = vector.broadcast %cst_131 : f32 to vector<8x128xf32>
    %354 = arith.addf %353, %352 : vector<8x128xf32>
    %355 = arith.divf %353, %354 : vector<8x128xf32>
    %356 = arith.mulf %347, %322 : vector<8x128xf32>
    %357 = arith.mulf %341, %349 : vector<8x128xf32>
    %358 = arith.addf %356, %357 : vector<8x128xf32>
    %359 = math.tanh %358 : vector<8x128xf32>
    %360 = arith.mulf %355, %359 : vector<8x128xf32>
    %c5_132 = arith.constant 5 : index
    %c0_133 = arith.constant 0 : index
    %c0_134 = arith.constant 0 : index
    %361 = vector.load %arg0[%c5_132, %c0_133, %c0_134] : memref<8x8x128xbf16, #tpu.memory_space<vmem>>, vector<1x8x128xbf16>
    %362 = vector.shape_cast %361 : vector<1x8x128xbf16> to vector<8x128xbf16>
    %c0_135 = arith.constant 0 : index
    %c0_136 = arith.constant 0 : index
    %363 = vector.load %arg4[%c0_135, %c0_136] : memref<128x512xbf16, #tpu.memory_space<vmem>>, vector<128x512xbf16>
    %cst_137 = arith.constant dense<0.000000e+00> : vector<8x512xf32>
    %364 = tpu.matmul %362, %363, %cst_137 {dimension_numbers = #tpu.dot_dimension_numbers<[1], [0], [0], [1], [0, 0, 1, 1], [], []>} : vector<8x128xbf16>, vector<128x512xbf16>, vector<8x512xf32> -> vector<8x512xf32>
    %365 = arith.truncf %360 : vector<8x128xf32> to vector<8x128xbf16>
    %c0_138 = arith.constant 0 : index
    %c0_139 = arith.constant 0 : index
    %366 = vector.load %arg5[%c0_138, %c0_139] : memref<128x512xbf16, #tpu.memory_space<vmem>>, vector<128x512xbf16>
    %cst_140 = arith.constant dense<0.000000e+00> : vector<8x512xf32>
    %367 = tpu.matmul %365, %366, %cst_140 {dimension_numbers = #tpu.dot_dimension_numbers<[1], [0], [0], [1], [0, 0, 1, 1], [], []>} : vector<8x128xbf16>, vector<128x512xbf16>, vector<8x512xf32> -> vector<8x512xf32>
    %368 = arith.addf %364, %367 : vector<8x512xf32>
    %c0_141 = arith.constant 0 : index
    %c0_142 = arith.constant 0 : index
    %369 = vector.load %arg6[%c0_141, %c0_142] : memref<1x512xf32, #tpu.memory_space<vmem>>, vector<1x512xf32>
    %370 = vector.broadcast %369 : vector<1x512xf32> to vector<8x512xf32>
    %371 = arith.addf %368, %370 : vector<8x512xf32>
    %372 = vector.extract_strided_slice %371 {offsets = [0, 0], sizes = [8, 128], strides = [1, 1]} : vector<8x512xf32> to vector<8x128xf32>
    %373 = arith.negf %372 : vector<8x128xf32>
    %374 = math.exp %373 : vector<8x128xf32>
    %cst_143 = arith.constant 1.000000e+00 : f32
    %375 = vector.broadcast %cst_143 : f32 to vector<8x128xf32>
    %376 = arith.addf %375, %374 : vector<8x128xf32>
    %377 = arith.divf %375, %376 : vector<8x128xf32>
    %378 = vector.extract_strided_slice %371 {offsets = [0, 128], sizes = [8, 128], strides = [1, 1]} : vector<8x512xf32> to vector<8x128xf32>
    %379 = arith.negf %378 : vector<8x128xf32>
    %380 = math.exp %379 : vector<8x128xf32>
    %cst_144 = arith.constant 1.000000e+00 : f32
    %381 = vector.broadcast %cst_144 : f32 to vector<8x128xf32>
    %382 = arith.addf %381, %380 : vector<8x128xf32>
    %383 = arith.divf %381, %382 : vector<8x128xf32>
    %384 = vector.extract_strided_slice %371 {offsets = [0, 256], sizes = [8, 128], strides = [1, 1]} : vector<8x512xf32> to vector<8x128xf32>
    %385 = math.tanh %384 : vector<8x128xf32>
    %386 = vector.extract_strided_slice %371 {offsets = [0, 384], sizes = [8, 128], strides = [1, 1]} : vector<8x512xf32> to vector<8x128xf32>
    %387 = arith.negf %386 : vector<8x128xf32>
    %388 = math.exp %387 : vector<8x128xf32>
    %cst_145 = arith.constant 1.000000e+00 : f32
    %389 = vector.broadcast %cst_145 : f32 to vector<8x128xf32>
    %390 = arith.addf %389, %388 : vector<8x128xf32>
    %391 = arith.divf %389, %390 : vector<8x128xf32>
    %392 = arith.mulf %383, %358 : vector<8x128xf32>
    %393 = arith.mulf %377, %385 : vector<8x128xf32>
    %394 = arith.addf %392, %393 : vector<8x128xf32>
    %395 = math.tanh %394 : vector<8x128xf32>
    %396 = arith.mulf %391, %395 : vector<8x128xf32>
    %c4_146 = arith.constant 4 : index
    %c0_147 = arith.constant 0 : index
    %c0_148 = arith.constant 0 : index
    %397 = vector.load %arg0[%c4_146, %c0_147, %c0_148] : memref<8x8x128xbf16, #tpu.memory_space<vmem>>, vector<1x8x128xbf16>
    %398 = vector.shape_cast %397 : vector<1x8x128xbf16> to vector<8x128xbf16>
    %c0_149 = arith.constant 0 : index
    %c0_150 = arith.constant 0 : index
    %399 = vector.load %arg4[%c0_149, %c0_150] : memref<128x512xbf16, #tpu.memory_space<vmem>>, vector<128x512xbf16>
    %cst_151 = arith.constant dense<0.000000e+00> : vector<8x512xf32>
    %400 = tpu.matmul %398, %399, %cst_151 {dimension_numbers = #tpu.dot_dimension_numbers<[1], [0], [0], [1], [0, 0, 1, 1], [], []>} : vector<8x128xbf16>, vector<128x512xbf16>, vector<8x512xf32> -> vector<8x512xf32>
    %401 = arith.truncf %396 : vector<8x128xf32> to vector<8x128xbf16>
    %c0_152 = arith.constant 0 : index
    %c0_153 = arith.constant 0 : index
    %402 = vector.load %arg5[%c0_152, %c0_153] : memref<128x512xbf16, #tpu.memory_space<vmem>>, vector<128x512xbf16>
    %cst_154 = arith.constant dense<0.000000e+00> : vector<8x512xf32>
    %403 = tpu.matmul %401, %402, %cst_154 {dimension_numbers = #tpu.dot_dimension_numbers<[1], [0], [0], [1], [0, 0, 1, 1], [], []>} : vector<8x128xbf16>, vector<128x512xbf16>, vector<8x512xf32> -> vector<8x512xf32>
    %404 = arith.addf %400, %403 : vector<8x512xf32>
    %c0_155 = arith.constant 0 : index
    %c0_156 = arith.constant 0 : index
    %405 = vector.load %arg6[%c0_155, %c0_156] : memref<1x512xf32, #tpu.memory_space<vmem>>, vector<1x512xf32>
    %406 = vector.broadcast %405 : vector<1x512xf32> to vector<8x512xf32>
    %407 = arith.addf %404, %406 : vector<8x512xf32>
    %408 = vector.extract_strided_slice %407 {offsets = [0, 0], sizes = [8, 128], strides = [1, 1]} : vector<8x512xf32> to vector<8x128xf32>
    %409 = arith.negf %408 : vector<8x128xf32>
    %410 = math.exp %409 : vector<8x128xf32>
    %cst_157 = arith.constant 1.000000e+00 : f32
    %411 = vector.broadcast %cst_157 : f32 to vector<8x128xf32>
    %412 = arith.addf %411, %410 : vector<8x128xf32>
    %413 = arith.divf %411, %412 : vector<8x128xf32>
    %414 = vector.extract_strided_slice %407 {offsets = [0, 128], sizes = [8, 128], strides = [1, 1]} : vector<8x512xf32> to vector<8x128xf32>
    %415 = arith.negf %414 : vector<8x128xf32>
    %416 = math.exp %415 : vector<8x128xf32>
    %cst_158 = arith.constant 1.000000e+00 : f32
    %417 = vector.broadcast %cst_158 : f32 to vector<8x128xf32>
    %418 = arith.addf %417, %416 : vector<8x128xf32>
    %419 = arith.divf %417, %418 : vector<8x128xf32>
    %420 = vector.extract_strided_slice %407 {offsets = [0, 256], sizes = [8, 128], strides = [1, 1]} : vector<8x512xf32> to vector<8x128xf32>
    %421 = math.tanh %420 : vector<8x128xf32>
    %422 = vector.extract_strided_slice %407 {offsets = [0, 384], sizes = [8, 128], strides = [1, 1]} : vector<8x512xf32> to vector<8x128xf32>
    %423 = arith.negf %422 : vector<8x128xf32>
    %424 = math.exp %423 : vector<8x128xf32>
    %cst_159 = arith.constant 1.000000e+00 : f32
    %425 = vector.broadcast %cst_159 : f32 to vector<8x128xf32>
    %426 = arith.addf %425, %424 : vector<8x128xf32>
    %427 = arith.divf %425, %426 : vector<8x128xf32>
    %428 = arith.mulf %419, %394 : vector<8x128xf32>
    %429 = arith.mulf %413, %421 : vector<8x128xf32>
    %430 = arith.addf %428, %429 : vector<8x128xf32>
    %431 = math.tanh %430 : vector<8x128xf32>
    %432 = arith.mulf %427, %431 : vector<8x128xf32>
    %c3_160 = arith.constant 3 : index
    %c0_161 = arith.constant 0 : index
    %c0_162 = arith.constant 0 : index
    %433 = vector.load %arg0[%c3_160, %c0_161, %c0_162] : memref<8x8x128xbf16, #tpu.memory_space<vmem>>, vector<1x8x128xbf16>
    %434 = vector.shape_cast %433 : vector<1x8x128xbf16> to vector<8x128xbf16>
    %c0_163 = arith.constant 0 : index
    %c0_164 = arith.constant 0 : index
    %435 = vector.load %arg4[%c0_163, %c0_164] : memref<128x512xbf16, #tpu.memory_space<vmem>>, vector<128x512xbf16>
    %cst_165 = arith.constant dense<0.000000e+00> : vector<8x512xf32>
    %436 = tpu.matmul %434, %435, %cst_165 {dimension_numbers = #tpu.dot_dimension_numbers<[1], [0], [0], [1], [0, 0, 1, 1], [], []>} : vector<8x128xbf16>, vector<128x512xbf16>, vector<8x512xf32> -> vector<8x512xf32>
    %437 = arith.truncf %432 : vector<8x128xf32> to vector<8x128xbf16>
    %c0_166 = arith.constant 0 : index
    %c0_167 = arith.constant 0 : index
    %438 = vector.load %arg5[%c0_166, %c0_167] : memref<128x512xbf16, #tpu.memory_space<vmem>>, vector<128x512xbf16>
    %cst_168 = arith.constant dense<0.000000e+00> : vector<8x512xf32>
    %439 = tpu.matmul %437, %438, %cst_168 {dimension_numbers = #tpu.dot_dimension_numbers<[1], [0], [0], [1], [0, 0, 1, 1], [], []>} : vector<8x128xbf16>, vector<128x512xbf16>, vector<8x512xf32> -> vector<8x512xf32>
    %440 = arith.addf %436, %439 : vector<8x512xf32>
    %c0_169 = arith.constant 0 : index
    %c0_170 = arith.constant 0 : index
    %441 = vector.load %arg6[%c0_169, %c0_170] : memref<1x512xf32, #tpu.memory_space<vmem>>, vector<1x512xf32>
    %442 = vector.broadcast %441 : vector<1x512xf32> to vector<8x512xf32>
    %443 = arith.addf %440, %442 : vector<8x512xf32>
    %444 = vector.extract_strided_slice %443 {offsets = [0, 0], sizes = [8, 128], strides = [1, 1]} : vector<8x512xf32> to vector<8x128xf32>
    %445 = arith.negf %444 : vector<8x128xf32>
    %446 = math.exp %445 : vector<8x128xf32>
    %cst_171 = arith.constant 1.000000e+00 : f32
    %447 = vector.broadcast %cst_171 : f32 to vector<8x128xf32>
    %448 = arith.addf %447, %446 : vector<8x128xf32>
    %449 = arith.divf %447, %448 : vector<8x128xf32>
    %450 = vector.extract_strided_slice %443 {offsets = [0, 128], sizes = [8, 128], strides = [1, 1]} : vector<8x512xf32> to vector<8x128xf32>
    %451 = arith.negf %450 : vector<8x128xf32>
    %452 = math.exp %451 : vector<8x128xf32>
    %cst_172 = arith.constant 1.000000e+00 : f32
    %453 = vector.broadcast %cst_172 : f32 to vector<8x128xf32>
    %454 = arith.addf %453, %452 : vector<8x128xf32>
    %455 = arith.divf %453, %454 : vector<8x128xf32>
    %456 = vector.extract_strided_slice %443 {offsets = [0, 256], sizes = [8, 128], strides = [1, 1]} : vector<8x512xf32> to vector<8x128xf32>
    %457 = math.tanh %456 : vector<8x128xf32>
    %458 = vector.extract_strided_slice %443 {offsets = [0, 384], sizes = [8, 128], strides = [1, 1]} : vector<8x512xf32> to vector<8x128xf32>
    %459 = arith.negf %458 : vector<8x128xf32>
    %460 = math.exp %459 : vector<8x128xf32>
    %cst_173 = arith.constant 1.000000e+00 : f32
    %461 = vector.broadcast %cst_173 : f32 to vector<8x128xf32>
    %462 = arith.addf %461, %460 : vector<8x128xf32>
    %463 = arith.divf %461, %462 : vector<8x128xf32>
    %464 = arith.mulf %455, %430 : vector<8x128xf32>
    %465 = arith.mulf %449, %457 : vector<8x128xf32>
    %466 = arith.addf %464, %465 : vector<8x128xf32>
    %467 = math.tanh %466 : vector<8x128xf32>
    %468 = arith.mulf %463, %467 : vector<8x128xf32>
    %c2_174 = arith.constant 2 : index
    %c0_175 = arith.constant 0 : index
    %c0_176 = arith.constant 0 : index
    %469 = vector.load %arg0[%c2_174, %c0_175, %c0_176] : memref<8x8x128xbf16, #tpu.memory_space<vmem>>, vector<1x8x128xbf16>
    %470 = vector.shape_cast %469 : vector<1x8x128xbf16> to vector<8x128xbf16>
    %c0_177 = arith.constant 0 : index
    %c0_178 = arith.constant 0 : index
    %471 = vector.load %arg4[%c0_177, %c0_178] : memref<128x512xbf16, #tpu.memory_space<vmem>>, vector<128x512xbf16>
    %cst_179 = arith.constant dense<0.000000e+00> : vector<8x512xf32>
    %472 = tpu.matmul %470, %471, %cst_179 {dimension_numbers = #tpu.dot_dimension_numbers<[1], [0], [0], [1], [0, 0, 1, 1], [], []>} : vector<8x128xbf16>, vector<128x512xbf16>, vector<8x512xf32> -> vector<8x512xf32>
    %473 = arith.truncf %468 : vector<8x128xf32> to vector<8x128xbf16>
    %c0_180 = arith.constant 0 : index
    %c0_181 = arith.constant 0 : index
    %474 = vector.load %arg5[%c0_180, %c0_181] : memref<128x512xbf16, #tpu.memory_space<vmem>>, vector<128x512xbf16>
    %cst_182 = arith.constant dense<0.000000e+00> : vector<8x512xf32>
    %475 = tpu.matmul %473, %474, %cst_182 {dimension_numbers = #tpu.dot_dimension_numbers<[1], [0], [0], [1], [0, 0, 1, 1], [], []>} : vector<8x128xbf16>, vector<128x512xbf16>, vector<8x512xf32> -> vector<8x512xf32>
    %476 = arith.addf %472, %475 : vector<8x512xf32>
    %c0_183 = arith.constant 0 : index
    %c0_184 = arith.constant 0 : index
    %477 = vector.load %arg6[%c0_183, %c0_184] : memref<1x512xf32, #tpu.memory_space<vmem>>, vector<1x512xf32>
    %478 = vector.broadcast %477 : vector<1x512xf32> to vector<8x512xf32>
    %479 = arith.addf %476, %478 : vector<8x512xf32>
    %480 = vector.extract_strided_slice %479 {offsets = [0, 0], sizes = [8, 128], strides = [1, 1]} : vector<8x512xf32> to vector<8x128xf32>
    %481 = arith.negf %480 : vector<8x128xf32>
    %482 = math.exp %481 : vector<8x128xf32>
    %cst_185 = arith.constant 1.000000e+00 : f32
    %483 = vector.broadcast %cst_185 : f32 to vector<8x128xf32>
    %484 = arith.addf %483, %482 : vector<8x128xf32>
    %485 = arith.divf %483, %484 : vector<8x128xf32>
    %486 = vector.extract_strided_slice %479 {offsets = [0, 128], sizes = [8, 128], strides = [1, 1]} : vector<8x512xf32> to vector<8x128xf32>
    %487 = arith.negf %486 : vector<8x128xf32>
    %488 = math.exp %487 : vector<8x128xf32>
    %cst_186 = arith.constant 1.000000e+00 : f32
    %489 = vector.broadcast %cst_186 : f32 to vector<8x128xf32>
    %490 = arith.addf %489, %488 : vector<8x128xf32>
    %491 = arith.divf %489, %490 : vector<8x128xf32>
    %492 = vector.extract_strided_slice %479 {offsets = [0, 256], sizes = [8, 128], strides = [1, 1]} : vector<8x512xf32> to vector<8x128xf32>
    %493 = math.tanh %492 : vector<8x128xf32>
    %494 = vector.extract_strided_slice %479 {offsets = [0, 384], sizes = [8, 128], strides = [1, 1]} : vector<8x512xf32> to vector<8x128xf32>
    %495 = arith.negf %494 : vector<8x128xf32>
    %496 = math.exp %495 : vector<8x128xf32>
    %cst_187 = arith.constant 1.000000e+00 : f32
    %497 = vector.broadcast %cst_187 : f32 to vector<8x128xf32>
    %498 = arith.addf %497, %496 : vector<8x128xf32>
    %499 = arith.divf %497, %498 : vector<8x128xf32>
    %500 = arith.mulf %491, %466 : vector<8x128xf32>
    %501 = arith.mulf %485, %493 : vector<8x128xf32>
    %502 = arith.addf %500, %501 : vector<8x128xf32>
    %503 = math.tanh %502 : vector<8x128xf32>
    %504 = arith.mulf %499, %503 : vector<8x128xf32>
    %c1_188 = arith.constant 1 : index
    %c0_189 = arith.constant 0 : index
    %c0_190 = arith.constant 0 : index
    %505 = vector.load %arg0[%c1_188, %c0_189, %c0_190] : memref<8x8x128xbf16, #tpu.memory_space<vmem>>, vector<1x8x128xbf16>
    %506 = vector.shape_cast %505 : vector<1x8x128xbf16> to vector<8x128xbf16>
    %c0_191 = arith.constant 0 : index
    %c0_192 = arith.constant 0 : index
    %507 = vector.load %arg4[%c0_191, %c0_192] : memref<128x512xbf16, #tpu.memory_space<vmem>>, vector<128x512xbf16>
    %cst_193 = arith.constant dense<0.000000e+00> : vector<8x512xf32>
    %508 = tpu.matmul %506, %507, %cst_193 {dimension_numbers = #tpu.dot_dimension_numbers<[1], [0], [0], [1], [0, 0, 1, 1], [], []>} : vector<8x128xbf16>, vector<128x512xbf16>, vector<8x512xf32> -> vector<8x512xf32>
    %509 = arith.truncf %504 : vector<8x128xf32> to vector<8x128xbf16>
    %c0_194 = arith.constant 0 : index
    %c0_195 = arith.constant 0 : index
    %510 = vector.load %arg5[%c0_194, %c0_195] : memref<128x512xbf16, #tpu.memory_space<vmem>>, vector<128x512xbf16>
    %cst_196 = arith.constant dense<0.000000e+00> : vector<8x512xf32>
    %511 = tpu.matmul %509, %510, %cst_196 {dimension_numbers = #tpu.dot_dimension_numbers<[1], [0], [0], [1], [0, 0, 1, 1], [], []>} : vector<8x128xbf16>, vector<128x512xbf16>, vector<8x512xf32> -> vector<8x512xf32>
    %512 = arith.addf %508, %511 : vector<8x512xf32>
    %c0_197 = arith.constant 0 : index
    %c0_198 = arith.constant 0 : index
    %513 = vector.load %arg6[%c0_197, %c0_198] : memref<1x512xf32, #tpu.memory_space<vmem>>, vector<1x512xf32>
    %514 = vector.broadcast %513 : vector<1x512xf32> to vector<8x512xf32>
    %515 = arith.addf %512, %514 : vector<8x512xf32>
    %516 = vector.extract_strided_slice %515 {offsets = [0, 0], sizes = [8, 128], strides = [1, 1]} : vector<8x512xf32> to vector<8x128xf32>
    %517 = arith.negf %516 : vector<8x128xf32>
    %518 = math.exp %517 : vector<8x128xf32>
    %cst_199 = arith.constant 1.000000e+00 : f32
    %519 = vector.broadcast %cst_199 : f32 to vector<8x128xf32>
    %520 = arith.addf %519, %518 : vector<8x128xf32>
    %521 = arith.divf %519, %520 : vector<8x128xf32>
    %522 = vector.extract_strided_slice %515 {offsets = [0, 128], sizes = [8, 128], strides = [1, 1]} : vector<8x512xf32> to vector<8x128xf32>
    %523 = arith.negf %522 : vector<8x128xf32>
    %524 = math.exp %523 : vector<8x128xf32>
    %cst_200 = arith.constant 1.000000e+00 : f32
    %525 = vector.broadcast %cst_200 : f32 to vector<8x128xf32>
    %526 = arith.addf %525, %524 : vector<8x128xf32>
    %527 = arith.divf %525, %526 : vector<8x128xf32>
    %528 = vector.extract_strided_slice %515 {offsets = [0, 256], sizes = [8, 128], strides = [1, 1]} : vector<8x512xf32> to vector<8x128xf32>
    %529 = math.tanh %528 : vector<8x128xf32>
    %530 = vector.extract_strided_slice %515 {offsets = [0, 384], sizes = [8, 128], strides = [1, 1]} : vector<8x512xf32> to vector<8x128xf32>
    %531 = arith.negf %530 : vector<8x128xf32>
    %532 = math.exp %531 : vector<8x128xf32>
    %cst_201 = arith.constant 1.000000e+00 : f32
    %533 = vector.broadcast %cst_201 : f32 to vector<8x128xf32>
    %534 = arith.addf %533, %532 : vector<8x128xf32>
    %535 = arith.divf %533, %534 : vector<8x128xf32>
    %536 = arith.mulf %527, %502 : vector<8x128xf32>
    %537 = arith.mulf %521, %529 : vector<8x128xf32>
    %538 = arith.addf %536, %537 : vector<8x128xf32>
    %539 = math.tanh %538 : vector<8x128xf32>
    %540 = arith.mulf %535, %539 : vector<8x128xf32>
    %c0_202 = arith.constant 0 : index
    %c0_203 = arith.constant 0 : index
    %c0_204 = arith.constant 0 : index
    %541 = vector.load %arg0[%c0_202, %c0_203, %c0_204] : memref<8x8x128xbf16, #tpu.memory_space<vmem>>, vector<1x8x128xbf16>
    %542 = vector.shape_cast %541 : vector<1x8x128xbf16> to vector<8x128xbf16>
    %c0_205 = arith.constant 0 : index
    %c0_206 = arith.constant 0 : index
    %543 = vector.load %arg4[%c0_205, %c0_206] : memref<128x512xbf16, #tpu.memory_space<vmem>>, vector<128x512xbf16>
    %cst_207 = arith.constant dense<0.000000e+00> : vector<8x512xf32>
    %544 = tpu.matmul %542, %543, %cst_207 {dimension_numbers = #tpu.dot_dimension_numbers<[1], [0], [0], [1], [0, 0, 1, 1], [], []>} : vector<8x128xbf16>, vector<128x512xbf16>, vector<8x512xf32> -> vector<8x512xf32>
    %545 = arith.truncf %540 : vector<8x128xf32> to vector<8x128xbf16>
    %c0_208 = arith.constant 0 : index
    %c0_209 = arith.constant 0 : index
    %546 = vector.load %arg5[%c0_208, %c0_209] : memref<128x512xbf16, #tpu.memory_space<vmem>>, vector<128x512xbf16>
    %cst_210 = arith.constant dense<0.000000e+00> : vector<8x512xf32>
    %547 = tpu.matmul %545, %546, %cst_210 {dimension_numbers = #tpu.dot_dimension_numbers<[1], [0], [0], [1], [0, 0, 1, 1], [], []>} : vector<8x128xbf16>, vector<128x512xbf16>, vector<8x512xf32> -> vector<8x512xf32>
    %548 = arith.addf %544, %547 : vector<8x512xf32>
    %c0_211 = arith.constant 0 : index
    %c0_212 = arith.constant 0 : index
    %549 = vector.load %arg6[%c0_211, %c0_212] : memref<1x512xf32, #tpu.memory_space<vmem>>, vector<1x512xf32>
    %550 = vector.broadcast %549 : vector<1x512xf32> to vector<8x512xf32>
    %551 = arith.addf %548, %550 : vector<8x512xf32>
    %552 = vector.extract_strided_slice %551 {offsets = [0, 0], sizes = [8, 128], strides = [1, 1]} : vector<8x512xf32> to vector<8x128xf32>
    %553 = arith.negf %552 : vector<8x128xf32>
    %554 = math.exp %553 : vector<8x128xf32>
    %cst_213 = arith.constant 1.000000e+00 : f32
    %555 = vector.broadcast %cst_213 : f32 to vector<8x128xf32>
    %556 = arith.addf %555, %554 : vector<8x128xf32>
    %557 = arith.divf %555, %556 : vector<8x128xf32>
    %558 = vector.extract_strided_slice %551 {offsets = [0, 128], sizes = [8, 128], strides = [1, 1]} : vector<8x512xf32> to vector<8x128xf32>
    %559 = arith.negf %558 : vector<8x128xf32>
    %560 = math.exp %559 : vector<8x128xf32>
    %cst_214 = arith.constant 1.000000e+00 : f32
    %561 = vector.broadcast %cst_214 : f32 to vector<8x128xf32>
    %562 = arith.addf %561, %560 : vector<8x128xf32>
    %563 = arith.divf %561, %562 : vector<8x128xf32>
    %564 = vector.extract_strided_slice %551 {offsets = [0, 256], sizes = [8, 128], strides = [1, 1]} : vector<8x512xf32> to vector<8x128xf32>
    %565 = math.tanh %564 : vector<8x128xf32>
    %566 = vector.extract_strided_slice %551 {offsets = [0, 384], sizes = [8, 128], strides = [1, 1]} : vector<8x512xf32> to vector<8x128xf32>
    %567 = arith.negf %566 : vector<8x128xf32>
    %568 = math.exp %567 : vector<8x128xf32>
    %cst_215 = arith.constant 1.000000e+00 : f32
    %569 = vector.broadcast %cst_215 : f32 to vector<8x128xf32>
    %570 = arith.addf %569, %568 : vector<8x128xf32>
    %571 = arith.divf %569, %570 : vector<8x128xf32>
    %572 = arith.mulf %563, %538 : vector<8x128xf32>
    %573 = arith.mulf %557, %565 : vector<8x128xf32>
    %574 = arith.addf %572, %573 : vector<8x128xf32>
    %575 = math.tanh %574 : vector<8x128xf32>
    %576 = arith.mulf %571, %575 : vector<8x128xf32>
    %577 = tpu.concatenate %288, %324 in 1 : vector<8x128xf32>, vector<8x128xf32> -> vector<8x256xf32>
    %578 = arith.truncf %577 : vector<8x256xf32> to vector<8x256xbf16>
    %c0_216 = arith.constant 0 : index
    %c0_217 = arith.constant 0 : index
    %579 = vector.load %arg7[%c0_216, %c0_217] : memref<256x512xbf16, #tpu.memory_space<vmem>>, vector<256x512xbf16>
    %cst_218 = arith.constant dense<0.000000e+00> : vector<8x512xf32>
    %580 = tpu.matmul %578, %579, %cst_218 {dimension_numbers = #tpu.dot_dimension_numbers<[1], [0], [0], [1], [0, 0, 1, 1], [], []>} : vector<8x256xbf16>, vector<256x512xbf16>, vector<8x512xf32> -> vector<8x512xf32>
    %581 = arith.truncf %0 : vector<8x128xf32> to vector<8x128xbf16>
    %c0_219 = arith.constant 0 : index
    %c0_220 = arith.constant 0 : index
    %582 = vector.load %arg8[%c0_219, %c0_220] : memref<128x512xbf16, #tpu.memory_space<vmem>>, vector<128x512xbf16>
    %cst_221 = arith.constant dense<0.000000e+00> : vector<8x512xf32>
    %583 = tpu.matmul %581, %582, %cst_221 {dimension_numbers = #tpu.dot_dimension_numbers<[1], [0], [0], [1], [0, 0, 1, 1], [], []>} : vector<8x128xbf16>, vector<128x512xbf16>, vector<8x512xf32> -> vector<8x512xf32>
    %584 = arith.addf %580, %583 : vector<8x512xf32>
    %c0_222 = arith.constant 0 : index
    %c0_223 = arith.constant 0 : index
    %585 = vector.load %arg9[%c0_222, %c0_223] : memref<1x512xf32, #tpu.memory_space<vmem>>, vector<1x512xf32>
    %586 = vector.broadcast %585 : vector<1x512xf32> to vector<8x512xf32>
    %587 = arith.addf %584, %586 : vector<8x512xf32>
    %588 = vector.extract_strided_slice %587 {offsets = [0, 0], sizes = [8, 128], strides = [1, 1]} : vector<8x512xf32> to vector<8x128xf32>
    %589 = arith.negf %588 : vector<8x128xf32>
    %590 = math.exp %589 : vector<8x128xf32>
    %cst_224 = arith.constant 1.000000e+00 : f32
    %591 = vector.broadcast %cst_224 : f32 to vector<8x128xf32>
    %592 = arith.addf %591, %590 : vector<8x128xf32>
    %593 = arith.divf %591, %592 : vector<8x128xf32>
    %594 = vector.extract_strided_slice %587 {offsets = [0, 128], sizes = [8, 128], strides = [1, 1]} : vector<8x512xf32> to vector<8x128xf32>
    %595 = arith.negf %594 : vector<8x128xf32>
    %596 = math.exp %595 : vector<8x128xf32>
    %cst_225 = arith.constant 1.000000e+00 : f32
    %597 = vector.broadcast %cst_225 : f32 to vector<8x128xf32>
    %598 = arith.addf %597, %596 : vector<8x128xf32>
    %599 = arith.divf %597, %598 : vector<8x128xf32>
    %600 = vector.extract_strided_slice %587 {offsets = [0, 256], sizes = [8, 128], strides = [1, 1]} : vector<8x512xf32> to vector<8x128xf32>
    %601 = math.tanh %600 : vector<8x128xf32>
    %602 = vector.extract_strided_slice %587 {offsets = [0, 384], sizes = [8, 128], strides = [1, 1]} : vector<8x512xf32> to vector<8x128xf32>
    %603 = arith.negf %602 : vector<8x128xf32>
    %604 = math.exp %603 : vector<8x128xf32>
    %cst_226 = arith.constant 1.000000e+00 : f32
    %605 = vector.broadcast %cst_226 : f32 to vector<8x128xf32>
    %606 = arith.addf %605, %604 : vector<8x128xf32>
    %607 = arith.divf %605, %606 : vector<8x128xf32>
    %608 = arith.mulf %599, %0 : vector<8x128xf32>
    %609 = arith.mulf %593, %601 : vector<8x128xf32>
    %610 = arith.addf %608, %609 : vector<8x128xf32>
    %611 = math.tanh %610 : vector<8x128xf32>
    %612 = arith.mulf %607, %611 : vector<8x128xf32>
    %613 = tpu.concatenate %252, %360 in 1 : vector<8x128xf32>, vector<8x128xf32> -> vector<8x256xf32>
    %614 = arith.truncf %613 : vector<8x256xf32> to vector<8x256xbf16>
    %c0_227 = arith.constant 0 : index
    %c0_228 = arith.constant 0 : index
    %615 = vector.load %arg7[%c0_227, %c0_228] : memref<256x512xbf16, #tpu.memory_space<vmem>>, vector<256x512xbf16>
    %cst_229 = arith.constant dense<0.000000e+00> : vector<8x512xf32>
    %616 = tpu.matmul %614, %615, %cst_229 {dimension_numbers = #tpu.dot_dimension_numbers<[1], [0], [0], [1], [0, 0, 1, 1], [], []>} : vector<8x256xbf16>, vector<256x512xbf16>, vector<8x512xf32> -> vector<8x512xf32>
    %617 = arith.truncf %612 : vector<8x128xf32> to vector<8x128xbf16>
    %c0_230 = arith.constant 0 : index
    %c0_231 = arith.constant 0 : index
    %618 = vector.load %arg8[%c0_230, %c0_231] : memref<128x512xbf16, #tpu.memory_space<vmem>>, vector<128x512xbf16>
    %cst_232 = arith.constant dense<0.000000e+00> : vector<8x512xf32>
    %619 = tpu.matmul %617, %618, %cst_232 {dimension_numbers = #tpu.dot_dimension_numbers<[1], [0], [0], [1], [0, 0, 1, 1], [], []>} : vector<8x128xbf16>, vector<128x512xbf16>, vector<8x512xf32> -> vector<8x512xf32>
    %620 = arith.addf %616, %619 : vector<8x512xf32>
    %c0_233 = arith.constant 0 : index
    %c0_234 = arith.constant 0 : index
    %621 = vector.load %arg9[%c0_233, %c0_234] : memref<1x512xf32, #tpu.memory_space<vmem>>, vector<1x512xf32>
    %622 = vector.broadcast %621 : vector<1x512xf32> to vector<8x512xf32>
    %623 = arith.addf %620, %622 : vector<8x512xf32>
    %624 = vector.extract_strided_slice %623 {offsets = [0, 0], sizes = [8, 128], strides = [1, 1]} : vector<8x512xf32> to vector<8x128xf32>
    %625 = arith.negf %624 : vector<8x128xf32>
    %626 = math.exp %625 : vector<8x128xf32>
    %cst_235 = arith.constant 1.000000e+00 : f32
    %627 = vector.broadcast %cst_235 : f32 to vector<8x128xf32>
    %628 = arith.addf %627, %626 : vector<8x128xf32>
    %629 = arith.divf %627, %628 : vector<8x128xf32>
    %630 = vector.extract_strided_slice %623 {offsets = [0, 128], sizes = [8, 128], strides = [1, 1]} : vector<8x512xf32> to vector<8x128xf32>
    %631 = arith.negf %630 : vector<8x128xf32>
    %632 = math.exp %631 : vector<8x128xf32>
    %cst_236 = arith.constant 1.000000e+00 : f32
    %633 = vector.broadcast %cst_236 : f32 to vector<8x128xf32>
    %634 = arith.addf %633, %632 : vector<8x128xf32>
    %635 = arith.divf %633, %634 : vector<8x128xf32>
    %636 = vector.extract_strided_slice %623 {offsets = [0, 256], sizes = [8, 128], strides = [1, 1]} : vector<8x512xf32> to vector<8x128xf32>
    %637 = math.tanh %636 : vector<8x128xf32>
    %638 = vector.extract_strided_slice %623 {offsets = [0, 384], sizes = [8, 128], strides = [1, 1]} : vector<8x512xf32> to vector<8x128xf32>
    %639 = arith.negf %638 : vector<8x128xf32>
    %640 = math.exp %639 : vector<8x128xf32>
    %cst_237 = arith.constant 1.000000e+00 : f32
    %641 = vector.broadcast %cst_237 : f32 to vector<8x128xf32>
    %642 = arith.addf %641, %640 : vector<8x128xf32>
    %643 = arith.divf %641, %642 : vector<8x128xf32>
    %644 = arith.mulf %635, %610 : vector<8x128xf32>
    %645 = arith.mulf %629, %637 : vector<8x128xf32>
    %646 = arith.addf %644, %645 : vector<8x128xf32>
    %647 = math.tanh %646 : vector<8x128xf32>
    %648 = arith.mulf %643, %647 : vector<8x128xf32>
    %649 = tpu.concatenate %216, %396 in 1 : vector<8x128xf32>, vector<8x128xf32> -> vector<8x256xf32>
    %650 = arith.truncf %649 : vector<8x256xf32> to vector<8x256xbf16>
    %c0_238 = arith.constant 0 : index
    %c0_239 = arith.constant 0 : index
    %651 = vector.load %arg7[%c0_238, %c0_239] : memref<256x512xbf16, #tpu.memory_space<vmem>>, vector<256x512xbf16>
    %cst_240 = arith.constant dense<0.000000e+00> : vector<8x512xf32>
    %652 = tpu.matmul %650, %651, %cst_240 {dimension_numbers = #tpu.dot_dimension_numbers<[1], [0], [0], [1], [0, 0, 1, 1], [], []>} : vector<8x256xbf16>, vector<256x512xbf16>, vector<8x512xf32> -> vector<8x512xf32>
    %653 = arith.truncf %648 : vector<8x128xf32> to vector<8x128xbf16>
    %c0_241 = arith.constant 0 : index
    %c0_242 = arith.constant 0 : index
    %654 = vector.load %arg8[%c0_241, %c0_242] : memref<128x512xbf16, #tpu.memory_space<vmem>>, vector<128x512xbf16>
    %cst_243 = arith.constant dense<0.000000e+00> : vector<8x512xf32>
    %655 = tpu.matmul %653, %654, %cst_243 {dimension_numbers = #tpu.dot_dimension_numbers<[1], [0], [0], [1], [0, 0, 1, 1], [], []>} : vector<8x128xbf16>, vector<128x512xbf16>, vector<8x512xf32> -> vector<8x512xf32>
    %656 = arith.addf %652, %655 : vector<8x512xf32>
    %c0_244 = arith.constant 0 : index
    %c0_245 = arith.constant 0 : index
    %657 = vector.load %arg9[%c0_244, %c0_245] : memref<1x512xf32, #tpu.memory_space<vmem>>, vector<1x512xf32>
    %658 = vector.broadcast %657 : vector<1x512xf32> to vector<8x512xf32>
    %659 = arith.addf %656, %658 : vector<8x512xf32>
    %660 = vector.extract_strided_slice %659 {offsets = [0, 0], sizes = [8, 128], strides = [1, 1]} : vector<8x512xf32> to vector<8x128xf32>
    %661 = arith.negf %660 : vector<8x128xf32>
    %662 = math.exp %661 : vector<8x128xf32>
    %cst_246 = arith.constant 1.000000e+00 : f32
    %663 = vector.broadcast %cst_246 : f32 to vector<8x128xf32>
    %664 = arith.addf %663, %662 : vector<8x128xf32>
    %665 = arith.divf %663, %664 : vector<8x128xf32>
    %666 = vector.extract_strided_slice %659 {offsets = [0, 128], sizes = [8, 128], strides = [1, 1]} : vector<8x512xf32> to vector<8x128xf32>
    %667 = arith.negf %666 : vector<8x128xf32>
    %668 = math.exp %667 : vector<8x128xf32>
    %cst_247 = arith.constant 1.000000e+00 : f32
    %669 = vector.broadcast %cst_247 : f32 to vector<8x128xf32>
    %670 = arith.addf %669, %668 : vector<8x128xf32>
    %671 = arith.divf %669, %670 : vector<8x128xf32>
    %672 = vector.extract_strided_slice %659 {offsets = [0, 256], sizes = [8, 128], strides = [1, 1]} : vector<8x512xf32> to vector<8x128xf32>
    %673 = math.tanh %672 : vector<8x128xf32>
    %674 = vector.extract_strided_slice %659 {offsets = [0, 384], sizes = [8, 128], strides = [1, 1]} : vector<8x512xf32> to vector<8x128xf32>
    %675 = arith.negf %674 : vector<8x128xf32>
    %676 = math.exp %675 : vector<8x128xf32>
    %cst_248 = arith.constant 1.000000e+00 : f32
    %677 = vector.broadcast %cst_248 : f32 to vector<8x128xf32>
    %678 = arith.addf %677, %676 : vector<8x128xf32>
    %679 = arith.divf %677, %678 : vector<8x128xf32>
    %680 = arith.mulf %671, %646 : vector<8x128xf32>
    %681 = arith.mulf %665, %673 : vector<8x128xf32>
    %682 = arith.addf %680, %681 : vector<8x128xf32>
    %683 = math.tanh %682 : vector<8x128xf32>
    %684 = arith.mulf %679, %683 : vector<8x128xf32>
    %685 = tpu.concatenate %180, %432 in 1 : vector<8x128xf32>, vector<8x128xf32> -> vector<8x256xf32>
    %686 = arith.truncf %685 : vector<8x256xf32> to vector<8x256xbf16>
    %c0_249 = arith.constant 0 : index
    %c0_250 = arith.constant 0 : index
    %687 = vector.load %arg7[%c0_249, %c0_250] : memref<256x512xbf16, #tpu.memory_space<vmem>>, vector<256x512xbf16>
    %cst_251 = arith.constant dense<0.000000e+00> : vector<8x512xf32>
    %688 = tpu.matmul %686, %687, %cst_251 {dimension_numbers = #tpu.dot_dimension_numbers<[1], [0], [0], [1], [0, 0, 1, 1], [], []>} : vector<8x256xbf16>, vector<256x512xbf16>, vector<8x512xf32> -> vector<8x512xf32>
    %689 = arith.truncf %684 : vector<8x128xf32> to vector<8x128xbf16>
    %c0_252 = arith.constant 0 : index
    %c0_253 = arith.constant 0 : index
    %690 = vector.load %arg8[%c0_252, %c0_253] : memref<128x512xbf16, #tpu.memory_space<vmem>>, vector<128x512xbf16>
    %cst_254 = arith.constant dense<0.000000e+00> : vector<8x512xf32>
    %691 = tpu.matmul %689, %690, %cst_254 {dimension_numbers = #tpu.dot_dimension_numbers<[1], [0], [0], [1], [0, 0, 1, 1], [], []>} : vector<8x128xbf16>, vector<128x512xbf16>, vector<8x512xf32> -> vector<8x512xf32>
    %692 = arith.addf %688, %691 : vector<8x512xf32>
    %c0_255 = arith.constant 0 : index
    %c0_256 = arith.constant 0 : index
    %693 = vector.load %arg9[%c0_255, %c0_256] : memref<1x512xf32, #tpu.memory_space<vmem>>, vector<1x512xf32>
    %694 = vector.broadcast %693 : vector<1x512xf32> to vector<8x512xf32>
    %695 = arith.addf %692, %694 : vector<8x512xf32>
    %696 = vector.extract_strided_slice %695 {offsets = [0, 0], sizes = [8, 128], strides = [1, 1]} : vector<8x512xf32> to vector<8x128xf32>
    %697 = arith.negf %696 : vector<8x128xf32>
    %698 = math.exp %697 : vector<8x128xf32>
    %cst_257 = arith.constant 1.000000e+00 : f32
    %699 = vector.broadcast %cst_257 : f32 to vector<8x128xf32>
    %700 = arith.addf %699, %698 : vector<8x128xf32>
    %701 = arith.divf %699, %700 : vector<8x128xf32>
    %702 = vector.extract_strided_slice %695 {offsets = [0, 128], sizes = [8, 128], strides = [1, 1]} : vector<8x512xf32> to vector<8x128xf32>
    %703 = arith.negf %702 : vector<8x128xf32>
    %704 = math.exp %703 : vector<8x128xf32>
    %cst_258 = arith.constant 1.000000e+00 : f32
    %705 = vector.broadcast %cst_258 : f32 to vector<8x128xf32>
    %706 = arith.addf %705, %704 : vector<8x128xf32>
    %707 = arith.divf %705, %706 : vector<8x128xf32>
    %708 = vector.extract_strided_slice %695 {offsets = [0, 256], sizes = [8, 128], strides = [1, 1]} : vector<8x512xf32> to vector<8x128xf32>
    %709 = math.tanh %708 : vector<8x128xf32>
    %710 = vector.extract_strided_slice %695 {offsets = [0, 384], sizes = [8, 128], strides = [1, 1]} : vector<8x512xf32> to vector<8x128xf32>
    %711 = arith.negf %710 : vector<8x128xf32>
    %712 = math.exp %711 : vector<8x128xf32>
    %cst_259 = arith.constant 1.000000e+00 : f32
    %713 = vector.broadcast %cst_259 : f32 to vector<8x128xf32>
    %714 = arith.addf %713, %712 : vector<8x128xf32>
    %715 = arith.divf %713, %714 : vector<8x128xf32>
    %716 = arith.mulf %707, %682 : vector<8x128xf32>
    %717 = arith.mulf %701, %709 : vector<8x128xf32>
    %718 = arith.addf %716, %717 : vector<8x128xf32>
    %719 = math.tanh %718 : vector<8x128xf32>
    %720 = arith.mulf %715, %719 : vector<8x128xf32>
    %721 = tpu.concatenate %144, %468 in 1 : vector<8x128xf32>, vector<8x128xf32> -> vector<8x256xf32>
    %722 = arith.truncf %721 : vector<8x256xf32> to vector<8x256xbf16>
    %c0_260 = arith.constant 0 : index
    %c0_261 = arith.constant 0 : index
    %723 = vector.load %arg7[%c0_260, %c0_261] : memref<256x512xbf16, #tpu.memory_space<vmem>>, vector<256x512xbf16>
    %cst_262 = arith.constant dense<0.000000e+00> : vector<8x512xf32>
    %724 = tpu.matmul %722, %723, %cst_262 {dimension_numbers = #tpu.dot_dimension_numbers<[1], [0], [0], [1], [0, 0, 1, 1], [], []>} : vector<8x256xbf16>, vector<256x512xbf16>, vector<8x512xf32> -> vector<8x512xf32>
    %725 = arith.truncf %720 : vector<8x128xf32> to vector<8x128xbf16>
    %c0_263 = arith.constant 0 : index
    %c0_264 = arith.constant 0 : index
    %726 = vector.load %arg8[%c0_263, %c0_264] : memref<128x512xbf16, #tpu.memory_space<vmem>>, vector<128x512xbf16>
    %cst_265 = arith.constant dense<0.000000e+00> : vector<8x512xf32>
    %727 = tpu.matmul %725, %726, %cst_265 {dimension_numbers = #tpu.dot_dimension_numbers<[1], [0], [0], [1], [0, 0, 1, 1], [], []>} : vector<8x128xbf16>, vector<128x512xbf16>, vector<8x512xf32> -> vector<8x512xf32>
    %728 = arith.addf %724, %727 : vector<8x512xf32>
    %c0_266 = arith.constant 0 : index
    %c0_267 = arith.constant 0 : index
    %729 = vector.load %arg9[%c0_266, %c0_267] : memref<1x512xf32, #tpu.memory_space<vmem>>, vector<1x512xf32>
    %730 = vector.broadcast %729 : vector<1x512xf32> to vector<8x512xf32>
    %731 = arith.addf %728, %730 : vector<8x512xf32>
    %732 = vector.extract_strided_slice %731 {offsets = [0, 0], sizes = [8, 128], strides = [1, 1]} : vector<8x512xf32> to vector<8x128xf32>
    %733 = arith.negf %732 : vector<8x128xf32>
    %734 = math.exp %733 : vector<8x128xf32>
    %cst_268 = arith.constant 1.000000e+00 : f32
    %735 = vector.broadcast %cst_268 : f32 to vector<8x128xf32>
    %736 = arith.addf %735, %734 : vector<8x128xf32>
    %737 = arith.divf %735, %736 : vector<8x128xf32>
    %738 = vector.extract_strided_slice %731 {offsets = [0, 128], sizes = [8, 128], strides = [1, 1]} : vector<8x512xf32> to vector<8x128xf32>
    %739 = arith.negf %738 : vector<8x128xf32>
    %740 = math.exp %739 : vector<8x128xf32>
    %cst_269 = arith.constant 1.000000e+00 : f32
    %741 = vector.broadcast %cst_269 : f32 to vector<8x128xf32>
    %742 = arith.addf %741, %740 : vector<8x128xf32>
    %743 = arith.divf %741, %742 : vector<8x128xf32>
    %744 = vector.extract_strided_slice %731 {offsets = [0, 256], sizes = [8, 128], strides = [1, 1]} : vector<8x512xf32> to vector<8x128xf32>
    %745 = math.tanh %744 : vector<8x128xf32>
    %746 = vector.extract_strided_slice %731 {offsets = [0, 384], sizes = [8, 128], strides = [1, 1]} : vector<8x512xf32> to vector<8x128xf32>
    %747 = arith.negf %746 : vector<8x128xf32>
    %748 = math.exp %747 : vector<8x128xf32>
    %cst_270 = arith.constant 1.000000e+00 : f32
    %749 = vector.broadcast %cst_270 : f32 to vector<8x128xf32>
    %750 = arith.addf %749, %748 : vector<8x128xf32>
    %751 = arith.divf %749, %750 : vector<8x128xf32>
    %752 = arith.mulf %743, %718 : vector<8x128xf32>
    %753 = arith.mulf %737, %745 : vector<8x128xf32>
    %754 = arith.addf %752, %753 : vector<8x128xf32>
    %755 = math.tanh %754 : vector<8x128xf32>
    %756 = arith.mulf %751, %755 : vector<8x128xf32>
    %757 = tpu.concatenate %108, %504 in 1 : vector<8x128xf32>, vector<8x128xf32> -> vector<8x256xf32>
    %758 = arith.truncf %757 : vector<8x256xf32> to vector<8x256xbf16>
    %c0_271 = arith.constant 0 : index
    %c0_272 = arith.constant 0 : index
    %759 = vector.load %arg7[%c0_271, %c0_272] : memref<256x512xbf16, #tpu.memory_space<vmem>>, vector<256x512xbf16>
    %cst_273 = arith.constant dense<0.000000e+00> : vector<8x512xf32>
    %760 = tpu.matmul %758, %759, %cst_273 {dimension_numbers = #tpu.dot_dimension_numbers<[1], [0], [0], [1], [0, 0, 1, 1], [], []>} : vector<8x256xbf16>, vector<256x512xbf16>, vector<8x512xf32> -> vector<8x512xf32>
    %761 = arith.truncf %756 : vector<8x128xf32> to vector<8x128xbf16>
    %c0_274 = arith.constant 0 : index
    %c0_275 = arith.constant 0 : index
    %762 = vector.load %arg8[%c0_274, %c0_275] : memref<128x512xbf16, #tpu.memory_space<vmem>>, vector<128x512xbf16>
    %cst_276 = arith.constant dense<0.000000e+00> : vector<8x512xf32>
    %763 = tpu.matmul %761, %762, %cst_276 {dimension_numbers = #tpu.dot_dimension_numbers<[1], [0], [0], [1], [0, 0, 1, 1], [], []>} : vector<8x128xbf16>, vector<128x512xbf16>, vector<8x512xf32> -> vector<8x512xf32>
    %764 = arith.addf %760, %763 : vector<8x512xf32>
    %c0_277 = arith.constant 0 : index
    %c0_278 = arith.constant 0 : index
    %765 = vector.load %arg9[%c0_277, %c0_278] : memref<1x512xf32, #tpu.memory_space<vmem>>, vector<1x512xf32>
    %766 = vector.broadcast %765 : vector<1x512xf32> to vector<8x512xf32>
    %767 = arith.addf %764, %766 : vector<8x512xf32>
    %768 = vector.extract_strided_slice %767 {offsets = [0, 0], sizes = [8, 128], strides = [1, 1]} : vector<8x512xf32> to vector<8x128xf32>
    %769 = arith.negf %768 : vector<8x128xf32>
    %770 = math.exp %769 : vector<8x128xf32>
    %cst_279 = arith.constant 1.000000e+00 : f32
    %771 = vector.broadcast %cst_279 : f32 to vector<8x128xf32>
    %772 = arith.addf %771, %770 : vector<8x128xf32>
    %773 = arith.divf %771, %772 : vector<8x128xf32>
    %774 = vector.extract_strided_slice %767 {offsets = [0, 128], sizes = [8, 128], strides = [1, 1]} : vector<8x512xf32> to vector<8x128xf32>
    %775 = arith.negf %774 : vector<8x128xf32>
    %776 = math.exp %775 : vector<8x128xf32>
    %cst_280 = arith.constant 1.000000e+00 : f32
    %777 = vector.broadcast %cst_280 : f32 to vector<8x128xf32>
    %778 = arith.addf %777, %776 : vector<8x128xf32>
    %779 = arith.divf %777, %778 : vector<8x128xf32>
    %780 = vector.extract_strided_slice %767 {offsets = [0, 256], sizes = [8, 128], strides = [1, 1]} : vector<8x512xf32> to vector<8x128xf32>
    %781 = math.tanh %780 : vector<8x128xf32>
    %782 = vector.extract_strided_slice %767 {offsets = [0, 384], sizes = [8, 128], strides = [1, 1]} : vector<8x512xf32> to vector<8x128xf32>
    %783 = arith.negf %782 : vector<8x128xf32>
    %784 = math.exp %783 : vector<8x128xf32>
    %cst_281 = arith.constant 1.000000e+00 : f32
    %785 = vector.broadcast %cst_281 : f32 to vector<8x128xf32>
    %786 = arith.addf %785, %784 : vector<8x128xf32>
    %787 = arith.divf %785, %786 : vector<8x128xf32>
    %788 = arith.mulf %779, %754 : vector<8x128xf32>
    %789 = arith.mulf %773, %781 : vector<8x128xf32>
    %790 = arith.addf %788, %789 : vector<8x128xf32>
    %791 = math.tanh %790 : vector<8x128xf32>
    %792 = arith.mulf %787, %791 : vector<8x128xf32>
    %793 = tpu.concatenate %72, %540 in 1 : vector<8x128xf32>, vector<8x128xf32> -> vector<8x256xf32>
    %794 = arith.truncf %793 : vector<8x256xf32> to vector<8x256xbf16>
    %c0_282 = arith.constant 0 : index
    %c0_283 = arith.constant 0 : index
    %795 = vector.load %arg7[%c0_282, %c0_283] : memref<256x512xbf16, #tpu.memory_space<vmem>>, vector<256x512xbf16>
    %cst_284 = arith.constant dense<0.000000e+00> : vector<8x512xf32>
    %796 = tpu.matmul %794, %795, %cst_284 {dimension_numbers = #tpu.dot_dimension_numbers<[1], [0], [0], [1], [0, 0, 1, 1], [], []>} : vector<8x256xbf16>, vector<256x512xbf16>, vector<8x512xf32> -> vector<8x512xf32>
    %797 = arith.truncf %792 : vector<8x128xf32> to vector<8x128xbf16>
    %c0_285 = arith.constant 0 : index
    %c0_286 = arith.constant 0 : index
    %798 = vector.load %arg8[%c0_285, %c0_286] : memref<128x512xbf16, #tpu.memory_space<vmem>>, vector<128x512xbf16>
    %cst_287 = arith.constant dense<0.000000e+00> : vector<8x512xf32>
    %799 = tpu.matmul %797, %798, %cst_287 {dimension_numbers = #tpu.dot_dimension_numbers<[1], [0], [0], [1], [0, 0, 1, 1], [], []>} : vector<8x128xbf16>, vector<128x512xbf16>, vector<8x512xf32> -> vector<8x512xf32>
    %800 = arith.addf %796, %799 : vector<8x512xf32>
    %c0_288 = arith.constant 0 : index
    %c0_289 = arith.constant 0 : index
    %801 = vector.load %arg9[%c0_288, %c0_289] : memref<1x512xf32, #tpu.memory_space<vmem>>, vector<1x512xf32>
    %802 = vector.broadcast %801 : vector<1x512xf32> to vector<8x512xf32>
    %803 = arith.addf %800, %802 : vector<8x512xf32>
    %804 = vector.extract_strided_slice %803 {offsets = [0, 0], sizes = [8, 128], strides = [1, 1]} : vector<8x512xf32> to vector<8x128xf32>
    %805 = arith.negf %804 : vector<8x128xf32>
    %806 = math.exp %805 : vector<8x128xf32>
    %cst_290 = arith.constant 1.000000e+00 : f32
    %807 = vector.broadcast %cst_290 : f32 to vector<8x128xf32>
    %808 = arith.addf %807, %806 : vector<8x128xf32>
    %809 = arith.divf %807, %808 : vector<8x128xf32>
    %810 = vector.extract_strided_slice %803 {offsets = [0, 128], sizes = [8, 128], strides = [1, 1]} : vector<8x512xf32> to vector<8x128xf32>
    %811 = arith.negf %810 : vector<8x128xf32>
    %812 = math.exp %811 : vector<8x128xf32>
    %cst_291 = arith.constant 1.000000e+00 : f32
    %813 = vector.broadcast %cst_291 : f32 to vector<8x128xf32>
    %814 = arith.addf %813, %812 : vector<8x128xf32>
    %815 = arith.divf %813, %814 : vector<8x128xf32>
    %816 = vector.extract_strided_slice %803 {offsets = [0, 256], sizes = [8, 128], strides = [1, 1]} : vector<8x512xf32> to vector<8x128xf32>
    %817 = math.tanh %816 : vector<8x128xf32>
    %818 = vector.extract_strided_slice %803 {offsets = [0, 384], sizes = [8, 128], strides = [1, 1]} : vector<8x512xf32> to vector<8x128xf32>
    %819 = arith.negf %818 : vector<8x128xf32>
    %820 = math.exp %819 : vector<8x128xf32>
    %cst_292 = arith.constant 1.000000e+00 : f32
    %821 = vector.broadcast %cst_292 : f32 to vector<8x128xf32>
    %822 = arith.addf %821, %820 : vector<8x128xf32>
    %823 = arith.divf %821, %822 : vector<8x128xf32>
    %824 = arith.mulf %815, %790 : vector<8x128xf32>
    %825 = arith.mulf %809, %817 : vector<8x128xf32>
    %826 = arith.addf %824, %825 : vector<8x128xf32>
    %827 = math.tanh %826 : vector<8x128xf32>
    %828 = arith.mulf %823, %827 : vector<8x128xf32>
    %829 = tpu.concatenate %36, %576 in 1 : vector<8x128xf32>, vector<8x128xf32> -> vector<8x256xf32>
    %830 = arith.truncf %829 : vector<8x256xf32> to vector<8x256xbf16>
    %c0_293 = arith.constant 0 : index
    %c0_294 = arith.constant 0 : index
    %831 = vector.load %arg7[%c0_293, %c0_294] : memref<256x512xbf16, #tpu.memory_space<vmem>>, vector<256x512xbf16>
    %cst_295 = arith.constant dense<0.000000e+00> : vector<8x512xf32>
    %832 = tpu.matmul %830, %831, %cst_295 {dimension_numbers = #tpu.dot_dimension_numbers<[1], [0], [0], [1], [0, 0, 1, 1], [], []>} : vector<8x256xbf16>, vector<256x512xbf16>, vector<8x512xf32> -> vector<8x512xf32>
    %833 = arith.truncf %828 : vector<8x128xf32> to vector<8x128xbf16>
    %c0_296 = arith.constant 0 : index
    %c0_297 = arith.constant 0 : index
    %834 = vector.load %arg8[%c0_296, %c0_297] : memref<128x512xbf16, #tpu.memory_space<vmem>>, vector<128x512xbf16>
    %cst_298 = arith.constant dense<0.000000e+00> : vector<8x512xf32>
    %835 = tpu.matmul %833, %834, %cst_298 {dimension_numbers = #tpu.dot_dimension_numbers<[1], [0], [0], [1], [0, 0, 1, 1], [], []>} : vector<8x128xbf16>, vector<128x512xbf16>, vector<8x512xf32> -> vector<8x512xf32>
    %836 = arith.addf %832, %835 : vector<8x512xf32>
    %c0_299 = arith.constant 0 : index
    %c0_300 = arith.constant 0 : index
    %837 = vector.load %arg9[%c0_299, %c0_300] : memref<1x512xf32, #tpu.memory_space<vmem>>, vector<1x512xf32>
    %838 = vector.broadcast %837 : vector<1x512xf32> to vector<8x512xf32>
    %839 = arith.addf %836, %838 : vector<8x512xf32>
    %840 = vector.extract_strided_slice %839 {offsets = [0, 0], sizes = [8, 128], strides = [1, 1]} : vector<8x512xf32> to vector<8x128xf32>
    %841 = arith.negf %840 : vector<8x128xf32>
    %842 = math.exp %841 : vector<8x128xf32>
    %cst_301 = arith.constant 1.000000e+00 : f32
    %843 = vector.broadcast %cst_301 : f32 to vector<8x128xf32>
    %844 = arith.addf %843, %842 : vector<8x128xf32>
    %845 = arith.divf %843, %844 : vector<8x128xf32>
    %846 = vector.extract_strided_slice %839 {offsets = [0, 128], sizes = [8, 128], strides = [1, 1]} : vector<8x512xf32> to vector<8x128xf32>
    %847 = arith.negf %846 : vector<8x128xf32>
    %848 = math.exp %847 : vector<8x128xf32>
    %cst_302 = arith.constant 1.000000e+00 : f32
    %849 = vector.broadcast %cst_302 : f32 to vector<8x128xf32>
    %850 = arith.addf %849, %848 : vector<8x128xf32>
    %851 = arith.divf %849, %850 : vector<8x128xf32>
    %852 = vector.extract_strided_slice %839 {offsets = [0, 256], sizes = [8, 128], strides = [1, 1]} : vector<8x512xf32> to vector<8x128xf32>
    %853 = math.tanh %852 : vector<8x128xf32>
    %854 = vector.extract_strided_slice %839 {offsets = [0, 384], sizes = [8, 128], strides = [1, 1]} : vector<8x512xf32> to vector<8x128xf32>
    %855 = arith.negf %854 : vector<8x128xf32>
    %856 = math.exp %855 : vector<8x128xf32>
    %cst_303 = arith.constant 1.000000e+00 : f32
    %857 = vector.broadcast %cst_303 : f32 to vector<8x128xf32>
    %858 = arith.addf %857, %856 : vector<8x128xf32>
    %859 = arith.divf %857, %858 : vector<8x128xf32>
    %860 = arith.mulf %851, %826 : vector<8x128xf32>
    %861 = arith.mulf %845, %853 : vector<8x128xf32>
    %862 = arith.addf %860, %861 : vector<8x128xf32>
    %863 = math.tanh %862 : vector<8x128xf32>
    %864 = arith.mulf %859, %863 : vector<8x128xf32>
    %c0_304 = arith.constant 0 : index
    %c0_305 = arith.constant 0 : index
    %865 = vector.load %arg14[%c0_304, %c0_305] : memref<8x128xf32, #tpu.memory_space<vmem>>, vector<8x128xf32>
    tpu.vector_store %arg14[%c0_304, %c0_305], %864 {strides = array<i32>} : memref<8x128xf32, #tpu.memory_space<vmem>>, vector<8x128xf32>,
    %866 = tpu.iota {dimensions = array<i32: 1>} : vector<8x128xi32>
    %867 = arith.truncf %864 : vector<8x128xf32> to vector<8x128xbf16>
    %c0_306 = arith.constant 0 : index
    %c0_307 = arith.constant 0 : index
    %868 = vector.load %arg11[%c0_306, %c0_307] : memref<128x640xbf16, #tpu.memory_space<vmem>>, vector<128x640xbf16>
    %cst_308 = arith.constant dense<0.000000e+00> : vector<8x640xf32>
    %869 = tpu.matmul %867, %868, %cst_308 {dimension_numbers = #tpu.dot_dimension_numbers<[1], [0], [0], [1], [0, 0, 1, 1], [], []>} : vector<8x128xbf16>, vector<128x640xbf16>, vector<8x640xf32> -> vector<8x640xf32>
    %c0_309 = arith.constant 0 : index
    %c0_310 = arith.constant 0 : index
    %870 = vector.load %arg12[%c0_309, %c0_310] : memref<1x640xf32, #tpu.memory_space<vmem>>, vector<1x640xf32>
    %871 = vector.broadcast %870 : vector<1x640xf32> to vector<8x640xf32>
    %872 = arith.addf %869, %871 : vector<8x640xf32>
    %cst_311 = arith.constant 0.000000e+00 : f32
    %873 = vector.broadcast %cst_311 : f32 to vector<8x512xf32>
    %874 = vector.extract_strided_slice %872 {offsets = [0, 0], sizes = [8, 512], strides = [1, 1]} : vector<8x640xf32> to vector<8x512xf32>
    %875 = arith.addf %873, %874 : vector<8x512xf32>
    %876 = vector.extract_strided_slice %875 {offsets = [0, 0], sizes = [8, 128], strides = [1, 1]} : vector<8x512xf32> to vector<8x128xf32>
    %877 = arith.negf %876 : vector<8x128xf32>
    %878 = math.exp %877 : vector<8x128xf32>
    %cst_312 = arith.constant 1.000000e+00 : f32
    %879 = vector.broadcast %cst_312 : f32 to vector<8x128xf32>
    %880 = arith.addf %879, %878 : vector<8x128xf32>
    %881 = arith.divf %879, %880 : vector<8x128xf32>
    %882 = vector.extract_strided_slice %875 {offsets = [0, 128], sizes = [8, 128], strides = [1, 1]} : vector<8x512xf32> to vector<8x128xf32>
    %883 = arith.negf %882 : vector<8x128xf32>
    %884 = math.exp %883 : vector<8x128xf32>
    %cst_313 = arith.constant 1.000000e+00 : f32
    %885 = vector.broadcast %cst_313 : f32 to vector<8x128xf32>
    %886 = arith.addf %885, %884 : vector<8x128xf32>
    %887 = arith.divf %885, %886 : vector<8x128xf32>
    %888 = vector.extract_strided_slice %875 {offsets = [0, 256], sizes = [8, 128], strides = [1, 1]} : vector<8x512xf32> to vector<8x128xf32>
    %889 = math.tanh %888 : vector<8x128xf32>
    %890 = vector.extract_strided_slice %875 {offsets = [0, 384], sizes = [8, 128], strides = [1, 1]} : vector<8x512xf32> to vector<8x128xf32>
    %891 = arith.negf %890 : vector<8x128xf32>
    %892 = math.exp %891 : vector<8x128xf32>
    %cst_314 = arith.constant 1.000000e+00 : f32
    %893 = vector.broadcast %cst_314 : f32 to vector<8x128xf32>
    %894 = arith.addf %893, %892 : vector<8x128xf32>
    %895 = arith.divf %893, %894 : vector<8x128xf32>
    %896 = arith.mulf %887, %862 : vector<8x128xf32>
    %897 = arith.mulf %881, %889 : vector<8x128xf32>
    %898 = arith.addf %896, %897 : vector<8x128xf32>
    %899 = math.tanh %898 : vector<8x128xf32>
    %900 = arith.mulf %895, %899 : vector<8x128xf32>
    %901 = arith.truncf %900 : vector<8x128xf32> to vector<8x128xbf16>
    %c0_315 = arith.constant 0 : index
    %c0_316 = arith.constant 0 : index
    %902 = vector.load %arg11[%c0_315, %c0_316] : memref<128x640xbf16, #tpu.memory_space<vmem>>, vector<128x640xbf16>
    %cst_317 = arith.constant dense<0.000000e+00> : vector<8x640xf32>
    %903 = tpu.matmul %901, %902, %cst_317 {dimension_numbers = #tpu.dot_dimension_numbers<[1], [0], [0], [1], [0, 0, 1, 1], [], []>} : vector<8x128xbf16>, vector<128x640xbf16>, vector<8x640xf32> -> vector<8x640xf32>
    %c0_318 = arith.constant 0 : index
    %c0_319 = arith.constant 0 : index
    %904 = vector.load %arg12[%c0_318, %c0_319] : memref<1x640xf32, #tpu.memory_space<vmem>>, vector<1x640xf32>
    %905 = vector.broadcast %904 : vector<1x640xf32> to vector<8x640xf32>
    %906 = arith.addf %903, %905 : vector<8x640xf32>
    %907 = vector.extract_strided_slice %906 {offsets = [0, 512], sizes = [8, 128], strides = [1, 1]} : vector<8x640xf32> to vector<8x128xf32>
    %cst_320 = arith.constant dense<0xFF800000> : vector<8xf32>
    %908 = vector.multi_reduction <maximumf>, %907, %cst_320 [1] : vector<8x128xf32> to vector<8xf32>
    %909 = vector.shape_cast %908 : vector<8xf32> to vector<8x1xf32>
    %910 = vector.broadcast %909 : vector<8x1xf32> to vector<8x128xf32>
    %911 = arith.cmpf oeq, %907, %910 : vector<8x128xf32>
    %c128_i32 = arith.constant 128 : i32
    %912 = vector.broadcast %c128_i32 : i32 to vector<8x128xi32>
    %913 = arith.select %911, %866, %912 : vector<8x128xi1>, vector<8x128xi32>
    %cst_321 = arith.constant dense<2147483647> : vector<8xi32>
    %914 = vector.multi_reduction <minsi>, %913, %cst_321 [1] : vector<8x128xi32> to vector<8xi32>
    %915 = vector.shape_cast %914 : vector<8xi32> to vector<8x1xi32>
    %916 = vector.broadcast %915 : vector<8x1xi32> to vector<8x128xi32>
    %917 = arith.cmpi eq, %866, %916 : vector<8x128xi32>
    %918 = arith.extui %917 : vector<8x128xi1> to vector<8x128xi32>
    %919 = arith.sitofp %918 : vector<8x128xi32> to vector<8x128xf32>
    %920 = arith.truncf %919 : vector<8x128xf32> to vector<8x128xbf16>
    %c0_322 = arith.constant 0 : index
    %c0_323 = arith.constant 0 : index
    %921 = vector.load %arg10[%c0_322, %c0_323] : memref<128x512xbf16, #tpu.memory_space<vmem>>, vector<128x512xbf16>
    %cst_324 = arith.constant dense<0.000000e+00> : vector<8x512xf32>
    %922 = tpu.matmul %920, %921, %cst_324 {dimension_numbers = #tpu.dot_dimension_numbers<[1], [0], [0], [1], [0, 0, 1, 1], [], []>} : vector<8x128xbf16>, vector<128x512xbf16>, vector<8x512xf32> -> vector<8x512xf32>
    %923 = vector.extract_strided_slice %906 {offsets = [0, 0], sizes = [8, 512], strides = [1, 1]} : vector<8x640xf32> to vector<8x512xf32>
    %924 = arith.addf %922, %923 : vector<8x512xf32>
    %925 = vector.extract_strided_slice %924 {offsets = [0, 0], sizes = [8, 128], strides = [1, 1]} : vector<8x512xf32> to vector<8x128xf32>
    %926 = arith.negf %925 : vector<8x128xf32>
    %927 = math.exp %926 : vector<8x128xf32>
    %cst_325 = arith.constant 1.000000e+00 : f32
    %928 = vector.broadcast %cst_325 : f32 to vector<8x128xf32>
    %929 = arith.addf %928, %927 : vector<8x128xf32>
    %930 = arith.divf %928, %929 : vector<8x128xf32>
    %931 = vector.extract_strided_slice %924 {offsets = [0, 128], sizes = [8, 128], strides = [1, 1]} : vector<8x512xf32> to vector<8x128xf32>
    %932 = arith.negf %931 : vector<8x128xf32>
    %933 = math.exp %932 : vector<8x128xf32>
    %cst_326 = arith.constant 1.000000e+00 : f32
    %934 = vector.broadcast %cst_326 : f32 to vector<8x128xf32>
    %935 = arith.addf %934, %933 : vector<8x128xf32>
    %936 = arith.divf %934, %935 : vector<8x128xf32>
    %937 = vector.extract_strided_slice %924 {offsets = [0, 256], sizes = [8, 128], strides = [1, 1]} : vector<8x512xf32> to vector<8x128xf32>
    %938 = math.tanh %937 : vector<8x128xf32>
    %939 = vector.extract_strided_slice %924 {offsets = [0, 384], sizes = [8, 128], strides = [1, 1]} : vector<8x512xf32> to vector<8x128xf32>
    %940 = arith.negf %939 : vector<8x128xf32>
    %941 = math.exp %940 : vector<8x128xf32>
    %cst_327 = arith.constant 1.000000e+00 : f32
    %942 = vector.broadcast %cst_327 : f32 to vector<8x128xf32>
    %943 = arith.addf %942, %941 : vector<8x128xf32>
    %944 = arith.divf %942, %943 : vector<8x128xf32>
    %945 = arith.mulf %936, %898 : vector<8x128xf32>
    %946 = arith.mulf %930, %938 : vector<8x128xf32>
    %947 = arith.addf %945, %946 : vector<8x128xf32>
    %948 = math.tanh %947 : vector<8x128xf32>
    %949 = arith.mulf %944, %948 : vector<8x128xf32>
    %950 = arith.truncf %949 : vector<8x128xf32> to vector<8x128xbf16>
    %c0_328 = arith.constant 0 : index
    %c0_329 = arith.constant 0 : index
    %951 = vector.load %arg11[%c0_328, %c0_329] : memref<128x640xbf16, #tpu.memory_space<vmem>>, vector<128x640xbf16>
    %cst_330 = arith.constant dense<0.000000e+00> : vector<8x640xf32>
    %952 = tpu.matmul %950, %951, %cst_330 {dimension_numbers = #tpu.dot_dimension_numbers<[1], [0], [0], [1], [0, 0, 1, 1], [], []>} : vector<8x128xbf16>, vector<128x640xbf16>, vector<8x640xf32> -> vector<8x640xf32>
    %c0_331 = arith.constant 0 : index
    %c0_332 = arith.constant 0 : index
    %953 = vector.load %arg12[%c0_331, %c0_332] : memref<1x640xf32, #tpu.memory_space<vmem>>, vector<1x640xf32>
    %954 = vector.broadcast %953 : vector<1x640xf32> to vector<8x640xf32>
    %955 = arith.addf %952, %954 : vector<8x640xf32>
    %956 = vector.extract_strided_slice %955 {offsets = [0, 512], sizes = [8, 128], strides = [1, 1]} : vector<8x640xf32> to vector<8x128xf32>
    %cst_333 = arith.constant dense<0xFF800000> : vector<8xf32>
    %957 = vector.multi_reduction <maximumf>, %956, %cst_333 [1] : vector<8x128xf32> to vector<8xf32>
    %958 = vector.shape_cast %957 : vector<8xf32> to vector<8x1xf32>
    %959 = vector.broadcast %958 : vector<8x1xf32> to vector<8x128xf32>
    %960 = arith.cmpf oeq, %956, %959 : vector<8x128xf32>
    %c128_i32_334 = arith.constant 128 : i32
    %961 = vector.broadcast %c128_i32_334 : i32 to vector<8x128xi32>
    %962 = arith.select %960, %866, %961 : vector<8x128xi1>, vector<8x128xi32>
    %cst_335 = arith.constant dense<2147483647> : vector<8xi32>
    %963 = vector.multi_reduction <minsi>, %962, %cst_335 [1] : vector<8x128xi32> to vector<8xi32>
    %964 = vector.shape_cast %963 : vector<8xi32> to vector<8x1xi32>
    %965 = vector.broadcast %964 : vector<8x1xi32> to vector<8x128xi32>
    %966 = arith.cmpi eq, %866, %965 : vector<8x128xi32>
    %967 = arith.extui %966 : vector<8x128xi1> to vector<8x128xi32>
    %968 = arith.sitofp %967 : vector<8x128xi32> to vector<8x128xf32>
    %969 = arith.truncf %968 : vector<8x128xf32> to vector<8x128xbf16>
    %c0_336 = arith.constant 0 : index
    %c0_337 = arith.constant 0 : index
    %970 = vector.load %arg10[%c0_336, %c0_337] : memref<128x512xbf16, #tpu.memory_space<vmem>>, vector<128x512xbf16>
    %cst_338 = arith.constant dense<0.000000e+00> : vector<8x512xf32>
    %971 = tpu.matmul %969, %970, %cst_338 {dimension_numbers = #tpu.dot_dimension_numbers<[1], [0], [0], [1], [0, 0, 1, 1], [], []>} : vector<8x128xbf16>, vector<128x512xbf16>, vector<8x512xf32> -> vector<8x512xf32>
    %972 = vector.extract_strided_slice %955 {offsets = [0, 0], sizes = [8, 512], strides = [1, 1]} : vector<8x640xf32> to vector<8x512xf32>
    %973 = arith.addf %971, %972 : vector<8x512xf32>
    %974 = vector.extract_strided_slice %973 {offsets = [0, 0], sizes = [8, 128], strides = [1, 1]} : vector<8x512xf32> to vector<8x128xf32>
    %975 = arith.negf %974 : vector<8x128xf32>
    %976 = math.exp %975 : vector<8x128xf32>
    %cst_339 = arith.constant 1.000000e+00 : f32
    %977 = vector.broadcast %cst_339 : f32 to vector<8x128xf32>
    %978 = arith.addf %977, %976 : vector<8x128xf32>
    %979 = arith.divf %977, %978 : vector<8x128xf32>
    %980 = vector.extract_strided_slice %973 {offsets = [0, 128], sizes = [8, 128], strides = [1, 1]} : vector<8x512xf32> to vector<8x128xf32>
    %981 = arith.negf %980 : vector<8x128xf32>
    %982 = math.exp %981 : vector<8x128xf32>
    %cst_340 = arith.constant 1.000000e+00 : f32
    %983 = vector.broadcast %cst_340 : f32 to vector<8x128xf32>
    %984 = arith.addf %983, %982 : vector<8x128xf32>
    %985 = arith.divf %983, %984 : vector<8x128xf32>
    %986 = vector.extract_strided_slice %973 {offsets = [0, 256], sizes = [8, 128], strides = [1, 1]} : vector<8x512xf32> to vector<8x128xf32>
    %987 = math.tanh %986 : vector<8x128xf32>
    %988 = vector.extract_strided_slice %973 {offsets = [0, 384], sizes = [8, 128], strides = [1, 1]} : vector<8x512xf32> to vector<8x128xf32>
    %989 = arith.negf %988 : vector<8x128xf32>
    %990 = math.exp %989 : vector<8x128xf32>
    %cst_341 = arith.constant 1.000000e+00 : f32
    %991 = vector.broadcast %cst_341 : f32 to vector<8x128xf32>
    %992 = arith.addf %991, %990 : vector<8x128xf32>
    %993 = arith.divf %991, %992 : vector<8x128xf32>
    %994 = arith.mulf %985, %947 : vector<8x128xf32>
    %995 = arith.mulf %979, %987 : vector<8x128xf32>
    %996 = arith.addf %994, %995 : vector<8x128xf32>
    %997 = math.tanh %996 : vector<8x128xf32>
    %998 = arith.mulf %993, %997 : vector<8x128xf32>
    %999 = arith.truncf %998 : vector<8x128xf32> to vector<8x128xbf16>
    %c0_342 = arith.constant 0 : index
    %c0_343 = arith.constant 0 : index
    %1000 = vector.load %arg11[%c0_342, %c0_343] : memref<128x640xbf16, #tpu.memory_space<vmem>>, vector<128x640xbf16>
    %cst_344 = arith.constant dense<0.000000e+00> : vector<8x640xf32>
    %1001 = tpu.matmul %999, %1000, %cst_344 {dimension_numbers = #tpu.dot_dimension_numbers<[1], [0], [0], [1], [0, 0, 1, 1], [], []>} : vector<8x128xbf16>, vector<128x640xbf16>, vector<8x640xf32> -> vector<8x640xf32>
    %c0_345 = arith.constant 0 : index
    %c0_346 = arith.constant 0 : index
    %1002 = vector.load %arg12[%c0_345, %c0_346] : memref<1x640xf32, #tpu.memory_space<vmem>>, vector<1x640xf32>
    %1003 = vector.broadcast %1002 : vector<1x640xf32> to vector<8x640xf32>
    %1004 = arith.addf %1001, %1003 : vector<8x640xf32>
    %1005 = vector.extract_strided_slice %1004 {offsets = [0, 512], sizes = [8, 128], strides = [1, 1]} : vector<8x640xf32> to vector<8x128xf32>
    %cst_347 = arith.constant dense<0xFF800000> : vector<8xf32>
    %1006 = vector.multi_reduction <maximumf>, %1005, %cst_347 [1] : vector<8x128xf32> to vector<8xf32>
    %1007 = vector.shape_cast %1006 : vector<8xf32> to vector<8x1xf32>
    %1008 = vector.broadcast %1007 : vector<8x1xf32> to vector<8x128xf32>
    %1009 = arith.cmpf oeq, %1005, %1008 : vector<8x128xf32>
    %c128_i32_348 = arith.constant 128 : i32
    %1010 = vector.broadcast %c128_i32_348 : i32 to vector<8x128xi32>
    %1011 = arith.select %1009, %866, %1010 : vector<8x128xi1>, vector<8x128xi32>
    %cst_349 = arith.constant dense<2147483647> : vector<8xi32>
    %1012 = vector.multi_reduction <minsi>, %1011, %cst_349 [1] : vector<8x128xi32> to vector<8xi32>
    %1013 = vector.shape_cast %1012 : vector<8xi32> to vector<8x1xi32>
    %1014 = vector.broadcast %1013 : vector<8x1xi32> to vector<8x128xi32>
    %1015 = arith.cmpi eq, %866, %1014 : vector<8x128xi32>
    %1016 = arith.extui %1015 : vector<8x128xi1> to vector<8x128xi32>
    %1017 = arith.sitofp %1016 : vector<8x128xi32> to vector<8x128xf32>
    %1018 = arith.truncf %1017 : vector<8x128xf32> to vector<8x128xbf16>
    %c0_350 = arith.constant 0 : index
    %c0_351 = arith.constant 0 : index
    %1019 = vector.load %arg10[%c0_350, %c0_351] : memref<128x512xbf16, #tpu.memory_space<vmem>>, vector<128x512xbf16>
    %cst_352 = arith.constant dense<0.000000e+00> : vector<8x512xf32>
    %1020 = tpu.matmul %1018, %1019, %cst_352 {dimension_numbers = #tpu.dot_dimension_numbers<[1], [0], [0], [1], [0, 0, 1, 1], [], []>} : vector<8x128xbf16>, vector<128x512xbf16>, vector<8x512xf32> -> vector<8x512xf32>
    %1021 = vector.extract_strided_slice %1004 {offsets = [0, 0], sizes = [8, 512], strides = [1, 1]} : vector<8x640xf32> to vector<8x512xf32>
    %1022 = arith.addf %1020, %1021 : vector<8x512xf32>
    %1023 = vector.extract_strided_slice %1022 {offsets = [0, 0], sizes = [8, 128], strides = [1, 1]} : vector<8x512xf32> to vector<8x128xf32>
    %1024 = arith.negf %1023 : vector<8x128xf32>
    %1025 = math.exp %1024 : vector<8x128xf32>
    %cst_353 = arith.constant 1.000000e+00 : f32
    %1026 = vector.broadcast %cst_353 : f32 to vector<8x128xf32>
    %1027 = arith.addf %1026, %1025 : vector<8x128xf32>
    %1028 = arith.divf %1026, %1027 : vector<8x128xf32>
    %1029 = vector.extract_strided_slice %1022 {offsets = [0, 128], sizes = [8, 128], strides = [1, 1]} : vector<8x512xf32> to vector<8x128xf32>
    %1030 = arith.negf %1029 : vector<8x128xf32>
    %1031 = math.exp %1030 : vector<8x128xf32>
    %cst_354 = arith.constant 1.000000e+00 : f32
    %1032 = vector.broadcast %cst_354 : f32 to vector<8x128xf32>
    %1033 = arith.addf %1032, %1031 : vector<8x128xf32>
    %1034 = arith.divf %1032, %1033 : vector<8x128xf32>
    %1035 = vector.extract_strided_slice %1022 {offsets = [0, 256], sizes = [8, 128], strides = [1, 1]} : vector<8x512xf32> to vector<8x128xf32>
    %1036 = math.tanh %1035 : vector<8x128xf32>
    %1037 = vector.extract_strided_slice %1022 {offsets = [0, 384], sizes = [8, 128], strides = [1, 1]} : vector<8x512xf32> to vector<8x128xf32>
    %1038 = arith.negf %1037 : vector<8x128xf32>
    %1039 = math.exp %1038 : vector<8x128xf32>
    %cst_355 = arith.constant 1.000000e+00 : f32
    %1040 = vector.broadcast %cst_355 : f32 to vector<8x128xf32>
    %1041 = arith.addf %1040, %1039 : vector<8x128xf32>
    %1042 = arith.divf %1040, %1041 : vector<8x128xf32>
    %1043 = arith.mulf %1034, %996 : vector<8x128xf32>
    %1044 = arith.mulf %1028, %1036 : vector<8x128xf32>
    %1045 = arith.addf %1043, %1044 : vector<8x128xf32>
    %1046 = math.tanh %1045 : vector<8x128xf32>
    %1047 = arith.mulf %1042, %1046 : vector<8x128xf32>
    %1048 = arith.truncf %1047 : vector<8x128xf32> to vector<8x128xbf16>
    %c0_356 = arith.constant 0 : index
    %c0_357 = arith.constant 0 : index
    %1049 = vector.load %arg11[%c0_356, %c0_357] : memref<128x640xbf16, #tpu.memory_space<vmem>>, vector<128x640xbf16>
    %cst_358 = arith.constant dense<0.000000e+00> : vector<8x640xf32>
    %1050 = tpu.matmul %1048, %1049, %cst_358 {dimension_numbers = #tpu.dot_dimension_numbers<[1], [0], [0], [1], [0, 0, 1, 1], [], []>} : vector<8x128xbf16>, vector<128x640xbf16>, vector<8x640xf32> -> vector<8x640xf32>
    %c0_359 = arith.constant 0 : index
    %c0_360 = arith.constant 0 : index
    %1051 = vector.load %arg12[%c0_359, %c0_360] : memref<1x640xf32, #tpu.memory_space<vmem>>, vector<1x640xf32>
    %1052 = vector.broadcast %1051 : vector<1x640xf32> to vector<8x640xf32>
    %1053 = arith.addf %1050, %1052 : vector<8x640xf32>
    %1054 = vector.extract_strided_slice %1053 {offsets = [0, 512], sizes = [8, 128], strides = [1, 1]} : vector<8x640xf32> to vector<8x128xf32>
    %cst_361 = arith.constant dense<0xFF800000> : vector<8xf32>
    %1055 = vector.multi_reduction <maximumf>, %1054, %cst_361 [1] : vector<8x128xf32> to vector<8xf32>
    %1056 = vector.shape_cast %1055 : vector<8xf32> to vector<8x1xf32>
    %1057 = vector.broadcast %1056 : vector<8x1xf32> to vector<8x128xf32>
    %1058 = arith.cmpf oeq, %1054, %1057 : vector<8x128xf32>
    %c128_i32_362 = arith.constant 128 : i32
    %1059 = vector.broadcast %c128_i32_362 : i32 to vector<8x128xi32>
    %1060 = arith.select %1058, %866, %1059 : vector<8x128xi1>, vector<8x128xi32>
    %cst_363 = arith.constant dense<2147483647> : vector<8xi32>
    %1061 = vector.multi_reduction <minsi>, %1060, %cst_363 [1] : vector<8x128xi32> to vector<8xi32>
    %1062 = vector.shape_cast %1061 : vector<8xi32> to vector<8x1xi32>
    %1063 = vector.broadcast %1062 : vector<8x1xi32> to vector<8x128xi32>
    %1064 = arith.cmpi eq, %866, %1063 : vector<8x128xi32>
    %1065 = arith.extui %1064 : vector<8x128xi1> to vector<8x128xi32>
    %1066 = arith.sitofp %1065 : vector<8x128xi32> to vector<8x128xf32>
    %1067 = arith.truncf %1066 : vector<8x128xf32> to vector<8x128xbf16>
    %c0_364 = arith.constant 0 : index
    %c0_365 = arith.constant 0 : index
    %1068 = vector.load %arg10[%c0_364, %c0_365] : memref<128x512xbf16, #tpu.memory_space<vmem>>, vector<128x512xbf16>
    %cst_366 = arith.constant dense<0.000000e+00> : vector<8x512xf32>
    %1069 = tpu.matmul %1067, %1068, %cst_366 {dimension_numbers = #tpu.dot_dimension_numbers<[1], [0], [0], [1], [0, 0, 1, 1], [], []>} : vector<8x128xbf16>, vector<128x512xbf16>, vector<8x512xf32> -> vector<8x512xf32>
    %1070 = vector.extract_strided_slice %1053 {offsets = [0, 0], sizes = [8, 512], strides = [1, 1]} : vector<8x640xf32> to vector<8x512xf32>
    %1071 = arith.addf %1069, %1070 : vector<8x512xf32>
    %1072 = vector.extract_strided_slice %1071 {offsets = [0, 0], sizes = [8, 128], strides = [1, 1]} : vector<8x512xf32> to vector<8x128xf32>
    %1073 = arith.negf %1072 : vector<8x128xf32>
    %1074 = math.exp %1073 : vector<8x128xf32>
    %cst_367 = arith.constant 1.000000e+00 : f32
    %1075 = vector.broadcast %cst_367 : f32 to vector<8x128xf32>
    %1076 = arith.addf %1075, %1074 : vector<8x128xf32>
    %1077 = arith.divf %1075, %1076 : vector<8x128xf32>
    %1078 = vector.extract_strided_slice %1071 {offsets = [0, 128], sizes = [8, 128], strides = [1, 1]} : vector<8x512xf32> to vector<8x128xf32>
    %1079 = arith.negf %1078 : vector<8x128xf32>
    %1080 = math.exp %1079 : vector<8x128xf32>
    %cst_368 = arith.constant 1.000000e+00 : f32
    %1081 = vector.broadcast %cst_368 : f32 to vector<8x128xf32>
    %1082 = arith.addf %1081, %1080 : vector<8x128xf32>
    %1083 = arith.divf %1081, %1082 : vector<8x128xf32>
    %1084 = vector.extract_strided_slice %1071 {offsets = [0, 256], sizes = [8, 128], strides = [1, 1]} : vector<8x512xf32> to vector<8x128xf32>
    %1085 = math.tanh %1084 : vector<8x128xf32>
    %1086 = vector.extract_strided_slice %1071 {offsets = [0, 384], sizes = [8, 128], strides = [1, 1]} : vector<8x512xf32> to vector<8x128xf32>
    %1087 = arith.negf %1086 : vector<8x128xf32>
    %1088 = math.exp %1087 : vector<8x128xf32>
    %cst_369 = arith.constant 1.000000e+00 : f32
    %1089 = vector.broadcast %cst_369 : f32 to vector<8x128xf32>
    %1090 = arith.addf %1089, %1088 : vector<8x128xf32>
    %1091 = arith.divf %1089, %1090 : vector<8x128xf32>
    %1092 = arith.mulf %1083, %1045 : vector<8x128xf32>
    %1093 = arith.mulf %1077, %1085 : vector<8x128xf32>
    %1094 = arith.addf %1092, %1093 : vector<8x128xf32>
    %1095 = math.tanh %1094 : vector<8x128xf32>
    %1096 = arith.mulf %1091, %1095 : vector<8x128xf32>
    %1097 = arith.truncf %1096 : vector<8x128xf32> to vector<8x128xbf16>
    %c0_370 = arith.constant 0 : index
    %c0_371 = arith.constant 0 : index
    %1098 = vector.load %arg11[%c0_370, %c0_371] : memref<128x640xbf16, #tpu.memory_space<vmem>>, vector<128x640xbf16>
    %cst_372 = arith.constant dense<0.000000e+00> : vector<8x640xf32>
    %1099 = tpu.matmul %1097, %1098, %cst_372 {dimension_numbers = #tpu.dot_dimension_numbers<[1], [0], [0], [1], [0, 0, 1, 1], [], []>} : vector<8x128xbf16>, vector<128x640xbf16>, vector<8x640xf32> -> vector<8x640xf32>
    %c0_373 = arith.constant 0 : index
    %c0_374 = arith.constant 0 : index
    %1100 = vector.load %arg12[%c0_373, %c0_374] : memref<1x640xf32, #tpu.memory_space<vmem>>, vector<1x640xf32>
    %1101 = vector.broadcast %1100 : vector<1x640xf32> to vector<8x640xf32>
    %1102 = arith.addf %1099, %1101 : vector<8x640xf32>
    %1103 = vector.extract_strided_slice %1102 {offsets = [0, 512], sizes = [8, 128], strides = [1, 1]} : vector<8x640xf32> to vector<8x128xf32>
    %cst_375 = arith.constant dense<0xFF800000> : vector<8xf32>
    %1104 = vector.multi_reduction <maximumf>, %1103, %cst_375 [1] : vector<8x128xf32> to vector<8xf32>
    %1105 = vector.shape_cast %1104 : vector<8xf32> to vector<8x1xf32>
    %1106 = vector.broadcast %1105 : vector<8x1xf32> to vector<8x128xf32>
    %1107 = arith.cmpf oeq, %1103, %1106 : vector<8x128xf32>
    %c128_i32_376 = arith.constant 128 : i32
    %1108 = vector.broadcast %c128_i32_376 : i32 to vector<8x128xi32>
    %1109 = arith.select %1107, %866, %1108 : vector<8x128xi1>, vector<8x128xi32>
    %cst_377 = arith.constant dense<2147483647> : vector<8xi32>
    %1110 = vector.multi_reduction <minsi>, %1109, %cst_377 [1] : vector<8x128xi32> to vector<8xi32>
    %1111 = vector.shape_cast %1110 : vector<8xi32> to vector<8x1xi32>
    %1112 = vector.broadcast %1111 : vector<8x1xi32> to vector<8x128xi32>
    %1113 = arith.cmpi eq, %866, %1112 : vector<8x128xi32>
    %1114 = arith.extui %1113 : vector<8x128xi1> to vector<8x128xi32>
    %1115 = arith.sitofp %1114 : vector<8x128xi32> to vector<8x128xf32>
    %1116 = arith.truncf %1115 : vector<8x128xf32> to vector<8x128xbf16>
    %c0_378 = arith.constant 0 : index
    %c0_379 = arith.constant 0 : index
    %1117 = vector.load %arg10[%c0_378, %c0_379] : memref<128x512xbf16, #tpu.memory_space<vmem>>, vector<128x512xbf16>
    %cst_380 = arith.constant dense<0.000000e+00> : vector<8x512xf32>
    %1118 = tpu.matmul %1116, %1117, %cst_380 {dimension_numbers = #tpu.dot_dimension_numbers<[1], [0], [0], [1], [0, 0, 1, 1], [], []>} : vector<8x128xbf16>, vector<128x512xbf16>, vector<8x512xf32> -> vector<8x512xf32>
    %1119 = vector.extract_strided_slice %1102 {offsets = [0, 0], sizes = [8, 512], strides = [1, 1]} : vector<8x640xf32> to vector<8x512xf32>
    %1120 = arith.addf %1118, %1119 : vector<8x512xf32>
    %1121 = vector.extract_strided_slice %1120 {offsets = [0, 0], sizes = [8, 128], strides = [1, 1]} : vector<8x512xf32> to vector<8x128xf32>
    %1122 = arith.negf %1121 : vector<8x128xf32>
    %1123 = math.exp %1122 : vector<8x128xf32>
    %cst_381 = arith.constant 1.000000e+00 : f32
    %1124 = vector.broadcast %cst_381 : f32 to vector<8x128xf32>
    %1125 = arith.addf %1124, %1123 : vector<8x128xf32>
    %1126 = arith.divf %1124, %1125 : vector<8x128xf32>
    %1127 = vector.extract_strided_slice %1120 {offsets = [0, 128], sizes = [8, 128], strides = [1, 1]} : vector<8x512xf32> to vector<8x128xf32>
    %1128 = arith.negf %1127 : vector<8x128xf32>
    %1129 = math.exp %1128 : vector<8x128xf32>
    %cst_382 = arith.constant 1.000000e+00 : f32
    %1130 = vector.broadcast %cst_382 : f32 to vector<8x128xf32>
    %1131 = arith.addf %1130, %1129 : vector<8x128xf32>
    %1132 = arith.divf %1130, %1131 : vector<8x128xf32>
    %1133 = vector.extract_strided_slice %1120 {offsets = [0, 256], sizes = [8, 128], strides = [1, 1]} : vector<8x512xf32> to vector<8x128xf32>
    %1134 = math.tanh %1133 : vector<8x128xf32>
    %1135 = vector.extract_strided_slice %1120 {offsets = [0, 384], sizes = [8, 128], strides = [1, 1]} : vector<8x512xf32> to vector<8x128xf32>
    %1136 = arith.negf %1135 : vector<8x128xf32>
    %1137 = math.exp %1136 : vector<8x128xf32>
    %cst_383 = arith.constant 1.000000e+00 : f32
    %1138 = vector.broadcast %cst_383 : f32 to vector<8x128xf32>
    %1139 = arith.addf %1138, %1137 : vector<8x128xf32>
    %1140 = arith.divf %1138, %1139 : vector<8x128xf32>
    %1141 = arith.mulf %1132, %1094 : vector<8x128xf32>
    %1142 = arith.mulf %1126, %1134 : vector<8x128xf32>
    %1143 = arith.addf %1141, %1142 : vector<8x128xf32>
    %1144 = math.tanh %1143 : vector<8x128xf32>
    %1145 = arith.mulf %1140, %1144 : vector<8x128xf32>
    %1146 = arith.truncf %1145 : vector<8x128xf32> to vector<8x128xbf16>
    %c0_384 = arith.constant 0 : index
    %c0_385 = arith.constant 0 : index
    %1147 = vector.load %arg11[%c0_384, %c0_385] : memref<128x640xbf16, #tpu.memory_space<vmem>>, vector<128x640xbf16>
    %cst_386 = arith.constant dense<0.000000e+00> : vector<8x640xf32>
    %1148 = tpu.matmul %1146, %1147, %cst_386 {dimension_numbers = #tpu.dot_dimension_numbers<[1], [0], [0], [1], [0, 0, 1, 1], [], []>} : vector<8x128xbf16>, vector<128x640xbf16>, vector<8x640xf32> -> vector<8x640xf32>
    %c0_387 = arith.constant 0 : index
    %c0_388 = arith.constant 0 : index
    %1149 = vector.load %arg12[%c0_387, %c0_388] : memref<1x640xf32, #tpu.memory_space<vmem>>, vector<1x640xf32>
    %1150 = vector.broadcast %1149 : vector<1x640xf32> to vector<8x640xf32>
    %1151 = arith.addf %1148, %1150 : vector<8x640xf32>
    %1152 = vector.extract_strided_slice %1151 {offsets = [0, 512], sizes = [8, 128], strides = [1, 1]} : vector<8x640xf32> to vector<8x128xf32>
    %cst_389 = arith.constant dense<0xFF800000> : vector<8xf32>
    %1153 = vector.multi_reduction <maximumf>, %1152, %cst_389 [1] : vector<8x128xf32> to vector<8xf32>
    %1154 = vector.shape_cast %1153 : vector<8xf32> to vector<8x1xf32>
    %1155 = vector.broadcast %1154 : vector<8x1xf32> to vector<8x128xf32>
    %1156 = arith.cmpf oeq, %1152, %1155 : vector<8x128xf32>
    %c128_i32_390 = arith.constant 128 : i32
    %1157 = vector.broadcast %c128_i32_390 : i32 to vector<8x128xi32>
    %1158 = arith.select %1156, %866, %1157 : vector<8x128xi1>, vector<8x128xi32>
    %cst_391 = arith.constant dense<2147483647> : vector<8xi32>
    %1159 = vector.multi_reduction <minsi>, %1158, %cst_391 [1] : vector<8x128xi32> to vector<8xi32>
    %1160 = vector.shape_cast %1159 : vector<8xi32> to vector<8x1xi32>
    %1161 = vector.broadcast %1160 : vector<8x1xi32> to vector<8x128xi32>
    %1162 = arith.cmpi eq, %866, %1161 : vector<8x128xi32>
    %1163 = arith.extui %1162 : vector<8x128xi1> to vector<8x128xi32>
    %1164 = arith.sitofp %1163 : vector<8x128xi32> to vector<8x128xf32>
    %1165 = arith.truncf %1164 : vector<8x128xf32> to vector<8x128xbf16>
    %c0_392 = arith.constant 0 : index
    %c0_393 = arith.constant 0 : index
    %1166 = vector.load %arg10[%c0_392, %c0_393] : memref<128x512xbf16, #tpu.memory_space<vmem>>, vector<128x512xbf16>
    %cst_394 = arith.constant dense<0.000000e+00> : vector<8x512xf32>
    %1167 = tpu.matmul %1165, %1166, %cst_394 {dimension_numbers = #tpu.dot_dimension_numbers<[1], [0], [0], [1], [0, 0, 1, 1], [], []>} : vector<8x128xbf16>, vector<128x512xbf16>, vector<8x512xf32> -> vector<8x512xf32>
    %1168 = vector.extract_strided_slice %1151 {offsets = [0, 0], sizes = [8, 512], strides = [1, 1]} : vector<8x640xf32> to vector<8x512xf32>
    %1169 = arith.addf %1167, %1168 : vector<8x512xf32>
    %1170 = vector.extract_strided_slice %1169 {offsets = [0, 0], sizes = [8, 128], strides = [1, 1]} : vector<8x512xf32> to vector<8x128xf32>
    %1171 = arith.negf %1170 : vector<8x128xf32>
    %1172 = math.exp %1171 : vector<8x128xf32>
    %cst_395 = arith.constant 1.000000e+00 : f32
    %1173 = vector.broadcast %cst_395 : f32 to vector<8x128xf32>
    %1174 = arith.addf %1173, %1172 : vector<8x128xf32>
    %1175 = arith.divf %1173, %1174 : vector<8x128xf32>
    %1176 = vector.extract_strided_slice %1169 {offsets = [0, 128], sizes = [8, 128], strides = [1, 1]} : vector<8x512xf32> to vector<8x128xf32>
    %1177 = arith.negf %1176 : vector<8x128xf32>
    %1178 = math.exp %1177 : vector<8x128xf32>
    %cst_396 = arith.constant 1.000000e+00 : f32
    %1179 = vector.broadcast %cst_396 : f32 to vector<8x128xf32>
    %1180 = arith.addf %1179, %1178 : vector<8x128xf32>
    %1181 = arith.divf %1179, %1180 : vector<8x128xf32>
    %1182 = vector.extract_strided_slice %1169 {offsets = [0, 256], sizes = [8, 128], strides = [1, 1]} : vector<8x512xf32> to vector<8x128xf32>
    %1183 = math.tanh %1182 : vector<8x128xf32>
    %1184 = vector.extract_strided_slice %1169 {offsets = [0, 384], sizes = [8, 128], strides = [1, 1]} : vector<8x512xf32> to vector<8x128xf32>
    %1185 = arith.negf %1184 : vector<8x128xf32>
    %1186 = math.exp %1185 : vector<8x128xf32>
    %cst_397 = arith.constant 1.000000e+00 : f32
    %1187 = vector.broadcast %cst_397 : f32 to vector<8x128xf32>
    %1188 = arith.addf %1187, %1186 : vector<8x128xf32>
    %1189 = arith.divf %1187, %1188 : vector<8x128xf32>
    %1190 = arith.mulf %1181, %1143 : vector<8x128xf32>
    %1191 = arith.mulf %1175, %1183 : vector<8x128xf32>
    %1192 = arith.addf %1190, %1191 : vector<8x128xf32>
    %1193 = math.tanh %1192 : vector<8x128xf32>
    %1194 = arith.mulf %1189, %1193 : vector<8x128xf32>
    %1195 = arith.truncf %1194 : vector<8x128xf32> to vector<8x128xbf16>
    %c0_398 = arith.constant 0 : index
    %c0_399 = arith.constant 0 : index
    %1196 = vector.load %arg11[%c0_398, %c0_399] : memref<128x640xbf16, #tpu.memory_space<vmem>>, vector<128x640xbf16>
    %cst_400 = arith.constant dense<0.000000e+00> : vector<8x640xf32>
    %1197 = tpu.matmul %1195, %1196, %cst_400 {dimension_numbers = #tpu.dot_dimension_numbers<[1], [0], [0], [1], [0, 0, 1, 1], [], []>} : vector<8x128xbf16>, vector<128x640xbf16>, vector<8x640xf32> -> vector<8x640xf32>
    %c0_401 = arith.constant 0 : index
    %c0_402 = arith.constant 0 : index
    %1198 = vector.load %arg12[%c0_401, %c0_402] : memref<1x640xf32, #tpu.memory_space<vmem>>, vector<1x640xf32>
    %1199 = vector.broadcast %1198 : vector<1x640xf32> to vector<8x640xf32>
    %1200 = arith.addf %1197, %1199 : vector<8x640xf32>
    %1201 = vector.extract_strided_slice %1200 {offsets = [0, 512], sizes = [8, 128], strides = [1, 1]} : vector<8x640xf32> to vector<8x128xf32>
    %cst_403 = arith.constant dense<0xFF800000> : vector<8xf32>
    %1202 = vector.multi_reduction <maximumf>, %1201, %cst_403 [1] : vector<8x128xf32> to vector<8xf32>
    %1203 = vector.shape_cast %1202 : vector<8xf32> to vector<8x1xf32>
    %1204 = vector.broadcast %1203 : vector<8x1xf32> to vector<8x128xf32>
    %1205 = arith.cmpf oeq, %1201, %1204 : vector<8x128xf32>
    %c128_i32_404 = arith.constant 128 : i32
    %1206 = vector.broadcast %c128_i32_404 : i32 to vector<8x128xi32>
    %1207 = arith.select %1205, %866, %1206 : vector<8x128xi1>, vector<8x128xi32>
    %cst_405 = arith.constant dense<2147483647> : vector<8xi32>
    %1208 = vector.multi_reduction <minsi>, %1207, %cst_405 [1] : vector<8x128xi32> to vector<8xi32>
    %1209 = vector.shape_cast %1208 : vector<8xi32> to vector<8x1xi32>
    %1210 = vector.broadcast %1209 : vector<8x1xi32> to vector<8x128xi32>
    %1211 = arith.cmpi eq, %866, %1210 : vector<8x128xi32>
    %1212 = arith.extui %1211 : vector<8x128xi1> to vector<8x128xi32>
    %1213 = arith.sitofp %1212 : vector<8x128xi32> to vector<8x128xf32>
    %1214 = arith.truncf %1213 : vector<8x128xf32> to vector<8x128xbf16>
    %c0_406 = arith.constant 0 : index
    %c0_407 = arith.constant 0 : index
    %1215 = vector.load %arg10[%c0_406, %c0_407] : memref<128x512xbf16, #tpu.memory_space<vmem>>, vector<128x512xbf16>
    %cst_408 = arith.constant dense<0.000000e+00> : vector<8x512xf32>
    %1216 = tpu.matmul %1214, %1215, %cst_408 {dimension_numbers = #tpu.dot_dimension_numbers<[1], [0], [0], [1], [0, 0, 1, 1], [], []>} : vector<8x128xbf16>, vector<128x512xbf16>, vector<8x512xf32> -> vector<8x512xf32>
    %1217 = vector.extract_strided_slice %1200 {offsets = [0, 0], sizes = [8, 512], strides = [1, 1]} : vector<8x640xf32> to vector<8x512xf32>
    %1218 = arith.addf %1216, %1217 : vector<8x512xf32>
    %1219 = vector.extract_strided_slice %1218 {offsets = [0, 0], sizes = [8, 128], strides = [1, 1]} : vector<8x512xf32> to vector<8x128xf32>
    %1220 = arith.negf %1219 : vector<8x128xf32>
    %1221 = math.exp %1220 : vector<8x128xf32>
    %cst_409 = arith.constant 1.000000e+00 : f32
    %1222 = vector.broadcast %cst_409 : f32 to vector<8x128xf32>
    %1223 = arith.addf %1222, %1221 : vector<8x128xf32>
    %1224 = arith.divf %1222, %1223 : vector<8x128xf32>
    %1225 = vector.extract_strided_slice %1218 {offsets = [0, 128], sizes = [8, 128], strides = [1, 1]} : vector<8x512xf32> to vector<8x128xf32>
    %1226 = arith.negf %1225 : vector<8x128xf32>
    %1227 = math.exp %1226 : vector<8x128xf32>
    %cst_410 = arith.constant 1.000000e+00 : f32
    %1228 = vector.broadcast %cst_410 : f32 to vector<8x128xf32>
    %1229 = arith.addf %1228, %1227 : vector<8x128xf32>
    %1230 = arith.divf %1228, %1229 : vector<8x128xf32>
    %1231 = vector.extract_strided_slice %1218 {offsets = [0, 256], sizes = [8, 128], strides = [1, 1]} : vector<8x512xf32> to vector<8x128xf32>
    %1232 = math.tanh %1231 : vector<8x128xf32>
    %1233 = vector.extract_strided_slice %1218 {offsets = [0, 384], sizes = [8, 128], strides = [1, 1]} : vector<8x512xf32> to vector<8x128xf32>
    %1234 = arith.negf %1233 : vector<8x128xf32>
    %1235 = math.exp %1234 : vector<8x128xf32>
    %cst_411 = arith.constant 1.000000e+00 : f32
    %1236 = vector.broadcast %cst_411 : f32 to vector<8x128xf32>
    %1237 = arith.addf %1236, %1235 : vector<8x128xf32>
    %1238 = arith.divf %1236, %1237 : vector<8x128xf32>
    %1239 = arith.mulf %1230, %1192 : vector<8x128xf32>
    %1240 = arith.mulf %1224, %1232 : vector<8x128xf32>
    %1241 = arith.addf %1239, %1240 : vector<8x128xf32>
    %1242 = math.tanh %1241 : vector<8x128xf32>
    %1243 = arith.mulf %1238, %1242 : vector<8x128xf32>
    %1244 = arith.truncf %1243 : vector<8x128xf32> to vector<8x128xbf16>
    %c0_412 = arith.constant 0 : index
    %c0_413 = arith.constant 0 : index
    %1245 = vector.load %arg11[%c0_412, %c0_413] : memref<128x640xbf16, #tpu.memory_space<vmem>>, vector<128x640xbf16>
    %cst_414 = arith.constant dense<0.000000e+00> : vector<8x640xf32>
    %1246 = tpu.matmul %1244, %1245, %cst_414 {dimension_numbers = #tpu.dot_dimension_numbers<[1], [0], [0], [1], [0, 0, 1, 1], [], []>} : vector<8x128xbf16>, vector<128x640xbf16>, vector<8x640xf32> -> vector<8x640xf32>
    %c0_415 = arith.constant 0 : index
    %c0_416 = arith.constant 0 : index
    %1247 = vector.load %arg12[%c0_415, %c0_416] : memref<1x640xf32, #tpu.memory_space<vmem>>, vector<1x640xf32>
    %1248 = vector.broadcast %1247 : vector<1x640xf32> to vector<8x640xf32>
    %1249 = arith.addf %1246, %1248 : vector<8x640xf32>
    %1250 = vector.extract_strided_slice %1249 {offsets = [0, 512], sizes = [8, 128], strides = [1, 1]} : vector<8x640xf32> to vector<8x128xf32>
    %1251 = tpu.concatenate %907, %956, %1005, %1054, %1103, %1152, %1201, %1250 in 1 : vector<8x128xf32>, vector<8x128xf32>, vector<8x128xf32>, vector<8x128xf32>, vector<8x128xf32>, vector<8x128xf32>, vector<8x128xf32>, vector<8x128xf32> -> vector<8x1024xf32>
    %c0_417 = arith.constant 0 : index
    %c0_418 = arith.constant 0 : index
    %1252 = vector.load %arg13[%c0_417, %c0_418] : memref<8x1024xf32, #tpu.memory_space<vmem>>, vector<8x1024xf32>
    tpu.vector_store %arg13[%c0_417, %c0_418], %1251 {strides = array<i32>} : memref<8x1024xf32, #tpu.memory_space<vmem>>, vector<8x1024xf32>,
    return
  }
}

</mosaic_0001>

<llo_original>
// kernel: recurrent_autoencoder_forward.1
$region0: #{recurrent_autoencoder_forward.1}
  #allocation0 [shape = 'u32[]', space=smem, size = 0x4, offset = 0x4, fixed_abs, tag = 'smem constant byte address 0x4 - core index']
  #allocation1 [shape = 'u32[144,128]{1,0:T(1,128)}', space=vmem, size = 0x12000, scoped, tag = 'internal scratch']
  %s0 = inlined_call_operand.vmem [shape: bf16[8,8,128], index: 0, kind: input, shape index: {}]
  %s1 = inlined_call_operand.vmem [shape: bf16[128,512], index: 1, kind: input, shape index: {}]
  %s2 = inlined_call_operand.vmem [shape: bf16[128,512], index: 2, kind: input, shape index: {}]
  %s3 = inlined_call_operand.vmem [shape: f32[1,512], index: 3, kind: input, shape index: {}]
  %s4 = inlined_call_operand.vmem [shape: bf16[128,512], index: 4, kind: input, shape index: {}]
  %s5 = inlined_call_operand.vmem [shape: bf16[128,512], index: 5, kind: input, shape index: {}]
  %s6 = inlined_call_operand.vmem [shape: f32[1,512], index: 6, kind: input, shape index: {}]
  %s7 = inlined_call_operand.vmem [shape: bf16[256,512], index: 7, kind: input, shape index: {}]
  %s8 = inlined_call_operand.vmem [shape: bf16[128,512], index: 8, kind: input, shape index: {}]
  %s9 = inlined_call_operand.vmem [shape: f32[1,512], index: 9, kind: input, shape index: {}]
  %s10 = inlined_call_operand.vmem [shape: bf16[128,512], index: 10, kind: input, shape index: {}]
  %s11 = inlined_call_operand.vmem [shape: bf16[128,640], index: 11, kind: input, shape index: {}]
  %s12 = inlined_call_operand.vmem [shape: f32[1,640], index: 12, kind: input, shape index: {}]
  %s13 = inlined_call_operand.vmem [shape: f32[8,1024], index: 13, kind: output, shape index: {0}]
  %s14 = inlined_call_operand.vmem [shape: f32[8,128], index: 14, kind: output, shape index: {1}]
  %15 = xla_tuple %s13, %s14
  %s16 = sld [smem:[#allocation0]]
  $region70: #{recurrent_autoencoder_forward.1} parent=0
    _
  %s18 = ssub.s32 1, %s16
  %s19 = scalar_select 0, %s18, %s16
  // Predicated region
  $region2: #{recurrent_autoencoder_forward.1} parent=0 // pred_check
    _
  $region3: #{recurrent_autoencoder_forward.1} parent=0 // pred_check_branch
    %21 = sbr.rel (0) target = $region5
  $region4: #{recurrent_autoencoder_forward.1} parent=0 // pred_region
    _
  $region5: #{recurrent_autoencoder_forward.1} parent=0 // pred_fallthru
    _
  // Predicated region
  $region6: #{recurrent_autoencoder_forward.1} parent=0 // pred_check
    _
  $region7: #{recurrent_autoencoder_forward.1} parent=0 // pred_check_branch
    %23 = sbr.rel (0) target = $region9
  $region8: #{recurrent_autoencoder_forward.1} parent=0 // pred_region
    _
  $region9: #{recurrent_autoencoder_forward.1} parent=0 // pred_fallthru
    _
  // Predicated region
  $region10: #{recurrent_autoencoder_forward.1} parent=0 // pred_check
    _
  $region11: #{recurrent_autoencoder_forward.1} parent=0 // pred_check_branch
    %25 = sbr.rel (0) target = $region13
  $region12: #{recurrent_autoencoder_forward.1} parent=0 // pred_region
    _
  $region13: #{recurrent_autoencoder_forward.1} parent=0 // pred_fallthru
    _
  // Predicated region
  $region14: #{recurrent_autoencoder_forward.1} parent=0 // pred_check
    _
  $region15: #{recurrent_autoencoder_forward.1} parent=0 // pred_check_branch
    %27 = sbr.rel (0) target = $region17
  $region16: #{recurrent_autoencoder_forward.1} parent=0 // pred_region
    _
  $region17: #{recurrent_autoencoder_forward.1} parent=0 // pred_fallthru
    _
  // Predicated region
  $region18: #{recurrent_autoencoder_forward.1} parent=0 // pred_check
    _
  $region19: #{recurrent_autoencoder_forward.1} parent=0 // pred_check_branch
    %29 = sbr.rel (0) target = $region21
  $region20: #{recurrent_autoencoder_forward.1} parent=0 // pred_region
    _
  $region21: #{recurrent_autoencoder_forward.1} parent=0 // pred_fallthru
    _
  // Predicated region
  $region22: #{recurrent_autoencoder_forward.1} parent=0 // pred_check
    _
  $region23: #{recurrent_autoencoder_forward.1} parent=0 // pred_check_branch
    %31 = sbr.rel (0) target = $region25
  $region24: #{recurrent_autoencoder_forward.1} parent=0 // pred_region
    _
  $region25: #{recurrent_autoencoder_forward.1} parent=0 // pred_fallthru
    _
  // Predicated region
  $region26: #{recurrent_autoencoder_forward.1} parent=0 // pred_check
    _
  $region27: #{recurrent_autoencoder_forward.1} parent=0 // pred_check_branch
    %33 = sbr.rel (0) target = $region29
  $region28: #{recurrent_autoencoder_forward.1} parent=0 // pred_region
    _
  $region29: #{recurrent_autoencoder_forward.1} parent=0 // pred_fallthru
    _
  // Predicated region
  $region30: #{recurrent_autoencoder_forward.1} parent=0 // pred_check
    _
  $region31: #{recurrent_autoencoder_forward.1} parent=0 // pred_check_branch
    %35 = sbr.rel (0) target = $region33
  $region32: #{recurrent_autoencoder_forward.1} parent=0 // pred_region
    _
  $region33: #{recurrent_autoencoder_forward.1} parent=0 // pred_fallthru
    _
  // Predicated region
  $region34: #{recurrent_autoencoder_forward.1} parent=0 // pred_check
    _
  $region35: #{recurrent_autoencoder_forward.1} parent=0 // pred_check_branch
    %37 = sbr.rel (0) target = $region37
  $region36: #{recurrent_autoencoder_forward.1} parent=0 // pred_region
    _
  $region37: #{recurrent_autoencoder_forward.1} parent=0 // pred_fallthru
    _
  // Predicated region
  $region38: #{recurrent_autoencoder_forward.1} parent=0 // pred_check
    _
  $region39: #{recurrent_autoencoder_forward.1} parent=0 // pred_check_branch
    %39 = sbr.rel (0) target = $region41
  $region40: #{recurrent_autoencoder_forward.1} parent=0 // pred_region
    _
  $region41: #{recurrent_autoencoder_forward.1} parent=0 // pred_fallthru
    _
  // Predicated region
  $region42: #{recurrent_autoencoder_forward.1} parent=0 // pred_check
    _
  $region43: #{recurrent_autoencoder_forward.1} parent=0 // pred_check_branch
    %41 = sbr.rel (0) target = $region45
  $region44: #{recurrent_autoencoder_forward.1} parent=0 // pred_region
    _
  $region45: #{recurrent_autoencoder_forward.1} parent=0 // pred_fallthru
    _
  // Predicated region
  $region46: #{recurrent_autoencoder_forward.1} parent=0 // pred_check
    _
  $region47: #{recurrent_autoencoder_forward.1} parent=0 // pred_check_branch
    %43 = sbr.rel (0) target = $region49
  $region48: #{recurrent_autoencoder_forward.1} parent=0 // pred_region
    _
  $region49: #{recurrent_autoencoder_forward.1} parent=0 // pred_fallthru
    _
  // Predicated region
  $region50: #{recurrent_autoencoder_forward.1} parent=0 // pred_check
    _
  $region51: #{recurrent_autoencoder_forward.1} parent=0 // pred_check_branch
    %45 = sbr.rel (0) target = $region53
  $region52: #{recurrent_autoencoder_forward.1} parent=0 // pred_region
    _
  $region53: #{recurrent_autoencoder_forward.1} parent=0 // pred_fallthru
    _
  %v47 = vld [vmem:[%s0] sm:$0xf]
  %v48 = vld [vmem:[%s1] sm:$0xff]
  %v49 = vld [vmem:[%s1 + $0x8] sm:$0xff]
  %v50 = vld [vmem:[%s1 + $0x10] sm:$0xff]
  %v51 = vld [vmem:[%s1 + $0x18] sm:$0xff]
  %v52 = vld [vmem:[%s1 + $0x20] sm:$0xff]
  %v53 = vld [vmem:[%s1 + $0x28] sm:$0xff]
  %v54 = vld [vmem:[%s1 + $0x30] sm:$0xff]
  %v55 = vld [vmem:[%s1 + $0x38] sm:$0xff]
  %v56 = vld [vmem:[%s1 + $0x40] sm:$0xff]
  %v57 = vld [vmem:[%s1 + $0x48] sm:$0xff]
  %v58 = vld [vmem:[%s1 + $0x50] sm:$0xff]
  %v59 = vld [vmem:[%s1 + $0x58] sm:$0xff]
  %v60 = vld [vmem:[%s1 + $0x60] sm:$0xff]
  %v61 = vld [vmem:[%s1 + $0x68] sm:$0xff]
  %v62 = vld [vmem:[%s1 + $0x70] sm:$0xff]
  %v63 = vld [vmem:[%s1 + $0x78] sm:$0xff]
  %v64 = vld [vmem:[%s1 + $0x80] sm:$0xff]
  %v65 = vld [vmem:[%s1 + $0x88] sm:$0xff]
  %v66 = vld [vmem:[%s1 + $0x90] sm:$0xff]
  %v67 = vld [vmem:[%s1 + $0x98] sm:$0xff]
  %v68 = vld [vmem:[%s1 + $0xa0] sm:$0xff]
  %v69 = vld [vmem:[%s1 + $0xa8] sm:$0xff]
  %v70 = vld [vmem:[%s1 + $0xb0] sm:$0xff]
  %v71 = vld [vmem:[%s1 + $0xb8] sm:$0xff]
  %v72 = vld [vmem:[%s1 + $0xc0] sm:$0xff]
  %v73 = vld [vmem:[%s1 + $0xc8] sm:$0xff]
  %v74 = vld [vmem:[%s1 + $0xd0] sm:$0xff]
  %v75 = vld [vmem:[%s1 + $0xd8] sm:$0xff]
  %v76 = vld [vmem:[%s1 + $0xe0] sm:$0xff]
  %v77 = vld [vmem:[%s1 + $0xe8] sm:$0xff]
  %v78 = vld [vmem:[%s1 + $0xf0] sm:$0xff]
  %v79 = vld [vmem:[%s1 + $0xf8] sm:$0xff]
  %v80 = vld [vmem:[%s2] sm:$0xff]
  %v81 = vld [vmem:[%s2 + $0x8] sm:$0xff]
  %v82 = vld [vmem:[%s2 + $0x10] sm:$0xff]
  %v83 = vld [vmem:[%s2 + $0x18] sm:$0xff]
  %v84 = vld [vmem:[%s2 + $0x20] sm:$0xff]
  %v85 = vld [vmem:[%s2 + $0x28] sm:$0xff]
  %v86 = vld [vmem:[%s2 + $0x30] sm:$0xff]
  %v87 = vld [vmem:[%s2 + $0x38] sm:$0xff]
  %v88 = vld [vmem:[%s2 + $0x40] sm:$0xff]
  %v89 = vld [vmem:[%s2 + $0x48] sm:$0xff]
  %v90 = vld [vmem:[%s2 + $0x50] sm:$0xff]
  %v91 = vld [vmem:[%s2 + $0x58] sm:$0xff]
  %v92 = vld [vmem:[%s2 + $0x60] sm:$0xff]
  %v93 = vld [vmem:[%s2 + $0x68] sm:$0xff]
  %v94 = vld [vmem:[%s2 + $0x70] sm:$0xff]
  %v95 = vld [vmem:[%s2 + $0x78] sm:$0xff]
  %v96 = vld [vmem:[%s2 + $0x80] sm:$0xff]
  %v97 = vld [vmem:[%s2 + $0x88] sm:$0xff]
  %v98 = vld [vmem:[%s2 + $0x90] sm:$0xff]
  %v99 = vld [vmem:[%s2 + $0x98] sm:$0xff]
  %v100 = vld [vmem:[%s2 + $0xa0] sm:$0xff]
  %v101 = vld [vmem:[%s2 + $0xa8] sm:$0xff]
  %v102 = vld [vmem:[%s2 + $0xb0] sm:$0xff]
  %v103 = vld [vmem:[%s2 + $0xb8] sm:$0xff]
  %v104 = vld [vmem:[%s2 + $0xc0] sm:$0xff]
  %v105 = vld [vmem:[%s2 + $0xc8] sm:$0xff]
  %v106 = vld [vmem:[%s2 + $0xd0] sm:$0xff]
  %v107 = vld [vmem:[%s2 + $0xd8] sm:$0xff]
  %v108 = vld [vmem:[%s2 + $0xe0] sm:$0xff]
  %v109 = vld [vmem:[%s2 + $0xe8] sm:$0xff]
  %v110 = vld [vmem:[%s2 + $0xf0] sm:$0xff]
  %v111 = vld [vmem:[%s2 + $0xf8] sm:$0xff]
  %v144 = vunpack.c.l.b16 %v80
  %v145 = vunpack.c.h.b16 %v80
  %v146 = vunpack.c.l.b16 %v81
  %v147 = vunpack.c.h.b16 %v81
  %v148 = vunpack.c.l.b16 %v82
  %v149 = vunpack.c.h.b16 %v82
  %v150 = vunpack.c.l.b16 %v83
  %v151 = vunpack.c.h.b16 %v83
  %v152 = vunpack.c.l.b16 %v84
  %v153 = vunpack.c.h.b16 %v84
  %v154 = vunpack.c.l.b16 %v85
  %v155 = vunpack.c.h.b16 %v85
  %v156 = vunpack.c.l.b16 %v86
  %v157 = vunpack.c.h.b16 %v86
  %v158 = vunpack.c.l.b16 %v87
  %v159 = vunpack.c.h.b16 %v87
  %v160 = vunpack.c.l.b16 %v88
  %v161 = vunpack.c.h.b16 %v88
  %v162 = vunpack.c.l.b16 %v89
  %v163 = vunpack.c.h.b16 %v89
  %v164 = vunpack.c.l.b16 %v90
  %v165 = vunpack.c.h.b16 %v90
  %v166 = vunpack.c.l.b16 %v91
  %v167 = vunpack.c.h.b16 %v91
  %v168 = vunpack.c.l.b16 %v92
  %v169 = vunpack.c.h.b16 %v92
  %v170 = vunpack.c.l.b16 %v93
  %v171 = vunpack.c.h.b16 %v93
  %v172 = vunpack.c.l.b16 %v94
  %v173 = vunpack.c.h.b16 %v94
  %v174 = vunpack.c.l.b16 %v95
  %v175 = vunpack.c.h.b16 %v95
  %v176 = vunpack.c.l.b16 %v96
  %v177 = vunpack.c.h.b16 %v96
  %v178 = vunpack.c.l.b16 %v97
  %v179 = vunpack.c.h.b16 %v97
  %v180 = vunpack.c.l.b16 %v98
  %v181 = vunpack.c.h.b16 %v98
  %v182 = vunpack.c.l.b16 %v99
  %v183 = vunpack.c.h.b16 %v99
  %v184 = vunpack.c.l.b16 %v100
  %v185 = vunpack.c.h.b16 %v100
  %v186 = vunpack.c.l.b16 %v101
  %v187 = vunpack.c.h.b16 %v101
  %v188 = vunpack.c.l.b16 %v102
  %v189 = vunpack.c.h.b16 %v102
  %v190 = vunpack.c.l.b16 %v103
  %v191 = vunpack.c.h.b16 %v103
  %v192 = vunpack.c.l.b16 %v104
  %v193 = vunpack.c.h.b16 %v104
  %v194 = vunpack.c.l.b16 %v105
  %v195 = vunpack.c.h.b16 %v105
  %v196 = vunpack.c.l.b16 %v106
  %v197 = vunpack.c.h.b16 %v106
  %v198 = vunpack.c.l.b16 %v107
  %v199 = vunpack.c.h.b16 %v107
  %v200 = vunpack.c.l.b16 %v108
  %v201 = vunpack.c.h.b16 %v108
  %v202 = vunpack.c.l.b16 %v109
  %v203 = vunpack.c.h.b16 %v109
  %v204 = vunpack.c.l.b16 %v110
  %v205 = vunpack.c.h.b16 %v110
  %v206 = vunpack.c.l.b16 %v111
  %v207 = vunpack.c.h.b16 %v111
  %v208 = vpack.c.b16 %v148, %v144
  %v209 = vpack.c.b16 %v149, %v145
  %v210 = vpack.c.b16 %v150, %v146
  %v211 = vpack.c.b16 %v151, %v147
  %v212 = vpack.c.b16 %v156, %v152
  %v213 = vpack.c.b16 %v157, %v153
  %v214 = vpack.c.b16 %v158, %v154
  %v215 = vpack.c.b16 %v159, %v155
  %v216 = vpack.c.b16 %v164, %v160
  %v217 = vpack.c.b16 %v165, %v161
  %v218 = vpack.c.b16 %v166, %v162
  %v219 = vpack.c.b16 %v167, %v163
  %v220 = vpack.c.b16 %v172, %v168
  %v221 = vpack.c.b16 %v173, %v169
  %v222 = vpack.c.b16 %v174, %v170
  %v223 = vpack.c.b16 %v175, %v171
  %v224 = vpack.c.b16 %v180, %v176
  %v225 = vpack.c.b16 %v181, %v177
  %v226 = vpack.c.b16 %v182, %v178
  %v227 = vpack.c.b16 %v183, %v179
  %v228 = vpack.c.b16 %v188, %v184
  %v229 = vpack.c.b16 %v189, %v185
  %v230 = vpack.c.b16 %v190, %v186
  %v231 = vpack.c.b16 %v191, %v187
  %v232 = vpack.c.b16 %v196, %v192
  %v233 = vpack.c.b16 %v197, %v193
  %v234 = vpack.c.b16 %v198, %v194
  %v235 = vpack.c.b16 %v199, %v195
  %v236 = vpack.c.b16 %v204, %v200
  %v237 = vpack.c.b16 %v205, %v201
  %v238 = vpack.c.b16 %v206, %v202
  %v239 = vpack.c.b16 %v207, %v203
  %272 = vmatprep.subr.bf16.mxu0 %v209
  %273 = vmatpush1.bf16.msra.mxu0 %v208
  %274 = vmatprep.subr.bf16.mxu0 %v213
  %275 = vmatpush1.bf16.msra.mxu0 %v212
  %276 = vmatprep.subr.bf16.mxu0 %v217
  %277 = vmatpush1.bf16.msra.mxu0 %v216
  %278 = vmatprep.subr.bf16.mxu0 %v221
  %279 = vmatpush1.bf16.msra.mxu0 %v220
  %280 = vmatprep.subr.bf16.mxu0 %v225
  %281 = vmatpush1.bf16.msra.mxu0 %v224
  %282 = vmatprep.subr.bf16.mxu0 %v229
  %283 = vmatpush1.bf16.msra.mxu0 %v228
  %284 = vmatprep.subr.bf16.mxu0 %v233
  %285 = vmatpush1.bf16.msra.mxu0 %v232
  %286 = vmatprep.subr.bf16.mxu0 %v237
  %287 = vmatpush1.bf16.msra.mxu0 %v236
  %288 = vmatprep.subr.bf16.mxu0 0
  %289 = vmatpush1.bf16.msra.mxu0 0
  %290 = vmatprep.subr.bf16.mxu0 0
  %291 = vmatpush1.bf16.msra.mxu0 0
  %292 = vmatprep.subr.bf16.mxu0 0
  %293 = vmatpush1.bf16.msra.mxu0 0
  %294 = vmatprep.subr.bf16.mxu0 0
  %295 = vmatpush1.bf16.msra.mxu0 0
  %296 = vmatprep.subr.bf16.mxu0 0
  %297 = vmatpush1.bf16.msra.mxu0 0
  %298 = vmatprep.subr.bf16.mxu0 0
  %299 = vmatpush1.bf16.msra.mxu0 0
  %300 = vmatprep.subr.bf16.mxu0 0
  %301 = vmatpush1.bf16.msra.mxu0 0
  %302 = vmatprep.subr.bf16.mxu0 0
  %303 = vmatpush1.bf16.msra.mxu0 0
  %304 = vmatprep.mubr.bf16.mxu0 0
  %305 = vmatmul.mubr.bf16.gmra.mrb[0].mxu0 0
  %v306 = vpop.f32.mrb[0].mxu0
  %v307 = vadd.f32 0.0, %v306
  %v308 = vpop.f32.mrb[0].mxu0
  %v309 = vadd.f32 0.0, %v308
  %v310 = vpop.f32.mrb[0].mxu0
  %v311 = vpop.f32.mrb[0].mxu0
  %312 = vdwg.mxu0
  %313 = vmatprep.subr.bf16.mxu0 %v211
  %314 = vmatpush1.bf16.msra.mxu0 %v210
  %315 = vmatprep.subr.bf16.mxu0 %v215
  %316 = vmatpush1.bf16.msra.mxu0 %v214
  %317 = vmatprep.subr.bf16.mxu0 %v219
  %318 = vmatpush1.bf16.msra.mxu0 %v218
  %319 = vmatprep.subr.bf16.mxu0 %v223
  %320 = vmatpush1.bf16.msra.mxu0 %v222
  %321 = vmatprep.subr.bf16.mxu0 %v227
  %322 = vmatpush1.bf16.msra.mxu0 %v226
  %323 = vmatprep.subr.bf16.mxu0 %v231
  %324 = vmatpush1.bf16.msra.mxu0 %v230
  %325 = vmatprep.subr.bf16.mxu0 %v235
  %326 = vmatpush1.bf16.msra.mxu0 %v234
  %327 = vmatprep.subr.bf16.mxu0 %v239
  %328 = vmatpush1.bf16.msra.mxu0 %v238
  %329 = vmatprep.subr.bf16.mxu0 0
  %330 = vmatpush1.bf16.msra.mxu0 0
  %331 = vmatprep.subr.bf16.mxu0 0
  %332 = vmatpush1.bf16.msra.mxu0 0
  %333 = vmatprep.subr.bf16.mxu0 0
  %334 = vmatpush1.bf16.msra.mxu0 0
  %335 = vmatprep.subr.bf16.mxu0 0
  %336 = vmatpush1.bf16.msra.mxu0 0
  %337 = vmatprep.subr.bf16.mxu0 0
  %338 = vmatpush1.bf16.msra.mxu0 0
  %339 = vmatprep.subr.bf16.mxu0 0
  %340 = vmatpush1.bf16.msra.mxu0 0
  %341 = vmatprep.subr.bf16.mxu0 0
  %342 = vmatpush1.bf16.msra.mxu0 0
  %343 = vmatprep.subr.bf16.mxu0 0
  %344 = vmatpush1.bf16.msra.mxu0 0
  %345 = vmatprep.mubr.bf16.mxu0 0
  %346 = vmatmul.mubr.bf16.gmra.mrb[0].mxu0 0
  %v347 = vpop.f32.mrb[0].mxu0
  %v348 = vadd.f32 0.0, %v347
  %v349 = vpop.f32.mrb[0].mxu0
  %v350 = vadd.f32 0.0, %v349
  %v351 = vpop.f32.mrb[0].mxu0
  %v352 = vpop.f32.mrb[0].mxu0
  %353 = vdwg.mxu0
  %v386 = vunpack.c.l.b16 %v48
  %v387 = vunpack.c.h.b16 %v48
  %v388 = vunpack.c.l.b16 %v49
  %v389 = vunpack.c.h.b16 %v49
  %v390 = vunpack.c.l.b16 %v50
  %v391 = vunpack.c.h.b16 %v50
  %v392 = vunpack.c.l.b16 %v51
  %v393 = vunpack.c.h.b16 %v51
  %v394 = vunpack.c.l.b16 %v52
  %v395 = vunpack.c.h.b16 %v52
  %v396 = vunpack.c.l.b16 %v53
  %v397 = vunpack.c.h.b16 %v53
  %v398 = vunpack.c.l.b16 %v54
  %v399 = vunpack.c.h.b16 %v54
  %v400 = vunpack.c.l.b16 %v55
  %v401 = vunpack.c.h.b16 %v55
  %v402 = vunpack.c.l.b16 %v56
  %v403 = vunpack.c.h.b16 %v56
  %v404 = vunpack.c.l.b16 %v57
  %v405 = vunpack.c.h.b16 %v57
  %v406 = vunpack.c.l.b16 %v58
  %v407 = vunpack.c.h.b16 %v58
  %v408 = vunpack.c.l.b16 %v59
  %v409 = vunpack.c.h.b16 %v59
  %v410 = vunpack.c.l.b16 %v60
  %v411 = vunpack.c.h.b16 %v60
  %v412 = vunpack.c.l.b16 %v61
  %v413 = vunpack.c.h.b16 %v61
  %v414 = vunpack.c.l.b16 %v62
  %v415 = vunpack.c.h.b16 %v62
  %v416 = vunpack.c.l.b16 %v63
  %v417 = vunpack.c.h.b16 %v63
  %v418 = vunpack.c.l.b16 %v64
  %v419 = vunpack.c.h.b16 %v64
  %v420 = vunpack.c.l.b16 %v65
  %v421 = vunpack.c.h.b16 %v65
  %v422 = vunpack.c.l.b16 %v66
  %v423 = vunpack.c.h.b16 %v66
  %v424 = vunpack.c.l.b16 %v67
  %v425 = vunpack.c.h.b16 %v67
  %v426 = vunpack.c.l.b16 %v68
  %v427 = vunpack.c.h.b16 %v68
  %v428 = vunpack.c.l.b16 %v69
  %v429 = vunpack.c.h.b16 %v69
  %v430 = vunpack.c.l.b16 %v70
  %v431 = vunpack.c.h.b16 %v70
  %v432 = vunpack.c.l.b16 %v71
  %v433 = vunpack.c.h.b16 %v71
  %v434 = vunpack.c.l.b16 %v72
  %v435 = vunpack.c.h.b16 %v72
  %v436 = vunpack.c.l.b16 %v73
  %v437 = vunpack.c.h.b16 %v73
  %v438 = vunpack.c.l.b16 %v74
  %v439 = vunpack.c.h.b16 %v74
  %v440 = vunpack.c.l.b16 %v75
  %v441 = vunpack.c.h.b16 %v75
  %v442 = vunpack.c.l.b16 %v76
  %v443 = vunpack.c.h.b16 %v76
  %v444 = vunpack.c.l.b16 %v77
  %v445 = vunpack.c.h.b16 %v77
  %v446 = vunpack.c.l.b16 %v78
  %v447 = vunpack.c.h.b16 %v78
  %v448 = vunpack.c.l.b16 %v79
  %v449 = vunpack.c.h.b16 %v79
  %v450 = vpack.c.b16 %v390, %v386
  %v451 = vpack.c.b16 %v391, %v387
  %v452 = vpack.c.b16 %v392, %v388
  %v453 = vpack.c.b16 %v393, %v389
  %v454 = vpack.c.b16 %v398, %v394
  %v455 = vpack.c.b16 %v399, %v395
  %v456 = vpack.c.b16 %v400, %v396
  %v457 = vpack.c.b16 %v401, %v397
  %v458 = vpack.c.b16 %v406, %v402
  %v459 = vpack.c.b16 %v407, %v403
  %v460 = vpack.c.b16 %v408, %v404
  %v461 = vpack.c.b16 %v409, %v405
  %v462 = vpack.c.b16 %v414, %v410
  %v463 = vpack.c.b16 %v415, %v411
  %v464 = vpack.c.b16 %v416, %v412
  %v465 = vpack.c.b16 %v417, %v413
  %v466 = vpack.c.b16 %v422, %v418
  %v467 = vpack.c.b16 %v423, %v419
  %v468 = vpack.c.b16 %v424, %v420
  %v469 = vpack.c.b16 %v425, %v421
  %v470 = vpack.c.b16 %v430, %v426
  %v471 = vpack.c.b16 %v431, %v427
  %v472 = vpack.c.b16 %v432, %v428
  %v473 = vpack.c.b16 %v433, %v429
  %v474 = vpack.c.b16 %v438, %v434
  %v475 = vpack.c.b16 %v439, %v435
  %v476 = vpack.c.b16 %v440, %v436
  %v477 = vpack.c.b16 %v441, %v437
  %v478 = vpack.c.b16 %v446, %v442
  %v479 = vpack.c.b16 %v447, %v443
  %v480 = vpack.c.b16 %v448, %v444
  %v481 = vpack.c.b16 %v449, %v445
  %514 = vmatprep.subr.bf16.mxu0 %v451
  %515 = vmatpush1.bf16.msra.mxu0 %v450
  %516 = vmatprep.subr.bf16.mxu0 %v455
  %517 = vmatpush1.bf16.msra.mxu0 %v454
  %518 = vmatprep.subr.bf16.mxu0 %v459
  %519 = vmatpush1.bf16.msra.mxu0 %v458
  %520 = vmatprep.subr.bf16.mxu0 %v463
  %521 = vmatpush1.bf16.msra.mxu0 %v462
  %522 = vmatprep.subr.bf16.mxu0 %v467
  %523 = vmatpush1.bf16.msra.mxu0 %v466
  %524 = vmatprep.subr.bf16.mxu0 %v471
  %525 = vmatpush1.bf16.msra.mxu0 %v470
  %526 = vmatprep.subr.bf16.mxu0 %v475
  %527 = vmatpush1.bf16.msra.mxu0 %v474
  %528 = vmatprep.subr.bf16.mxu0 %v479
  %529 = vmatpush1.bf16.msra.mxu0 %v478
  %530 = vmatprep.subr.bf16.mxu0 0
  %531 = vmatpush1.bf16.msra.mxu0 0
  %532 = vmatprep.subr.bf16.mxu0 0
  %533 = vmatpush1.bf16.msra.mxu0 0
  %534 = vmatprep.subr.bf16.mxu0 0
  %535 = vmatpush1.bf16.msra.mxu0 0
  %536 = vmatprep.subr.bf16.mxu0 0
  %537 = vmatpush1.bf16.msra.mxu0 0
  %538 = vmatprep.subr.bf16.mxu0 0
  %539 = vmatpush1.bf16.msra.mxu0 0
  %540 = vmatprep.subr.bf16.mxu0 0
  %541 = vmatpush1.bf16.msra.mxu0 0
  %542 = vmatprep.subr.bf16.mxu0 0
  %543 = vmatpush1.bf16.msra.mxu0 0
  %544 = vmatprep.subr.bf16.mxu0 0
  %545 = vmatpush1.bf16.msra.mxu0 0
  %546 = vmatprep.mubr.bf16.mxu0 0
  %547 = vmatmul.mubr.bf16.gmra.mrb[0].mxu0 %v47
  %v548 = vpop.f32.mrb[0].mxu0
  %v549 = vadd.f32 %v307, %v548
  %v550 = vpop.f32.mrb[0].mxu0
  %v551 = vadd.f32 %v309, %v550
  %v552 = vpop.f32.mrb[0].mxu0
  %v553 = vpop.f32.mrb[0].mxu0
  %554 = vdwg.mxu0
  %555 = vmatprep.subr.bf16.mxu0 %v453
  %556 = vmatpush1.bf16.msra.mxu0 %v452
  %557 = vmatprep.subr.bf16.mxu0 %v457
  %558 = vmatpush1.bf16.msra.mxu0 %v456
  %559 = vmatprep.subr.bf16.mxu0 %v461
  %560 = vmatpush1.bf16.msra.mxu0 %v460
  %561 = vmatprep.subr.bf16.mxu0 %v465
  %562 = vmatpush1.bf16.msra.mxu0 %v464
  %563 = vmatprep.subr.bf16.mxu0 %v469
  %564 = vmatpush1.bf16.msra.mxu0 %v468
  %565 = vmatprep.subr.bf16.mxu0 %v473
  %566 = vmatpush1.bf16.msra.mxu0 %v472
  %567 = vmatprep.subr.bf16.mxu0 %v477
  %568 = vmatpush1.bf16.msra.mxu0 %v476
  %569 = vmatprep.subr.bf16.mxu0 %v481
  %570 = vmatpush1.bf16.msra.mxu0 %v480
  %571 = vmatprep.subr.bf16.mxu0 0
  %572 = vmatpush1.bf16.msra.mxu0 0
  %573 = vmatprep.subr.bf16.mxu0 0
  %574 = vmatpush1.bf16.msra.mxu0 0
  %575 = vmatprep.subr.bf16.mxu0 0
  %576 = vmatpush1.bf16.msra.mxu0 0
  %577 = vmatprep.subr.bf16.mxu0 0
  %578 = vmatpush1.bf16.msra.mxu0 0
  %579 = vmatprep.subr.bf16.mxu0 0
  %580 = vmatpush1.bf16.msra.mxu0 0
  %581 = vmatprep.subr.bf16.mxu0 0
  %582 = vmatpush1.bf16.msra.mxu0 0
  %583 = vmatprep.subr.bf16.mxu0 0
  %584 = vmatpush1.bf16.msra.mxu0 0
  %585 = vmatprep.subr.bf16.mxu0 0
  %586 = vmatpush1.bf16.msra.mxu0 0
  %587 = vmatprep.mubr.bf16.mxu0 0
  %588 = vmatmul.mubr.bf16.gmra.mrb[0].mxu0 %v47
  %v589 = vpop.f32.mrb[0].mxu0
  %v590 = vadd.f32 %v348, %v589
  %v591 = vpop.f32.mrb[0].mxu0
  %v592 = vadd.f32 %v350, %v591
  %v593 = vpop.f32.mrb[0].mxu0
  %v594 = vpop.f32.mrb[0].mxu0
  %595 = vdwg.mxu0
  %v596 = vld [vmem:[%s3] sm:$0xf]
  %v598 = vlaneseq
  %v599 = vshrl.u32 %v598, 7
  %v600 = vsub.s32 0, %v599
  %v601 = vrot.slane %v596, %v600
  %v602 = vlaneseq
  %v603 = vshrl.u32 %v602, 7
  %v604 = vsub.s32 1, %v603
  %v605 = vrot.slane %v596, %v604
  %v606 = vlaneseq
  %v607 = vshrl.u32 %v606, 7
  %v608 = vsub.s32 2, %v607
  %v609 = vrot.slane %v596, %v608
  %v610 = vlaneseq
  %v611 = vshrl.u32 %v610, 7
  %v612 = vsub.s32 3, %v611
  %v613 = vrot.slane %v596, %v612
  %v618 = vadd.f32 %v549, %v601
  %v619 = vadd.f32 %v551, %v605
  %v620 = vadd.f32 %v590, %v609
  %v621 = vadd.f32 %v592, %v613
  %v622 = vxor.u32 %v618, 2147483648
  %v623 = vmul.f32 %v622, 1.442695
  %v624 = vpow.pop %v623
  %v625 = vadd.f32 %v624, 1.0
  %v626 = vrcp.pop %v625
  %v627 = vmul.f32 1.0, %v626
  %v628 = vxor.u32 %v619, 2147483648
  %v629 = vmul.f32 %v628, 1.442695
  %v630 = vpow.pop %v629
  %v631 = vadd.f32 %v630, 1.0
  %v632 = vrcp.pop %v631
  %v633 = vmul.f32 1.0, %v632
  %v634 = vtanh.pop %v620
  %v635 = vxor.u32 %v621, 2147483648
  %v636 = vmul.f32 %v635, 1.442695
  %v637 = vpow.pop %v636
  %v638 = vadd.f32 %v637, 1.0
  %v639 = vrcp.pop %v638
  %v640 = vmul.f32 1.0, %v639
  %v641 = vmul.f32 %v633, 0.0
  %v642 = vmul.f32 %v627, %v634
  %v643 = vadd.f32 %v641, %v642
  %v644 = vtanh.pop %v643
  %v645 = vmul.f32 %v640, %v644
  %s646 = scalar_lea.vmem %s0, 4
  %v647 = vld [vmem:[%s646] sm:$0xf]
  %v648 = vpack.c.bf16 %v645, %v645
  %649 = vmatprep.subr.bf16.mxu0 %v209
  %650 = vmatpush1.bf16.msra.mxu0 %v208
  %651 = vmatprep.subr.bf16.mxu0 %v213
  %652 = vmatpush1.bf16.msra.mxu0 %v212
  %653 = vmatprep.subr.bf16.mxu0 %v217
  %654 = vmatpush1.bf16.msra.mxu0 %v216
  %655 = vmatprep.subr.bf16.mxu0 %v221
  %656 = vmatpush1.bf16.msra.mxu0 %v220
  %657 = vmatprep.subr.bf16.mxu0 %v225
  %658 = vmatpush1.bf16.msra.mxu0 %v224
  %659 = vmatprep.subr.bf16.mxu0 %v229
  %660 = vmatpush1.bf16.msra.mxu0 %v228
  %661 = vmatprep.subr.bf16.mxu0 %v233
  %662 = vmatpush1.bf16.msra.mxu0 %v232
  %663 = vmatprep.subr.bf16.mxu0 %v237
  %664 = vmatpush1.bf16.msra.mxu0 %v236
  %665 = vmatprep.subr.bf16.mxu0 0
  %666 = vmatpush1.bf16.msra.mxu0 0
  %667 = vmatprep.subr.bf16.mxu0 0
  %668 = vmatpush1.bf16.msra.mxu0 0
  %669 = vmatprep.subr.bf16.mxu0 0
  %670 = vmatpush1.bf16.msra.mxu0 0
  %671 = vmatprep.subr.bf16.mxu0 0
  %672 = vmatpush1.bf16.msra.mxu0 0
  %673 = vmatprep.subr.bf16.mxu0 0
  %674 = vmatpush1.bf16.msra.mxu0 0
  %675 = vmatprep.subr.bf16.mxu0 0
  %676 = vmatpush1.bf16.msra.mxu0 0
  %677 = vmatprep.subr.bf16.mxu0 0
  %678 = vmatpush1.bf16.msra.mxu0 0
  %679 = vmatprep.subr.bf16.mxu0 0
  %680 = vmatpush1.bf16.msra.mxu0 0
  %681 = vmatprep.mubr.bf16.mxu0 0
  %682 = vmatmul.mubr.bf16.gmra.mrb[0].mxu0 %v648
  %v683 = vpop.f32.mrb[0].mxu0
  %v684 = vadd.f32 0.0, %v683
  %v685 = vpop.f32.mrb[0].mxu0
  %v686 = vadd.f32 0.0, %v685
  %v687 = vpop.f32.mrb[0].mxu0
  %v688 = vpop.f32.mrb[0].mxu0
  %689 = vdwg.mxu0
  %690 = vmatprep.subr.bf16.mxu0 %v211
  %691 = vmatpush1.bf16.msra.mxu0 %v210
  %692 = vmatprep.subr.bf16.mxu0 %v215
  %693 = vmatpush1.bf16.msra.mxu0 %v214
  %694 = vmatprep.subr.bf16.mxu0 %v219
  %695 = vmatpush1.bf16.msra.mxu0 %v218
  %696 = vmatprep.subr.bf16.mxu0 %v223
  %697 = vmatpush1.bf16.msra.mxu0 %v222
  %698 = vmatprep.subr.bf16.mxu0 %v227
  %699 = vmatpush1.bf16.msra.mxu0 %v226
  %700 = vmatprep.subr.bf16.mxu0 %v231
  %701 = vmatpush1.bf16.msra.mxu0 %v230
  %702 = vmatprep.subr.bf16.mxu0 %v235
  %703 = vmatpush1.bf16.msra.mxu0 %v234
  %704 = vmatprep.subr.bf16.mxu0 %v239
  %705 = vmatpush1.bf16.msra.mxu0 %v238
  %706 = vmatprep.subr.bf16.mxu0 0
  %707 = vmatpush1.bf16.msra.mxu0 0
  %708 = vmatprep.subr.bf16.mxu0 0
  %709 = vmatpush1.bf16.msra.mxu0 0
  %710 = vmatprep.subr.bf16.mxu0 0
  %711 = vmatpush1.bf16.msra.mxu0 0
  %712 = vmatprep.subr.bf16.mxu0 0
  %713 = vmatpush1.bf16.msra.mxu0 0
  %714 = vmatprep.subr.bf16.mxu0 0
  %715 = vmatpush1.bf16.msra.mxu0 0
  %716 = vmatprep.subr.bf16.mxu0 0
  %717 = vmatpush1.bf16.msra.mxu0 0
  %718 = vmatprep.subr.bf16.mxu0 0
  %719 = vmatpush1.bf16.msra.mxu0 0
  %720 = vmatprep.subr.bf16.mxu0 0
  %721 = vmatpush1.bf16.msra.mxu0 0
  %722 = vmatprep.mubr.bf16.mxu0 0
  %723 = vmatmul.mubr.bf16.gmra.mrb[0].mxu0 %v648
  %v724 = vpop.f32.mrb[0].mxu0
  %v725 = vadd.f32 0.0, %v724
  %v726 = vpop.f32.mrb[0].mxu0
  %v727 = vadd.f32 0.0, %v726
  %v728 = vpop.f32.mrb[0].mxu0
  %v729 = vpop.f32.mrb[0].mxu0
  %730 = vdwg.mxu0
  %731 = vmatprep.subr.bf16.mxu0 %v451
  %732 = vmatpush1.bf16.msra.mxu0 %v450
  %733 = vmatprep.subr.bf16.mxu0 %v455
  %734 = vmatpush1.bf16.msra.mxu0 %v454
  %735 = vmatprep.subr.bf16.mxu0 %v459
  %736 = vmatpush1.bf16.msra.mxu0 %v458
  %737 = vmatprep.subr.bf16.mxu0 %v463
  %738 = vmatpush1.bf16.msra.mxu0 %v462
  %739 = vmatprep.subr.bf16.mxu0 %v467
  %740 = vmatpush1.bf16.msra.mxu0 %v466
  %741 = vmatprep.subr.bf16.mxu0 %v471
  %742 = vmatpush1.bf16.msra.mxu0 %v470
  %743 = vmatprep.subr.bf16.mxu0 %v475
  %744 = vmatpush1.bf16.msra.mxu0 %v474
  %745 = vmatprep.subr.bf16.mxu0 %v479
  %746 = vmatpush1.bf16.msra.mxu0 %v478
  %747 = vmatprep.subr.bf16.mxu0 0
  %748 = vmatpush1.bf16.msra.mxu0 0
  %749 = vmatprep.subr.bf16.mxu0 0
  %750 = vmatpush1.bf16.msra.mxu0 0
  %751 = vmatprep.subr.bf16.mxu0 0
  %752 = vmatpush1.bf16.msra.mxu0 0
  %753 = vmatprep.subr.bf16.mxu0 0
  %754 = vmatpush1.bf16.msra.mxu0 0
  %755 = vmatprep.subr.bf16.mxu0 0
  %756 = vmatpush1.bf16.msra.mxu0 0
  %757 = vmatprep.subr.bf16.mxu0 0
  %758 = vmatpush1.bf16.msra.mxu0 0
  %759 = vmatprep.subr.bf16.mxu0 0
  %760 = vmatpush1.bf16.msra.mxu0 0
  %761 = vmatprep.subr.bf16.mxu0 0
  %762 = vmatpush1.bf16.msra.mxu0 0
  %763 = vmatprep.mubr.bf16.mxu0 0
  %764 = vmatmul.mubr.bf16.gmra.mrb[0].mxu0 %v647
  %v765 = vpop.f32.mrb[0].mxu0
  %v766 = vadd.f32 %v684, %v765
  %v767 = vpop.f32.mrb[0].mxu0
  %v768 = vadd.f32 %v686, %v767
  %v769 = vpop.f32.mrb[0].mxu0
  %v770 = vpop.f32.mrb[0].mxu0
  %771 = vdwg.mxu0
  %772 = vmatprep.subr.bf16.mxu0 %v453
  %773 = vmatpush1.bf16.msra.mxu0 %v452
  %774 = vmatprep.subr.bf16.mxu0 %v457
  %775 = vmatpush1.bf16.msra.mxu0 %v456
  %776 = vmatprep.subr.bf16.mxu0 %v461
  %777 = vmatpush1.bf16.msra.mxu0 %v460
  %778 = vmatprep.subr.bf16.mxu0 %v465
  %779 = vmatpush1.bf16.msra.mxu0 %v464
  %780 = vmatprep.subr.bf16.mxu0 %v469
  %781 = vmatpush1.bf16.msra.mxu0 %v468
  %782 = vmatprep.subr.bf16.mxu0 %v473
  %783 = vmatpush1.bf16.msra.mxu0 %v472
  %784 = vmatprep.subr.bf16.mxu0 %v477
  %785 = vmatpush1.bf16.msra.mxu0 %v476
  %786 = vmatprep.subr.bf16.mxu0 %v481
  %787 = vmatpush1.bf16.msra.mxu0 %v480
  %788 = vmatprep.subr.bf16.mxu0 0
  %789 = vmatpush1.bf16.msra.mxu0 0
  %790 = vmatprep.subr.bf16.mxu0 0
  %791 = vmatpush1.bf16.msra.mxu0 0
  %792 = vmatprep.subr.bf16.mxu0 0
  %793 = vmatpush1.bf16.msra.mxu0 0
  %794 = vmatprep.subr.bf16.mxu0 0
  %795 = vmatpush1.bf16.msra.mxu0 0
  %796 = vmatprep.subr.bf16.mxu0 0
  %797 = vmatpush1.bf16.msra.mxu0 0
  %798 = vmatprep.subr.bf16.mxu0 0
  %799 = vmatpush1.bf16.msra.mxu0 0
  %800 = vmatprep.subr.bf16.mxu0 0
  %801 = vmatpush1.bf16.msra.mxu0 0
  %802 = vmatprep.subr.bf16.mxu0 0
  %803 = vmatpush1.bf16.msra.mxu0 0
  %804 = vmatprep.mubr.bf16.mxu0 0
  %805 = vmatmul.mubr.bf16.gmra.mrb[0].mxu0 %v647
  %v806 = vpop.f32.mrb[0].mxu0
  %v807 = vadd.f32 %v725, %v806
  %v808 = vpop.f32.mrb[0].mxu0
  %v809 = vadd.f32 %v727, %v808
  %v810 = vpop.f32.mrb[0].mxu0
  %v811 = vpop.f32.mrb[0].mxu0
  %812 = vdwg.mxu0
  %v813 = vadd.f32 %v766, %v601
  %v814 = vadd.f32 %v768, %v605
  %v815 = vadd.f32 %v807, %v609
  %v816 = vadd.f32 %v809, %v613
  %v817 = vxor.u32 %v813, 2147483648
  %v818 = vmul.f32 %v817, 1.442695
  %v819 = vpow.pop %v818
  %v820 = vadd.f32 %v819, 1.0
  %v821 = vrcp.pop %v820
  %v822 = vmul.f32 1.0, %v821
  %v823 = vxor.u32 %v814, 2147483648
  %v824 = vmul.f32 %v823, 1.442695
  %v825 = vpow.pop %v824
  %v826 = vadd.f32 %v825, 1.0
  %v827 = vrcp.pop %v826
  %v828 = vmul.f32 1.0, %v827
  %v829 = vtanh.pop %v815
  %v830 = vxor.u32 %v816, 2147483648
  %v831 = vmul.f32 %v830, 1.442695
  %v832 = vpow.pop %v831
  %v833 = vadd.f32 %v832, 1.0
  %v834 = vrcp.pop %v833
  %v835 = vmul.f32 1.0, %v834
  %v836 = vmul.f32 %v828, %v643
  %v837 = vmul.f32 %v822, %v829
  %v838 = vadd.f32 %v836, %v837
  %v839 = vtanh.pop %v838
  %v840 = vmul.f32 %v835, %v839
  %s841 = scalar_lea.vmem %s0, 8
  %v842 = vld [vmem:[%s841] sm:$0xf]
  %v843 = vpack.c.bf16 %v840, %v840
  %844 = vmatprep.subr.bf16.mxu0 %v209
  %845 = vmatpush1.bf16.msra.mxu0 %v208
  %846 = vmatprep.subr.bf16.mxu0 %v213
  %847 = vmatpush1.bf16.msra.mxu0 %v212
  %848 = vmatprep.subr.bf16.mxu0 %v217
  %849 = vmatpush1.bf16.msra.mxu0 %v216
  %850 = vmatprep.subr.bf16.mxu0 %v221
  %851 = vmatpush1.bf16.msra.mxu0 %v220
  %852 = vmatprep.subr.bf16.mxu0 %v225
  %853 = vmatpush1.bf16.msra.mxu0 %v224
  %854 = vmatprep.subr.bf16.mxu0 %v229
  %855 = vmatpush1.bf16.msra.mxu0 %v228
  %856 = vmatprep.subr.bf16.mxu0 %v233
  %857 = vmatpush1.bf16.msra.mxu0 %v232
  %858 = vmatprep.subr.bf16.mxu0 %v237
  %859 = vmatpush1.bf16.msra.mxu0 %v236
  %860 = vmatprep.subr.bf16.mxu0 0
  %861 = vmatpush1.bf16.msra.mxu0 0
  %862 = vmatprep.subr.bf16.mxu0 0
  %863 = vmatpush1.bf16.msra.mxu0 0
  %864 = vmatprep.subr.bf16.mxu0 0
  %865 = vmatpush1.bf16.msra.mxu0 0
  %866 = vmatprep.subr.bf16.mxu0 0
  %867 = vmatpush1.bf16.msra.mxu0 0
  %868 = vmatprep.subr.bf16.mxu0 0
  %869 = vmatpush1.bf16.msra.mxu0 0
  %870 = vmatprep.subr.bf16.mxu0 0
  %871 = vmatpush1.bf16.msra.mxu0 0
  %872 = vmatprep.subr.bf16.mxu0 0
  %873 = vmatpush1.bf16.msra.mxu0 0
  %874 = vmatprep.subr.bf16.mxu0 0
  %875 = vmatpush1.bf16.msra.mxu0 0
  %876 = vmatprep.mubr.bf16.mxu0 0
  %877 = vmatmul.mubr.bf16.gmra.mrb[0].mxu0 %v843
  %v878 = vpop.f32.mrb[0].mxu0
  %v879 = vadd.f32 0.0, %v878
  %v880 = vpop.f32.mrb[0].mxu0
  %v881 = vadd.f32 0.0, %v880
  %v882 = vpop.f32.mrb[0].mxu0
  %v883 = vpop.f32.mrb[0].mxu0
  %884 = vdwg.mxu0
  %885 = vmatprep.subr.bf16.mxu0 %v211
  %886 = vmatpush1.bf16.msra.mxu0 %v210
  %887 = vmatprep.subr.bf16.mxu0 %v215
  %888 = vmatpush1.bf16.msra.mxu0 %v214
  %889 = vmatprep.subr.bf16.mxu0 %v219
  %890 = vmatpush1.bf16.msra.mxu0 %v218
  %891 = vmatprep.subr.bf16.mxu0 %v223
  %892 = vmatpush1.bf16.msra.mxu0 %v222
  %893 = vmatprep.subr.bf16.mxu0 %v227
  %894 = vmatpush1.bf16.msra.mxu0 %v226
  %895 = vmatprep.subr.bf16.mxu0 %v231
  %896 = vmatpush1.bf16.msra.mxu0 %v230
  %897 = vmatprep.subr.bf16.mxu0 %v235
  %898 = vmatpush1.bf16.msra.mxu0 %v234
  %899 = vmatprep.subr.bf16.mxu0 %v239
  %900 = vmatpush1.bf16.msra.mxu0 %v238
  %901 = vmatprep.subr.bf16.mxu0 0
  %902 = vmatpush1.bf16.msra.mxu0 0
  %903 = vmatprep.subr.bf16.mxu0 0
  %904 = vmatpush1.bf16.msra.mxu0 0
  %905 = vmatprep.subr.bf16.mxu0 0
  %906 = vmatpush1.bf16.msra.mxu0 0
  %907 = vmatprep.subr.bf16.mxu0 0
  %908 = vmatpush1.bf16.msra.mxu0 0
  %909 = vmatprep.subr.bf16.mxu0 0
  %910 = vmatpush1.bf16.msra.mxu0 0
  %911 = vmatprep.subr.bf16.mxu0 0
  %912 = vmatpush1.bf16.msra.mxu0 0
  %913 = vmatprep.subr.bf16.mxu0 0
  %914 = vmatpush1.bf16.msra.mxu0 0
  %915 = vmatprep.subr.bf16.mxu0 0
  %916 = vmatpush1.bf16.msra.mxu0 0
  %917 = vmatprep.mubr.bf16.mxu0 0
  %918 = vmatmul.mubr.bf16.gmra.mrb[0].mxu0 %v843
  %v919 = vpop.f32.mrb[0].mxu0
  %v920 = vadd.f32 0.0, %v919
  %v921 = vpop.f32.mrb[0].mxu0
  %v922 = vadd.f32 0.0, %v921
  %v923 = vpop.f32.mrb[0].mxu0
  %v924 = vpop.f32.mrb[0].mxu0
  %925 = vdwg.mxu0
  %926 = vmatprep.subr.bf16.mxu0 %v451
  %927 = vmatpush1.bf16.msra.mxu0 %v450
  %928 = vmatprep.subr.bf16.mxu0 %v455
  %929 = vmatpush1.bf16.msra.mxu0 %v454
  %930 = vmatprep.subr.bf16.mxu0 %v459
  %931 = vmatpush1.bf16.msra.mxu0 %v458
  %932 = vmatprep.subr.bf16.mxu0 %v463
  %933 = vmatpush1.bf16.msra.mxu0 %v462
  %934 = vmatprep.subr.bf16.mxu0 %v467
  %935 = vmatpush1.bf16.msra.mxu0 %v466
  %936 = vmatprep.subr.bf16.mxu0 %v471
  %937 = vmatpush1.bf16.msra.mxu0 %v470
  %938 = vmatprep.subr.bf16.mxu0 %v475
  %939 = vmatpush1.bf16.msra.mxu0 %v474
  %940 = vmatprep.subr.bf16.mxu0 %v479
  %941 = vmatpush1.bf16.msra.mxu0 %v478
  %942 = vmatprep.subr.bf16.mxu0 0
  %943 = vmatpush1.bf16.msra.mxu0 0
  %944 = vmatprep.subr.bf16.mxu0 0
  %945 = vmatpush1.bf16.msra.mxu0 0
  %946 = vmatprep.subr.bf16.mxu0 0
  %947 = vmatpush1.bf16.msra.mxu0 0
  %948 = vmatprep.subr.bf16.mxu0 0
  %949 = vmatpush1.bf16.msra.mxu0 0
  %950 = vmatprep.subr.bf16.mxu0 0
  %951 = vmatpush1.bf16.msra.mxu0 0
  %952 = vmatprep.subr.bf16.mxu0 0
  %953 = vmatpush1.bf16.msra.mxu0 0
  %954 = vmatprep.subr.bf16.mxu0 0
  %955 = vmatpush1.bf16.msra.mxu0 0
  %956 = vmatprep.subr.bf16.mxu0 0
  %957 = vmatpush1.bf16.msra.mxu0 0
  %958 = vmatprep.mubr.bf16.mxu0 0
  %959 = vmatmul.mubr.bf16.gmra.mrb[0].mxu0 %v842
  %v960 = vpop.f32.mrb[0].mxu0
  %v961 = vadd.f32 %v879, %v960
  %v962 = vpop.f32.mrb[0].mxu0
  %v963 = vadd.f32 %v881, %v962
  %v964 = vpop.f32.mrb[0].mxu0
  %v965 = vpop.f32.mrb[0].mxu0
  %966 = vdwg.mxu0
  %967 = vmatprep.subr.bf16.mxu0 %v453
  %968 = vmatpush1.bf16.msra.mxu0 %v452
  %969 = vmatprep.subr.bf16.mxu0 %v457
  %970 = vmatpush1.bf16.msra.mxu0 %v456
  %971 = vmatprep.subr.bf16.mxu0 %v461
  %972 = vmatpush1.bf16.msra.mxu0 %v460
  %973 = vmatprep.subr.bf16.mxu0 %v465
  %974 = vmatpush1.bf16.msra.mxu0 %v464
  %975 = vmatprep.subr.bf16.mxu0 %v469
  %976 = vmatpush1.bf16.msra.mxu0 %v468
  %977 = vmatprep.subr.bf16.mxu0 %v473
  %978 = vmatpush1.bf16.msra.mxu0 %v472
  %979 = vmatprep.subr.bf16.mxu0 %v477
  %980 = vmatpush1.bf16.msra.mxu0 %v476
  %981 = vmatprep.subr.bf16.mxu0 %v481
  %982 = vmatpush1.bf16.msra.mxu0 %v480
  %983 = vmatprep.subr.bf16.mxu0 0
  %984 = vmatpush1.bf16.msra.mxu0 0
  %985 = vmatprep.subr.bf16.mxu0 0
  %986 = vmatpush1.bf16.msra.mxu0 0
  %987 = vmatprep.subr.bf16.mxu0 0
  %988 = vmatpush1.bf16.msra.mxu0 0
  %989 = vmatprep.subr.bf16.mxu0 0
  %990 = vmatpush1.bf16.msra.mxu0 0
  %991 = vmatprep.subr.bf16.mxu0 0
  %992 = vmatpush1.bf16.msra.mxu0 0
  %993 = vmatprep.subr.bf16.mxu0 0
  %994 = vmatpush1.bf16.msra.mxu0 0
  %995 = vmatprep.subr.bf16.mxu0 0
  %996 = vmatpush1.bf16.msra.mxu0 0
  %997 = vmatprep.subr.bf16.mxu0 0
  %998 = vmatpush1.bf16.msra.mxu0 0
  %999 = vmatprep.mubr.bf16.mxu0 0
  %1000 = vmatmul.mubr.bf16.gmra.mrb[0].mxu0 %v842
  %v1001 = vpop.f32.mrb[0].mxu0
  %v1002 = vadd.f32 %v920, %v1001
  %v1003 = vpop.f32.mrb[0].mxu0
  %v1004 = vadd.f32 %v922, %v1003
  %v1005 = vpop.f32.mrb[0].mxu0
  %v1006 = vpop.f32.mrb[0].mxu0
  %1007 = vdwg.mxu0
  %v1008 = vadd.f32 %v961, %v601
  %v1009 = vadd.f32 %v963, %v605
  %v1010 = vadd.f32 %v1002, %v609
  %v1011 = vadd.f32 %v1004, %v613
  %v1012 = vxor.u32 %v1008, 2147483648
  %v1013 = vmul.f32 %v1012, 1.442695
  %v1014 = vpow.pop %v1013
  %v1015 = vadd.f32 %v1014, 1.0
  %v1016 = vrcp.pop %v1015
  %v1017 = vmul.f32 1.0, %v1016
  %v1018 = vxor.u32 %v1009, 2147483648
  %v1019 = vmul.f32 %v1018, 1.442695
  %v1020 = vpow.pop %v1019
  %v1021 = vadd.f32 %v1020, 1.0
  %v1022 = vrcp.pop %v1021
  %v1023 = vmul.f32 1.0, %v1022
  %v1024 = vtanh.pop %v1010
  %v1025 = vxor.u32 %v1011, 2147483648
  %v1026 = vmul.f32 %v1025, 1.442695
  %v1027 = vpow.pop %v1026
  %v1028 = vadd.f32 %v1027, 1.0
  %v1029 = vrcp.pop %v1028
  %v1030 = vmul.f32 1.0, %v1029
  %v1031 = vmul.f32 %v1023, %v838
  %v1032 = vmul.f32 %v1017, %v1024
  %v1033 = vadd.f32 %v1031, %v1032
  %v1034 = vtanh.pop %v1033
  %v1035 = vmul.f32 %v1030, %v1034
  %s1036 = scalar_lea.vmem %s0, 12
  %v1037 = vld [vmem:[%s1036] sm:$0xf]
  %v1038 = vpack.c.bf16 %v1035, %v1035
  %1039 = vmatprep.subr.bf16.mxu0 %v209
  %1040 = vmatpush1.bf16.msra.mxu0 %v208
  %1041 = vmatprep.subr.bf16.mxu0 %v213
  %1042 = vmatpush1.bf16.msra.mxu0 %v212
  %1043 = vmatprep.subr.bf16.mxu0 %v217
  %1044 = vmatpush1.bf16.msra.mxu0 %v216
  %1045 = vmatprep.subr.bf16.mxu0 %v221
  %1046 = vmatpush1.bf16.msra.mxu0 %v220
  %1047 = vmatprep.subr.bf16.mxu0 %v225
  %1048 = vmatpush1.bf16.msra.mxu0 %v224
  %1049 = vmatprep.subr.bf16.mxu0 %v229
  %1050 = vmatpush1.bf16.msra.mxu0 %v228
  %1051 = vmatprep.subr.bf16.mxu0 %v233
  %1052 = vmatpush1.bf16.msra.mxu0 %v232
  %1053 = vmatprep.subr.bf16.mxu0 %v237
  %1054 = vmatpush1.bf16.msra.mxu0 %v236
  %1055 = vmatprep.subr.bf16.mxu0 0
  %1056 = vmatpush1.bf16.msra.mxu0 0
  %1057 = vmatprep.subr.bf16.mxu0 0
  %1058 = vmatpush1.bf16.msra.mxu0 0
  %1059 = vmatprep.subr.bf16.mxu0 0
  %1060 = vmatpush1.bf16.msra.mxu0 0
  %1061 = vmatprep.subr.bf16.mxu0 0
  %1062 = vmatpush1.bf16.msra.mxu0 0
  %1063 = vmatprep.subr.bf16.mxu0 0
  %1064 = vmatpush1.bf16.msra.mxu0 0
  %1065 = vmatprep.subr.bf16.mxu0 0
  %1066 = vmatpush1.bf16.msra.mxu0 0
  %1067 = vmatprep.subr.bf16.mxu0 0
  %1068 = vmatpush1.bf16.msra.mxu0 0
  %1069 = vmatprep.subr.bf16.mxu0 0
  %1070 = vmatpush1.bf16.msra.mxu0 0
  %1071 = vmatprep.mubr.bf16.mxu0 0
  %1072 = vmatmul.mubr.bf16.gmra.mrb[0].mxu0 %v1038
  %v1073 = vpop.f32.mrb[0].mxu0
  %v1074 = vadd.f32 0.0, %v1073
  %v1075 = vpop.f32.mrb[0].mxu0
  %v1076 = vadd.f32 0.0, %v1075
  %v1077 = vpop.f32.mrb[0].mxu0
  %v1078 = vpop.f32.mrb[0].mxu0
  %1079 = vdwg.mxu0
  %1080 = vmatprep.subr.bf16.mxu0 %v211
  %1081 = vmatpush1.bf16.msra.mxu0 %v210
  %1082 = vmatprep.subr.bf16.mxu0 %v215
  %1083 = vmatpush1.bf16.msra.mxu0 %v214
  %1084 = vmatprep.subr.bf16.mxu0 %v219
  %1085 = vmatpush1.bf16.msra.mxu0 %v218
  %1086 = vmatprep.subr.bf16.mxu0 %v223
  %1087 = vmatpush1.bf16.msra.mxu0 %v222
  %1088 = vmatprep.subr.bf16.mxu0 %v227
  %1089 = vmatpush1.bf16.msra.mxu0 %v226
  %1090 = vmatprep.subr.bf16.mxu0 %v231
  %1091 = vmatpush1.bf16.msra.mxu0 %v230
  %1092 = vmatprep.subr.bf16.mxu0 %v235
  %1093 = vmatpush1.bf16.msra.mxu0 %v234
  %1094 = vmatprep.subr.bf16.mxu0 %v239
  %1095 = vmatpush1.bf16.msra.mxu0 %v238
  %1096 = vmatprep.subr.bf16.mxu0 0
  %1097 = vmatpush1.bf16.msra.mxu0 0
  %1098 = vmatprep.subr.bf16.mxu0 0
  %1099 = vmatpush1.bf16.msra.mxu0 0
  %1100 = vmatprep.subr.bf16.mxu0 0
  %1101 = vmatpush1.bf16.msra.mxu0 0
  %1102 = vmatprep.subr.bf16.mxu0 0
  %1103 = vmatpush1.bf16.msra.mxu0 0
  %1104 = vmatprep.subr.bf16.mxu0 0
  %1105 = vmatpush1.bf16.msra.mxu0 0
  %1106 = vmatprep.subr.bf16.mxu0 0
  %1107 = vmatpush1.bf16.msra.mxu0 0
  %1108 = vmatprep.subr.bf16.mxu0 0
  %1109 = vmatpush1.bf16.msra.mxu0 0
  %1110 = vmatprep.subr.bf16.mxu0 0
  %1111 = vmatpush1.bf16.msra.mxu0 0
  %1112 = vmatprep.mubr.bf16.mxu0 0
  %1113 = vmatmul.mubr.bf16.gmra.mrb[0].mxu0 %v1038
  %v1114 = vpop.f32.mrb[0].mxu0
  %v1115 = vadd.f32 0.0, %v1114
  %v1116 = vpop.f32.mrb[0].mxu0
  %v1117 = vadd.f32 0.0, %v1116
  %v1118 = vpop.f32.mrb[0].mxu0
  %v1119 = vpop.f32.mrb[0].mxu0
  %1120 = vdwg.mxu0
  %1121 = vmatprep.subr.bf16.mxu0 %v451
  %1122 = vmatpush1.bf16.msra.mxu0 %v450
  %1123 = vmatprep.subr.bf16.mxu0 %v455
  %1124 = vmatpush1.bf16.msra.mxu0 %v454
  %1125 = vmatprep.subr.bf16.mxu0 %v459
  %1126 = vmatpush1.bf16.msra.mxu0 %v458
  %1127 = vmatprep.subr.bf16.mxu0 %v463
  %1128 = vmatpush1.bf16.msra.mxu0 %v462
  %1129 = vmatprep.subr.bf16.mxu0 %v467
  %1130 = vmatpush1.bf16.msra.mxu0 %v466
  %1131 = vmatprep.subr.bf16.mxu0 %v471
  %1132 = vmatpush1.bf16.msra.mxu0 %v470
  %1133 = vmatprep.subr.bf16.mxu0 %v475
  %1134 = vmatpush1.bf16.msra.mxu0 %v474
  %1135 = vmatprep.subr.bf16.mxu0 %v479
  %1136 = vmatpush1.bf16.msra.mxu0 %v478
  %1137 = vmatprep.subr.bf16.mxu0 0
  %1138 = vmatpush1.bf16.msra.mxu0 0
  %1139 = vmatprep.subr.bf16.mxu0 0
  %1140 = vmatpush1.bf16.msra.mxu0 0
  %1141 = vmatprep.subr.bf16.mxu0 0
  %1142 = vmatpush1.bf16.msra.mxu0 0
  %1143 = vmatprep.subr.bf16.mxu0 0
  %1144 = vmatpush1.bf16.msra.mxu0 0
  %1145 = vmatprep.subr.bf16.mxu0 0
  %1146 = vmatpush1.bf16.msra.mxu0 0
  %1147 = vmatprep.subr.bf16.mxu0 0
  %1148 = vmatpush1.bf16.msra.mxu0 0
  %1149 = vmatprep.subr.bf16.mxu0 0
  %1150 = vmatpush1.bf16.msra.mxu0 0
  %1151 = vmatprep.subr.bf16.mxu0 0
  %1152 = vmatpush1.bf16.msra.mxu0 0
  %1153 = vmatprep.mubr.bf16.mxu0 0
  %1154 = vmatmul.mubr.bf16.gmra.mrb[0].mxu0 %v1037
  %v1155 = vpop.f32.mrb[0].mxu0
  %v1156 = vadd.f32 %v1074, %v1155
  %v1157 = vpop.f32.mrb[0].mxu0
  %v1158 = vadd.f32 %v1076, %v1157
  %v1159 = vpop.f32.mrb[0].mxu0
  %v1160 = vpop.f32.mrb[0].mxu0
  %1161 = vdwg.mxu0
  %1162 = vmatprep.subr.bf16.mxu0 %v453
  %1163 = vmatpush1.bf16.msra.mxu0 %v452
  %1164 = vmatprep.subr.bf16.mxu0 %v457
  %1165 = vmatpush1.bf16.msra.mxu0 %v456
  %1166 = vmatprep.subr.bf16.mxu0 %v461
  %1167 = vmatpush1.bf16.msra.mxu0 %v460
  %1168 = vmatprep.subr.bf16.mxu0 %v465
  %1169 = vmatpush1.bf16.msra.mxu0 %v464
  %1170 = vmatprep.subr.bf16.mxu0 %v469
  %1171 = vmatpush1.bf16.msra.mxu0 %v468
  %1172 = vmatprep.subr.bf16.mxu0 %v473
  %1173 = vmatpush1.bf16.msra.mxu0 %v472
  %1174 = vmatprep.subr.bf16.mxu0 %v477
  %1175 = vmatpush1.bf16.msra.mxu0 %v476
  %1176 = vmatprep.subr.bf16.mxu0 %v481
  %1177 = vmatpush1.bf16.msra.mxu0 %v480
  %1178 = vmatprep.subr.bf16.mxu0 0
  %1179 = vmatpush1.bf16.msra.mxu0 0
  %1180 = vmatprep.subr.bf16.mxu0 0
  %1181 = vmatpush1.bf16.msra.mxu0 0
  %1182 = vmatprep.subr.bf16.mxu0 0
  %1183 = vmatpush1.bf16.msra.mxu0 0
  %1184 = vmatprep.subr.bf16.mxu0 0
  %1185 = vmatpush1.bf16.msra.mxu0 0
  %1186 = vmatprep.subr.bf16.mxu0 0
  %1187 = vmatpush1.bf16.msra.mxu0 0
  %1188 = vmatprep.subr.bf16.mxu0 0
  %1189 = vmatpush1.bf16.msra.mxu0 0
  %1190 = vmatprep.subr.bf16.mxu0 0
  %1191 = vmatpush1.bf16.msra.mxu0 0
  %1192 = vmatprep.subr.bf16.mxu0 0
  %1193 = vmatpush1.bf16.msra.mxu0 0
  %1194 = vmatprep.mubr.bf16.mxu0 0
  %1195 = vmatmul.mubr.bf16.gmra.mrb[0].mxu0 %v1037
  %v1196 = vpop.f32.mrb[0].mxu0
  %v1197 = vadd.f32 %v1115, %v1196
  %v1198 = vpop.f32.mrb[0].mxu0
  %v1199 = vadd.f32 %v1117, %v1198
  %v1200 = vpop.f32.mrb[0].mxu0
  %v1201 = vpop.f32.mrb[0].mxu0
  %1202 = vdwg.mxu0
  %v1203 = vadd.f32 %v1156, %v601
  %v1204 = vadd.f32 %v1158, %v605
  %v1205 = vadd.f32 %v1197, %v609
  %v1206 = vadd.f32 %v1199, %v613
  %v1207 = vxor.u32 %v1203, 2147483648
  %v1208 = vmul.f32 %v1207, 1.442695
  %v1209 = vpow.pop %v1208
  %v1210 = vadd.f32 %v1209, 1.0
  %v1211 = vrcp.pop %v1210
  %v1212 = vmul.f32 1.0, %v1211
  %v1213 = vxor.u32 %v1204, 2147483648
  %v1214 = vmul.f32 %v1213, 1.442695
  %v1215 = vpow.pop %v1214
  %v1216 = vadd.f32 %v1215, 1.0
  %v1217 = vrcp.pop %v1216
  %v1218 = vmul.f32 1.0, %v1217
  %v1219 = vtanh.pop %v1205
  %v1220 = vxor.u32 %v1206, 2147483648
  %v1221 = vmul.f32 %v1220, 1.442695
  %v1222 = vpow.pop %v1221
  %v1223 = vadd.f32 %v1222, 1.0
  %v1224 = vrcp.pop %v1223
  %v1225 = vmul.f32 1.0, %v1224
  %v1226 = vmul.f32 %v1218, %v1033
  %v1227 = vmul.f32 %v1212, %v1219
  %v1228 = vadd.f32 %v1226, %v1227
  %v1229 = vtanh.pop %v1228
  %v1230 = vmul.f32 %v1225, %v1229
  %s1231 = scalar_lea.vmem %s0, 16
  %v1232 = vld [vmem:[%s1231] sm:$0xf]
  %v1233 = vpack.c.bf16 %v1230, %v1230
  %1234 = vmatprep.subr.bf16.mxu0 %v209
  %1235 = vmatpush1.bf16.msra.mxu0 %v208
  %1236 = vmatprep.subr.bf16.mxu0 %v213
  %1237 = vmatpush1.bf16.msra.mxu0 %v212
  %1238 = vmatprep.subr.bf16.mxu0 %v217
  %1239 = vmatpush1.bf16.msra.mxu0 %v216
  %1240 = vmatprep.subr.bf16.mxu0 %v221
  %1241 = vmatpush1.bf16.msra.mxu0 %v220
  %1242 = vmatprep.subr.bf16.mxu0 %v225
  %1243 = vmatpush1.bf16.msra.mxu0 %v224
  %1244 = vmatprep.subr.bf16.mxu0 %v229
  %1245 = vmatpush1.bf16.msra.mxu0 %v228
  %1246 = vmatprep.subr.bf16.mxu0 %v233
  %1247 = vmatpush1.bf16.msra.mxu0 %v232
  %1248 = vmatprep.subr.bf16.mxu0 %v237
  %1249 = vmatpush1.bf16.msra.mxu0 %v236
  %1250 = vmatprep.subr.bf16.mxu0 0
  %1251 = vmatpush1.bf16.msra.mxu0 0
  %1252 = vmatprep.subr.bf16.mxu0 0
  %1253 = vmatpush1.bf16.msra.mxu0 0
  %1254 = vmatprep.subr.bf16.mxu0 0
  %1255 = vmatpush1.bf16.msra.mxu0 0
  %1256 = vmatprep.subr.bf16.mxu0 0
  %1257 = vmatpush1.bf16.msra.mxu0 0
  %1258 = vmatprep.subr.bf16.mxu0 0
  %1259 = vmatpush1.bf16.msra.mxu0 0
  %1260 = vmatprep.subr.bf16.mxu0 0
  %1261 = vmatpush1.bf16.msra.mxu0 0
  %1262 = vmatprep.subr.bf16.mxu0 0
  %1263 = vmatpush1.bf16.msra.mxu0 0
  %1264 = vmatprep.subr.bf16.mxu0 0
  %1265 = vmatpush1.bf16.msra.mxu0 0
  %1266 = vmatprep.mubr.bf16.mxu0 0
  %1267 = vmatmul.mubr.bf16.gmra.mrb[0].mxu0 %v1233
  %v1268 = vpop.f32.mrb[0].mxu0
  %v1269 = vadd.f32 0.0, %v1268
  %v1270 = vpop.f32.mrb[0].mxu0
  %v1271 = vadd.f32 0.0, %v1270
  %v1272 = vpop.f32.mrb[0].mxu0
  %v1273 = vpop.f32.mrb[0].mxu0
  %1274 = vdwg.mxu0
  %1275 = vmatprep.subr.bf16.mxu0 %v211
  %1276 = vmatpush1.bf16.msra.mxu0 %v210
  %1277 = vmatprep.subr.bf16.mxu0 %v215
  %1278 = vmatpush1.bf16.msra.mxu0 %v214
  %1279 = vmatprep.subr.bf16.mxu0 %v219
  %1280 = vmatpush1.bf16.msra.mxu0 %v218
  %1281 = vmatprep.subr.bf16.mxu0 %v223
  %1282 = vmatpush1.bf16.msra.mxu0 %v222
  %1283 = vmatprep.subr.bf16.mxu0 %v227
  %1284 = vmatpush1.bf16.msra.mxu0 %v226
  %1285 = vmatprep.subr.bf16.mxu0 %v231
  %1286 = vmatpush1.bf16.msra.mxu0 %v230
  %1287 = vmatprep.subr.bf16.mxu0 %v235
  %1288 = vmatpush1.bf16.msra.mxu0 %v234
  %1289 = vmatprep.subr.bf16.mxu0 %v239
  %1290 = vmatpush1.bf16.msra.mxu0 %v238
  %1291 = vmatprep.subr.bf16.mxu0 0
  %1292 = vmatpush1.bf16.msra.mxu0 0
  %1293 = vmatprep.subr.bf16.mxu0 0
  %1294 = vmatpush1.bf16.msra.mxu0 0
  %1295 = vmatprep.subr.bf16.mxu0 0
  %1296 = vmatpush1.bf16.msra.mxu0 0
  %1297 = vmatprep.subr.bf16.mxu0 0
  %1298 = vmatpush1.bf16.msra.mxu0 0
  %1299 = vmatprep.subr.bf16.mxu0 0
  %1300 = vmatpush1.bf16.msra.mxu0 0
  %1301 = vmatprep.subr.bf16.mxu0 0
  %1302 = vmatpush1.bf16.msra.mxu0 0
  %1303 = vmatprep.subr.bf16.mxu0 0
  %1304 = vmatpush1.bf16.msra.mxu0 0
  %1305 = vmatprep.subr.bf16.mxu0 0
  %1306 = vmatpush1.bf16.msra.mxu0 0
  %1307 = vmatprep.mubr.bf16.mxu0 0
  %1308 = vmatmul.mubr.bf16.gmra.mrb[0].mxu0 %v1233
  %v1309 = vpop.f32.mrb[0].mxu0
  %v1310 = vadd.f32 0.0, %v1309
  %v1311 = vpop.f32.mrb[0].mxu0
  %v1312 = vadd.f32 0.0, %v1311
  %v1313 = vpop.f32.mrb[0].mxu0
  %v1314 = vpop.f32.mrb[0].mxu0
  %1315 = vdwg.mxu0
  %1316 = vmatprep.subr.bf16.mxu0 %v451
  %1317 = vmatpush1.bf16.msra.mxu0 %v450
  %1318 = vmatprep.subr.bf16.mxu0 %v455
  %1319 = vmatpush1.bf16.msra.mxu0 %v454
  %1320 = vmatprep.subr.bf16.mxu0 %v459
  %1321 = vmatpush1.bf16.msra.mxu0 %v458
  %1322 = vmatprep.subr.bf16.mxu0 %v463
  %1323 = vmatpush1.bf16.msra.mxu0 %v462
  %1324 = vmatprep.subr.bf16.mxu0 %v467
  %1325 = vmatpush1.bf16.msra.mxu0 %v466
  %1326 = vmatprep.subr.bf16.mxu0 %v471
  %1327 = vmatpush1.bf16.msra.mxu0 %v470
  %1328 = vmatprep.subr.bf16.mxu0 %v475
  %1329 = vmatpush1.bf16.msra.mxu0 %v474
  %1330 = vmatprep.subr.bf16.mxu0 %v479
  %1331 = vmatpush1.bf16.msra.mxu0 %v478
  %1332 = vmatprep.subr.bf16.mxu0 0
  %1333 = vmatpush1.bf16.msra.mxu0 0
  %1334 = vmatprep.subr.bf16.mxu0 0
  %1335 = vmatpush1.bf16.msra.mxu0 0
  %1336 = vmatprep.subr.bf16.mxu0 0
  %1337 = vmatpush1.bf16.msra.mxu0 0
  %1338 = vmatprep.subr.bf16.mxu0 0
  %1339 = vmatpush1.bf16.msra.mxu0 0
  %1340 = vmatprep.subr.bf16.mxu0 0
  %1341 = vmatpush1.bf16.msra.mxu0 0
  %1342 = vmatprep.subr.bf16.mxu0 0
  %1343 = vmatpush1.bf16.msra.mxu0 0
  %1344 = vmatprep.subr.bf16.mxu0 0
  %1345 = vmatpush1.bf16.msra.mxu0 0
  %1346 = vmatprep.subr.bf16.mxu0 0
  %1347 = vmatpush1.bf16.msra.mxu0 0
  %1348 = vmatprep.mubr.bf16.mxu0 0
  %1349 = vmatmul.mubr.bf16.gmra.mrb[0].mxu0 %v1232
  %v1350 = vpop.f32.mrb[0].mxu0
  %v1351 = vadd.f32 %v1269, %v1350
  %v1352 = vpop.f32.mrb[0].mxu0
  %v1353 = vadd.f32 %v1271, %v1352
  %v1354 = vpop.f32.mrb[0].mxu0
  %v1355 = vpop.f32.mrb[0].mxu0
  %1356 = vdwg.mxu0
  %1357 = vmatprep.subr.bf16.mxu0 %v453
  %1358 = vmatpush1.bf16.msra.mxu0 %v452
  %1359 = vmatprep.subr.bf16.mxu0 %v457
  %1360 = vmatpush1.bf16.msra.mxu0 %v456
  %1361 = vmatprep.subr.bf16.mxu0 %v461
  %1362 = vmatpush1.bf16.msra.mxu0 %v460
  %1363 = vmatprep.subr.bf16.mxu0 %v465
  %1364 = vmatpush1.bf16.msra.mxu0 %v464
  %1365 = vmatprep.subr.bf16.mxu0 %v469
  %1366 = vmatpush1.bf16.msra.mxu0 %v468
  %1367 = vmatprep.subr.bf16.mxu0 %v473
  %1368 = vmatpush1.bf16.msra.mxu0 %v472
  %1369 = vmatprep.subr.bf16.mxu0 %v477
  %1370 = vmatpush1.bf16.msra.mxu0 %v476
  %1371 = vmatprep.subr.bf16.mxu0 %v481
  %1372 = vmatpush1.bf16.msra.mxu0 %v480
  %1373 = vmatprep.subr.bf16.mxu0 0
  %1374 = vmatpush1.bf16.msra.mxu0 0
  %1375 = vmatprep.subr.bf16.mxu0 0
  %1376 = vmatpush1.bf16.msra.mxu0 0
  %1377 = vmatprep.subr.bf16.mxu0 0
  %1378 = vmatpush1.bf16.msra.mxu0 0
  %1379 = vmatprep.subr.bf16.mxu0 0
  %1380 = vmatpush1.bf16.msra.mxu0 0
  %1381 = vmatprep.subr.bf16.mxu0 0
  %1382 = vmatpush1.bf16.msra.mxu0 0
  %1383 = vmatprep.subr.bf16.mxu0 0
  %1384 = vmatpush1.bf16.msra.mxu0 0
  %1385 = vmatprep.subr.bf16.mxu0 0
  %1386 = vmatpush1.bf16.msra.mxu0 0
  %1387 = vmatprep.subr.bf16.mxu0 0
  %1388 = vmatpush1.bf16.msra.mxu0 0
  %1389 = vmatprep.mubr.bf16.mxu0 0
  %1390 = vmatmul.mubr.bf16.gmra.mrb[0].mxu0 %v1232
  %v1391 = vpop.f32.mrb[0].mxu0
  %v1392 = vadd.f32 %v1310, %v1391
  %v1393 = vpop.f32.mrb[0].mxu0
  %v1394 = vadd.f32 %v1312, %v1393
  %v1395 = vpop.f32.mrb[0].mxu0
  %v1396 = vpop.f32.mrb[0].mxu0
  %1397 = vdwg.mxu0
  %v1398 = vadd.f32 %v1351, %v601
  %v1399 = vadd.f32 %v1353, %v605
  %v1400 = vadd.f32 %v1392, %v609
  %v1401 = vadd.f32 %v1394, %v613
  %v1402 = vxor.u32 %v1398, 2147483648
  %v1403 = vmul.f32 %v1402, 1.442695
  %v1404 = vpow.pop %v1403
  %v1405 = vadd.f32 %v1404, 1.0
  %v1406 = vrcp.pop %v1405
  %v1407 = vmul.f32 1.0, %v1406
  %v1408 = vxor.u32 %v1399, 2147483648
  %v1409 = vmul.f32 %v1408, 1.442695
  %v1410 = vpow.pop %v1409
  %v1411 = vadd.f32 %v1410, 1.0
  %v1412 = vrcp.pop %v1411
  %v1413 = vmul.f32 1.0, %v1412
  %v1414 = vtanh.pop %v1400
  %v1415 = vxor.u32 %v1401, 2147483648
  %v1416 = vmul.f32 %v1415, 1.442695
  %v1417 = vpow.pop %v1416
  %v1418 = vadd.f32 %v1417, 1.0
  %v1419 = vrcp.pop %v1418
  %v1420 = vmul.f32 1.0, %v1419
  %v1421 = vmul.f32 %v1413, %v1228
  %v1422 = vmul.f32 %v1407, %v1414
  %v1423 = vadd.f32 %v1421, %v1422
  %v1424 = vtanh.pop %v1423
  %v1425 = vmul.f32 %v1420, %v1424
  %s1426 = scalar_lea.vmem %s0, 20
  %v1427 = vld [vmem:[%s1426] sm:$0xf]
  %v1428 = vpack.c.bf16 %v1425, %v1425
  %1429 = vmatprep.subr.bf16.mxu0 %v209
  %1430 = vmatpush1.bf16.msra.mxu0 %v208
  %1431 = vmatprep.subr.bf16.mxu0 %v213
  %1432 = vmatpush1.bf16.msra.mxu0 %v212
  %1433 = vmatprep.subr.bf16.mxu0 %v217
  %1434 = vmatpush1.bf16.msra.mxu0 %v216
  %1435 = vmatprep.subr.bf16.mxu0 %v221
  %1436 = vmatpush1.bf16.msra.mxu0 %v220
  %1437 = vmatprep.subr.bf16.mxu0 %v225
  %1438 = vmatpush1.bf16.msra.mxu0 %v224
  %1439 = vmatprep.subr.bf16.mxu0 %v229
  %1440 = vmatpush1.bf16.msra.mxu0 %v228
  %1441 = vmatprep.subr.bf16.mxu0 %v233
  %1442 = vmatpush1.bf16.msra.mxu0 %v232
  %1443 = vmatprep.subr.bf16.mxu0 %v237
  %1444 = vmatpush1.bf16.msra.mxu0 %v236
  %1445 = vmatprep.subr.bf16.mxu0 0
  %1446 = vmatpush1.bf16.msra.mxu0 0
  %1447 = vmatprep.subr.bf16.mxu0 0
  %1448 = vmatpush1.bf16.msra.mxu0 0
  %1449 = vmatprep.subr.bf16.mxu0 0
  %1450 = vmatpush1.bf16.msra.mxu0 0
  %1451 = vmatprep.subr.bf16.mxu0 0
  %1452 = vmatpush1.bf16.msra.mxu0 0
  %1453 = vmatprep.subr.bf16.mxu0 0
  %1454 = vmatpush1.bf16.msra.mxu0 0
  %1455 = vmatprep.subr.bf16.mxu0 0
  %1456 = vmatpush1.bf16.msra.mxu0 0
  %1457 = vmatprep.subr.bf16.mxu0 0
  %1458 = vmatpush1.bf16.msra.mxu0 0
  %1459 = vmatprep.subr.bf16.mxu0 0
  %1460 = vmatpush1.bf16.msra.mxu0 0
  %1461 = vmatprep.mubr.bf16.mxu0 0
  %1462 = vmatmul.mubr.bf16.gmra.mrb[0].mxu0 %v1428
  %v1463 = vpop.f32.mrb[0].mxu0
  %v1464 = vadd.f32 0.0, %v1463
  %v1465 = vpop.f32.mrb[0].mxu0
  %v1466 = vadd.f32 0.0, %v1465
  %v1467 = vpop.f32.mrb[0].mxu0
  %v1468 = vpop.f32.mrb[0].mxu0
  %1469 = vdwg.mxu0
  %1470 = vmatprep.subr.bf16.mxu0 %v211
  %1471 = vmatpush1.bf16.msra.mxu0 %v210
  %1472 = vmatprep.subr.bf16.mxu0 %v215
  %1473 = vmatpush1.bf16.msra.mxu0 %v214
  %1474 = vmatprep.subr.bf16.mxu0 %v219
  %1475 = vmatpush1.bf16.msra.mxu0 %v218
  %1476 = vmatprep.subr.bf16.mxu0 %v223
  %1477 = vmatpush1.bf16.msra.mxu0 %v222
  %1478 = vmatprep.subr.bf16.mxu0 %v227
  %1479 = vmatpush1.bf16.msra.mxu0 %v226
  %1480 = vmatprep.subr.bf16.mxu0 %v231
  %1481 = vmatpush1.bf16.msra.mxu0 %v230
  %1482 = vmatprep.subr.bf16.mxu0 %v235
  %1483 = vmatpush1.bf16.msra.mxu0 %v234
  %1484 = vmatprep.subr.bf16.mxu0 %v239
  %1485 = vmatpush1.bf16.msra.mxu0 %v238
  %1486 = vmatprep.subr.bf16.mxu0 0
  %1487 = vmatpush1.bf16.msra.mxu0 0
  %1488 = vmatprep.subr.bf16.mxu0 0
  %1489 = vmatpush1.bf16.msra.mxu0 0
  %1490 = vmatprep.subr.bf16.mxu0 0
  %1491 = vmatpush1.bf16.msra.mxu0 0
  %1492 = vmatprep.subr.bf16.mxu0 0
  %1493 = vmatpush1.bf16.msra.mxu0 0
  %1494 = vmatprep.subr.bf16.mxu0 0
  %1495 = vmatpush1.bf16.msra.mxu0 0
  %1496 = vmatprep.subr.bf16.mxu0 0
  %1497 = vmatpush1.bf16.msra.mxu0 0
  %1498 = vmatprep.subr.bf16.mxu0 0
  %1499 = vmatpush1.bf16.msra.mxu0 0
  %1500 = vmatprep.subr.bf16.mxu0 0
  %1501 = vmatpush1.bf16.msra.mxu0 0
  %1502 = vmatprep.mubr.bf16.mxu0 0
  %1503 = vmatmul.mubr.bf16.gmra.mrb[0].mxu0 %v1428
  %v1504 = vpop.f32.mrb[0].mxu0
  %v1505 = vadd.f32 0.0, %v1504
  %v1506 = vpop.f32.mrb[0].mxu0
  %v1507 = vadd.f32 0.0, %v1506
  %v1508 = vpop.f32.mrb[0].mxu0
  %v1509 = vpop.f32.mrb[0].mxu0
  %1510 = vdwg.mxu0
  %1511 = vmatprep.subr.bf16.mxu0 %v451
  %1512 = vmatpush1.bf16.msra.mxu0 %v450
  %1513 = vmatprep.subr.bf16.mxu0 %v455
  %1514 = vmatpush1.bf16.msra.mxu0 %v454
  %1515 = vmatprep.subr.bf16.mxu0 %v459
  %1516 = vmatpush1.bf16.msra.mxu0 %v458
  %1517 = vmatprep.subr.bf16.mxu0 %v463
  %1518 = vmatpush1.bf16.msra.mxu0 %v462
  %1519 = vmatprep.subr.bf16.mxu0 %v467
  %1520 = vmatpush1.bf16.msra.mxu0 %v466
  %1521 = vmatprep.subr.bf16.mxu0 %v471
  %1522 = vmatpush1.bf16.msra.mxu0 %v470
  %1523 = vmatprep.subr.bf16.mxu0 %v475
  %1524 = vmatpush1.bf16.msra.mxu0 %v474
  %1525 = vmatprep.subr.bf16.mxu0 %v479
  %1526 = vmatpush1.bf16.msra.mxu0 %v478
  %1527 = vmatprep.subr.bf16.mxu0 0
  %1528 = vmatpush1.bf16.msra.mxu0 0
  %1529 = vmatprep.subr.bf16.mxu0 0
  %1530 = vmatpush1.bf16.msra.mxu0 0
  %1531 = vmatprep.subr.bf16.mxu0 0
  %1532 = vmatpush1.bf16.msra.mxu0 0
  %1533 = vmatprep.subr.bf16.mxu0 0
  %1534 = vmatpush1.bf16.msra.mxu0 0
  %1535 = vmatprep.subr.bf16.mxu0 0
  %1536 = vmatpush1.bf16.msra.mxu0 0
  %1537 = vmatprep.subr.bf16.mxu0 0
  %1538 = vmatpush1.bf16.msra.mxu0 0
  %1539 = vmatprep.subr.bf16.mxu0 0
  %1540 = vmatpush1.bf16.msra.mxu0 0
  %1541 = vmatprep.subr.bf16.mxu0 0
  %1542 = vmatpush1.bf16.msra.mxu0 0
  %1543 = vmatprep.mubr.bf16.mxu0 0
  %1544 = vmatmul.mubr.bf16.gmra.mrb[0].mxu0 %v1427
  %v1545 = vpop.f32.mrb[0].mxu0
  %v1546 = vadd.f32 %v1464, %v1545
  %v1547 = vpop.f32.mrb[0].mxu0
  %v1548 = vadd.f32 %v1466, %v1547
  %v1549 = vpop.f32.mrb[0].mxu0
  %v1550 = vpop.f32.mrb[0].mxu0
  %1551 = vdwg.mxu0
  %1552 = vmatprep.subr.bf16.mxu0 %v453
  %1553 = vmatpush1.bf16.msra.mxu0 %v452
  %1554 = vmatprep.subr.bf16.mxu0 %v457
  %1555 = vmatpush1.bf16.msra.mxu0 %v456
  %1556 = vmatprep.subr.bf16.mxu0 %v461
  %1557 = vmatpush1.bf16.msra.mxu0 %v460
  %1558 = vmatprep.subr.bf16.mxu0 %v465
  %1559 = vmatpush1.bf16.msra.mxu0 %v464
  %1560 = vmatprep.subr.bf16.mxu0 %v469
  %1561 = vmatpush1.bf16.msra.mxu0 %v468
  %1562 = vmatprep.subr.bf16.mxu0 %v473
  %1563 = vmatpush1.bf16.msra.mxu0 %v472
  %1564 = vmatprep.subr.bf16.mxu0 %v477
  %1565 = vmatpush1.bf16.msra.mxu0 %v476
  %1566 = vmatprep.subr.bf16.mxu0 %v481
  %1567 = vmatpush1.bf16.msra.mxu0 %v480
  %1568 = vmatprep.subr.bf16.mxu0 0
  %1569 = vmatpush1.bf16.msra.mxu0 0
  %1570 = vmatprep.subr.bf16.mxu0 0
  %1571 = vmatpush1.bf16.msra.mxu0 0
  %1572 = vmatprep.subr.bf16.mxu0 0
  %1573 = vmatpush1.bf16.msra.mxu0 0
  %1574 = vmatprep.subr.bf16.mxu0 0
  %1575 = vmatpush1.bf16.msra.mxu0 0
  %1576 = vmatprep.subr.bf16.mxu0 0
  %1577 = vmatpush1.bf16.msra.mxu0 0
  %1578 = vmatprep.subr.bf16.mxu0 0
  %1579 = vmatpush1.bf16.msra.mxu0 0
  %1580 = vmatprep.subr.bf16.mxu0 0
  %1581 = vmatpush1.bf16.msra.mxu0 0
  %1582 = vmatprep.subr.bf16.mxu0 0
  %1583 = vmatpush1.bf16.msra.mxu0 0
  %1584 = vmatprep.mubr.bf16.mxu0 0
  %1585 = vmatmul.mubr.bf16.gmra.mrb[0].mxu0 %v1427
  %v1586 = vpop.f32.mrb[0].mxu0
  %v1587 = vadd.f32 %v1505, %v1586
  %v1588 = vpop.f32.mrb[0].mxu0
  %v1589 = vadd.f32 %v1507, %v1588
  %v1590 = vpop.f32.mrb[0].mxu0
  %v1591 = vpop.f32.mrb[0].mxu0
  %1592 = vdwg.mxu0
  %v1593 = vadd.f32 %v1546, %v601
  %v1594 = vadd.f32 %v1548, %v605
  %v1595 = vadd.f32 %v1587, %v609
  %v1596 = vadd.f32 %v1589, %v613
  %v1597 = vxor.u32 %v1593, 2147483648
  %v1598 = vmul.f32 %v1597, 1.442695
  %v1599 = vpow.pop %v1598
  %v1600 = vadd.f32 %v1599, 1.0
  %v1601 = vrcp.pop %v1600
  %v1602 = vmul.f32 1.0, %v1601
  %v1603 = vxor.u32 %v1594, 2147483648
  %v1604 = vmul.f32 %v1603, 1.442695
  %v1605 = vpow.pop %v1604
  %v1606 = vadd.f32 %v1605, 1.0
  %v1607 = vrcp.pop %v1606
  %v1608 = vmul.f32 1.0, %v1607
  %v1609 = vtanh.pop %v1595
  %v1610 = vxor.u32 %v1596, 2147483648
  %v1611 = vmul.f32 %v1610, 1.442695
  %v1612 = vpow.pop %v1611
  %v1613 = vadd.f32 %v1612, 1.0
  %v1614 = vrcp.pop %v1613
  %v1615 = vmul.f32 1.0, %v1614
  %v1616 = vmul.f32 %v1608, %v1423
  %v1617 = vmul.f32 %v1602, %v1609
  %v1618 = vadd.f32 %v1616, %v1617
  %v1619 = vtanh.pop %v1618
  %v1620 = vmul.f32 %v1615, %v1619
  %s1621 = scalar_lea.vmem %s0, 24
  %v1622 = vld [vmem:[%s1621] sm:$0xf]
  %v1623 = vpack.c.bf16 %v1620, %v1620
  %1624 = vmatprep.subr.bf16.mxu0 %v209
  %1625 = vmatpush1.bf16.msra.mxu0 %v208
  %1626 = vmatprep.subr.bf16.mxu0 %v213
  %1627 = vmatpush1.bf16.msra.mxu0 %v212
  %1628 = vmatprep.subr.bf16.mxu0 %v217
  %1629 = vmatpush1.bf16.msra.mxu0 %v216
  %1630 = vmatprep.subr.bf16.mxu0 %v221
  %1631 = vmatpush1.bf16.msra.mxu0 %v220
  %1632 = vmatprep.subr.bf16.mxu0 %v225
  %1633 = vmatpush1.bf16.msra.mxu0 %v224
  %1634 = vmatprep.subr.bf16.mxu0 %v229
  %1635 = vmatpush1.bf16.msra.mxu0 %v228
  %1636 = vmatprep.subr.bf16.mxu0 %v233
  %1637 = vmatpush1.bf16.msra.mxu0 %v232
  %1638 = vmatprep.subr.bf16.mxu0 %v237
  %1639 = vmatpush1.bf16.msra.mxu0 %v236
  %1640 = vmatprep.subr.bf16.mxu0 0
  %1641 = vmatpush1.bf16.msra.mxu0 0
  %1642 = vmatprep.subr.bf16.mxu0 0
  %1643 = vmatpush1.bf16.msra.mxu0 0
  %1644 = vmatprep.subr.bf16.mxu0 0
  %1645 = vmatpush1.bf16.msra.mxu0 0
  %1646 = vmatprep.subr.bf16.mxu0 0
  %1647 = vmatpush1.bf16.msra.mxu0 0
  %1648 = vmatprep.subr.bf16.mxu0 0
  %1649 = vmatpush1.bf16.msra.mxu0 0
  %1650 = vmatprep.subr.bf16.mxu0 0
  %1651 = vmatpush1.bf16.msra.mxu0 0
  %1652 = vmatprep.subr.bf16.mxu0 0
  %1653 = vmatpush1.bf16.msra.mxu0 0
  %1654 = vmatprep.subr.bf16.mxu0 0
  %1655 = vmatpush1.bf16.msra.mxu0 0
  %1656 = vmatprep.mubr.bf16.mxu0 0
  %1657 = vmatmul.mubr.bf16.gmra.mrb[0].mxu0 %v1623
  %v1658 = vpop.f32.mrb[0].mxu0
  %v1659 = vadd.f32 0.0, %v1658
  %v1660 = vpop.f32.mrb[0].mxu0
  %v1661 = vadd.f32 0.0, %v1660
  %v1662 = vpop.f32.mrb[0].mxu0
  %v1663 = vpop.f32.mrb[0].mxu0
  %1664 = vdwg.mxu0
  %1665 = vmatprep.subr.bf16.mxu0 %v211
  %1666 = vmatpush1.bf16.msra.mxu0 %v210
  %1667 = vmatprep.subr.bf16.mxu0 %v215
  %1668 = vmatpush1.bf16.msra.mxu0 %v214
  %1669 = vmatprep.subr.bf16.mxu0 %v219
  %1670 = vmatpush1.bf16.msra.mxu0 %v218
  %1671 = vmatprep.subr.bf16.mxu0 %v223
  %1672 = vmatpush1.bf16.msra.mxu0 %v222
  %1673 = vmatprep.subr.bf16.mxu0 %v227
  %1674 = vmatpush1.bf16.msra.mxu0 %v226
  %1675 = vmatprep.subr.bf16.mxu0 %v231
  %1676 = vmatpush1.bf16.msra.mxu0 %v230
  %1677 = vmatprep.subr.bf16.mxu0 %v235
  %1678 = vmatpush1.bf16.msra.mxu0 %v234
  %1679 = vmatprep.subr.bf16.mxu0 %v239
  %1680 = vmatpush1.bf16.msra.mxu0 %v238
  %1681 = vmatprep.subr.bf16.mxu0 0
  %1682 = vmatpush1.bf16.msra.mxu0 0
  %1683 = vmatprep.subr.bf16.mxu0 0
  %1684 = vmatpush1.bf16.msra.mxu0 0
  %1685 = vmatprep.subr.bf16.mxu0 0
  %1686 = vmatpush1.bf16.msra.mxu0 0
  %1687 = vmatprep.subr.bf16.mxu0 0
  %1688 = vmatpush1.bf16.msra.mxu0 0
  %1689 = vmatprep.subr.bf16.mxu0 0
  %1690 = vmatpush1.bf16.msra.mxu0 0
  %1691 = vmatprep.subr.bf16.mxu0 0
  %1692 = vmatpush1.bf16.msra.mxu0 0
  %1693 = vmatprep.subr.bf16.mxu0 0
  %1694 = vmatpush1.bf16.msra.mxu0 0
  %1695 = vmatprep.subr.bf16.mxu0 0
  %1696 = vmatpush1.bf16.msra.mxu0 0
  %1697 = vmatprep.mubr.bf16.mxu0 0
  %1698 = vmatmul.mubr.bf16.gmra.mrb[0].mxu0 %v1623
  %v1699 = vpop.f32.mrb[0].mxu0
  %v1700 = vadd.f32 0.0, %v1699
  %v1701 = vpop.f32.mrb[0].mxu0
  %v1702 = vadd.f32 0.0, %v1701
  %v1703 = vpop.f32.mrb[0].mxu0
  %v1704 = vpop.f32.mrb[0].mxu0
  %1705 = vdwg.mxu0
  %1706 = vmatprep.subr.bf16.mxu0 %v451
  %1707 = vmatpush1.bf16.msra.mxu0 %v450
  %1708 = vmatprep.subr.bf16.mxu0 %v455
  %1709 = vmatpush1.bf16.msra.mxu0 %v454
  %1710 = vmatprep.subr.bf16.mxu0 %v459
  %1711 = vmatpush1.bf16.msra.mxu0 %v458
  %1712 = vmatprep.subr.bf16.mxu0 %v463
  %1713 = vmatpush1.bf16.msra.mxu0 %v462
  %1714 = vmatprep.subr.bf16.mxu0 %v467
  %1715 = vmatpush1.bf16.msra.mxu0 %v466
  %1716 = vmatprep.subr.bf16.mxu0 %v471
  %1717 = vmatpush1.bf16.msra.mxu0 %v470
  %1718 = vmatprep.subr.bf16.mxu0 %v475
  %1719 = vmatpush1.bf16.msra.mxu0 %v474
  %1720 = vmatprep.subr.bf16.mxu0 %v479
  %1721 = vmatpush1.bf16.msra.mxu0 %v478
  %1722 = vmatprep.subr.bf16.mxu0 0
  %1723 = vmatpush1.bf16.msra.mxu0 0
  %1724 = vmatprep.subr.bf16.mxu0 0
  %1725 = vmatpush1.bf16.msra.mxu0 0
  %1726 = vmatprep.subr.bf16.mxu0 0
  %1727 = vmatpush1.bf16.msra.mxu0 0
  %1728 = vmatprep.subr.bf16.mxu0 0
  %1729 = vmatpush1.bf16.msra.mxu0 0
  %1730 = vmatprep.subr.bf16.mxu0 0
  %1731 = vmatpush1.bf16.msra.mxu0 0
  %1732 = vmatprep.subr.bf16.mxu0 0
  %1733 = vmatpush1.bf16.msra.mxu0 0
  %1734 = vmatprep.subr.bf16.mxu0 0
  %1735 = vmatpush1.bf16.msra.mxu0 0
  %1736 = vmatprep.subr.bf16.mxu0 0
  %1737 = vmatpush1.bf16.msra.mxu0 0
  %1738 = vmatprep.mubr.bf16.mxu0 0
  %1739 = vmatmul.mubr.bf16.gmra.mrb[0].mxu0 %v1622
  %v1740 = vpop.f32.mrb[0].mxu0
  %v1741 = vadd.f32 %v1659, %v1740
  %v1742 = vpop.f32.mrb[0].mxu0
  %v1743 = vadd.f32 %v1661, %v1742
  %v1744 = vpop.f32.mrb[0].mxu0
  %v1745 = vpop.f32.mrb[0].mxu0
  %1746 = vdwg.mxu0
  %1747 = vmatprep.subr.bf16.mxu0 %v453
  %1748 = vmatpush1.bf16.msra.mxu0 %v452
  %1749 = vmatprep.subr.bf16.mxu0 %v457
  %1750 = vmatpush1.bf16.msra.mxu0 %v456
  %1751 = vmatprep.subr.bf16.mxu0 %v461
  %1752 = vmatpush1.bf16.msra.mxu0 %v460
  %1753 = vmatprep.subr.bf16.mxu0 %v465
  %1754 = vmatpush1.bf16.msra.mxu0 %v464
  %1755 = vmatprep.subr.bf16.mxu0 %v469
  %1756 = vmatpush1.bf16.msra.mxu0 %v468
  %1757 = vmatprep.subr.bf16.mxu0 %v473
  %1758 = vmatpush1.bf16.msra.mxu0 %v472
  %1759 = vmatprep.subr.bf16.mxu0 %v477
  %1760 = vmatpush1.bf16.msra.mxu0 %v476
  %1761 = vmatprep.subr.bf16.mxu0 %v481
  %1762 = vmatpush1.bf16.msra.mxu0 %v480
  %1763 = vmatprep.subr.bf16.mxu0 0
  %1764 = vmatpush1.bf16.msra.mxu0 0
  %1765 = vmatprep.subr.bf16.mxu0 0
  %1766 = vmatpush1.bf16.msra.mxu0 0
  %1767 = vmatprep.subr.bf16.mxu0 0
  %1768 = vmatpush1.bf16.msra.mxu0 0
  %1769 = vmatprep.subr.bf16.mxu0 0
  %1770 = vmatpush1.bf16.msra.mxu0 0
  %1771 = vmatprep.subr.bf16.mxu0 0
  %1772 = vmatpush1.bf16.msra.mxu0 0
  %1773 = vmatprep.subr.bf16.mxu0 0
  %1774 = vmatpush1.bf16.msra.mxu0 0
  %1775 = vmatprep.subr.bf16.mxu0 0
  %1776 = vmatpush1.bf16.msra.mxu0 0
  %1777 = vmatprep.subr.bf16.mxu0 0
  %1778 = vmatpush1.bf16.msra.mxu0 0
  %1779 = vmatprep.mubr.bf16.mxu0 0
  %1780 = vmatmul.mubr.bf16.gmra.mrb[0].mxu0 %v1622
  %v1781 = vpop.f32.mrb[0].mxu0
  %v1782 = vadd.f32 %v1700, %v1781
  %v1783 = vpop.f32.mrb[0].mxu0
  %v1784 = vadd.f32 %v1702, %v1783
  %v1785 = vpop.f32.mrb[0].mxu0
  %v1786 = vpop.f32.mrb[0].mxu0
  %1787 = vdwg.mxu0
  %v1788 = vadd.f32 %v1741, %v601
  %v1789 = vadd.f32 %v1743, %v605
  %v1790 = vadd.f32 %v1782, %v609
  %v1791 = vadd.f32 %v1784, %v613
  %v1792 = vxor.u32 %v1788, 2147483648
  %v1793 = vmul.f32 %v1792, 1.442695
  %v1794 = vpow.pop %v1793
  %v1795 = vadd.f32 %v1794, 1.0
  %v1796 = vrcp.pop %v1795
  %v1797 = vmul.f32 1.0, %v1796
  %v1798 = vxor.u32 %v1789, 2147483648
  %v1799 = vmul.f32 %v1798, 1.442695
  %v1800 = vpow.pop %v1799
  %v1801 = vadd.f32 %v1800, 1.0
  %v1802 = vrcp.pop %v1801
  %v1803 = vmul.f32 1.0, %v1802
  %v1804 = vtanh.pop %v1790
  %v1805 = vxor.u32 %v1791, 2147483648
  %v1806 = vmul.f32 %v1805, 1.442695
  %v1807 = vpow.pop %v1806
  %v1808 = vadd.f32 %v1807, 1.0
  %v1809 = vrcp.pop %v1808
  %v1810 = vmul.f32 1.0, %v1809
  %v1811 = vmul.f32 %v1803, %v1618
  %v1812 = vmul.f32 %v1797, %v1804
  %v1813 = vadd.f32 %v1811, %v1812
  %v1814 = vtanh.pop %v1813
  %v1815 = vmul.f32 %v1810, %v1814
  %s1816 = scalar_lea.vmem %s0, 28
  %v1817 = vld [vmem:[%s1816] sm:$0xf]
  %v1818 = vpack.c.bf16 %v1815, %v1815
  %1819 = vmatprep.subr.bf16.mxu0 %v209
  %1820 = vmatpush1.bf16.msra.mxu0 %v208
  %1821 = vmatprep.subr.bf16.mxu0 %v213
  %1822 = vmatpush1.bf16.msra.mxu0 %v212
  %1823 = vmatprep.subr.bf16.mxu0 %v217
  %1824 = vmatpush1.bf16.msra.mxu0 %v216
  %1825 = vmatprep.subr.bf16.mxu0 %v221
  %1826 = vmatpush1.bf16.msra.mxu0 %v220
  %1827 = vmatprep.subr.bf16.mxu0 %v225
  %1828 = vmatpush1.bf16.msra.mxu0 %v224
  %1829 = vmatprep.subr.bf16.mxu0 %v229
  %1830 = vmatpush1.bf16.msra.mxu0 %v228
  %1831 = vmatprep.subr.bf16.mxu0 %v233
  %1832 = vmatpush1.bf16.msra.mxu0 %v232
  %1833 = vmatprep.subr.bf16.mxu0 %v237
  %1834 = vmatpush1.bf16.msra.mxu0 %v236
  %1835 = vmatprep.subr.bf16.mxu0 0
  %1836 = vmatpush1.bf16.msra.mxu0 0
  %1837 = vmatprep.subr.bf16.mxu0 0
  %1838 = vmatpush1.bf16.msra.mxu0 0
  %1839 = vmatprep.subr.bf16.mxu0 0
  %1840 = vmatpush1.bf16.msra.mxu0 0
  %1841 = vmatprep.subr.bf16.mxu0 0
  %1842 = vmatpush1.bf16.msra.mxu0 0
  %1843 = vmatprep.subr.bf16.mxu0 0
  %1844 = vmatpush1.bf16.msra.mxu0 0
  %1845 = vmatprep.subr.bf16.mxu0 0
  %1846 = vmatpush1.bf16.msra.mxu0 0
  %1847 = vmatprep.subr.bf16.mxu0 0
  %1848 = vmatpush1.bf16.msra.mxu0 0
  %1849 = vmatprep.subr.bf16.mxu0 0
  %1850 = vmatpush1.bf16.msra.mxu0 0
  %1851 = vmatprep.mubr.bf16.mxu0 0
  %1852 = vmatmul.mubr.bf16.gmra.mrb[0].mxu0 %v1818
  %v1853 = vpop.f32.mrb[0].mxu0
  %v1854 = vadd.f32 0.0, %v1853
  %v1855 = vpop.f32.mrb[0].mxu0
  %v1856 = vadd.f32 0.0, %v1855
  %v1857 = vpop.f32.mrb[0].mxu0
  %v1858 = vpop.f32.mrb[0].mxu0
  %1859 = vdwg.mxu0
  %1860 = vmatprep.subr.bf16.mxu0 %v211
  %1861 = vmatpush1.bf16.msra.mxu0 %v210
  %1862 = vmatprep.subr.bf16.mxu0 %v215
  %1863 = vmatpush1.bf16.msra.mxu0 %v214
  %1864 = vmatprep.subr.bf16.mxu0 %v219
  %1865 = vmatpush1.bf16.msra.mxu0 %v218
  %1866 = vmatprep.subr.bf16.mxu0 %v223
  %1867 = vmatpush1.bf16.msra.mxu0 %v222
  %1868 = vmatprep.subr.bf16.mxu0 %v227
  %1869 = vmatpush1.bf16.msra.mxu0 %v226
  %1870 = vmatprep.subr.bf16.mxu0 %v231
  %1871 = vmatpush1.bf16.msra.mxu0 %v230
  %1872 = vmatprep.subr.bf16.mxu0 %v235
  %1873 = vmatpush1.bf16.msra.mxu0 %v234
  %1874 = vmatprep.subr.bf16.mxu0 %v239
  %1875 = vmatpush1.bf16.msra.mxu0 %v238
  %1876 = vmatprep.subr.bf16.mxu0 0
  %1877 = vmatpush1.bf16.msra.mxu0 0
  %1878 = vmatprep.subr.bf16.mxu0 0
  %1879 = vmatpush1.bf16.msra.mxu0 0
  %1880 = vmatprep.subr.bf16.mxu0 0
  %1881 = vmatpush1.bf16.msra.mxu0 0
  %1882 = vmatprep.subr.bf16.mxu0 0
  %1883 = vmatpush1.bf16.msra.mxu0 0
  %1884 = vmatprep.subr.bf16.mxu0 0
  %1885 = vmatpush1.bf16.msra.mxu0 0
  %1886 = vmatprep.subr.bf16.mxu0 0
  %1887 = vmatpush1.bf16.msra.mxu0 0
  %1888 = vmatprep.subr.bf16.mxu0 0
  %1889 = vmatpush1.bf16.msra.mxu0 0
  %1890 = vmatprep.subr.bf16.mxu0 0
  %1891 = vmatpush1.bf16.msra.mxu0 0
  %1892 = vmatprep.mubr.bf16.mxu0 0
  %1893 = vmatmul.mubr.bf16.gmra.mrb[0].mxu0 %v1818
  %v1894 = vpop.f32.mrb[0].mxu0
  %v1895 = vadd.f32 0.0, %v1894
  %v1896 = vpop.f32.mrb[0].mxu0
  %v1897 = vadd.f32 0.0, %v1896
  %v1898 = vpop.f32.mrb[0].mxu0
  %v1899 = vpop.f32.mrb[0].mxu0
  %1900 = vdwg.mxu0
  %1901 = vmatprep.subr.bf16.mxu0 %v451
  %1902 = vmatpush1.bf16.msra.mxu0 %v450
  %1903 = vmatprep.subr.bf16.mxu0 %v455
  %1904 = vmatpush1.bf16.msra.mxu0 %v454
  %1905 = vmatprep.subr.bf16.mxu0 %v459
  %1906 = vmatpush1.bf16.msra.mxu0 %v458
  %1907 = vmatprep.subr.bf16.mxu0 %v463
  %1908 = vmatpush1.bf16.msra.mxu0 %v462
  %1909 = vmatprep.subr.bf16.mxu0 %v467
  %1910 = vmatpush1.bf16.msra.mxu0 %v466
  %1911 = vmatprep.subr.bf16.mxu0 %v471
  %1912 = vmatpush1.bf16.msra.mxu0 %v470
  %1913 = vmatprep.subr.bf16.mxu0 %v475
  %1914 = vmatpush1.bf16.msra.mxu0 %v474
  %1915 = vmatprep.subr.bf16.mxu0 %v479
  %1916 = vmatpush1.bf16.msra.mxu0 %v478
  %1917 = vmatprep.subr.bf16.mxu0 0
  %1918 = vmatpush1.bf16.msra.mxu0 0
  %1919 = vmatprep.subr.bf16.mxu0 0
  %1920 = vmatpush1.bf16.msra.mxu0 0
  %1921 = vmatprep.subr.bf16.mxu0 0
  %1922 = vmatpush1.bf16.msra.mxu0 0
  %1923 = vmatprep.subr.bf16.mxu0 0
  %1924 = vmatpush1.bf16.msra.mxu0 0
  %1925 = vmatprep.subr.bf16.mxu0 0
  %1926 = vmatpush1.bf16.msra.mxu0 0
  %1927 = vmatprep.subr.bf16.mxu0 0
  %1928 = vmatpush1.bf16.msra.mxu0 0
  %1929 = vmatprep.subr.bf16.mxu0 0
  %1930 = vmatpush1.bf16.msra.mxu0 0
  %1931 = vmatprep.subr.bf16.mxu0 0
  %1932 = vmatpush1.bf16.msra.mxu0 0
  %1933 = vmatprep.mubr.bf16.mxu0 0
  %1934 = vmatmul.mubr.bf16.gmra.mrb[0].mxu0 %v1817
  %v1935 = vpop.f32.mrb[0].mxu0
  %v1936 = vadd.f32 %v1854, %v1935
  %v1937 = vpop.f32.mrb[0].mxu0
  %v1938 = vadd.f32 %v1856, %v1937
  %v1939 = vpop.f32.mrb[0].mxu0
  %v1940 = vpop.f32.mrb[0].mxu0
  %1941 = vdwg.mxu0
  %1942 = vmatprep.subr.bf16.mxu0 %v453
  %1943 = vmatpush1.bf16.msra.mxu0 %v452
  %1944 = vmatprep.subr.bf16.mxu0 %v457
  %1945 = vmatpush1.bf16.msra.mxu0 %v456
  %1946 = vmatprep.subr.bf16.mxu0 %v461
  %1947 = vmatpush1.bf16.msra.mxu0 %v460
  %1948 = vmatprep.subr.bf16.mxu0 %v465
  %1949 = vmatpush1.bf16.msra.mxu0 %v464
  %1950 = vmatprep.subr.bf16.mxu0 %v469
  %1951 = vmatpush1.bf16.msra.mxu0 %v468
  %1952 = vmatprep.subr.bf16.mxu0 %v473
  %1953 = vmatpush1.bf16.msra.mxu0 %v472
  %1954 = vmatprep.subr.bf16.mxu0 %v477
  %1955 = vmatpush1.bf16.msra.mxu0 %v476
  %1956 = vmatprep.subr.bf16.mxu0 %v481
  %1957 = vmatpush1.bf16.msra.mxu0 %v480
  %1958 = vmatprep.subr.bf16.mxu0 0
  %1959 = vmatpush1.bf16.msra.mxu0 0
  %1960 = vmatprep.subr.bf16.mxu0 0
  %1961 = vmatpush1.bf16.msra.mxu0 0
  %1962 = vmatprep.subr.bf16.mxu0 0
  %1963 = vmatpush1.bf16.msra.mxu0 0
  %1964 = vmatprep.subr.bf16.mxu0 0
  %1965 = vmatpush1.bf16.msra.mxu0 0
  %1966 = vmatprep.subr.bf16.mxu0 0
  %1967 = vmatpush1.bf16.msra.mxu0 0
  %1968 = vmatprep.subr.bf16.mxu0 0
  %1969 = vmatpush1.bf16.msra.mxu0 0
  %1970 = vmatprep.subr.bf16.mxu0 0
  %1971 = vmatpush1.bf16.msra.mxu0 0
  %1972 = vmatprep.subr.bf16.mxu0 0
  %1973 = vmatpush1.bf16.msra.mxu0 0
  %1974 = vmatprep.mubr.bf16.mxu0 0
  %1975 = vmatmul.mubr.bf16.gmra.mrb[0].mxu0 %v1817
  %v1976 = vpop.f32.mrb[0].mxu0
  %v1977 = vadd.f32 %v1895, %v1976
  %v1978 = vpop.f32.mrb[0].mxu0
  %v1979 = vadd.f32 %v1897, %v1978
  %v1980 = vpop.f32.mrb[0].mxu0
  %v1981 = vpop.f32.mrb[0].mxu0
  %1982 = vdwg.mxu0
  %v1983 = vadd.f32 %v1936, %v601
  %v1984 = vadd.f32 %v1938, %v605
  %v1985 = vadd.f32 %v1977, %v609
  %v1986 = vadd.f32 %v1979, %v613
  %v1987 = vxor.u32 %v1983, 2147483648
  %v1988 = vmul.f32 %v1987, 1.442695
  %v1989 = vpow.pop %v1988
  %v1990 = vadd.f32 %v1989, 1.0
  %v1991 = vrcp.pop %v1990
  %v1992 = vmul.f32 1.0, %v1991
  %v1993 = vxor.u32 %v1984, 2147483648
  %v1994 = vmul.f32 %v1993, 1.442695
  %v1995 = vpow.pop %v1994
  %v1996 = vadd.f32 %v1995, 1.0
  %v1997 = vrcp.pop %v1996
  %v1998 = vmul.f32 1.0, %v1997
  %v1999 = vtanh.pop %v1985
  %v2000 = vxor.u32 %v1986, 2147483648
  %v2001 = vmul.f32 %v2000, 1.442695
  %v2002 = vpow.pop %v2001
  %v2003 = vadd.f32 %v2002, 1.0
  %v2004 = vrcp.pop %v2003
  %v2005 = vmul.f32 1.0, %v2004
  %v2006 = vmul.f32 %v1998, %v1813
  %v2007 = vmul.f32 %v1992, %v1999
  %v2008 = vadd.f32 %v2006, %v2007
  %v2009 = vtanh.pop %v2008
  %v2010 = vmul.f32 %v2005, %v2009
  %v2011 = vld [vmem:[%s4] sm:$0xff]
  %v2012 = vld [vmem:[%s4 + $0x8] sm:$0xff]
  %v2013 = vld [vmem:[%s4 + $0x10] sm:$0xff]
  %v2014 = vld [vmem:[%s4 + $0x18] sm:$0xff]
  %v2015 = vld [vmem:[%s4 + $0x20] sm:$0xff]
  %v2016 = vld [vmem:[%s4 + $0x28] sm:$0xff]
  %v2017 = vld [vmem:[%s4 + $0x30] sm:$0xff]
  %v2018 = vld [vmem:[%s4 + $0x38] sm:$0xff]
  %v2019 = vld [vmem:[%s4 + $0x40] sm:$0xff]
  %v2020 = vld [vmem:[%s4 + $0x48] sm:$0xff]
  %v2021 = vld [vmem:[%s4 + $0x50] sm:$0xff]
  %v2022 = vld [vmem:[%s4 + $0x58] sm:$0xff]
  %v2023 = vld [vmem:[%s4 + $0x60] sm:$0xff]
  %v2024 = vld [vmem:[%s4 + $0x68] sm:$0xff]
  %v2025 = vld [vmem:[%s4 + $0x70] sm:$0xff]
  %v2026 = vld [vmem:[%s4 + $0x78] sm:$0xff]
  %v2027 = vld [vmem:[%s4 + $0x80] sm:$0xff]
  %v2028 = vld [vmem:[%s4 + $0x88] sm:$0xff]
  %v2029 = vld [vmem:[%s4 + $0x90] sm:$0xff]
  %v2030 = vld [vmem:[%s4 + $0x98] sm:$0xff]
  %v2031 = vld [vmem:[%s4 + $0xa0] sm:$0xff]
  %v2032 = vld [vmem:[%s4 + $0xa8] sm:$0xff]
  %v2033 = vld [vmem:[%s4 + $0xb0] sm:$0xff]
  %v2034 = vld [vmem:[%s4 + $0xb8] sm:$0xff]
  %v2035 = vld [vmem:[%s4 + $0xc0] sm:$0xff]
  %v2036 = vld [vmem:[%s4 + $0xc8] sm:$0xff]
  %v2037 = vld [vmem:[%s4 + $0xd0] sm:$0xff]
  %v2038 = vld [vmem:[%s4 + $0xd8] sm:$0xff]
  %v2039 = vld [vmem:[%s4 + $0xe0] sm:$0xff]
  %v2040 = vld [vmem:[%s4 + $0xe8] sm:$0xff]
  %v2041 = vld [vmem:[%s4 + $0xf0] sm:$0xff]
  %v2042 = vld [vmem:[%s4 + $0xf8] sm:$0xff]
  %v2043 = vld [vmem:[%s5] sm:$0xff]
  %v2044 = vld [vmem:[%s5 + $0x8] sm:$0xff]
  %v2045 = vld [vmem:[%s5 + $0x10] sm:$0xff]
  %v2046 = vld [vmem:[%s5 + $0x18] sm:$0xff]
  %v2047 = vld [vmem:[%s5 + $0x20] sm:$0xff]
  %v2048 = vld [vmem:[%s5 + $0x28] sm:$0xff]
  %v2049 = vld [vmem:[%s5 + $0x30] sm:$0xff]
  %v2050 = vld [vmem:[%s5 + $0x38] sm:$0xff]
  %v2051 = vld [vmem:[%s5 + $0x40] sm:$0xff]
  %v2052 = vld [vmem:[%s5 + $0x48] sm:$0xff]
  %v2053 = vld [vmem:[%s5 + $0x50] sm:$0xff]
  %v2054 = vld [vmem:[%s5 + $0x58] sm:$0xff]
  %v2055 = vld [vmem:[%s5 + $0x60] sm:$0xff]
  %v2056 = vld [vmem:[%s5 + $0x68] sm:$0xff]
  %v2057 = vld [vmem:[%s5 + $0x70] sm:$0xff]
  %v2058 = vld [vmem:[%s5 + $0x78] sm:$0xff]
  %v2059 = vld [vmem:[%s5 + $0x80] sm:$0xff]
  %v2060 = vld [vmem:[%s5 + $0x88] sm:$0xff]
  %v2061 = vld [vmem:[%s5 + $0x90] sm:$0xff]
  %v2062 = vld [vmem:[%s5 + $0x98] sm:$0xff]
  %v2063 = vld [vmem:[%s5 + $0xa0] sm:$0xff]
  %v2064 = vld [vmem:[%s5 + $0xa8] sm:$0xff]
  %v2065 = vld [vmem:[%s5 + $0xb0] sm:$0xff]
  %v2066 = vld [vmem:[%s5 + $0xb8] sm:$0xff]
  %v2067 = vld [vmem:[%s5 + $0xc0] sm:$0xff]
  %v2068 = vld [vmem:[%s5 + $0xc8] sm:$0xff]
  %v2069 = vld [vmem:[%s5 + $0xd0] sm:$0xff]
  %v2070 = vld [vmem:[%s5 + $0xd8] sm:$0xff]
  %v2071 = vld [vmem:[%s5 + $0xe0] sm:$0xff]
  %v2072 = vld [vmem:[%s5 + $0xe8] sm:$0xff]
  %v2073 = vld [vmem:[%s5 + $0xf0] sm:$0xff]
  %v2074 = vld [vmem:[%s5 + $0xf8] sm:$0xff]
  %v2107 = vunpack.c.l.b16 %v2043
  %v2108 = vunpack.c.h.b16 %v2043
  %v2109 = vunpack.c.l.b16 %v2044
  %v2110 = vunpack.c.h.b16 %v2044
  %v2111 = vunpack.c.l.b16 %v2045
  %v2112 = vunpack.c.h.b16 %v2045
  %v2113 = vunpack.c.l.b16 %v2046
  %v2114 = vunpack.c.h.b16 %v2046
  %v2115 = vunpack.c.l.b16 %v2047
  %v2116 = vunpack.c.h.b16 %v2047
  %v2117 = vunpack.c.l.b16 %v2048
  %v2118 = vunpack.c.h.b16 %v2048
  %v2119 = vunpack.c.l.b16 %v2049
  %v2120 = vunpack.c.h.b16 %v2049
  %v2121 = vunpack.c.l.b16 %v2050
  %v2122 = vunpack.c.h.b16 %v2050
  %v2123 = vunpack.c.l.b16 %v2051
  %v2124 = vunpack.c.h.b16 %v2051
  %v2125 = vunpack.c.l.b16 %v2052
  %v2126 = vunpack.c.h.b16 %v2052
  %v2127 = vunpack.c.l.b16 %v2053
  %v2128 = vunpack.c.h.b16 %v2053
  %v2129 = vunpack.c.l.b16 %v2054
  %v2130 = vunpack.c.h.b16 %v2054
  %v2131 = vunpack.c.l.b16 %v2055
  %v2132 = vunpack.c.h.b16 %v2055
  %v2133 = vunpack.c.l.b16 %v2056
  %v2134 = vunpack.c.h.b16 %v2056
  %v2135 = vunpack.c.l.b16 %v2057
  %v2136 = vunpack.c.h.b16 %v2057
  %v2137 = vunpack.c.l.b16 %v2058
  %v2138 = vunpack.c.h.b16 %v2058
  %v2139 = vunpack.c.l.b16 %v2059
  %v2140 = vunpack.c.h.b16 %v2059
  %v2141 = vunpack.c.l.b16 %v2060
  %v2142 = vunpack.c.h.b16 %v2060
  %v2143 = vunpack.c.l.b16 %v2061
  %v2144 = vunpack.c.h.b16 %v2061
  %v2145 = vunpack.c.l.b16 %v2062
  %v2146 = vunpack.c.h.b16 %v2062
  %v2147 = vunpack.c.l.b16 %v2063
  %v2148 = vunpack.c.h.b16 %v2063
  %v2149 = vunpack.c.l.b16 %v2064
  %v2150 = vunpack.c.h.b16 %v2064
  %v2151 = vunpack.c.l.b16 %v2065
  %v2152 = vunpack.c.h.b16 %v2065
  %v2153 = vunpack.c.l.b16 %v2066
  %v2154 = vunpack.c.h.b16 %v2066
  %v2155 = vunpack.c.l.b16 %v2067
  %v2156 = vunpack.c.h.b16 %v2067
  %v2157 = vunpack.c.l.b16 %v2068
  %v2158 = vunpack.c.h.b16 %v2068
  %v2159 = vunpack.c.l.b16 %v2069
  %v2160 = vunpack.c.h.b16 %v2069
  %v2161 = vunpack.c.l.b16 %v2070
  %v2162 = vunpack.c.h.b16 %v2070
  %v2163 = vunpack.c.l.b16 %v2071
  %v2164 = vunpack.c.h.b16 %v2071
  %v2165 = vunpack.c.l.b16 %v2072
  %v2166 = vunpack.c.h.b16 %v2072
  %v2167 = vunpack.c.l.b16 %v2073
  %v2168 = vunpack.c.h.b16 %v2073
  %v2169 = vunpack.c.l.b16 %v2074
  %v2170 = vunpack.c.h.b16 %v2074
  %v2171 = vpack.c.b16 %v2111, %v2107
  %v2172 = vpack.c.b16 %v2112, %v2108
  %v2173 = vpack.c.b16 %v2113, %v2109
  %v2174 = vpack.c.b16 %v2114, %v2110
  %v2175 = vpack.c.b16 %v2119, %v2115
  %v2176 = vpack.c.b16 %v2120, %v2116
  %v2177 = vpack.c.b16 %v2121, %v2117
  %v2178 = vpack.c.b16 %v2122, %v2118
  %v2179 = vpack.c.b16 %v2127, %v2123
  %v2180 = vpack.c.b16 %v2128, %v2124
  %v2181 = vpack.c.b16 %v2129, %v2125
  %v2182 = vpack.c.b16 %v2130, %v2126
  %v2183 = vpack.c.b16 %v2135, %v2131
  %v2184 = vpack.c.b16 %v2136, %v2132
  %v2185 = vpack.c.b16 %v2137, %v2133
  %v2186 = vpack.c.b16 %v2138, %v2134
  %v2187 = vpack.c.b16 %v2143, %v2139
  %v2188 = vpack.c.b16 %v2144, %v2140
  %v2189 = vpack.c.b16 %v2145, %v2141
  %v2190 = vpack.c.b16 %v2146, %v2142
  %v2191 = vpack.c.b16 %v2151, %v2147
  %v2192 = vpack.c.b16 %v2152, %v2148
  %v2193 = vpack.c.b16 %v2153, %v2149
  %v2194 = vpack.c.b16 %v2154, %v2150
  %v2195 = vpack.c.b16 %v2159, %v2155
  %v2196 = vpack.c.b16 %v2160, %v2156
  %v2197 = vpack.c.b16 %v2161, %v2157
  %v2198 = vpack.c.b16 %v2162, %v2158
  %v2199 = vpack.c.b16 %v2167, %v2163
  %v2200 = vpack.c.b16 %v2168, %v2164
  %v2201 = vpack.c.b16 %v2169, %v2165
  %v2202 = vpack.c.b16 %v2170, %v2166
  %2235 = vmatprep.subr.bf16.mxu0 %v2172
  %2236 = vmatpush1.bf16.msra.mxu0 %v2171
  %2237 = vmatprep.subr.bf16.mxu0 %v2176
  %2238 = vmatpush1.bf16.msra.mxu0 %v2175
  %2239 = vmatprep.subr.bf16.mxu0 %v2180
  %2240 = vmatpush1.bf16.msra.mxu0 %v2179
  %2241 = vmatprep.subr.bf16.mxu0 %v2184
  %2242 = vmatpush1.bf16.msra.mxu0 %v2183
  %2243 = vmatprep.subr.bf16.mxu0 %v2188
  %2244 = vmatpush1.bf16.msra.mxu0 %v2187
  %2245 = vmatprep.subr.bf16.mxu0 %v2192
  %2246 = vmatpush1.bf16.msra.mxu0 %v2191
  %2247 = vmatprep.subr.bf16.mxu0 %v2196
  %2248 = vmatpush1.bf16.msra.mxu0 %v2195
  %2249 = vmatprep.subr.bf16.mxu0 %v2200
  %2250 = vmatpush1.bf16.msra.mxu0 %v2199
  %2251 = vmatprep.subr.bf16.mxu0 0
  %2252 = vmatpush1.bf16.msra.mxu0 0
  %2253 = vmatprep.subr.bf16.mxu0 0
  %2254 = vmatpush1.bf16.msra.mxu0 0
  %2255 = vmatprep.subr.bf16.mxu0 0
  %2256 = vmatpush1.bf16.msra.mxu0 0
  %2257 = vmatprep.subr.bf16.mxu0 0
  %2258 = vmatpush1.bf16.msra.mxu0 0
  %2259 = vmatprep.subr.bf16.mxu0 0
  %2260 = vmatpush1.bf16.msra.mxu0 0
  %2261 = vmatprep.subr.bf16.mxu0 0
  %2262 = vmatpush1.bf16.msra.mxu0 0
  %2263 = vmatprep.subr.bf16.mxu0 0
  %2264 = vmatpush1.bf16.msra.mxu0 0
  %2265 = vmatprep.subr.bf16.mxu0 0
  %2266 = vmatpush1.bf16.msra.mxu0 0
  %2267 = vmatprep.mubr.bf16.mxu0 0
  %2268 = vmatmul.mubr.bf16.gmra.mrb[0].mxu0 0
  %v2269 = vpop.f32.mrb[0].mxu0
  %v2270 = vadd.f32 0.0, %v2269
  %v2271 = vpop.f32.mrb[0].mxu0
  %v2272 = vadd.f32 0.0, %v2271
  %v2273 = vpop.f32.mrb[0].mxu0
  %v2274 = vpop.f32.mrb[0].mxu0
  %2275 = vdwg.mxu0
  %2276 = vmatprep.subr.bf16.mxu0 %v2174
  %2277 = vmatpush1.bf16.msra.mxu0 %v2173
  %2278 = vmatprep.subr.bf16.mxu0 %v2178
  %2279 = vmatpush1.bf16.msra.mxu0 %v2177
  %2280 = vmatprep.subr.bf16.mxu0 %v2182
  %2281 = vmatpush1.bf16.msra.mxu0 %v2181
  %2282 = vmatprep.subr.bf16.mxu0 %v2186
  %2283 = vmatpush1.bf16.msra.mxu0 %v2185
  %2284 = vmatprep.subr.bf16.mxu0 %v2190
  %2285 = vmatpush1.bf16.msra.mxu0 %v2189
  %2286 = vmatprep.subr.bf16.mxu0 %v2194
  %2287 = vmatpush1.bf16.msra.mxu0 %v2193
  %2288 = vmatprep.subr.bf16.mxu0 %v2198
  %2289 = vmatpush1.bf16.msra.mxu0 %v2197
  %2290 = vmatprep.subr.bf16.mxu0 %v2202
  %2291 = vmatpush1.bf16.msra.mxu0 %v2201
  %2292 = vmatprep.subr.bf16.mxu0 0
  %2293 = vmatpush1.bf16.msra.mxu0 0
  %2294 = vmatprep.subr.bf16.mxu0 0
  %2295 = vmatpush1.bf16.msra.mxu0 0
  %2296 = vmatprep.subr.bf16.mxu0 0
  %2297 = vmatpush1.bf16.msra.mxu0 0
  %2298 = vmatprep.subr.bf16.mxu0 0
  %2299 = vmatpush1.bf16.msra.mxu0 0
  %2300 = vmatprep.subr.bf16.mxu0 0
  %2301 = vmatpush1.bf16.msra.mxu0 0
  %2302 = vmatprep.subr.bf16.mxu0 0
  %2303 = vmatpush1.bf16.msra.mxu0 0
  %2304 = vmatprep.subr.bf16.mxu0 0
  %2305 = vmatpush1.bf16.msra.mxu0 0
  %2306 = vmatprep.subr.bf16.mxu0 0
  %2307 = vmatpush1.bf16.msra.mxu0 0
  %2308 = vmatprep.mubr.bf16.mxu0 0
  %2309 = vmatmul.mubr.bf16.gmra.mrb[0].mxu0 0
  %v2310 = vpop.f32.mrb[0].mxu0
  %v2311 = vadd.f32 0.0, %v2310
  %v2312 = vpop.f32.mrb[0].mxu0
  %v2313 = vadd.f32 0.0, %v2312
  %v2314 = vpop.f32.mrb[0].mxu0
  %v2315 = vpop.f32.mrb[0].mxu0
  %2316 = vdwg.mxu0
  %v2349 = vunpack.c.l.b16 %v2011
  %v2350 = vunpack.c.h.b16 %v2011
  %v2351 = vunpack.c.l.b16 %v2012
  %v2352 = vunpack.c.h.b16 %v2012
  %v2353 = vunpack.c.l.b16 %v2013
  %v2354 = vunpack.c.h.b16 %v2013
  %v2355 = vunpack.c.l.b16 %v2014
  %v2356 = vunpack.c.h.b16 %v2014
  %v2357 = vunpack.c.l.b16 %v2015
  %v2358 = vunpack.c.h.b16 %v2015
  %v2359 = vunpack.c.l.b16 %v2016
  %v2360 = vunpack.c.h.b16 %v2016
  %v2361 = vunpack.c.l.b16 %v2017
  %v2362 = vunpack.c.h.b16 %v2017
  %v2363 = vunpack.c.l.b16 %v2018
  %v2364 = vunpack.c.h.b16 %v2018
  %v2365 = vunpack.c.l.b16 %v2019
  %v2366 = vunpack.c.h.b16 %v2019
  %v2367 = vunpack.c.l.b16 %v2020
  %v2368 = vunpack.c.h.b16 %v2020
  %v2369 = vunpack.c.l.b16 %v2021
  %v2370 = vunpack.c.h.b16 %v2021
  %v2371 = vunpack.c.l.b16 %v2022
  %v2372 = vunpack.c.h.b16 %v2022
  %v2373 = vunpack.c.l.b16 %v2023
  %v2374 = vunpack.c.h.b16 %v2023
  %v2375 = vunpack.c.l.b16 %v2024
  %v2376 = vunpack.c.h.b16 %v2024
  %v2377 = vunpack.c.l.b16 %v2025
  %v2378 = vunpack.c.h.b16 %v2025
  %v2379 = vunpack.c.l.b16 %v2026
  %v2380 = vunpack.c.h.b16 %v2026
  %v2381 = vunpack.c.l.b16 %v2027
  %v2382 = vunpack.c.h.b16 %v2027
  %v2383 = vunpack.c.l.b16 %v2028
  %v2384 = vunpack.c.h.b16 %v2028
  %v2385 = vunpack.c.l.b16 %v2029
  %v2386 = vunpack.c.h.b16 %v2029
  %v2387 = vunpack.c.l.b16 %v2030
  %v2388 = vunpack.c.h.b16 %v2030
  %v2389 = vunpack.c.l.b16 %v2031
  %v2390 = vunpack.c.h.b16 %v2031
  %v2391 = vunpack.c.l.b16 %v2032
  %v2392 = vunpack.c.h.b16 %v2032
  %v2393 = vunpack.c.l.b16 %v2033
  %v2394 = vunpack.c.h.b16 %v2033
  %v2395 = vunpack.c.l.b16 %v2034
  %v2396 = vunpack.c.h.b16 %v2034
  %v2397 = vunpack.c.l.b16 %v2035
  %v2398 = vunpack.c.h.b16 %v2035
  %v2399 = vunpack.c.l.b16 %v2036
  %v2400 = vunpack.c.h.b16 %v2036
  %v2401 = vunpack.c.l.b16 %v2037
  %v2402 = vunpack.c.h.b16 %v2037
  %v2403 = vunpack.c.l.b16 %v2038
  %v2404 = vunpack.c.h.b16 %v2038
  %v2405 = vunpack.c.l.b16 %v2039
  %v2406 = vunpack.c.h.b16 %v2039
  %v2407 = vunpack.c.l.b16 %v2040
  %v2408 = vunpack.c.h.b16 %v2040
  %v2409 = vunpack.c.l.b16 %v2041
  %v2410 = vunpack.c.h.b16 %v2041
  %v2411 = vunpack.c.l.b16 %v2042
  %v2412 = vunpack.c.h.b16 %v2042
  %v2413 = vpack.c.b16 %v2353, %v2349
  %v2414 = vpack.c.b16 %v2354, %v2350
  %v2415 = vpack.c.b16 %v2355, %v2351
  %v2416 = vpack.c.b16 %v2356, %v2352
  %v2417 = vpack.c.b16 %v2361, %v2357
  %v2418 = vpack.c.b16 %v2362, %v2358
  %v2419 = vpack.c.b16 %v2363, %v2359
  %v2420 = vpack.c.b16 %v2364, %v2360
  %v2421 = vpack.c.b16 %v2369, %v2365
  %v2422 = vpack.c.b16 %v2370, %v2366
  %v2423 = vpack.c.b16 %v2371, %v2367
  %v2424 = vpack.c.b16 %v2372, %v2368
  %v2425 = vpack.c.b16 %v2377, %v2373
  %v2426 = vpack.c.b16 %v2378, %v2374
  %v2427 = vpack.c.b16 %v2379, %v2375
  %v2428 = vpack.c.b16 %v2380, %v2376
  %v2429 = vpack.c.b16 %v2385, %v2381
  %v2430 = vpack.c.b16 %v2386, %v2382
  %v2431 = vpack.c.b16 %v2387, %v2383
  %v2432 = vpack.c.b16 %v2388, %v2384
  %v2433 = vpack.c.b16 %v2393, %v2389
  %v2434 = vpack.c.b16 %v2394, %v2390
  %v2435 = vpack.c.b16 %v2395, %v2391
  %v2436 = vpack.c.b16 %v2396, %v2392
  %v2437 = vpack.c.b16 %v2401, %v2397
  %v2438 = vpack.c.b16 %v2402, %v2398
  %v2439 = vpack.c.b16 %v2403, %v2399
  %v2440 = vpack.c.b16 %v2404, %v2400
  %v2441 = vpack.c.b16 %v2409, %v2405
  %v2442 = vpack.c.b16 %v2410, %v2406
  %v2443 = vpack.c.b16 %v2411, %v2407
  %v2444 = vpack.c.b16 %v2412, %v2408
  %2477 = vmatprep.subr.bf16.mxu0 %v2414
  %2478 = vmatpush1.bf16.msra.mxu0 %v2413
  %2479 = vmatprep.subr.bf16.mxu0 %v2418
  %2480 = vmatpush1.bf16.msra.mxu0 %v2417
  %2481 = vmatprep.subr.bf16.mxu0 %v2422
  %2482 = vmatpush1.bf16.msra.mxu0 %v2421
  %2483 = vmatprep.subr.bf16.mxu0 %v2426
  %2484 = vmatpush1.bf16.msra.mxu0 %v2425
  %2485 = vmatprep.subr.bf16.mxu0 %v2430
  %2486 = vmatpush1.bf16.msra.mxu0 %v2429
  %2487 = vmatprep.subr.bf16.mxu0 %v2434
  %2488 = vmatpush1.bf16.msra.mxu0 %v2433
  %2489 = vmatprep.subr.bf16.mxu0 %v2438
  %2490 = vmatpush1.bf16.msra.mxu0 %v2437
  %2491 = vmatprep.subr.bf16.mxu0 %v2442
  %2492 = vmatpush1.bf16.msra.mxu0 %v2441
  %2493 = vmatprep.subr.bf16.mxu0 0
  %2494 = vmatpush1.bf16.msra.mxu0 0
  %2495 = vmatprep.subr.bf16.mxu0 0
  %2496 = vmatpush1.bf16.msra.mxu0 0
  %2497 = vmatprep.subr.bf16.mxu0 0
  %2498 = vmatpush1.bf16.msra.mxu0 0
  %2499 = vmatprep.subr.bf16.mxu0 0
  %2500 = vmatpush1.bf16.msra.mxu0 0
  %2501 = vmatprep.subr.bf16.mxu0 0
  %2502 = vmatpush1.bf16.msra.mxu0 0
  %2503 = vmatprep.subr.bf16.mxu0 0
  %2504 = vmatpush1.bf16.msra.mxu0 0
  %2505 = vmatprep.subr.bf16.mxu0 0
  %2506 = vmatpush1.bf16.msra.mxu0 0
  %2507 = vmatprep.subr.bf16.mxu0 0
  %2508 = vmatpush1.bf16.msra.mxu0 0
  %2509 = vmatprep.mubr.bf16.mxu0 0
  %2510 = vmatmul.mubr.bf16.gmra.mrb[0].mxu0 %v1817
  %v2511 = vpop.f32.mrb[0].mxu0
  %v2512 = vadd.f32 %v2270, %v2511
  %v2513 = vpop.f32.mrb[0].mxu0
  %v2514 = vadd.f32 %v2272, %v2513
  %v2515 = vpop.f32.mrb[0].mxu0
  %v2516 = vpop.f32.mrb[0].mxu0
  %2517 = vdwg.mxu0
  %2518 = vmatprep.subr.bf16.mxu0 %v2416
  %2519 = vmatpush1.bf16.msra.mxu0 %v2415
  %2520 = vmatprep.subr.bf16.mxu0 %v2420
  %2521 = vmatpush1.bf16.msra.mxu0 %v2419
  %2522 = vmatprep.subr.bf16.mxu0 %v2424
  %2523 = vmatpush1.bf16.msra.mxu0 %v2423
  %2524 = vmatprep.subr.bf16.mxu0 %v2428
  %2525 = vmatpush1.bf16.msra.mxu0 %v2427
  %2526 = vmatprep.subr.bf16.mxu0 %v2432
  %2527 = vmatpush1.bf16.msra.mxu0 %v2431
  %2528 = vmatprep.subr.bf16.mxu0 %v2436
  %2529 = vmatpush1.bf16.msra.mxu0 %v2435
  %2530 = vmatprep.subr.bf16.mxu0 %v2440
  %2531 = vmatpush1.bf16.msra.mxu0 %v2439
  %2532 = vmatprep.subr.bf16.mxu0 %v2444
  %2533 = vmatpush1.bf16.msra.mxu0 %v2443
  %2534 = vmatprep.subr.bf16.mxu0 0
  %2535 = vmatpush1.bf16.msra.mxu0 0
  %2536 = vmatprep.subr.bf16.mxu0 0
  %2537 = vmatpush1.bf16.msra.mxu0 0
  %2538 = vmatprep.subr.bf16.mxu0 0
  %2539 = vmatpush1.bf16.msra.mxu0 0
  %2540 = vmatprep.subr.bf16.mxu0 0
  %2541 = vmatpush1.bf16.msra.mxu0 0
  %2542 = vmatprep.subr.bf16.mxu0 0
  %2543 = vmatpush1.bf16.msra.mxu0 0
  %2544 = vmatprep.subr.bf16.mxu0 0
  %2545 = vmatpush1.bf16.msra.mxu0 0
  %2546 = vmatprep.subr.bf16.mxu0 0
  %2547 = vmatpush1.bf16.msra.mxu0 0
  %2548 = vmatprep.subr.bf16.mxu0 0
  %2549 = vmatpush1.bf16.msra.mxu0 0
  %2550 = vmatprep.mubr.bf16.mxu0 0
  %2551 = vmatmul.mubr.bf16.gmra.mrb[0].mxu0 %v1817
  %v2552 = vpop.f32.mrb[0].mxu0
  %v2553 = vadd.f32 %v2311, %v2552
  %v2554 = vpop.f32.mrb[0].mxu0
  %v2555 = vadd.f32 %v2313, %v2554
  %v2556 = vpop.f32.mrb[0].mxu0
  %v2557 = vpop.f32.mrb[0].mxu0
  %2558 = vdwg.mxu0
  %v2559 = vld [vmem:[%s6] sm:$0xf]
  %v2561 = vlaneseq
  %v2562 = vshrl.u32 %v2561, 7
  %v2563 = vsub.s32 0, %v2562
  %v2564 = vrot.slane %v2559, %v2563
  %v2565 = vlaneseq
  %v2566 = vshrl.u32 %v2565, 7
  %v2567 = vsub.s32 1, %v2566
  %v2568 = vrot.slane %v2559, %v2567
  %v2569 = vlaneseq
  %v2570 = vshrl.u32 %v2569, 7
  %v2571 = vsub.s32 2, %v2570
  %v2572 = vrot.slane %v2559, %v2571
  %v2573 = vlaneseq
  %v2574 = vshrl.u32 %v2573, 7
  %v2575 = vsub.s32 3, %v2574
  %v2576 = vrot.slane %v2559, %v2575
  %v2581 = vadd.f32 %v2512, %v2564
  %v2582 = vadd.f32 %v2514, %v2568
  %v2583 = vadd.f32 %v2553, %v2572
  %v2584 = vadd.f32 %v2555, %v2576
  %v2585 = vxor.u32 %v2581, 2147483648
  %v2586 = vmul.f32 %v2585, 1.442695
  %v2587 = vpow.pop %v2586
  %v2588 = vadd.f32 %v2587, 1.0
  %v2589 = vrcp.pop %v2588
  %v2590 = vmul.f32 1.0, %v2589
  %v2591 = vxor.u32 %v2582, 2147483648
  %v2592 = vmul.f32 %v2591, 1.442695
  %v2593 = vpow.pop %v2592
  %v2594 = vadd.f32 %v2593, 1.0
  %v2595 = vrcp.pop %v2594
  %v2596 = vmul.f32 1.0, %v2595
  %v2597 = vtanh.pop %v2583
  %v2598 = vxor.u32 %v2584, 2147483648
  %v2599 = vmul.f32 %v2598, 1.442695
  %v2600 = vpow.pop %v2599
  %v2601 = vadd.f32 %v2600, 1.0
  %v2602 = vrcp.pop %v2601
  %v2603 = vmul.f32 1.0, %v2602
  %v2604 = vmul.f32 %v2596, 0.0
  %v2605 = vmul.f32 %v2590, %v2597
  %v2606 = vadd.f32 %v2604, %v2605
  %v2607 = vtanh.pop %v2606
  %v2608 = vmul.f32 %v2603, %v2607
  %v2609 = vpack.c.bf16 %v2608, %v2608
  %2610 = vmatprep.subr.bf16.mxu0 %v2172
  %2611 = vmatpush1.bf16.msra.mxu0 %v2171
  %2612 = vmatprep.subr.bf16.mxu0 %v2176
  %2613 = vmatpush1.bf16.msra.mxu0 %v2175
  %2614 = vmatprep.subr.bf16.mxu0 %v2180
  %2615 = vmatpush1.bf16.msra.mxu0 %v2179
  %2616 = vmatprep.subr.bf16.mxu0 %v2184
  %2617 = vmatpush1.bf16.msra.mxu0 %v2183
  %2618 = vmatprep.subr.bf16.mxu0 %v2188
  %2619 = vmatpush1.bf16.msra.mxu0 %v2187
  %2620 = vmatprep.subr.bf16.mxu0 %v2192
  %2621 = vmatpush1.bf16.msra.mxu0 %v2191
  %2622 = vmatprep.subr.bf16.mxu0 %v2196
  %2623 = vmatpush1.bf16.msra.mxu0 %v2195
  %2624 = vmatprep.subr.bf16.mxu0 %v2200
  %2625 = vmatpush1.bf16.msra.mxu0 %v2199
  %2626 = vmatprep.subr.bf16.mxu0 0
  %2627 = vmatpush1.bf16.msra.mxu0 0
  %2628 = vmatprep.subr.bf16.mxu0 0
  %2629 = vmatpush1.bf16.msra.mxu0 0
  %2630 = vmatprep.subr.bf16.mxu0 0
  %2631 = vmatpush1.bf16.msra.mxu0 0
  %2632 = vmatprep.subr.bf16.mxu0 0
  %2633 = vmatpush1.bf16.msra.mxu0 0
  %2634 = vmatprep.subr.bf16.mxu0 0
  %2635 = vmatpush1.bf16.msra.mxu0 0
  %2636 = vmatprep.subr.bf16.mxu0 0
  %2637 = vmatpush1.bf16.msra.mxu0 0
  %2638 = vmatprep.subr.bf16.mxu0 0
  %2639 = vmatpush1.bf16.msra.mxu0 0
  %2640 = vmatprep.subr.bf16.mxu0 0
  %2641 = vmatpush1.bf16.msra.mxu0 0
  %2642 = vmatprep.mubr.bf16.mxu0 0
  %2643 = vmatmul.mubr.bf16.gmra.mrb[0].mxu0 %v2609
  %v2644 = vpop.f32.mrb[0].mxu0
  %v2645 = vadd.f32 0.0, %v2644
  %v2646 = vpop.f32.mrb[0].mxu0
  %v2647 = vadd.f32 0.0, %v2646
  %v2648 = vpop.f32.mrb[0].mxu0
  %v2649 = vpop.f32.mrb[0].mxu0
  %2650 = vdwg.mxu0
  %2651 = vmatprep.subr.bf16.mxu0 %v2174
  %2652 = vmatpush1.bf16.msra.mxu0 %v2173
  %2653 = vmatprep.subr.bf16.mxu0 %v2178
  %2654 = vmatpush1.bf16.msra.mxu0 %v2177
  %2655 = vmatprep.subr.bf16.mxu0 %v2182
  %2656 = vmatpush1.bf16.msra.mxu0 %v2181
  %2657 = vmatprep.subr.bf16.mxu0 %v2186
  %2658 = vmatpush1.bf16.msra.mxu0 %v2185
  %2659 = vmatprep.subr.bf16.mxu0 %v2190
  %2660 = vmatpush1.bf16.msra.mxu0 %v2189
  %2661 = vmatprep.subr.bf16.mxu0 %v2194
  %2662 = vmatpush1.bf16.msra.mxu0 %v2193
  %2663 = vmatprep.subr.bf16.mxu0 %v2198
  %2664 = vmatpush1.bf16.msra.mxu0 %v2197
  %2665 = vmatprep.subr.bf16.mxu0 %v2202
  %2666 = vmatpush1.bf16.msra.mxu0 %v2201
  %2667 = vmatprep.subr.bf16.mxu0 0
  %2668 = vmatpush1.bf16.msra.mxu0 0
  %2669 = vmatprep.subr.bf16.mxu0 0
  %2670 = vmatpush1.bf16.msra.mxu0 0
  %2671 = vmatprep.subr.bf16.mxu0 0
  %2672 = vmatpush1.bf16.msra.mxu0 0
  %2673 = vmatprep.subr.bf16.mxu0 0
  %2674 = vmatpush1.bf16.msra.mxu0 0
  %2675 = vmatprep.subr.bf16.mxu0 0
  %2676 = vmatpush1.bf16.msra.mxu0 0
  %2677 = vmatprep.subr.bf16.mxu0 0
  %2678 = vmatpush1.bf16.msra.mxu0 0
  %2679 = vmatprep.subr.bf16.mxu0 0
  %2680 = vmatpush1.bf16.msra.mxu0 0
  %2681 = vmatprep.subr.bf16.mxu0 0
  %2682 = vmatpush1.bf16.msra.mxu0 0
  %2683 = vmatprep.mubr.bf16.mxu0 0
  %2684 = vmatmul.mubr.bf16.gmra.mrb[0].mxu0 %v2609
  %v2685 = vpop.f32.mrb[0].mxu0
  %v2686 = vadd.f32 0.0, %v2685
  %v2687 = vpop.f32.mrb[0].mxu0
  %v2688 = vadd.f32 0.0, %v2687
  %v2689 = vpop.f32.mrb[0].mxu0
  %v2690 = vpop.f32.mrb[0].mxu0
  %2691 = vdwg.mxu0
  %2692 = vmatprep.subr.bf16.mxu0 %v2414
  %2693 = vmatpush1.bf16.msra.mxu0 %v2413
  %2694 = vmatprep.subr.bf16.mxu0 %v2418
  %2695 = vmatpush1.bf16.msra.mxu0 %v2417
  %2696 = vmatprep.subr.bf16.mxu0 %v2422
  %2697 = vmatpush1.bf16.msra.mxu0 %v2421
  %2698 = vmatprep.subr.bf16.mxu0 %v2426
  %2699 = vmatpush1.bf16.msra.mxu0 %v2425
  %2700 = vmatprep.subr.bf16.mxu0 %v2430
  %2701 = vmatpush1.bf16.msra.mxu0 %v2429
  %2702 = vmatprep.subr.bf16.mxu0 %v2434
  %2703 = vmatpush1.bf16.msra.mxu0 %v2433
  %2704 = vmatprep.subr.bf16.mxu0 %v2438
  %2705 = vmatpush1.bf16.msra.mxu0 %v2437
  %2706 = vmatprep.subr.bf16.mxu0 %v2442
  %2707 = vmatpush1.bf16.msra.mxu0 %v2441
  %2708 = vmatprep.subr.bf16.mxu0 0
  %2709 = vmatpush1.bf16.msra.mxu0 0
  %2710 = vmatprep.subr.bf16.mxu0 0
  %2711 = vmatpush1.bf16.msra.mxu0 0
  %2712 = vmatprep.subr.bf16.mxu0 0
  %2713 = vmatpush1.bf16.msra.mxu0 0
  %2714 = vmatprep.subr.bf16.mxu0 0
  %2715 = vmatpush1.bf16.msra.mxu0 0
  %2716 = vmatprep.subr.bf16.mxu0 0
  %2717 = vmatpush1.bf16.msra.mxu0 0
  %2718 = vmatprep.subr.bf16.mxu0 0
  %2719 = vmatpush1.bf16.msra.mxu0 0
  %2720 = vmatprep.subr.bf16.mxu0 0
  %2721 = vmatpush1.bf16.msra.mxu0 0
  %2722 = vmatprep.subr.bf16.mxu0 0
  %2723 = vmatpush1.bf16.msra.mxu0 0
  %2724 = vmatprep.mubr.bf16.mxu0 0
  %2725 = vmatmul.mubr.bf16.gmra.mrb[0].mxu0 %v1622
  %v2726 = vpop.f32.mrb[0].mxu0
  %v2727 = vadd.f32 %v2645, %v2726
  %v2728 = vpop.f32.mrb[0].mxu0
  %v2729 = vadd.f32 %v2647, %v2728
  %v2730 = vpop.f32.mrb[0].mxu0
  %v2731 = vpop.f32.mrb[0].mxu0
  %2732 = vdwg.mxu0
  %2733 = vmatprep.subr.bf16.mxu0 %v2416
  %2734 = vmatpush1.bf16.msra.mxu0 %v2415
  %2735 = vmatprep.subr.bf16.mxu0 %v2420
  %2736 = vmatpush1.bf16.msra.mxu0 %v2419
  %2737 = vmatprep.subr.bf16.mxu0 %v2424
  %2738 = vmatpush1.bf16.msra.mxu0 %v2423
  %2739 = vmatprep.subr.bf16.mxu0 %v2428
  %2740 = vmatpush1.bf16.msra.mxu0 %v2427
  %2741 = vmatprep.subr.bf16.mxu0 %v2432
  %2742 = vmatpush1.bf16.msra.mxu0 %v2431
  %2743 = vmatprep.subr.bf16.mxu0 %v2436
  %2744 = vmatpush1.bf16.msra.mxu0 %v2435
  %2745 = vmatprep.subr.bf16.mxu0 %v2440
  %2746 = vmatpush1.bf16.msra.mxu0 %v2439
  %2747 = vmatprep.subr.bf16.mxu0 %v2444
  %2748 = vmatpush1.bf16.msra.mxu0 %v2443
  %2749 = vmatprep.subr.bf16.mxu0 0
  %2750 = vmatpush1.bf16.msra.mxu0 0
  %2751 = vmatprep.subr.bf16.mxu0 0
  %2752 = vmatpush1.bf16.msra.mxu0 0
  %2753 = vmatprep.subr.bf16.mxu0 0
  %2754 = vmatpush1.bf16.msra.mxu0 0
  %2755 = vmatprep.subr.bf16.mxu0 0
  %2756 = vmatpush1.bf16.msra.mxu0 0
  %2757 = vmatprep.subr.bf16.mxu0 0
  %2758 = vmatpush1.bf16.msra.mxu0 0
  %2759 = vmatprep.subr.bf16.mxu0 0
  %2760 = vmatpush1.bf16.msra.mxu0 0
  %2761 = vmatprep.subr.bf16.mxu0 0
  %2762 = vmatpush1.bf16.msra.mxu0 0
  %2763 = vmatprep.subr.bf16.mxu0 0
  %2764 = vmatpush1.bf16.msra.mxu0 0
  %2765 = vmatprep.mubr.bf16.mxu0 0
  %2766 = vmatmul.mubr.bf16.gmra.mrb[0].mxu0 %v1622
  %v2767 = vpop.f32.mrb[0].mxu0
  %v2768 = vadd.f32 %v2686, %v2767
  %v2769 = vpop.f32.mrb[0].mxu0
  %v2770 = vadd.f32 %v2688, %v2769
  %v2771 = vpop.f32.mrb[0].mxu0
  %v2772 = vpop.f32.mrb[0].mxu0
  %2773 = vdwg.mxu0
  %v2774 = vadd.f32 %v2727, %v2564
  %v2775 = vadd.f32 %v2729, %v2568
  %v2776 = vadd.f32 %v2768, %v2572
  %v2777 = vadd.f32 %v2770, %v2576
  %v2778 = vxor.u32 %v2774, 2147483648
  %v2779 = vmul.f32 %v2778, 1.442695
  %v2780 = vpow.pop %v2779
  %v2781 = vadd.f32 %v2780, 1.0
  %v2782 = vrcp.pop %v2781
  %v2783 = vmul.f32 1.0, %v2782
  %v2784 = vxor.u32 %v2775, 2147483648
  %v2785 = vmul.f32 %v2784, 1.442695
  %v2786 = vpow.pop %v2785
  %v2787 = vadd.f32 %v2786, 1.0
  %v2788 = vrcp.pop %v2787
  %v2789 = vmul.f32 1.0, %v2788
  %v2790 = vtanh.pop %v2776
  %v2791 = vxor.u32 %v2777, 2147483648
  %v2792 = vmul.f32 %v2791, 1.442695
  %v2793 = vpow.pop %v2792
  %v2794 = vadd.f32 %v2793, 1.0
  %v2795 = vrcp.pop %v2794
  %v2796 = vmul.f32 1.0, %v2795
  %v2797 = vmul.f32 %v2789, %v2606
  %v2798 = vmul.f32 %v2783, %v2790
  %v2799 = vadd.f32 %v2797, %v2798
  %v2800 = vtanh.pop %v2799
  %v2801 = vmul.f32 %v2796, %v2800
  %v2802 = vpack.c.bf16 %v2801, %v2801
  %2803 = vmatprep.subr.bf16.mxu0 %v2172
  %2804 = vmatpush1.bf16.msra.mxu0 %v2171
  %2805 = vmatprep.subr.bf16.mxu0 %v2176
  %2806 = vmatpush1.bf16.msra.mxu0 %v2175
  %2807 = vmatprep.subr.bf16.mxu0 %v2180
  %2808 = vmatpush1.bf16.msra.mxu0 %v2179
  %2809 = vmatprep.subr.bf16.mxu0 %v2184
  %2810 = vmatpush1.bf16.msra.mxu0 %v2183
  %2811 = vmatprep.subr.bf16.mxu0 %v2188
  %2812 = vmatpush1.bf16.msra.mxu0 %v2187
  %2813 = vmatprep.subr.bf16.mxu0 %v2192
  %2814 = vmatpush1.bf16.msra.mxu0 %v2191
  %2815 = vmatprep.subr.bf16.mxu0 %v2196
  %2816 = vmatpush1.bf16.msra.mxu0 %v2195
  %2817 = vmatprep.subr.bf16.mxu0 %v2200
  %2818 = vmatpush1.bf16.msra.mxu0 %v2199
  %2819 = vmatprep.subr.bf16.mxu0 0
  %2820 = vmatpush1.bf16.msra.mxu0 0
  %2821 = vmatprep.subr.bf16.mxu0 0
  %2822 = vmatpush1.bf16.msra.mxu0 0
  %2823 = vmatprep.subr.bf16.mxu0 0
  %2824 = vmatpush1.bf16.msra.mxu0 0
  %2825 = vmatprep.subr.bf16.mxu0 0
  %2826 = vmatpush1.bf16.msra.mxu0 0
  %2827 = vmatprep.subr.bf16.mxu0 0
  %2828 = vmatpush1.bf16.msra.mxu0 0
  %2829 = vmatprep.subr.bf16.mxu0 0
  %2830 = vmatpush1.bf16.msra.mxu0 0
  %2831 = vmatprep.subr.bf16.mxu0 0
  %2832 = vmatpush1.bf16.msra.mxu0 0
  %2833 = vmatprep.subr.bf16.mxu0 0
  %2834 = vmatpush1.bf16.msra.mxu0 0
  %2835 = vmatprep.mubr.bf16.mxu0 0
  %2836 = vmatmul.mubr.bf16.gmra.mrb[0].mxu0 %v2802
  %v2837 = vpop.f32.mrb[0].mxu0
  %v2838 = vadd.f32 0.0, %v2837
  %v2839 = vpop.f32.mrb[0].mxu0
  %v2840 = vadd.f32 0.0, %v2839
  %v2841 = vpop.f32.mrb[0].mxu0
  %v2842 = vpop.f32.mrb[0].mxu0
  %2843 = vdwg.mxu0
  %2844 = vmatprep.subr.bf16.mxu0 %v2174
  %2845 = vmatpush1.bf16.msra.mxu0 %v2173
  %2846 = vmatprep.subr.bf16.mxu0 %v2178
  %2847 = vmatpush1.bf16.msra.mxu0 %v2177
  %2848 = vmatprep.subr.bf16.mxu0 %v2182
  %2849 = vmatpush1.bf16.msra.mxu0 %v2181
  %2850 = vmatprep.subr.bf16.mxu0 %v2186
  %2851 = vmatpush1.bf16.msra.mxu0 %v2185
  %2852 = vmatprep.subr.bf16.mxu0 %v2190
  %2853 = vmatpush1.bf16.msra.mxu0 %v2189
  %2854 = vmatprep.subr.bf16.mxu0 %v2194
  %2855 = vmatpush1.bf16.msra.mxu0 %v2193
  %2856 = vmatprep.subr.bf16.mxu0 %v2198
  %2857 = vmatpush1.bf16.msra.mxu0 %v2197
  %2858 = vmatprep.subr.bf16.mxu0 %v2202
  %2859 = vmatpush1.bf16.msra.mxu0 %v2201
  %2860 = vmatprep.subr.bf16.mxu0 0
  %2861 = vmatpush1.bf16.msra.mxu0 0
  %2862 = vmatprep.subr.bf16.mxu0 0
  %2863 = vmatpush1.bf16.msra.mxu0 0
  %2864 = vmatprep.subr.bf16.mxu0 0
  %2865 = vmatpush1.bf16.msra.mxu0 0
  %2866 = vmatprep.subr.bf16.mxu0 0
  %2867 = vmatpush1.bf16.msra.mxu0 0
  %2868 = vmatprep.subr.bf16.mxu0 0
  %2869 = vmatpush1.bf16.msra.mxu0 0
  %2870 = vmatprep.subr.bf16.mxu0 0
  %2871 = vmatpush1.bf16.msra.mxu0 0
  %2872 = vmatprep.subr.bf16.mxu0 0
  %2873 = vmatpush1.bf16.msra.mxu0 0
  %2874 = vmatprep.subr.bf16.mxu0 0
  %2875 = vmatpush1.bf16.msra.mxu0 0
  %2876 = vmatprep.mubr.bf16.mxu0 0
  %2877 = vmatmul.mubr.bf16.gmra.mrb[0].mxu0 %v2802
  %v2878 = vpop.f32.mrb[0].mxu0
  %v2879 = vadd.f32 0.0, %v2878
  %v2880 = vpop.f32.mrb[0].mxu0
  %v2881 = vadd.f32 0.0, %v2880
  %v2882 = vpop.f32.mrb[0].mxu0
  %v2883 = vpop.f32.mrb[0].mxu0
  %2884 = vdwg.mxu0
  %2885 = vmatprep.subr.bf16.mxu0 %v2414
  %2886 = vmatpush1.bf16.msra.mxu0 %v2413
  %2887 = vmatprep.subr.bf16.mxu0 %v2418
  %2888 = vmatpush1.bf16.msra.mxu0 %v2417
  %2889 = vmatprep.subr.bf16.mxu0 %v2422
  %2890 = vmatpush1.bf16.msra.mxu0 %v2421
  %2891 = vmatprep.subr.bf16.mxu0 %v2426
  %2892 = vmatpush1.bf16.msra.mxu0 %v2425
  %2893 = vmatprep.subr.bf16.mxu0 %v2430
  %2894 = vmatpush1.bf16.msra.mxu0 %v2429
  %2895 = vmatprep.subr.bf16.mxu0 %v2434
  %2896 = vmatpush1.bf16.msra.mxu0 %v2433
  %2897 = vmatprep.subr.bf16.mxu0 %v2438
  %2898 = vmatpush1.bf16.msra.mxu0 %v2437
  %2899 = vmatprep.subr.bf16.mxu0 %v2442
  %2900 = vmatpush1.bf16.msra.mxu0 %v2441
  %2901 = vmatprep.subr.bf16.mxu0 0
  %2902 = vmatpush1.bf16.msra.mxu0 0
  %2903 = vmatprep.subr.bf16.mxu0 0
  %2904 = vmatpush1.bf16.msra.mxu0 0
  %2905 = vmatprep.subr.bf16.mxu0 0
  %2906 = vmatpush1.bf16.msra.mxu0 0
  %2907 = vmatprep.subr.bf16.mxu0 0
  %2908 = vmatpush1.bf16.msra.mxu0 0
  %2909 = vmatprep.subr.bf16.mxu0 0
  %2910 = vmatpush1.bf16.msra.mxu0 0
  %2911 = vmatprep.subr.bf16.mxu0 0
  %2912 = vmatpush1.bf16.msra.mxu0 0
  %2913 = vmatprep.subr.bf16.mxu0 0
  %2914 = vmatpush1.bf16.msra.mxu0 0
  %2915 = vmatprep.subr.bf16.mxu0 0
  %2916 = vmatpush1.bf16.msra.mxu0 0
  %2917 = vmatprep.mubr.bf16.mxu0 0
  %2918 = vmatmul.mubr.bf16.gmra.mrb[0].mxu0 %v1427
  %v2919 = vpop.f32.mrb[0].mxu0
  %v2920 = vadd.f32 %v2838, %v2919
  %v2921 = vpop.f32.mrb[0].mxu0
  %v2922 = vadd.f32 %v2840, %v2921
  %v2923 = vpop.f32.mrb[0].mxu0
  %v2924 = vpop.f32.mrb[0].mxu0
  %2925 = vdwg.mxu0
  %2926 = vmatprep.subr.bf16.mxu0 %v2416
  %2927 = vmatpush1.bf16.msra.mxu0 %v2415
  %2928 = vmatprep.subr.bf16.mxu0 %v2420
  %2929 = vmatpush1.bf16.msra.mxu0 %v2419
  %2930 = vmatprep.subr.bf16.mxu0 %v2424
  %2931 = vmatpush1.bf16.msra.mxu0 %v2423
  %2932 = vmatprep.subr.bf16.mxu0 %v2428
  %2933 = vmatpush1.bf16.msra.mxu0 %v2427
  %2934 = vmatprep.subr.bf16.mxu0 %v2432
  %2935 = vmatpush1.bf16.msra.mxu0 %v2431
  %2936 = vmatprep.subr.bf16.mxu0 %v2436
  %2937 = vmatpush1.bf16.msra.mxu0 %v2435
  %2938 = vmatprep.subr.bf16.mxu0 %v2440
  %2939 = vmatpush1.bf16.msra.mxu0 %v2439
  %2940 = vmatprep.subr.bf16.mxu0 %v2444
  %2941 = vmatpush1.bf16.msra.mxu0 %v2443
  %2942 = vmatprep.subr.bf16.mxu0 0
  %2943 = vmatpush1.bf16.msra.mxu0 0
  %2944 = vmatprep.subr.bf16.mxu0 0
  %2945 = vmatpush1.bf16.msra.mxu0 0
  %2946 = vmatprep.subr.bf16.mxu0 0
  %2947 = vmatpush1.bf16.msra.mxu0 0
  %2948 = vmatprep.subr.bf16.mxu0 0
  %2949 = vmatpush1.bf16.msra.mxu0 0
  %2950 = vmatprep.subr.bf16.mxu0 0
  %2951 = vmatpush1.bf16.msra.mxu0 0
  %2952 = vmatprep.subr.bf16.mxu0 0
  %2953 = vmatpush1.bf16.msra.mxu0 0
  %2954 = vmatprep.subr.bf16.mxu0 0
  %2955 = vmatpush1.bf16.msra.mxu0 0
  %2956 = vmatprep.subr.bf16.mxu0 0
  %2957 = vmatpush1.bf16.msra.mxu0 0
  %2958 = vmatprep.mubr.bf16.mxu0 0
  %2959 = vmatmul.mubr.bf16.gmra.mrb[0].mxu0 %v1427
  %v2960 = vpop.f32.mrb[0].mxu0
  %v2961 = vadd.f32 %v2879, %v2960
  %v2962 = vpop.f32.mrb[0].mxu0
  %v2963 = vadd.f32 %v2881, %v2962
  %v2964 = vpop.f32.mrb[0].mxu0
  %v2965 = vpop.f32.mrb[0].mxu0
  %2966 = vdwg.mxu0
  %v2967 = vadd.f32 %v2920, %v2564
  %v2968 = vadd.f32 %v2922, %v2568
  %v2969 = vadd.f32 %v2961, %v2572
  %v2970 = vadd.f32 %v2963, %v2576
  %v2971 = vxor.u32 %v2967, 2147483648
  %v2972 = vmul.f32 %v2971, 1.442695
  %v2973 = vpow.pop %v2972
  %v2974 = vadd.f32 %v2973, 1.0
  %v2975 = vrcp.pop %v2974
  %v2976 = vmul.f32 1.0, %v2975
  %v2977 = vxor.u32 %v2968, 2147483648
  %v2978 = vmul.f32 %v2977, 1.442695
  %v2979 = vpow.pop %v2978
  %v2980 = vadd.f32 %v2979, 1.0
  %v2981 = vrcp.pop %v2980
  %v2982 = vmul.f32 1.0, %v2981
  %v2983 = vtanh.pop %v2969
  %v2984 = vxor.u32 %v2970, 2147483648
  %v2985 = vmul.f32 %v2984, 1.442695
  %v2986 = vpow.pop %v2985
  %v2987 = vadd.f32 %v2986, 1.0
  %v2988 = vrcp.pop %v2987
  %v2989 = vmul.f32 1.0, %v2988
  %v2990 = vmul.f32 %v2982, %v2799
  %v2991 = vmul.f32 %v2976, %v2983
  %v2992 = vadd.f32 %v2990, %v2991
  %v2993 = vtanh.pop %v2992
  %v2994 = vmul.f32 %v2989, %v2993
  %v2995 = vpack.c.bf16 %v2994, %v2994
  %2996 = vmatprep.subr.bf16.mxu0 %v2172
  %2997 = vmatpush1.bf16.msra.mxu0 %v2171
  %2998 = vmatprep.subr.bf16.mxu0 %v2176
  %2999 = vmatpush1.bf16.msra.mxu0 %v2175
  %3000 = vmatprep.subr.bf16.mxu0 %v2180
  %3001 = vmatpush1.bf16.msra.mxu0 %v2179
  %3002 = vmatprep.subr.bf16.mxu0 %v2184
  %3003 = vmatpush1.bf16.msra.mxu0 %v2183
  %3004 = vmatprep.subr.bf16.mxu0 %v2188
  %3005 = vmatpush1.bf16.msra.mxu0 %v2187
  %3006 = vmatprep.subr.bf16.mxu0 %v2192
  %3007 = vmatpush1.bf16.msra.mxu0 %v2191
  %3008 = vmatprep.subr.bf16.mxu0 %v2196
  %3009 = vmatpush1.bf16.msra.mxu0 %v2195
  %3010 = vmatprep.subr.bf16.mxu0 %v2200
  %3011 = vmatpush1.bf16.msra.mxu0 %v2199
  %3012 = vmatprep.subr.bf16.mxu0 0
  %3013 = vmatpush1.bf16.msra.mxu0 0
  %3014 = vmatprep.subr.bf16.mxu0 0
  %3015 = vmatpush1.bf16.msra.mxu0 0
  %3016 = vmatprep.subr.bf16.mxu0 0
  %3017 = vmatpush1.bf16.msra.mxu0 0
  %3018 = vmatprep.subr.bf16.mxu0 0
  %3019 = vmatpush1.bf16.msra.mxu0 0
  %3020 = vmatprep.subr.bf16.mxu0 0
  %3021 = vmatpush1.bf16.msra.mxu0 0
  %3022 = vmatprep.subr.bf16.mxu0 0
  %3023 = vmatpush1.bf16.msra.mxu0 0
  %3024 = vmatprep.subr.bf16.mxu0 0
  %3025 = vmatpush1.bf16.msra.mxu0 0
  %3026 = vmatprep.subr.bf16.mxu0 0
  %3027 = vmatpush1.bf16.msra.mxu0 0
  %3028 = vmatprep.mubr.bf16.mxu0 0
  %3029 = vmatmul.mubr.bf16.gmra.mrb[0].mxu0 %v2995
  %v3030 = vpop.f32.mrb[0].mxu0
  %v3031 = vadd.f32 0.0, %v3030
  %v3032 = vpop.f32.mrb[0].mxu0
  %v3033 = vadd.f32 0.0, %v3032
  %v3034 = vpop.f32.mrb[0].mxu0
  %v3035 = vpop.f32.mrb[0].mxu0
  %3036 = vdwg.mxu0
  %3037 = vmatprep.subr.bf16.mxu0 %v2174
  %3038 = vmatpush1.bf16.msra.mxu0 %v2173
  %3039 = vmatprep.subr.bf16.mxu0 %v2178
  %3040 = vmatpush1.bf16.msra.mxu0 %v2177
  %3041 = vmatprep.subr.bf16.mxu0 %v2182
  %3042 = vmatpush1.bf16.msra.mxu0 %v2181
  %3043 = vmatprep.subr.bf16.mxu0 %v2186
  %3044 = vmatpush1.bf16.msra.mxu0 %v2185
  %3045 = vmatprep.subr.bf16.mxu0 %v2190
  %3046 = vmatpush1.bf16.msra.mxu0 %v2189
  %3047 = vmatprep.subr.bf16.mxu0 %v2194
  %3048 = vmatpush1.bf16.msra.mxu0 %v2193
  %3049 = vmatprep.subr.bf16.mxu0 %v2198
  %3050 = vmatpush1.bf16.msra.mxu0 %v2197
  %3051 = vmatprep.subr.bf16.mxu0 %v2202
  %3052 = vmatpush1.bf16.msra.mxu0 %v2201
  %3053 = vmatprep.subr.bf16.mxu0 0
  %3054 = vmatpush1.bf16.msra.mxu0 0
  %3055 = vmatprep.subr.bf16.mxu0 0
  %3056 = vmatpush1.bf16.msra.mxu0 0
  %3057 = vmatprep.subr.bf16.mxu0 0
  %3058 = vmatpush1.bf16.msra.mxu0 0
  %3059 = vmatprep.subr.bf16.mxu0 0
  %3060 = vmatpush1.bf16.msra.mxu0 0
  %3061 = vmatprep.subr.bf16.mxu0 0
  %3062 = vmatpush1.bf16.msra.mxu0 0
  %3063 = vmatprep.subr.bf16.mxu0 0
  %3064 = vmatpush1.bf16.msra.mxu0 0
  %3065 = vmatprep.subr.bf16.mxu0 0
  %3066 = vmatpush1.bf16.msra.mxu0 0
  %3067 = vmatprep.subr.bf16.mxu0 0
  %3068 = vmatpush1.bf16.msra.mxu0 0
  %3069 = vmatprep.mubr.bf16.mxu0 0
  %3070 = vmatmul.mubr.bf16.gmra.mrb[0].mxu0 %v2995
  %v3071 = vpop.f32.mrb[0].mxu0
  %v3072 = vadd.f32 0.0, %v3071
  %v3073 = vpop.f32.mrb[0].mxu0
  %v3074 = vadd.f32 0.0, %v3073
  %v3075 = vpop.f32.mrb[0].mxu0
  %v3076 = vpop.f32.mrb[0].mxu0
  %3077 = vdwg.mxu0
  %3078 = vmatprep.subr.bf16.mxu0 %v2414
  %3079 = vmatpush1.bf16.msra.mxu0 %v2413
  %3080 = vmatprep.subr.bf16.mxu0 %v2418
  %3081 = vmatpush1.bf16.msra.mxu0 %v2417
  %3082 = vmatprep.subr.bf16.mxu0 %v2422
  %3083 = vmatpush1.bf16.msra.mxu0 %v2421
  %3084 = vmatprep.subr.bf16.mxu0 %v2426
  %3085 = vmatpush1.bf16.msra.mxu0 %v2425
  %3086 = vmatprep.subr.bf16.mxu0 %v2430
  %3087 = vmatpush1.bf16.msra.mxu0 %v2429
  %3088 = vmatprep.subr.bf16.mxu0 %v2434
  %3089 = vmatpush1.bf16.msra.mxu0 %v2433
  %3090 = vmatprep.subr.bf16.mxu0 %v2438
  %3091 = vmatpush1.bf16.msra.mxu0 %v2437
  %3092 = vmatprep.subr.bf16.mxu0 %v2442
  %3093 = vmatpush1.bf16.msra.mxu0 %v2441
  %3094 = vmatprep.subr.bf16.mxu0 0
  %3095 = vmatpush1.bf16.msra.mxu0 0
  %3096 = vmatprep.subr.bf16.mxu0 0
  %3097 = vmatpush1.bf16.msra.mxu0 0
  %3098 = vmatprep.subr.bf16.mxu0 0
  %3099 = vmatpush1.bf16.msra.mxu0 0
  %3100 = vmatprep.subr.bf16.mxu0 0
  %3101 = vmatpush1.bf16.msra.mxu0 0
  %3102 = vmatprep.subr.bf16.mxu0 0
  %3103 = vmatpush1.bf16.msra.mxu0 0
  %3104 = vmatprep.subr.bf16.mxu0 0
  %3105 = vmatpush1.bf16.msra.mxu0 0
  %3106 = vmatprep.subr.bf16.mxu0 0
  %3107 = vmatpush1.bf16.msra.mxu0 0
  %3108 = vmatprep.subr.bf16.mxu0 0
  %3109 = vmatpush1.bf16.msra.mxu0 0
  %3110 = vmatprep.mubr.bf16.mxu0 0
  %3111 = vmatmul.mubr.bf16.gmra.mrb[0].mxu0 %v1232
  %v3112 = vpop.f32.mrb[0].mxu0
  %v3113 = vadd.f32 %v3031, %v3112
  %v3114 = vpop.f32.mrb[0].mxu0
  %v3115 = vadd.f32 %v3033, %v3114
  %v3116 = vpop.f32.mrb[0].mxu0
  %v3117 = vpop.f32.mrb[0].mxu0
  %3118 = vdwg.mxu0
  %3119 = vmatprep.subr.bf16.mxu0 %v2416
  %3120 = vmatpush1.bf16.msra.mxu0 %v2415
  %3121 = vmatprep.subr.bf16.mxu0 %v2420
  %3122 = vmatpush1.bf16.msra.mxu0 %v2419
  %3123 = vmatprep.subr.bf16.mxu0 %v2424
  %3124 = vmatpush1.bf16.msra.mxu0 %v2423
  %3125 = vmatprep.subr.bf16.mxu0 %v2428
  %3126 = vmatpush1.bf16.msra.mxu0 %v2427
  %3127 = vmatprep.subr.bf16.mxu0 %v2432
  %3128 = vmatpush1.bf16.msra.mxu0 %v2431
  %3129 = vmatprep.subr.bf16.mxu0 %v2436
  %3130 = vmatpush1.bf16.msra.mxu0 %v2435
  %3131 = vmatprep.subr.bf16.mxu0 %v2440
  %3132 = vmatpush1.bf16.msra.mxu0 %v2439
  %3133 = vmatprep.subr.bf16.mxu0 %v2444
  %3134 = vmatpush1.bf16.msra.mxu0 %v2443
  %3135 = vmatprep.subr.bf16.mxu0 0
  %3136 = vmatpush1.bf16.msra.mxu0 0
  %3137 = vmatprep.subr.bf16.mxu0 0
  %3138 = vmatpush1.bf16.msra.mxu0 0
  %3139 = vmatprep.subr.bf16.mxu0 0
  %3140 = vmatpush1.bf16.msra.mxu0 0
  %3141 = vmatprep.subr.bf16.mxu0 0
  %3142 = vmatpush1.bf16.msra.mxu0 0
  %3143 = vmatprep.subr.bf16.mxu0 0
  %3144 = vmatpush1.bf16.msra.mxu0 0
  %3145 = vmatprep.subr.bf16.mxu0 0
  %3146 = vmatpush1.bf16.msra.mxu0 0
  %3147 = vmatprep.subr.bf16.mxu0 0
  %3148 = vmatpush1.bf16.msra.mxu0 0
  %3149 = vmatprep.subr.bf16.mxu0 0
  %3150 = vmatpush1.bf16.msra.mxu0 0
  %3151 = vmatprep.mubr.bf16.mxu0 0
  %3152 = vmatmul.mubr.bf16.gmra.mrb[0].mxu0 %v1232
  %v3153 = vpop.f32.mrb[0].mxu0
  %v3154 = vadd.f32 %v3072, %v3153
  %v3155 = vpop.f32.mrb[0].mxu0
  %v3156 = vadd.f32 %v3074, %v3155
  %v3157 = vpop.f32.mrb[0].mxu0
  %v3158 = vpop.f32.mrb[0].mxu0
  %3159 = vdwg.mxu0
  %v3160 = vadd.f32 %v3113, %v2564
  %v3161 = vadd.f32 %v3115, %v2568
  %v3162 = vadd.f32 %v3154, %v2572
  %v3163 = vadd.f32 %v3156, %v2576
  %v3164 = vxor.u32 %v3160, 2147483648
  %v3165 = vmul.f32 %v3164, 1.442695
  %v3166 = vpow.pop %v3165
  %v3167 = vadd.f32 %v3166, 1.0
  %v3168 = vrcp.pop %v3167
  %v3169 = vmul.f32 1.0, %v3168
  %v3170 = vxor.u32 %v3161, 2147483648
  %v3171 = vmul.f32 %v3170, 1.442695
  %v3172 = vpow.pop %v3171
  %v3173 = vadd.f32 %v3172, 1.0
  %v3174 = vrcp.pop %v3173
  %v3175 = vmul.f32 1.0, %v3174
  %v3176 = vtanh.pop %v3162
  %v3177 = vxor.u32 %v3163, 2147483648
  %v3178 = vmul.f32 %v3177, 1.442695
  %v3179 = vpow.pop %v3178
  %v3180 = vadd.f32 %v3179, 1.0
  %v3181 = vrcp.pop %v3180
  %v3182 = vmul.f32 1.0, %v3181
  %v3183 = vmul.f32 %v3175, %v2992
  %v3184 = vmul.f32 %v3169, %v3176
  %v3185 = vadd.f32 %v3183, %v3184
  %v3186 = vtanh.pop %v3185
  %v3187 = vmul.f32 %v3182, %v3186
  %v3188 = vpack.c.bf16 %v3187, %v3187
  %3189 = vmatprep.subr.bf16.mxu0 %v2172
  %3190 = vmatpush1.bf16.msra.mxu0 %v2171
  %3191 = vmatprep.subr.bf16.mxu0 %v2176
  %3192 = vmatpush1.bf16.msra.mxu0 %v2175
  %3193 = vmatprep.subr.bf16.mxu0 %v2180
  %3194 = vmatpush1.bf16.msra.mxu0 %v2179
  %3195 = vmatprep.subr.bf16.mxu0 %v2184
  %3196 = vmatpush1.bf16.msra.mxu0 %v2183
  %3197 = vmatprep.subr.bf16.mxu0 %v2188
  %3198 = vmatpush1.bf16.msra.mxu0 %v2187
  %3199 = vmatprep.subr.bf16.mxu0 %v2192
  %3200 = vmatpush1.bf16.msra.mxu0 %v2191
  %3201 = vmatprep.subr.bf16.mxu0 %v2196
  %3202 = vmatpush1.bf16.msra.mxu0 %v2195
  %3203 = vmatprep.subr.bf16.mxu0 %v2200
  %3204 = vmatpush1.bf16.msra.mxu0 %v2199
  %3205 = vmatprep.subr.bf16.mxu0 0
  %3206 = vmatpush1.bf16.msra.mxu0 0
  %3207 = vmatprep.subr.bf16.mxu0 0
  %3208 = vmatpush1.bf16.msra.mxu0 0
  %3209 = vmatprep.subr.bf16.mxu0 0
  %3210 = vmatpush1.bf16.msra.mxu0 0
  %3211 = vmatprep.subr.bf16.mxu0 0
  %3212 = vmatpush1.bf16.msra.mxu0 0
  %3213 = vmatprep.subr.bf16.mxu0 0
  %3214 = vmatpush1.bf16.msra.mxu0 0
  %3215 = vmatprep.subr.bf16.mxu0 0
  %3216 = vmatpush1.bf16.msra.mxu0 0
  %3217 = vmatprep.subr.bf16.mxu0 0
  %3218 = vmatpush1.bf16.msra.mxu0 0
  %3219 = vmatprep.subr.bf16.mxu0 0
  %3220 = vmatpush1.bf16.msra.mxu0 0
  %3221 = vmatprep.mubr.bf16.mxu0 0
  %3222 = vmatmul.mubr.bf16.gmra.mrb[0].mxu0 %v3188
  %v3223 = vpop.f32.mrb[0].mxu0
  %v3224 = vadd.f32 0.0, %v3223
  %v3225 = vpop.f32.mrb[0].mxu0
  %v3226 = vadd.f32 0.0, %v3225
  %v3227 = vpop.f32.mrb[0].mxu0
  %v3228 = vpop.f32.mrb[0].mxu0
  %3229 = vdwg.mxu0
  %3230 = vmatprep.subr.bf16.mxu0 %v2174
  %3231 = vmatpush1.bf16.msra.mxu0 %v2173
  %3232 = vmatprep.subr.bf16.mxu0 %v2178
  %3233 = vmatpush1.bf16.msra.mxu0 %v2177
  %3234 = vmatprep.subr.bf16.mxu0 %v2182
  %3235 = vmatpush1.bf16.msra.mxu0 %v2181
  %3236 = vmatprep.subr.bf16.mxu0 %v2186
  %3237 = vmatpush1.bf16.msra.mxu0 %v2185
  %3238 = vmatprep.subr.bf16.mxu0 %v2190
  %3239 = vmatpush1.bf16.msra.mxu0 %v2189
  %3240 = vmatprep.subr.bf16.mxu0 %v2194
  %3241 = vmatpush1.bf16.msra.mxu0 %v2193
  %3242 = vmatprep.subr.bf16.mxu0 %v2198
  %3243 = vmatpush1.bf16.msra.mxu0 %v2197
  %3244 = vmatprep.subr.bf16.mxu0 %v2202
  %3245 = vmatpush1.bf16.msra.mxu0 %v2201
  %3246 = vmatprep.subr.bf16.mxu0 0
  %3247 = vmatpush1.bf16.msra.mxu0 0
  %3248 = vmatprep.subr.bf16.mxu0 0
  %3249 = vmatpush1.bf16.msra.mxu0 0
  %3250 = vmatprep.subr.bf16.mxu0 0
  %3251 = vmatpush1.bf16.msra.mxu0 0
  %3252 = vmatprep.subr.bf16.mxu0 0
  %3253 = vmatpush1.bf16.msra.mxu0 0
  %3254 = vmatprep.subr.bf16.mxu0 0
  %3255 = vmatpush1.bf16.msra.mxu0 0
  %3256 = vmatprep.subr.bf16.mxu0 0
  %3257 = vmatpush1.bf16.msra.mxu0 0
  %3258 = vmatprep.subr.bf16.mxu0 0
  %3259 = vmatpush1.bf16.msra.mxu0 0
  %3260 = vmatprep.subr.bf16.mxu0 0
  %3261 = vmatpush1.bf16.msra.mxu0 0
  %3262 = vmatprep.mubr.bf16.mxu0 0
  %3263 = vmatmul.mubr.bf16.gmra.mrb[0].mxu0 %v3188
  %v3264 = vpop.f32.mrb[0].mxu0
  %v3265 = vadd.f32 0.0, %v3264
  %v3266 = vpop.f32.mrb[0].mxu0
  %v3267 = vadd.f32 0.0, %v3266
  %v3268 = vpop.f32.mrb[0].mxu0
  %v3269 = vpop.f32.mrb[0].mxu0
  %3270 = vdwg.mxu0
  %3271 = vmatprep.subr.bf16.mxu0 %v2414
  %3272 = vmatpush1.bf16.msra.mxu0 %v2413
  %3273 = vmatprep.subr.bf16.mxu0 %v2418
  %3274 = vmatpush1.bf16.msra.mxu0 %v2417
  %3275 = vmatprep.subr.bf16.mxu0 %v2422
  %3276 = vmatpush1.bf16.msra.mxu0 %v2421
  %3277 = vmatprep.subr.bf16.mxu0 %v2426
  %3278 = vmatpush1.bf16.msra.mxu0 %v2425
  %3279 = vmatprep.subr.bf16.mxu0 %v2430
  %3280 = vmatpush1.bf16.msra.mxu0 %v2429
  %3281 = vmatprep.subr.bf16.mxu0 %v2434
  %3282 = vmatpush1.bf16.msra.mxu0 %v2433
  %3283 = vmatprep.subr.bf16.mxu0 %v2438
  %3284 = vmatpush1.bf16.msra.mxu0 %v2437
  %3285 = vmatprep.subr.bf16.mxu0 %v2442
  %3286 = vmatpush1.bf16.msra.mxu0 %v2441
  %3287 = vmatprep.subr.bf16.mxu0 0
  %3288 = vmatpush1.bf16.msra.mxu0 0
  %3289 = vmatprep.subr.bf16.mxu0 0
  %3290 = vmatpush1.bf16.msra.mxu0 0
  %3291 = vmatprep.subr.bf16.mxu0 0
  %3292 = vmatpush1.bf16.msra.mxu0 0
  %3293 = vmatprep.subr.bf16.mxu0 0
  %3294 = vmatpush1.bf16.msra.mxu0 0
  %3295 = vmatprep.subr.bf16.mxu0 0
  %3296 = vmatpush1.bf16.msra.mxu0 0
  %3297 = vmatprep.subr.bf16.mxu0 0
  %3298 = vmatpush1.bf16.msra.mxu0 0
  %3299 = vmatprep.subr.bf16.mxu0 0
  %3300 = vmatpush1.bf16.msra.mxu0 0
  %3301 = vmatprep.subr.bf16.mxu0 0
  %3302 = vmatpush1.bf16.msra.mxu0 0
  %3303 = vmatprep.mubr.bf16.mxu0 0
  %3304 = vmatmul.mubr.bf16.gmra.mrb[0].mxu0 %v1037
  %v3305 = vpop.f32.mrb[0].mxu0
  %v3306 = vadd.f32 %v3224, %v3305
  %v3307 = vpop.f32.mrb[0].mxu0
  %v3308 = vadd.f32 %v3226, %v3307
  %v3309 = vpop.f32.mrb[0].mxu0
  %v3310 = vpop.f32.mrb[0].mxu0
  %3311 = vdwg.mxu0
  %3312 = vmatprep.subr.bf16.mxu0 %v2416
  %3313 = vmatpush1.bf16.msra.mxu0 %v2415
  %3314 = vmatprep.subr.bf16.mxu0 %v2420
  %3315 = vmatpush1.bf16.msra.mxu0 %v2419
  %3316 = vmatprep.subr.bf16.mxu0 %v2424
  %3317 = vmatpush1.bf16.msra.mxu0 %v2423
  %3318 = vmatprep.subr.bf16.mxu0 %v2428
  %3319 = vmatpush1.bf16.msra.mxu0 %v2427
  %3320 = vmatprep.subr.bf16.mxu0 %v2432
  %3321 = vmatpush1.bf16.msra.mxu0 %v2431
  %3322 = vmatprep.subr.bf16.mxu0 %v2436
  %3323 = vmatpush1.bf16.msra.mxu0 %v2435
  %3324 = vmatprep.subr.bf16.mxu0 %v2440
  %3325 = vmatpush1.bf16.msra.mxu0 %v2439
  %3326 = vmatprep.subr.bf16.mxu0 %v2444
  %3327 = vmatpush1.bf16.msra.mxu0 %v2443
  %3328 = vmatprep.subr.bf16.mxu0 0
  %3329 = vmatpush1.bf16.msra.mxu0 0
  %3330 = vmatprep.subr.bf16.mxu0 0
  %3331 = vmatpush1.bf16.msra.mxu0 0
  %3332 = vmatprep.subr.bf16.mxu0 0
  %3333 = vmatpush1.bf16.msra.mxu0 0
  %3334 = vmatprep.subr.bf16.mxu0 0
  %3335 = vmatpush1.bf16.msra.mxu0 0
  %3336 = vmatprep.subr.bf16.mxu0 0
  %3337 = vmatpush1.bf16.msra.mxu0 0
  %3338 = vmatprep.subr.bf16.mxu0 0
  %3339 = vmatpush1.bf16.msra.mxu0 0
  %3340 = vmatprep.subr.bf16.mxu0 0
  %3341 = vmatpush1.bf16.msra.mxu0 0
  %3342 = vmatprep.subr.bf16.mxu0 0
  %3343 = vmatpush1.bf16.msra.mxu0 0
  %3344 = vmatprep.mubr.bf16.mxu0 0
  %3345 = vmatmul.mubr.bf16.gmra.mrb[0].mxu0 %v1037
  %v3346 = vpop.f32.mrb[0].mxu0
  %v3347 = vadd.f32 %v3265, %v3346
  %v3348 = vpop.f32.mrb[0].mxu0
  %v3349 = vadd.f32 %v3267, %v3348
  %v3350 = vpop.f32.mrb[0].mxu0
  %v3351 = vpop.f32.mrb[0].mxu0
  %3352 = vdwg.mxu0
  %v3353 = vadd.f32 %v3306, %v2564
  %v3354 = vadd.f32 %v3308, %v2568
  %v3355 = vadd.f32 %v3347, %v2572
  %v3356 = vadd.f32 %v3349, %v2576
  %v3357 = vxor.u32 %v3353, 2147483648
  %v3358 = vmul.f32 %v3357, 1.442695
  %v3359 = vpow.pop %v3358
  %v3360 = vadd.f32 %v3359, 1.0
  %v3361 = vrcp.pop %v3360
  %v3362 = vmul.f32 1.0, %v3361
  %v3363 = vxor.u32 %v3354, 2147483648
  %v3364 = vmul.f32 %v3363, 1.442695
  %v3365 = vpow.pop %v3364
  %v3366 = vadd.f32 %v3365, 1.0
  %v3367 = vrcp.pop %v3366
  %v3368 = vmul.f32 1.0, %v3367
  %v3369 = vtanh.pop %v3355
  %v3370 = vxor.u32 %v3356, 2147483648
  %v3371 = vmul.f32 %v3370, 1.442695
  %v3372 = vpow.pop %v3371
  %v3373 = vadd.f32 %v3372, 1.0
  %v3374 = vrcp.pop %v3373
  %v3375 = vmul.f32 1.0, %v3374
  %v3376 = vmul.f32 %v3368, %v3185
  %v3377 = vmul.f32 %v3362, %v3369
  %v3378 = vadd.f32 %v3376, %v3377
  %v3379 = vtanh.pop %v3378
  %v3380 = vmul.f32 %v3375, %v3379
  %v3381 = vpack.c.bf16 %v3380, %v3380
  %3382 = vmatprep.subr.bf16.mxu0 %v2172
  %3383 = vmatpush1.bf16.msra.mxu0 %v2171
  %3384 = vmatprep.subr.bf16.mxu0 %v2176
  %3385 = vmatpush1.bf16.msra.mxu0 %v2175
  %3386 = vmatprep.subr.bf16.mxu0 %v2180
  %3387 = vmatpush1.bf16.msra.mxu0 %v2179
  %3388 = vmatprep.subr.bf16.mxu0 %v2184
  %3389 = vmatpush1.bf16.msra.mxu0 %v2183
  %3390 = vmatprep.subr.bf16.mxu0 %v2188
  %3391 = vmatpush1.bf16.msra.mxu0 %v2187
  %3392 = vmatprep.subr.bf16.mxu0 %v2192
  %3393 = vmatpush1.bf16.msra.mxu0 %v2191
  %3394 = vmatprep.subr.bf16.mxu0 %v2196
  %3395 = vmatpush1.bf16.msra.mxu0 %v2195
  %3396 = vmatprep.subr.bf16.mxu0 %v2200
  %3397 = vmatpush1.bf16.msra.mxu0 %v2199
  %3398 = vmatprep.subr.bf16.mxu0 0
  %3399 = vmatpush1.bf16.msra.mxu0 0
  %3400 = vmatprep.subr.bf16.mxu0 0
  %3401 = vmatpush1.bf16.msra.mxu0 0
  %3402 = vmatprep.subr.bf16.mxu0 0
  %3403 = vmatpush1.bf16.msra.mxu0 0
  %3404 = vmatprep.subr.bf16.mxu0 0
  %3405 = vmatpush1.bf16.msra.mxu0 0
  %3406 = vmatprep.subr.bf16.mxu0 0
  %3407 = vmatpush1.bf16.msra.mxu0 0
  %3408 = vmatprep.subr.bf16.mxu0 0
  %3409 = vmatpush1.bf16.msra.mxu0 0
  %3410 = vmatprep.subr.bf16.mxu0 0
  %3411 = vmatpush1.bf16.msra.mxu0 0
  %3412 = vmatprep.subr.bf16.mxu0 0
  %3413 = vmatpush1.bf16.msra.mxu0 0
  %3414 = vmatprep.mubr.bf16.mxu0 0
  %3415 = vmatmul.mubr.bf16.gmra.mrb[0].mxu0 %v3381
  %v3416 = vpop.f32.mrb[0].mxu0
  %v3417 = vadd.f32 0.0, %v3416
  %v3418 = vpop.f32.mrb[0].mxu0
  %v3419 = vadd.f32 0.0, %v3418
  %v3420 = vpop.f32.mrb[0].mxu0
  %v3421 = vpop.f32.mrb[0].mxu0
  %3422 = vdwg.mxu0
  %3423 = vmatprep.subr.bf16.mxu0 %v2174
  %3424 = vmatpush1.bf16.msra.mxu0 %v2173
  %3425 = vmatprep.subr.bf16.mxu0 %v2178
  %3426 = vmatpush1.bf16.msra.mxu0 %v2177
  %3427 = vmatprep.subr.bf16.mxu0 %v2182
  %3428 = vmatpush1.bf16.msra.mxu0 %v2181
  %3429 = vmatprep.subr.bf16.mxu0 %v2186
  %3430 = vmatpush1.bf16.msra.mxu0 %v2185
  %3431 = vmatprep.subr.bf16.mxu0 %v2190
  %3432 = vmatpush1.bf16.msra.mxu0 %v2189
  %3433 = vmatprep.subr.bf16.mxu0 %v2194
  %3434 = vmatpush1.bf16.msra.mxu0 %v2193
  %3435 = vmatprep.subr.bf16.mxu0 %v2198
  %3436 = vmatpush1.bf16.msra.mxu0 %v2197
  %3437 = vmatprep.subr.bf16.mxu0 %v2202
  %3438 = vmatpush1.bf16.msra.mxu0 %v2201
  %3439 = vmatprep.subr.bf16.mxu0 0
  %3440 = vmatpush1.bf16.msra.mxu0 0
  %3441 = vmatprep.subr.bf16.mxu0 0
  %3442 = vmatpush1.bf16.msra.mxu0 0
  %3443 = vmatprep.subr.bf16.mxu0 0
  %3444 = vmatpush1.bf16.msra.mxu0 0
  %3445 = vmatprep.subr.bf16.mxu0 0
  %3446 = vmatpush1.bf16.msra.mxu0 0
  %3447 = vmatprep.subr.bf16.mxu0 0
  %3448 = vmatpush1.bf16.msra.mxu0 0
  %3449 = vmatprep.subr.bf16.mxu0 0
  %3450 = vmatpush1.bf16.msra.mxu0 0
  %3451 = vmatprep.subr.bf16.mxu0 0
  %3452 = vmatpush1.bf16.msra.mxu0 0
  %3453 = vmatprep.subr.bf16.mxu0 0
  %3454 = vmatpush1.bf16.msra.mxu0 0
  %3455 = vmatprep.mubr.bf16.mxu0 0
  %3456 = vmatmul.mubr.bf16.gmra.mrb[0].mxu0 %v3381
  %v3457 = vpop.f32.mrb[0].mxu0
  %v3458 = vadd.f32 0.0, %v3457
  %v3459 = vpop.f32.mrb[0].mxu0
  %v3460 = vadd.f32 0.0, %v3459
  %v3461 = vpop.f32.mrb[0].mxu0
  %v3462 = vpop.f32.mrb[0].mxu0
  %3463 = vdwg.mxu0
  %3464 = vmatprep.subr.bf16.mxu0 %v2414
  %3465 = vmatpush1.bf16.msra.mxu0 %v2413
  %3466 = vmatprep.subr.bf16.mxu0 %v2418
  %3467 = vmatpush1.bf16.msra.mxu0 %v2417
  %3468 = vmatprep.subr.bf16.mxu0 %v2422
  %3469 = vmatpush1.bf16.msra.mxu0 %v2421
  %3470 = vmatprep.subr.bf16.mxu0 %v2426
  %3471 = vmatpush1.bf16.msra.mxu0 %v2425
  %3472 = vmatprep.subr.bf16.mxu0 %v2430
  %3473 = vmatpush1.bf16.msra.mxu0 %v2429
  %3474 = vmatprep.subr.bf16.mxu0 %v2434
  %3475 = vmatpush1.bf16.msra.mxu0 %v2433
  %3476 = vmatprep.subr.bf16.mxu0 %v2438
  %3477 = vmatpush1.bf16.msra.mxu0 %v2437
  %3478 = vmatprep.subr.bf16.mxu0 %v2442
  %3479 = vmatpush1.bf16.msra.mxu0 %v2441
  %3480 = vmatprep.subr.bf16.mxu0 0
  %3481 = vmatpush1.bf16.msra.mxu0 0
  %3482 = vmatprep.subr.bf16.mxu0 0
  %3483 = vmatpush1.bf16.msra.mxu0 0
  %3484 = vmatprep.subr.bf16.mxu0 0
  %3485 = vmatpush1.bf16.msra.mxu0 0
  %3486 = vmatprep.subr.bf16.mxu0 0
  %3487 = vmatpush1.bf16.msra.mxu0 0
  %3488 = vmatprep.subr.bf16.mxu0 0
  %3489 = vmatpush1.bf16.msra.mxu0 0
  %3490 = vmatprep.subr.bf16.mxu0 0
  %3491 = vmatpush1.bf16.msra.mxu0 0
  %3492 = vmatprep.subr.bf16.mxu0 0
  %3493 = vmatpush1.bf16.msra.mxu0 0
  %3494 = vmatprep.subr.bf16.mxu0 0
  %3495 = vmatpush1.bf16.msra.mxu0 0
  %3496 = vmatprep.mubr.bf16.mxu0 0
  %3497 = vmatmul.mubr.bf16.gmra.mrb[0].mxu0 %v842
  %v3498 = vpop.f32.mrb[0].mxu0
  %v3499 = vadd.f32 %v3417, %v3498
  %v3500 = vpop.f32.mrb[0].mxu0
  %v3501 = vadd.f32 %v3419, %v3500
  %v3502 = vpop.f32.mrb[0].mxu0
  %v3503 = vpop.f32.mrb[0].mxu0
  %3504 = vdwg.mxu0
  %3505 = vmatprep.subr.bf16.mxu0 %v2416
  %3506 = vmatpush1.bf16.msra.mxu0 %v2415
  %3507 = vmatprep.subr.bf16.mxu0 %v2420
  %3508 = vmatpush1.bf16.msra.mxu0 %v2419
  %3509 = vmatprep.subr.bf16.mxu0 %v2424
  %3510 = vmatpush1.bf16.msra.mxu0 %v2423
  %3511 = vmatprep.subr.bf16.mxu0 %v2428
  %3512 = vmatpush1.bf16.msra.mxu0 %v2427
  %3513 = vmatprep.subr.bf16.mxu0 %v2432
  %3514 = vmatpush1.bf16.msra.mxu0 %v2431
  %3515 = vmatprep.subr.bf16.mxu0 %v2436
  %3516 = vmatpush1.bf16.msra.mxu0 %v2435
  %3517 = vmatprep.subr.bf16.mxu0 %v2440
  %3518 = vmatpush1.bf16.msra.mxu0 %v2439
  %3519 = vmatprep.subr.bf16.mxu0 %v2444
  %3520 = vmatpush1.bf16.msra.mxu0 %v2443
  %3521 = vmatprep.subr.bf16.mxu0 0
  %3522 = vmatpush1.bf16.msra.mxu0 0
  %3523 = vmatprep.subr.bf16.mxu0 0
  %3524 = vmatpush1.bf16.msra.mxu0 0
  %3525 = vmatprep.subr.bf16.mxu0 0
  %3526 = vmatpush1.bf16.msra.mxu0 0
  %3527 = vmatprep.subr.bf16.mxu0 0
  %3528 = vmatpush1.bf16.msra.mxu0 0
  %3529 = vmatprep.subr.bf16.mxu0 0
  %3530 = vmatpush1.bf16.msra.mxu0 0
  %3531 = vmatprep.subr.bf16.mxu0 0
  %3532 = vmatpush1.bf16.msra.mxu0 0
  %3533 = vmatprep.subr.bf16.mxu0 0
  %3534 = vmatpush1.bf16.msra.mxu0 0
  %3535 = vmatprep.subr.bf16.mxu0 0
  %3536 = vmatpush1.bf16.msra.mxu0 0
  %3537 = vmatprep.mubr.bf16.mxu0 0
  %3538 = vmatmul.mubr.bf16.gmra.mrb[0].mxu0 %v842
  %v3539 = vpop.f32.mrb[0].mxu0
  %v3540 = vadd.f32 %v3458, %v3539
  %v3541 = vpop.f32.mrb[0].mxu0
  %v3542 = vadd.f32 %v3460, %v3541
  %v3543 = vpop.f32.mrb[0].mxu0
  %v3544 = vpop.f32.mrb[0].mxu0
  %3545 = vdwg.mxu0
  %v3546 = vadd.f32 %v3499, %v2564
  %v3547 = vadd.f32 %v3501, %v2568
  %v3548 = vadd.f32 %v3540, %v2572
  %v3549 = vadd.f32 %v3542, %v2576
  %v3550 = vxor.u32 %v3546, 2147483648
  %v3551 = vmul.f32 %v3550, 1.442695
  %v3552 = vpow.pop %v3551
  %v3553 = vadd.f32 %v3552, 1.0
  %v3554 = vrcp.pop %v3553
  %v3555 = vmul.f32 1.0, %v3554
  %v3556 = vxor.u32 %v3547, 2147483648
  %v3557 = vmul.f32 %v3556, 1.442695
  %v3558 = vpow.pop %v3557
  %v3559 = vadd.f32 %v3558, 1.0
  %v3560 = vrcp.pop %v3559
  %v3561 = vmul.f32 1.0, %v3560
  %v3562 = vtanh.pop %v3548
  %v3563 = vxor.u32 %v3549, 2147483648
  %v3564 = vmul.f32 %v3563, 1.442695
  %v3565 = vpow.pop %v3564
  %v3566 = vadd.f32 %v3565, 1.0
  %v3567 = vrcp.pop %v3566
  %v3568 = vmul.f32 1.0, %v3567
  %v3569 = vmul.f32 %v3561, %v3378
  %v3570 = vmul.f32 %v3555, %v3562
  %v3571 = vadd.f32 %v3569, %v3570
  %v3572 = vtanh.pop %v3571
  %v3573 = vmul.f32 %v3568, %v3572
  %v3574 = vpack.c.bf16 %v3573, %v3573
  %3575 = vmatprep.subr.bf16.mxu0 %v2172
  %3576 = vmatpush1.bf16.msra.mxu0 %v2171
  %3577 = vmatprep.subr.bf16.mxu0 %v2176
  %3578 = vmatpush1.bf16.msra.mxu0 %v2175
  %3579 = vmatprep.subr.bf16.mxu0 %v2180
  %3580 = vmatpush1.bf16.msra.mxu0 %v2179
  %3581 = vmatprep.subr.bf16.mxu0 %v2184
  %3582 = vmatpush1.bf16.msra.mxu0 %v2183
  %3583 = vmatprep.subr.bf16.mxu0 %v2188
  %3584 = vmatpush1.bf16.msra.mxu0 %v2187
  %3585 = vmatprep.subr.bf16.mxu0 %v2192
  %3586 = vmatpush1.bf16.msra.mxu0 %v2191
  %3587 = vmatprep.subr.bf16.mxu0 %v2196
  %3588 = vmatpush1.bf16.msra.mxu0 %v2195
  %3589 = vmatprep.subr.bf16.mxu0 %v2200
  %3590 = vmatpush1.bf16.msra.mxu0 %v2199
  %3591 = vmatprep.subr.bf16.mxu0 0
  %3592 = vmatpush1.bf16.msra.mxu0 0
  %3593 = vmatprep.subr.bf16.mxu0 0
  %3594 = vmatpush1.bf16.msra.mxu0 0
  %3595 = vmatprep.subr.bf16.mxu0 0
  %3596 = vmatpush1.bf16.msra.mxu0 0
  %3597 = vmatprep.subr.bf16.mxu0 0
  %3598 = vmatpush1.bf16.msra.mxu0 0
  %3599 = vmatprep.subr.bf16.mxu0 0
  %3600 = vmatpush1.bf16.msra.mxu0 0
  %3601 = vmatprep.subr.bf16.mxu0 0
  %3602 = vmatpush1.bf16.msra.mxu0 0
  %3603 = vmatprep.subr.bf16.mxu0 0
  %3604 = vmatpush1.bf16.msra.mxu0 0
  %3605 = vmatprep.subr.bf16.mxu0 0
  %3606 = vmatpush1.bf16.msra.mxu0 0
  %3607 = vmatprep.mubr.bf16.mxu0 0
  %3608 = vmatmul.mubr.bf16.gmra.mrb[0].mxu0 %v3574
  %v3609 = vpop.f32.mrb[0].mxu0
  %v3610 = vadd.f32 0.0, %v3609
  %v3611 = vpop.f32.mrb[0].mxu0
  %v3612 = vadd.f32 0.0, %v3611
  %v3613 = vpop.f32.mrb[0].mxu0
  %v3614 = vpop.f32.mrb[0].mxu0
  %3615 = vdwg.mxu0
  %3616 = vmatprep.subr.bf16.mxu0 %v2174
  %3617 = vmatpush1.bf16.msra.mxu0 %v2173
  %3618 = vmatprep.subr.bf16.mxu0 %v2178
  %3619 = vmatpush1.bf16.msra.mxu0 %v2177
  %3620 = vmatprep.subr.bf16.mxu0 %v2182
  %3621 = vmatpush1.bf16.msra.mxu0 %v2181
  %3622 = vmatprep.subr.bf16.mxu0 %v2186
  %3623 = vmatpush1.bf16.msra.mxu0 %v2185
  %3624 = vmatprep.subr.bf16.mxu0 %v2190
  %3625 = vmatpush1.bf16.msra.mxu0 %v2189
  %3626 = vmatprep.subr.bf16.mxu0 %v2194
  %3627 = vmatpush1.bf16.msra.mxu0 %v2193
  %3628 = vmatprep.subr.bf16.mxu0 %v2198
  %3629 = vmatpush1.bf16.msra.mxu0 %v2197
  %3630 = vmatprep.subr.bf16.mxu0 %v2202
  %3631 = vmatpush1.bf16.msra.mxu0 %v2201
  %3632 = vmatprep.subr.bf16.mxu0 0
  %3633 = vmatpush1.bf16.msra.mxu0 0
  %3634 = vmatprep.subr.bf16.mxu0 0
  %3635 = vmatpush1.bf16.msra.mxu0 0
  %3636 = vmatprep.subr.bf16.mxu0 0
  %3637 = vmatpush1.bf16.msra.mxu0 0
  %3638 = vmatprep.subr.bf16.mxu0 0
  %3639 = vmatpush1.bf16.msra.mxu0 0
  %3640 = vmatprep.subr.bf16.mxu0 0
  %3641 = vmatpush1.bf16.msra.mxu0 0
  %3642 = vmatprep.subr.bf16.mxu0 0
  %3643 = vmatpush1.bf16.msra.mxu0 0
  %3644 = vmatprep.subr.bf16.mxu0 0
  %3645 = vmatpush1.bf16.msra.mxu0 0
  %3646 = vmatprep.subr.bf16.mxu0 0
  %3647 = vmatpush1.bf16.msra.mxu0 0
  %3648 = vmatprep.mubr.bf16.mxu0 0
  %3649 = vmatmul.mubr.bf16.gmra.mrb[0].mxu0 %v3574
  %v3650 = vpop.f32.mrb[0].mxu0
  %v3651 = vadd.f32 0.0, %v3650
  %v3652 = vpop.f32.mrb[0].mxu0
  %v3653 = vadd.f32 0.0, %v3652
  %v3654 = vpop.f32.mrb[0].mxu0
  %v3655 = vpop.f32.mrb[0].mxu0
  %3656 = vdwg.mxu0
  %3657 = vmatprep.subr.bf16.mxu0 %v2414
  %3658 = vmatpush1.bf16.msra.mxu0 %v2413
  %3659 = vmatprep.subr.bf16.mxu0 %v2418
  %3660 = vmatpush1.bf16.msra.mxu0 %v2417
  %3661 = vmatprep.subr.bf16.mxu0 %v2422
  %3662 = vmatpush1.bf16.msra.mxu0 %v2421
  %3663 = vmatprep.subr.bf16.mxu0 %v2426
  %3664 = vmatpush1.bf16.msra.mxu0 %v2425
  %3665 = vmatprep.subr.bf16.mxu0 %v2430
  %3666 = vmatpush1.bf16.msra.mxu0 %v2429
  %3667 = vmatprep.subr.bf16.mxu0 %v2434
  %3668 = vmatpush1.bf16.msra.mxu0 %v2433
  %3669 = vmatprep.subr.bf16.mxu0 %v2438
  %3670 = vmatpush1.bf16.msra.mxu0 %v2437
  %3671 = vmatprep.subr.bf16.mxu0 %v2442
  %3672 = vmatpush1.bf16.msra.mxu0 %v2441
  %3673 = vmatprep.subr.bf16.mxu0 0
  %3674 = vmatpush1.bf16.msra.mxu0 0
  %3675 = vmatprep.subr.bf16.mxu0 0
  %3676 = vmatpush1.bf16.msra.mxu0 0
  %3677 = vmatprep.subr.bf16.mxu0 0
  %3678 = vmatpush1.bf16.msra.mxu0 0
  %3679 = vmatprep.subr.bf16.mxu0 0
  %3680 = vmatpush1.bf16.msra.mxu0 0
  %3681 = vmatprep.subr.bf16.mxu0 0
  %3682 = vmatpush1.bf16.msra.mxu0 0
  %3683 = vmatprep.subr.bf16.mxu0 0
  %3684 = vmatpush1.bf16.msra.mxu0 0
  %3685 = vmatprep.subr.bf16.mxu0 0
  %3686 = vmatpush1.bf16.msra.mxu0 0
  %3687 = vmatprep.subr.bf16.mxu0 0
  %3688 = vmatpush1.bf16.msra.mxu0 0
  %3689 = vmatprep.mubr.bf16.mxu0 0
  %3690 = vmatmul.mubr.bf16.gmra.mrb[0].mxu0 %v647
  %v3691 = vpop.f32.mrb[0].mxu0
  %v3692 = vadd.f32 %v3610, %v3691
  %v3693 = vpop.f32.mrb[0].mxu0
  %v3694 = vadd.f32 %v3612, %v3693
  %v3695 = vpop.f32.mrb[0].mxu0
  %v3696 = vpop.f32.mrb[0].mxu0
  %3697 = vdwg.mxu0
  %3698 = vmatprep.subr.bf16.mxu0 %v2416
  %3699 = vmatpush1.bf16.msra.mxu0 %v2415
  %3700 = vmatprep.subr.bf16.mxu0 %v2420
  %3701 = vmatpush1.bf16.msra.mxu0 %v2419
  %3702 = vmatprep.subr.bf16.mxu0 %v2424
  %3703 = vmatpush1.bf16.msra.mxu0 %v2423
  %3704 = vmatprep.subr.bf16.mxu0 %v2428
  %3705 = vmatpush1.bf16.msra.mxu0 %v2427
  %3706 = vmatprep.subr.bf16.mxu0 %v2432
  %3707 = vmatpush1.bf16.msra.mxu0 %v2431
  %3708 = vmatprep.subr.bf16.mxu0 %v2436
  %3709 = vmatpush1.bf16.msra.mxu0 %v2435
  %3710 = vmatprep.subr.bf16.mxu0 %v2440
  %3711 = vmatpush1.bf16.msra.mxu0 %v2439
  %3712 = vmatprep.subr.bf16.mxu0 %v2444
  %3713 = vmatpush1.bf16.msra.mxu0 %v2443
  %3714 = vmatprep.subr.bf16.mxu0 0
  %3715 = vmatpush1.bf16.msra.mxu0 0
  %3716 = vmatprep.subr.bf16.mxu0 0
  %3717 = vmatpush1.bf16.msra.mxu0 0
  %3718 = vmatprep.subr.bf16.mxu0 0
  %3719 = vmatpush1.bf16.msra.mxu0 0
  %3720 = vmatprep.subr.bf16.mxu0 0
  %3721 = vmatpush1.bf16.msra.mxu0 0
  %3722 = vmatprep.subr.bf16.mxu0 0
  %3723 = vmatpush1.bf16.msra.mxu0 0
  %3724 = vmatprep.subr.bf16.mxu0 0
  %3725 = vmatpush1.bf16.msra.mxu0 0
  %3726 = vmatprep.subr.bf16.mxu0 0
  %3727 = vmatpush1.bf16.msra.mxu0 0
  %3728 = vmatprep.subr.bf16.mxu0 0
  %3729 = vmatpush1.bf16.msra.mxu0 0
  %3730 = vmatprep.mubr.bf16.mxu0 0
  %3731 = vmatmul.mubr.bf16.gmra.mrb[0].mxu0 %v647
  %v3732 = vpop.f32.mrb[0].mxu0
  %v3733 = vadd.f32 %v3651, %v3732
  %v3734 = vpop.f32.mrb[0].mxu0
  %v3735 = vadd.f32 %v3653, %v3734
  %v3736 = vpop.f32.mrb[0].mxu0
  %v3737 = vpop.f32.mrb[0].mxu0
  %3738 = vdwg.mxu0
  %v3739 = vadd.f32 %v3692, %v2564
  %v3740 = vadd.f32 %v3694, %v2568
  %v3741 = vadd.f32 %v3733, %v2572
  %v3742 = vadd.f32 %v3735, %v2576
  %v3743 = vxor.u32 %v3739, 2147483648
  %v3744 = vmul.f32 %v3743, 1.442695
  %v3745 = vpow.pop %v3744
  %v3746 = vadd.f32 %v3745, 1.0
  %v3747 = vrcp.pop %v3746
  %v3748 = vmul.f32 1.0, %v3747
  %v3749 = vxor.u32 %v3740, 2147483648
  %v3750 = vmul.f32 %v3749, 1.442695
  %v3751 = vpow.pop %v3750
  %v3752 = vadd.f32 %v3751, 1.0
  %v3753 = vrcp.pop %v3752
  %v3754 = vmul.f32 1.0, %v3753
  %v3755 = vtanh.pop %v3741
  %v3756 = vxor.u32 %v3742, 2147483648
  %v3757 = vmul.f32 %v3756, 1.442695
  %v3758 = vpow.pop %v3757
  %v3759 = vadd.f32 %v3758, 1.0
  %v3760 = vrcp.pop %v3759
  %v3761 = vmul.f32 1.0, %v3760
  %v3762 = vmul.f32 %v3754, %v3571
  %v3763 = vmul.f32 %v3748, %v3755
  %v3764 = vadd.f32 %v3762, %v3763
  %v3765 = vtanh.pop %v3764
  %v3766 = vmul.f32 %v3761, %v3765
  %v3767 = vpack.c.bf16 %v3766, %v3766
  %3768 = vmatprep.subr.bf16.mxu0 %v2172
  %3769 = vmatpush1.bf16.msra.mxu0 %v2171
  %3770 = vmatprep.subr.bf16.mxu0 %v2176
  %3771 = vmatpush1.bf16.msra.mxu0 %v2175
  %3772 = vmatprep.subr.bf16.mxu0 %v2180
  %3773 = vmatpush1.bf16.msra.mxu0 %v2179
  %3774 = vmatprep.subr.bf16.mxu0 %v2184
  %3775 = vmatpush1.bf16.msra.mxu0 %v2183
  %3776 = vmatprep.subr.bf16.mxu0 %v2188
  %3777 = vmatpush1.bf16.msra.mxu0 %v2187
  %3778 = vmatprep.subr.bf16.mxu0 %v2192
  %3779 = vmatpush1.bf16.msra.mxu0 %v2191
  %3780 = vmatprep.subr.bf16.mxu0 %v2196
  %3781 = vmatpush1.bf16.msra.mxu0 %v2195
  %3782 = vmatprep.subr.bf16.mxu0 %v2200
  %3783 = vmatpush1.bf16.msra.mxu0 %v2199
  %3784 = vmatprep.subr.bf16.mxu0 0
  %3785 = vmatpush1.bf16.msra.mxu0 0
  %3786 = vmatprep.subr.bf16.mxu0 0
  %3787 = vmatpush1.bf16.msra.mxu0 0
  %3788 = vmatprep.subr.bf16.mxu0 0
  %3789 = vmatpush1.bf16.msra.mxu0 0
  %3790 = vmatprep.subr.bf16.mxu0 0
  %3791 = vmatpush1.bf16.msra.mxu0 0
  %3792 = vmatprep.subr.bf16.mxu0 0
  %3793 = vmatpush1.bf16.msra.mxu0 0
  %3794 = vmatprep.subr.bf16.mxu0 0
  %3795 = vmatpush1.bf16.msra.mxu0 0
  %3796 = vmatprep.subr.bf16.mxu0 0
  %3797 = vmatpush1.bf16.msra.mxu0 0
  %3798 = vmatprep.subr.bf16.mxu0 0
  %3799 = vmatpush1.bf16.msra.mxu0 0
  %3800 = vmatprep.mubr.bf16.mxu0 0
  %3801 = vmatmul.mubr.bf16.gmra.mrb[0].mxu0 %v3767
  %v3802 = vpop.f32.mrb[0].mxu0
  %v3803 = vadd.f32 0.0, %v3802
  %v3804 = vpop.f32.mrb[0].mxu0
  %v3805 = vadd.f32 0.0, %v3804
  %v3806 = vpop.f32.mrb[0].mxu0
  %v3807 = vpop.f32.mrb[0].mxu0
  %3808 = vdwg.mxu0
  %3809 = vmatprep.subr.bf16.mxu0 %v2174
  %3810 = vmatpush1.bf16.msra.mxu0 %v2173
  %3811 = vmatprep.subr.bf16.mxu0 %v2178
  %3812 = vmatpush1.bf16.msra.mxu0 %v2177
  %3813 = vmatprep.subr.bf16.mxu0 %v2182
  %3814 = vmatpush1.bf16.msra.mxu0 %v2181
  %3815 = vmatprep.subr.bf16.mxu0 %v2186
  %3816 = vmatpush1.bf16.msra.mxu0 %v2185
  %3817 = vmatprep.subr.bf16.mxu0 %v2190
  %3818 = vmatpush1.bf16.msra.mxu0 %v2189
  %3819 = vmatprep.subr.bf16.mxu0 %v2194
  %3820 = vmatpush1.bf16.msra.mxu0 %v2193
  %3821 = vmatprep.subr.bf16.mxu0 %v2198
  %3822 = vmatpush1.bf16.msra.mxu0 %v2197
  %3823 = vmatprep.subr.bf16.mxu0 %v2202
  %3824 = vmatpush1.bf16.msra.mxu0 %v2201
  %3825 = vmatprep.subr.bf16.mxu0 0
  %3826 = vmatpush1.bf16.msra.mxu0 0
  %3827 = vmatprep.subr.bf16.mxu0 0
  %3828 = vmatpush1.bf16.msra.mxu0 0
  %3829 = vmatprep.subr.bf16.mxu0 0
  %3830 = vmatpush1.bf16.msra.mxu0 0
  %3831 = vmatprep.subr.bf16.mxu0 0
  %3832 = vmatpush1.bf16.msra.mxu0 0
  %3833 = vmatprep.subr.bf16.mxu0 0
  %3834 = vmatpush1.bf16.msra.mxu0 0
  %3835 = vmatprep.subr.bf16.mxu0 0
  %3836 = vmatpush1.bf16.msra.mxu0 0
  %3837 = vmatprep.subr.bf16.mxu0 0
  %3838 = vmatpush1.bf16.msra.mxu0 0
  %3839 = vmatprep.subr.bf16.mxu0 0
  %3840 = vmatpush1.bf16.msra.mxu0 0
  %3841 = vmatprep.mubr.bf16.mxu0 0
  %3842 = vmatmul.mubr.bf16.gmra.mrb[0].mxu0 %v3767
  %v3843 = vpop.f32.mrb[0].mxu0
  %v3844 = vadd.f32 0.0, %v3843
  %v3845 = vpop.f32.mrb[0].mxu0
  %v3846 = vadd.f32 0.0, %v3845
  %v3847 = vpop.f32.mrb[0].mxu0
  %v3848 = vpop.f32.mrb[0].mxu0
  %3849 = vdwg.mxu0
  %3850 = vmatprep.subr.bf16.mxu0 %v2414
  %3851 = vmatpush1.bf16.msra.mxu0 %v2413
  %3852 = vmatprep.subr.bf16.mxu0 %v2418
  %3853 = vmatpush1.bf16.msra.mxu0 %v2417
  %3854 = vmatprep.subr.bf16.mxu0 %v2422
  %3855 = vmatpush1.bf16.msra.mxu0 %v2421
  %3856 = vmatprep.subr.bf16.mxu0 %v2426
  %3857 = vmatpush1.bf16.msra.mxu0 %v2425
  %3858 = vmatprep.subr.bf16.mxu0 %v2430
  %3859 = vmatpush1.bf16.msra.mxu0 %v2429
  %3860 = vmatprep.subr.bf16.mxu0 %v2434
  %3861 = vmatpush1.bf16.msra.mxu0 %v2433
  %3862 = vmatprep.subr.bf16.mxu0 %v2438
  %3863 = vmatpush1.bf16.msra.mxu0 %v2437
  %3864 = vmatprep.subr.bf16.mxu0 %v2442
  %3865 = vmatpush1.bf16.msra.mxu0 %v2441
  %3866 = vmatprep.subr.bf16.mxu0 0
  %3867 = vmatpush1.bf16.msra.mxu0 0
  %3868 = vmatprep.subr.bf16.mxu0 0
  %3869 = vmatpush1.bf16.msra.mxu0 0
  %3870 = vmatprep.subr.bf16.mxu0 0
  %3871 = vmatpush1.bf16.msra.mxu0 0
  %3872 = vmatprep.subr.bf16.mxu0 0
  %3873 = vmatpush1.bf16.msra.mxu0 0
  %3874 = vmatprep.subr.bf16.mxu0 0
  %3875 = vmatpush1.bf16.msra.mxu0 0
  %3876 = vmatprep.subr.bf16.mxu0 0
  %3877 = vmatpush1.bf16.msra.mxu0 0
  %3878 = vmatprep.subr.bf16.mxu0 0
  %3879 = vmatpush1.bf16.msra.mxu0 0
  %3880 = vmatprep.subr.bf16.mxu0 0
  %3881 = vmatpush1.bf16.msra.mxu0 0
  %3882 = vmatprep.mubr.bf16.mxu0 0
  %3883 = vmatmul.mubr.bf16.gmra.mrb[0].mxu0 %v47
  %v3884 = vpop.f32.mrb[0].mxu0
  %v3885 = vadd.f32 %v3803, %v3884
  %v3886 = vpop.f32.mrb[0].mxu0
  %v3887 = vadd.f32 %v3805, %v3886
  %v3888 = vpop.f32.mrb[0].mxu0
  %v3889 = vpop.f32.mrb[0].mxu0
  %3890 = vdwg.mxu0
  %3891 = vmatprep.subr.bf16.mxu0 %v2416
  %3892 = vmatpush1.bf16.msra.mxu0 %v2415
  %3893 = vmatprep.subr.bf16.mxu0 %v2420
  %3894 = vmatpush1.bf16.msra.mxu0 %v2419
  %3895 = vmatprep.subr.bf16.mxu0 %v2424
  %3896 = vmatpush1.bf16.msra.mxu0 %v2423
  %3897 = vmatprep.subr.bf16.mxu0 %v2428
  %3898 = vmatpush1.bf16.msra.mxu0 %v2427
  %3899 = vmatprep.subr.bf16.mxu0 %v2432
  %3900 = vmatpush1.bf16.msra.mxu0 %v2431
  %3901 = vmatprep.subr.bf16.mxu0 %v2436
  %3902 = vmatpush1.bf16.msra.mxu0 %v2435
  %3903 = vmatprep.subr.bf16.mxu0 %v2440
  %3904 = vmatpush1.bf16.msra.mxu0 %v2439
  %3905 = vmatprep.subr.bf16.mxu0 %v2444
  %3906 = vmatpush1.bf16.msra.mxu0 %v2443
  %3907 = vmatprep.subr.bf16.mxu0 0
  %3908 = vmatpush1.bf16.msra.mxu0 0
  %3909 = vmatprep.subr.bf16.mxu0 0
  %3910 = vmatpush1.bf16.msra.mxu0 0
  %3911 = vmatprep.subr.bf16.mxu0 0
  %3912 = vmatpush1.bf16.msra.mxu0 0
  %3913 = vmatprep.subr.bf16.mxu0 0
  %3914 = vmatpush1.bf16.msra.mxu0 0
  %3915 = vmatprep.subr.bf16.mxu0 0
  %3916 = vmatpush1.bf16.msra.mxu0 0
  %3917 = vmatprep.subr.bf16.mxu0 0
  %3918 = vmatpush1.bf16.msra.mxu0 0
  %3919 = vmatprep.subr.bf16.mxu0 0
  %3920 = vmatpush1.bf16.msra.mxu0 0
  %3921 = vmatprep.subr.bf16.mxu0 0
  %3922 = vmatpush1.bf16.msra.mxu0 0
  %3923 = vmatprep.mubr.bf16.mxu0 0
  %3924 = vmatmul.mubr.bf16.gmra.mrb[0].mxu0 %v47
  %v3925 = vpop.f32.mrb[0].mxu0
  %v3926 = vadd.f32 %v3844, %v3925
  %v3927 = vpop.f32.mrb[0].mxu0
  %v3928 = vadd.f32 %v3846, %v3927
  %v3929 = vpop.f32.mrb[0].mxu0
  %v3930 = vpop.f32.mrb[0].mxu0
  %3931 = vdwg.mxu0
  %v3932 = vadd.f32 %v3885, %v2564
  %v3933 = vadd.f32 %v3887, %v2568
  %v3934 = vadd.f32 %v3926, %v2572
  %v3935 = vadd.f32 %v3928, %v2576
  %v3936 = vxor.u32 %v3932, 2147483648
  %v3937 = vmul.f32 %v3936, 1.442695
  %v3938 = vpow.pop %v3937
  %v3939 = vadd.f32 %v3938, 1.0
  %v3940 = vrcp.pop %v3939
  %v3941 = vmul.f32 1.0, %v3940
  %v3942 = vxor.u32 %v3933, 2147483648
  %v3943 = vmul.f32 %v3942, 1.442695
  %v3944 = vpow.pop %v3943
  %v3945 = vadd.f32 %v3944, 1.0
  %v3946 = vrcp.pop %v3945
  %v3947 = vmul.f32 1.0, %v3946
  %v3948 = vtanh.pop %v3934
  %v3949 = vxor.u32 %v3935, 2147483648
  %v3950 = vmul.f32 %v3949, 1.442695
  %v3951 = vpow.pop %v3950
  %v3952 = vadd.f32 %v3951, 1.0
  %v3953 = vrcp.pop %v3952
  %v3954 = vmul.f32 1.0, %v3953
  %v3955 = vmul.f32 %v3947, %v3764
  %v3956 = vmul.f32 %v3941, %v3948
  %v3957 = vadd.f32 %v3955, %v3956
  %v3958 = vtanh.pop %v3957
  %v3959 = vmul.f32 %v3954, %v3958
  %v3960 = vpack.c.bf16 %v2010, %v2010
  %v3961 = vld [vmem:[%s7] sm:$0xff]
  %v3962 = vld [vmem:[%s7 + $0x8] sm:$0xff]
  %v3963 = vld [vmem:[%s7 + $0x10] sm:$0xff]
  %v3964 = vld [vmem:[%s7 + $0x18] sm:$0xff]
  %v3965 = vld [vmem:[%s7 + $0x20] sm:$0xff]
  %v3966 = vld [vmem:[%s7 + $0x28] sm:$0xff]
  %v3967 = vld [vmem:[%s7 + $0x30] sm:$0xff]
  %v3968 = vld [vmem:[%s7 + $0x38] sm:$0xff]
  %v3969 = vld [vmem:[%s7 + $0x40] sm:$0xff]
  %v3970 = vld [vmem:[%s7 + $0x48] sm:$0xff]
  %v3971 = vld [vmem:[%s7 + $0x50] sm:$0xff]
  %v3972 = vld [vmem:[%s7 + $0x58] sm:$0xff]
  %v3973 = vld [vmem:[%s7 + $0x60] sm:$0xff]
  %v3974 = vld [vmem:[%s7 + $0x68] sm:$0xff]
  %v3975 = vld [vmem:[%s7 + $0x70] sm:$0xff]
  %v3976 = vld [vmem:[%s7 + $0x78] sm:$0xff]
  %v3977 = vld [vmem:[%s7 + $0x80] sm:$0xff]
  %v3978 = vld [vmem:[%s7 + $0x88] sm:$0xff]
  %v3979 = vld [vmem:[%s7 + $0x90] sm:$0xff]
  %v3980 = vld [vmem:[%s7 + $0x98] sm:$0xff]
  %v3981 = vld [vmem:[%s7 + $0xa0] sm:$0xff]
  %v3982 = vld [vmem:[%s7 + $0xa8] sm:$0xff]
  %v3983 = vld [vmem:[%s7 + $0xb0] sm:$0xff]
  %v3984 = vld [vmem:[%s7 + $0xb8] sm:$0xff]
  %v3985 = vld [vmem:[%s7 + $0xc0] sm:$0xff]
  %v3986 = vld [vmem:[%s7 + $0xc8] sm:$0xff]
  %v3987 = vld [vmem:[%s7 + $0xd0] sm:$0xff]
  %v3988 = vld [vmem:[%s7 + $0xd8] sm:$0xff]
  %v3989 = vld [vmem:[%s7 + $0xe0] sm:$0xff]
  %v3990 = vld [vmem:[%s7 + $0xe8] sm:$0xff]
  %v3991 = vld [vmem:[%s7 + $0xf0] sm:$0xff]
  %v3992 = vld [vmem:[%s7 + $0xf8] sm:$0xff]
  %v3993 = vld [vmem:[%s7 + $0x100] sm:$0xff]
  %v3994 = vld [vmem:[%s7 + $0x108] sm:$0xff]
  %v3995 = vld [vmem:[%s7 + $0x110] sm:$0xff]
  %v3996 = vld [vmem:[%s7 + $0x118] sm:$0xff]
  %v3997 = vld [vmem:[%s7 + $0x120] sm:$0xff]
  %v3998 = vld [vmem:[%s7 + $0x128] sm:$0xff]
  %v3999 = vld [vmem:[%s7 + $0x130] sm:$0xff]
  %v4000 = vld [vmem:[%s7 + $0x138] sm:$0xff]
  %v4001 = vld [vmem:[%s7 + $0x140] sm:$0xff]
  %v4002 = vld [vmem:[%s7 + $0x148] sm:$0xff]
  %v4003 = vld [vmem:[%s7 + $0x150] sm:$0xff]
  %v4004 = vld [vmem:[%s7 + $0x158] sm:$0xff]
  %v4005 = vld [vmem:[%s7 + $0x160] sm:$0xff]
  %v4006 = vld [vmem:[%s7 + $0x168] sm:$0xff]
  %v4007 = vld [vmem:[%s7 + $0x170] sm:$0xff]
  %v4008 = vld [vmem:[%s7 + $0x178] sm:$0xff]
  %v4009 = vld [vmem:[%s7 + $0x180] sm:$0xff]
  %v4010 = vld [vmem:[%s7 + $0x188] sm:$0xff]
  %v4011 = vld [vmem:[%s7 + $0x190] sm:$0xff]
  %v4012 = vld [vmem:[%s7 + $0x198] sm:$0xff]
  %v4013 = vld [vmem:[%s7 + $0x1a0] sm:$0xff]
  %v4014 = vld [vmem:[%s7 + $0x1a8] sm:$0xff]
  %v4015 = vld [vmem:[%s7 + $0x1b0] sm:$0xff]
  %v4016 = vld [vmem:[%s7 + $0x1b8] sm:$0xff]
  %v4017 = vld [vmem:[%s7 + $0x1c0] sm:$0xff]
  %v4018 = vld [vmem:[%s7 + $0x1c8] sm:$0xff]
  %v4019 = vld [vmem:[%s7 + $0x1d0] sm:$0xff]
  %v4020 = vld [vmem:[%s7 + $0x1d8] sm:$0xff]
  %v4021 = vld [vmem:[%s7 + $0x1e0] sm:$0xff]
  %v4022 = vld [vmem:[%s7 + $0x1e8] sm:$0xff]
  %v4023 = vld [vmem:[%s7 + $0x1f0] sm:$0xff]
  %v4024 = vld [vmem:[%s7 + $0x1f8] sm:$0xff]
  %v4025 = vld [vmem:[%s8] sm:$0xff]
  %v4026 = vld [vmem:[%s8 + $0x8] sm:$0xff]
  %v4027 = vld [vmem:[%s8 + $0x10] sm:$0xff]
  %v4028 = vld [vmem:[%s8 + $0x18] sm:$0xff]
  %v4029 = vld [vmem:[%s8 + $0x20] sm:$0xff]
  %v4030 = vld [vmem:[%s8 + $0x28] sm:$0xff]
  %v4031 = vld [vmem:[%s8 + $0x30] sm:$0xff]
  %v4032 = vld [vmem:[%s8 + $0x38] sm:$0xff]
  %v4033 = vld [vmem:[%s8 + $0x40] sm:$0xff]
  %v4034 = vld [vmem:[%s8 + $0x48] sm:$0xff]
  %v4035 = vld [vmem:[%s8 + $0x50] sm:$0xff]
  %v4036 = vld [vmem:[%s8 + $0x58] sm:$0xff]
  %v4037 = vld [vmem:[%s8 + $0x60] sm:$0xff]
  %v4038 = vld [vmem:[%s8 + $0x68] sm:$0xff]
  %v4039 = vld [vmem:[%s8 + $0x70] sm:$0xff]
  %v4040 = vld [vmem:[%s8 + $0x78] sm:$0xff]
  %v4041 = vld [vmem:[%s8 + $0x80] sm:$0xff]
  %v4042 = vld [vmem:[%s8 + $0x88] sm:$0xff]
  %v4043 = vld [vmem:[%s8 + $0x90] sm:$0xff]
  %v4044 = vld [vmem:[%s8 + $0x98] sm:$0xff]
  %v4045 = vld [vmem:[%s8 + $0xa0] sm:$0xff]
  %v4046 = vld [vmem:[%s8 + $0xa8] sm:$0xff]
  %v4047 = vld [vmem:[%s8 + $0xb0] sm:$0xff]
  %v4048 = vld [vmem:[%s8 + $0xb8] sm:$0xff]
  %v4049 = vld [vmem:[%s8 + $0xc0] sm:$0xff]
  %v4050 = vld [vmem:[%s8 + $0xc8] sm:$0xff]
  %v4051 = vld [vmem:[%s8 + $0xd0] sm:$0xff]
  %v4052 = vld [vmem:[%s8 + $0xd8] sm:$0xff]
  %v4053 = vld [vmem:[%s8 + $0xe0] sm:$0xff]
  %v4054 = vld [vmem:[%s8 + $0xe8] sm:$0xff]
  %v4055 = vld [vmem:[%s8 + $0xf0] sm:$0xff]
  %v4056 = vld [vmem:[%s8 + $0xf8] sm:$0xff]
  %v4089 = vunpack.c.l.b16 %v4025
  %v4090 = vunpack.c.h.b16 %v4025
  %v4091 = vunpack.c.l.b16 %v4026
  %v4092 = vunpack.c.h.b16 %v4026
  %v4093 = vunpack.c.l.b16 %v4027
  %v4094 = vunpack.c.h.b16 %v4027
  %v4095 = vunpack.c.l.b16 %v4028
  %v4096 = vunpack.c.h.b16 %v4028
  %v4097 = vunpack.c.l.b16 %v4029
  %v4098 = vunpack.c.h.b16 %v4029
  %v4099 = vunpack.c.l.b16 %v4030
  %v4100 = vunpack.c.h.b16 %v4030
  %v4101 = vunpack.c.l.b16 %v4031
  %v4102 = vunpack.c.h.b16 %v4031
  %v4103 = vunpack.c.l.b16 %v4032
  %v4104 = vunpack.c.h.b16 %v4032
  %v4105 = vunpack.c.l.b16 %v4033
  %v4106 = vunpack.c.h.b16 %v4033
  %v4107 = vunpack.c.l.b16 %v4034
  %v4108 = vunpack.c.h.b16 %v4034
  %v4109 = vunpack.c.l.b16 %v4035
  %v4110 = vunpack.c.h.b16 %v4035
  %v4111 = vunpack.c.l.b16 %v4036
  %v4112 = vunpack.c.h.b16 %v4036
  %v4113 = vunpack.c.l.b16 %v4037
  %v4114 = vunpack.c.h.b16 %v4037
  %v4115 = vunpack.c.l.b16 %v4038
  %v4116 = vunpack.c.h.b16 %v4038
  %v4117 = vunpack.c.l.b16 %v4039
  %v4118 = vunpack.c.h.b16 %v4039
  %v4119 = vunpack.c.l.b16 %v4040
  %v4120 = vunpack.c.h.b16 %v4040
  %v4121 = vunpack.c.l.b16 %v4041
  %v4122 = vunpack.c.h.b16 %v4041
  %v4123 = vunpack.c.l.b16 %v4042
  %v4124 = vunpack.c.h.b16 %v4042
  %v4125 = vunpack.c.l.b16 %v4043
  %v4126 = vunpack.c.h.b16 %v4043
  %v4127 = vunpack.c.l.b16 %v4044
  %v4128 = vunpack.c.h.b16 %v4044
  %v4129 = vunpack.c.l.b16 %v4045
  %v4130 = vunpack.c.h.b16 %v4045
  %v4131 = vunpack.c.l.b16 %v4046
  %v4132 = vunpack.c.h.b16 %v4046
  %v4133 = vunpack.c.l.b16 %v4047
  %v4134 = vunpack.c.h.b16 %v4047
  %v4135 = vunpack.c.l.b16 %v4048
  %v4136 = vunpack.c.h.b16 %v4048
  %v4137 = vunpack.c.l.b16 %v4049
  %v4138 = vunpack.c.h.b16 %v4049
  %v4139 = vunpack.c.l.b16 %v4050
  %v4140 = vunpack.c.h.b16 %v4050
  %v4141 = vunpack.c.l.b16 %v4051
  %v4142 = vunpack.c.h.b16 %v4051
  %v4143 = vunpack.c.l.b16 %v4052
  %v4144 = vunpack.c.h.b16 %v4052
  %v4145 = vunpack.c.l.b16 %v4053
  %v4146 = vunpack.c.h.b16 %v4053
  %v4147 = vunpack.c.l.b16 %v4054
  %v4148 = vunpack.c.h.b16 %v4054
  %v4149 = vunpack.c.l.b16 %v4055
  %v4150 = vunpack.c.h.b16 %v4055
  %v4151 = vunpack.c.l.b16 %v4056
  %v4152 = vunpack.c.h.b16 %v4056
  %v4153 = vpack.c.b16 %v4093, %v4089
  %v4154 = vpack.c.b16 %v4094, %v4090
  %v4155 = vpack.c.b16 %v4095, %v4091
  %v4156 = vpack.c.b16 %v4096, %v4092
  %v4157 = vpack.c.b16 %v4101, %v4097
  %v4158 = vpack.c.b16 %v4102, %v4098
  %v4159 = vpack.c.b16 %v4103, %v4099
  %v4160 = vpack.c.b16 %v4104, %v4100
  %v4161 = vpack.c.b16 %v4109, %v4105
  %v4162 = vpack.c.b16 %v4110, %v4106
  %v4163 = vpack.c.b16 %v4111, %v4107
  %v4164 = vpack.c.b16 %v4112, %v4108
  %v4165 = vpack.c.b16 %v4117, %v4113
  %v4166 = vpack.c.b16 %v4118, %v4114
  %v4167 = vpack.c.b16 %v4119, %v4115
  %v4168 = vpack.c.b16 %v4120, %v4116
  %v4169 = vpack.c.b16 %v4125, %v4121
  %v4170 = vpack.c.b16 %v4126, %v4122
  %v4171 = vpack.c.b16 %v4127, %v4123
  %v4172 = vpack.c.b16 %v4128, %v4124
  %v4173 = vpack.c.b16 %v4133, %v4129
  %v4174 = vpack.c.b16 %v4134, %v4130
  %v4175 = vpack.c.b16 %v4135, %v4131
  %v4176 = vpack.c.b16 %v4136, %v4132
  %v4177 = vpack.c.b16 %v4141, %v4137
  %v4178 = vpack.c.b16 %v4142, %v4138
  %v4179 = vpack.c.b16 %v4143, %v4139
  %v4180 = vpack.c.b16 %v4144, %v4140
  %v4181 = vpack.c.b16 %v4149, %v4145
  %v4182 = vpack.c.b16 %v4150, %v4146
  %v4183 = vpack.c.b16 %v4151, %v4147
  %v4184 = vpack.c.b16 %v4152, %v4148
  %4217 = vmatprep.subr.bf16.mxu0 %v4154
  %4218 = vmatpush1.bf16.msra.mxu0 %v4153
  %4219 = vmatprep.subr.bf16.mxu0 %v4158
  %4220 = vmatpush1.bf16.msra.mxu0 %v4157
  %4221 = vmatprep.subr.bf16.mxu0 %v4162
  %4222 = vmatpush1.bf16.msra.mxu0 %v4161
  %4223 = vmatprep.subr.bf16.mxu0 %v4166
  %4224 = vmatpush1.bf16.msra.mxu0 %v4165
  %4225 = vmatprep.subr.bf16.mxu0 %v4170
  %4226 = vmatpush1.bf16.msra.mxu0 %v4169
  %4227 = vmatprep.subr.bf16.mxu0 %v4174
  %4228 = vmatpush1.bf16.msra.mxu0 %v4173
  %4229 = vmatprep.subr.bf16.mxu0 %v4178
  %4230 = vmatpush1.bf16.msra.mxu0 %v4177
  %4231 = vmatprep.subr.bf16.mxu0 %v4182
  %4232 = vmatpush1.bf16.msra.mxu0 %v4181
  %4233 = vmatprep.subr.bf16.mxu0 0
  %4234 = vmatpush1.bf16.msra.mxu0 0
  %4235 = vmatprep.subr.bf16.mxu0 0
  %4236 = vmatpush1.bf16.msra.mxu0 0
  %4237 = vmatprep.subr.bf16.mxu0 0
  %4238 = vmatpush1.bf16.msra.mxu0 0
  %4239 = vmatprep.subr.bf16.mxu0 0
  %4240 = vmatpush1.bf16.msra.mxu0 0
  %4241 = vmatprep.subr.bf16.mxu0 0
  %4242 = vmatpush1.bf16.msra.mxu0 0
  %4243 = vmatprep.subr.bf16.mxu0 0
  %4244 = vmatpush1.bf16.msra.mxu0 0
  %4245 = vmatprep.subr.bf16.mxu0 0
  %4246 = vmatpush1.bf16.msra.mxu0 0
  %4247 = vmatprep.subr.bf16.mxu0 0
  %4248 = vmatpush1.bf16.msra.mxu0 0
  %4249 = vmatprep.mubr.bf16.mxu0 0
  %4250 = vmatmul.mubr.bf16.gmra.mrb[0].mxu0 0
  %v4251 = vpop.f32.mrb[0].mxu0
  %v4252 = vadd.f32 0.0, %v4251
  %v4253 = vpop.f32.mrb[0].mxu0
  %v4254 = vadd.f32 0.0, %v4253
  %v4255 = vpop.f32.mrb[0].mxu0
  %v4256 = vpop.f32.mrb[0].mxu0
  %4257 = vdwg.mxu0
  %4258 = vmatprep.subr.bf16.mxu0 %v4156
  %4259 = vmatpush1.bf16.msra.mxu0 %v4155
  %4260 = vmatprep.subr.bf16.mxu0 %v4160
  %4261 = vmatpush1.bf16.msra.mxu0 %v4159
  %4262 = vmatprep.subr.bf16.mxu0 %v4164
  %4263 = vmatpush1.bf16.msra.mxu0 %v4163
  %4264 = vmatprep.subr.bf16.mxu0 %v4168
  %4265 = vmatpush1.bf16.msra.mxu0 %v4167
  %4266 = vmatprep.subr.bf16.mxu0 %v4172
  %4267 = vmatpush1.bf16.msra.mxu0 %v4171
  %4268 = vmatprep.subr.bf16.mxu0 %v4176
  %4269 = vmatpush1.bf16.msra.mxu0 %v4175
  %4270 = vmatprep.subr.bf16.mxu0 %v4180
  %4271 = vmatpush1.bf16.msra.mxu0 %v4179
  %4272 = vmatprep.subr.bf16.mxu0 %v4184
  %4273 = vmatpush1.bf16.msra.mxu0 %v4183
  %4274 = vmatprep.subr.bf16.mxu0 0
  %4275 = vmatpush1.bf16.msra.mxu0 0
  %4276 = vmatprep.subr.bf16.mxu0 0
  %4277 = vmatpush1.bf16.msra.mxu0 0
  %4278 = vmatprep.subr.bf16.mxu0 0
  %4279 = vmatpush1.bf16.msra.mxu0 0
  %4280 = vmatprep.subr.bf16.mxu0 0
  %4281 = vmatpush1.bf16.msra.mxu0 0
  %4282 = vmatprep.subr.bf16.mxu0 0
  %4283 = vmatpush1.bf16.msra.mxu0 0
  %4284 = vmatprep.subr.bf16.mxu0 0
  %4285 = vmatpush1.bf16.msra.mxu0 0
  %4286 = vmatprep.subr.bf16.mxu0 0
  %4287 = vmatpush1.bf16.msra.mxu0 0
  %4288 = vmatprep.subr.bf16.mxu0 0
  %4289 = vmatpush1.bf16.msra.mxu0 0
  %4290 = vmatprep.mubr.bf16.mxu0 0
  %4291 = vmatmul.mubr.bf16.gmra.mrb[0].mxu0 0
  %v4292 = vpop.f32.mrb[0].mxu0
  %v4293 = vadd.f32 0.0, %v4292
  %v4294 = vpop.f32.mrb[0].mxu0
  %v4295 = vadd.f32 0.0, %v4294
  %v4296 = vpop.f32.mrb[0].mxu0
  %v4297 = vpop.f32.mrb[0].mxu0
  %4298 = vdwg.mxu0
  %v4363 = vunpack.c.l.b16 %v3961
  %v4364 = vunpack.c.h.b16 %v3961
  %v4365 = vunpack.c.l.b16 %v3962
  %v4366 = vunpack.c.h.b16 %v3962
  %v4367 = vunpack.c.l.b16 %v3963
  %v4368 = vunpack.c.h.b16 %v3963
  %v4369 = vunpack.c.l.b16 %v3964
  %v4370 = vunpack.c.h.b16 %v3964
  %v4371 = vunpack.c.l.b16 %v3965
  %v4372 = vunpack.c.h.b16 %v3965
  %v4373 = vunpack.c.l.b16 %v3966
  %v4374 = vunpack.c.h.b16 %v3966
  %v4375 = vunpack.c.l.b16 %v3967
  %v4376 = vunpack.c.h.b16 %v3967
  %v4377 = vunpack.c.l.b16 %v3968
  %v4378 = vunpack.c.h.b16 %v3968
  %v4379 = vunpack.c.l.b16 %v3969
  %v4380 = vunpack.c.h.b16 %v3969
  %v4381 = vunpack.c.l.b16 %v3970
  %v4382 = vunpack.c.h.b16 %v3970
  %v4383 = vunpack.c.l.b16 %v3971
  %v4384 = vunpack.c.h.b16 %v3971
  %v4385 = vunpack.c.l.b16 %v3972
  %v4386 = vunpack.c.h.b16 %v3972
  %v4387 = vunpack.c.l.b16 %v3973
  %v4388 = vunpack.c.h.b16 %v3973
  %v4389 = vunpack.c.l.b16 %v3974
  %v4390 = vunpack.c.h.b16 %v3974
  %v4391 = vunpack.c.l.b16 %v3975
  %v4392 = vunpack.c.h.b16 %v3975
  %v4393 = vunpack.c.l.b16 %v3976
  %v4394 = vunpack.c.h.b16 %v3976
  %v4395 = vunpack.c.l.b16 %v3977
  %v4396 = vunpack.c.h.b16 %v3977
  %v4397 = vunpack.c.l.b16 %v3978
  %v4398 = vunpack.c.h.b16 %v3978
  %v4399 = vunpack.c.l.b16 %v3979
  %v4400 = vunpack.c.h.b16 %v3979
  %v4401 = vunpack.c.l.b16 %v3980
  %v4402 = vunpack.c.h.b16 %v3980
  %v4403 = vunpack.c.l.b16 %v3981
  %v4404 = vunpack.c.h.b16 %v3981
  %v4405 = vunpack.c.l.b16 %v3982
  %v4406 = vunpack.c.h.b16 %v3982
  %v4407 = vunpack.c.l.b16 %v3983
  %v4408 = vunpack.c.h.b16 %v3983
  %v4409 = vunpack.c.l.b16 %v3984
  %v4410 = vunpack.c.h.b16 %v3984
  %v4411 = vunpack.c.l.b16 %v3985
  %v4412 = vunpack.c.h.b16 %v3985
  %v4413 = vunpack.c.l.b16 %v3986
  %v4414 = vunpack.c.h.b16 %v3986
  %v4415 = vunpack.c.l.b16 %v3987
  %v4416 = vunpack.c.h.b16 %v3987
  %v4417 = vunpack.c.l.b16 %v3988
  %v4418 = vunpack.c.h.b16 %v3988
  %v4419 = vunpack.c.l.b16 %v3989
  %v4420 = vunpack.c.h.b16 %v3989
  %v4421 = vunpack.c.l.b16 %v3990
  %v4422 = vunpack.c.h.b16 %v3990
  %v4423 = vunpack.c.l.b16 %v3991
  %v4424 = vunpack.c.h.b16 %v3991
  %v4425 = vunpack.c.l.b16 %v3992
  %v4426 = vunpack.c.h.b16 %v3992
  %v4427 = vunpack.c.l.b16 %v3993
  %v4428 = vunpack.c.h.b16 %v3993
  %v4429 = vunpack.c.l.b16 %v3994
  %v4430 = vunpack.c.h.b16 %v3994
  %v4431 = vunpack.c.l.b16 %v3995
  %v4432 = vunpack.c.h.b16 %v3995
  %v4433 = vunpack.c.l.b16 %v3996
  %v4434 = vunpack.c.h.b16 %v3996
  %v4435 = vunpack.c.l.b16 %v3997
  %v4436 = vunpack.c.h.b16 %v3997
  %v4437 = vunpack.c.l.b16 %v3998
  %v4438 = vunpack.c.h.b16 %v3998
  %v4439 = vunpack.c.l.b16 %v3999
  %v4440 = vunpack.c.h.b16 %v3999
  %v4441 = vunpack.c.l.b16 %v4000
  %v4442 = vunpack.c.h.b16 %v4000
  %v4443 = vunpack.c.l.b16 %v4001
  %v4444 = vunpack.c.h.b16 %v4001
  %v4445 = vunpack.c.l.b16 %v4002
  %v4446 = vunpack.c.h.b16 %v4002
  %v4447 = vunpack.c.l.b16 %v4003
  %v4448 = vunpack.c.h.b16 %v4003
  %v4449 = vunpack.c.l.b16 %v4004
  %v4450 = vunpack.c.h.b16 %v4004
  %v4451 = vunpack.c.l.b16 %v4005
  %v4452 = vunpack.c.h.b16 %v4005
  %v4453 = vunpack.c.l.b16 %v4006
  %v4454 = vunpack.c.h.b16 %v4006
  %v4455 = vunpack.c.l.b16 %v4007
  %v4456 = vunpack.c.h.b16 %v4007
  %v4457 = vunpack.c.l.b16 %v4008
  %v4458 = vunpack.c.h.b16 %v4008
  %v4459 = vunpack.c.l.b16 %v4009
  %v4460 = vunpack.c.h.b16 %v4009
  %v4461 = vunpack.c.l.b16 %v4010
  %v4462 = vunpack.c.h.b16 %v4010
  %v4463 = vunpack.c.l.b16 %v4011
  %v4464 = vunpack.c.h.b16 %v4011
  %v4465 = vunpack.c.l.b16 %v4012
  %v4466 = vunpack.c.h.b16 %v4012
  %v4467 = vunpack.c.l.b16 %v4013
  %v4468 = vunpack.c.h.b16 %v4013
  %v4469 = vunpack.c.l.b16 %v4014
  %v4470 = vunpack.c.h.b16 %v4014
  %v4471 = vunpack.c.l.b16 %v4015
  %v4472 = vunpack.c.h.b16 %v4015
  %v4473 = vunpack.c.l.b16 %v4016
  %v4474 = vunpack.c.h.b16 %v4016
  %v4475 = vunpack.c.l.b16 %v4017
  %v4476 = vunpack.c.h.b16 %v4017
  %v4477 = vunpack.c.l.b16 %v4018
  %v4478 = vunpack.c.h.b16 %v4018
  %v4479 = vunpack.c.l.b16 %v4019
  %v4480 = vunpack.c.h.b16 %v4019
  %v4481 = vunpack.c.l.b16 %v4020
  %v4482 = vunpack.c.h.b16 %v4020
  %v4483 = vunpack.c.l.b16 %v4021
  %v4484 = vunpack.c.h.b16 %v4021
  %v4485 = vunpack.c.l.b16 %v4022
  %v4486 = vunpack.c.h.b16 %v4022
  %v4487 = vunpack.c.l.b16 %v4023
  %v4488 = vunpack.c.h.b16 %v4023
  %v4489 = vunpack.c.l.b16 %v4024
  %v4490 = vunpack.c.h.b16 %v4024
  %v4491 = vpack.c.b16 %v4367, %v4363
  %v4492 = vpack.c.b16 %v4368, %v4364
  %v4493 = vpack.c.b16 %v4369, %v4365
  %v4494 = vpack.c.b16 %v4370, %v4366
  %v4495 = vpack.c.b16 %v4375, %v4371
  %v4496 = vpack.c.b16 %v4376, %v4372
  %v4497 = vpack.c.b16 %v4377, %v4373
  %v4498 = vpack.c.b16 %v4378, %v4374
  %v4499 = vpack.c.b16 %v4383, %v4379
  %v4500 = vpack.c.b16 %v4384, %v4380
  %v4501 = vpack.c.b16 %v4385, %v4381
  %v4502 = vpack.c.b16 %v4386, %v4382
  %v4503 = vpack.c.b16 %v4391, %v4387
  %v4504 = vpack.c.b16 %v4392, %v4388
  %v4505 = vpack.c.b16 %v4393, %v4389
  %v4506 = vpack.c.b16 %v4394, %v4390
  %v4507 = vpack.c.b16 %v4399, %v4395
  %v4508 = vpack.c.b16 %v4400, %v4396
  %v4509 = vpack.c.b16 %v4401, %v4397
  %v4510 = vpack.c.b16 %v4402, %v4398
  %v4511 = vpack.c.b16 %v4407, %v4403
  %v4512 = vpack.c.b16 %v4408, %v4404
  %v4513 = vpack.c.b16 %v4409, %v4405
  %v4514 = vpack.c.b16 %v4410, %v4406
  %v4515 = vpack.c.b16 %v4415, %v4411
  %v4516 = vpack.c.b16 %v4416, %v4412
  %v4517 = vpack.c.b16 %v4417, %v4413
  %v4518 = vpack.c.b16 %v4418, %v4414
  %v4519 = vpack.c.b16 %v4423, %v4419
  %v4520 = vpack.c.b16 %v4424, %v4420
  %v4521 = vpack.c.b16 %v4425, %v4421
  %v4522 = vpack.c.b16 %v4426, %v4422
  %v4523 = vpack.c.b16 %v4431, %v4427
  %v4524 = vpack.c.b16 %v4432, %v4428
  %v4525 = vpack.c.b16 %v4433, %v4429
  %v4526 = vpack.c.b16 %v4434, %v4430
  %v4527 = vpack.c.b16 %v4439, %v4435
  %v4528 = vpack.c.b16 %v4440, %v4436
  %v4529 = vpack.c.b16 %v4441, %v4437
  %v4530 = vpack.c.b16 %v4442, %v4438
  %v4531 = vpack.c.b16 %v4447, %v4443
  %v4532 = vpack.c.b16 %v4448, %v4444
  %v4533 = vpack.c.b16 %v4449, %v4445
  %v4534 = vpack.c.b16 %v4450, %v4446
  %v4535 = vpack.c.b16 %v4455, %v4451
  %v4536 = vpack.c.b16 %v4456, %v4452
  %v4537 = vpack.c.b16 %v4457, %v4453
  %v4538 = vpack.c.b16 %v4458, %v4454
  %v4539 = vpack.c.b16 %v4463, %v4459
  %v4540 = vpack.c.b16 %v4464, %v4460
  %v4541 = vpack.c.b16 %v4465, %v4461
  %v4542 = vpack.c.b16 %v4466, %v4462
  %v4543 = vpack.c.b16 %v4471, %v4467
  %v4544 = vpack.c.b16 %v4472, %v4468
  %v4545 = vpack.c.b16 %v4473, %v4469
  %v4546 = vpack.c.b16 %v4474, %v4470
  %v4547 = vpack.c.b16 %v4479, %v4475
  %v4548 = vpack.c.b16 %v4480, %v4476
  %v4549 = vpack.c.b16 %v4481, %v4477
  %v4550 = vpack.c.b16 %v4482, %v4478
  %v4551 = vpack.c.b16 %v4487, %v4483
  %v4552 = vpack.c.b16 %v4488, %v4484
  %v4553 = vpack.c.b16 %v4489, %v4485
  %v4554 = vpack.c.b16 %v4490, %v4486
  %4619 = vmatprep.subr.bf16.mxu0 %v4492
  %4620 = vmatpush1.bf16.msra.mxu0 %v4491
  %4621 = vmatprep.subr.bf16.mxu0 %v4496
  %4622 = vmatpush1.bf16.msra.mxu0 %v4495
  %4623 = vmatprep.subr.bf16.mxu0 %v4500
  %4624 = vmatpush1.bf16.msra.mxu0 %v4499
  %4625 = vmatprep.subr.bf16.mxu0 %v4504
  %4626 = vmatpush1.bf16.msra.mxu0 %v4503
  %4627 = vmatprep.subr.bf16.mxu0 %v4508
  %4628 = vmatpush1.bf16.msra.mxu0 %v4507
  %4629 = vmatprep.subr.bf16.mxu0 %v4512
  %4630 = vmatpush1.bf16.msra.mxu0 %v4511
  %4631 = vmatprep.subr.bf16.mxu0 %v4516
  %4632 = vmatpush1.bf16.msra.mxu0 %v4515
  %4633 = vmatprep.subr.bf16.mxu0 %v4520
  %4634 = vmatpush1.bf16.msra.mxu0 %v4519
  %4635 = vmatprep.subr.bf16.mxu0 %v4524
  %4636 = vmatpush1.bf16.msra.mxu0 %v4523
  %4637 = vmatprep.subr.bf16.mxu0 %v4528
  %4638 = vmatpush1.bf16.msra.mxu0 %v4527
  %4639 = vmatprep.subr.bf16.mxu0 %v4532
  %4640 = vmatpush1.bf16.msra.mxu0 %v4531
  %4641 = vmatprep.subr.bf16.mxu0 %v4536
  %4642 = vmatpush1.bf16.msra.mxu0 %v4535
  %4643 = vmatprep.subr.bf16.mxu0 %v4540
  %4644 = vmatpush1.bf16.msra.mxu0 %v4539
  %4645 = vmatprep.subr.bf16.mxu0 %v4544
  %4646 = vmatpush1.bf16.msra.mxu0 %v4543
  %4647 = vmatprep.subr.bf16.mxu0 %v4548
  %4648 = vmatpush1.bf16.msra.mxu0 %v4547
  %4649 = vmatprep.subr.bf16.mxu0 %v4552
  %4650 = vmatpush1.bf16.msra.mxu0 %v4551
  %4651 = vmatprep.mubr.bf16.mxu0 %v2609
  %4652 = vmatmul.mubr.bf16.gmra.mrb[0].mxu0 %v3960
  %v4653 = vpop.f32.mrb[0].mxu0
  %v4654 = vadd.f32 %v4252, %v4653
  %v4655 = vpop.f32.mrb[0].mxu0
  %v4656 = vadd.f32 %v4254, %v4655
  %v4657 = vpop.f32.mrb[0].mxu0
  %v4658 = vpop.f32.mrb[0].mxu0
  %4659 = vdwg.mxu0
  %4660 = vmatprep.subr.bf16.mxu0 %v4494
  %4661 = vmatpush1.bf16.msra.mxu0 %v4493
  %4662 = vmatprep.subr.bf16.mxu0 %v4498
  %4663 = vmatpush1.bf16.msra.mxu0 %v4497
  %4664 = vmatprep.subr.bf16.mxu0 %v4502
  %4665 = vmatpush1.bf16.msra.mxu0 %v4501
  %4666 = vmatprep.subr.bf16.mxu0 %v4506
  %4667 = vmatpush1.bf16.msra.mxu0 %v4505
  %4668 = vmatprep.subr.bf16.mxu0 %v4510
  %4669 = vmatpush1.bf16.msra.mxu0 %v4509
  %4670 = vmatprep.subr.bf16.mxu0 %v4514
  %4671 = vmatpush1.bf16.msra.mxu0 %v4513
  %4672 = vmatprep.subr.bf16.mxu0 %v4518
  %4673 = vmatpush1.bf16.msra.mxu0 %v4517
  %4674 = vmatprep.subr.bf16.mxu0 %v4522
  %4675 = vmatpush1.bf16.msra.mxu0 %v4521
  %4676 = vmatprep.subr.bf16.mxu0 %v4526
  %4677 = vmatpush1.bf16.msra.mxu0 %v4525
  %4678 = vmatprep.subr.bf16.mxu0 %v4530
  %4679 = vmatpush1.bf16.msra.mxu0 %v4529
  %4680 = vmatprep.subr.bf16.mxu0 %v4534
  %4681 = vmatpush1.bf16.msra.mxu0 %v4533
  %4682 = vmatprep.subr.bf16.mxu0 %v4538
  %4683 = vmatpush1.bf16.msra.mxu0 %v4537
  %4684 = vmatprep.subr.bf16.mxu0 %v4542
  %4685 = vmatpush1.bf16.msra.mxu0 %v4541
  %4686 = vmatprep.subr.bf16.mxu0 %v4546
  %4687 = vmatpush1.bf16.msra.mxu0 %v4545
  %4688 = vmatprep.subr.bf16.mxu0 %v4550
  %4689 = vmatpush1.bf16.msra.mxu0 %v4549
  %4690 = vmatprep.subr.bf16.mxu0 %v4554
  %4691 = vmatpush1.bf16.msra.mxu0 %v4553
  %4692 = vmatprep.mubr.bf16.mxu0 %v2609
  %4693 = vmatmul.mubr.bf16.gmra.mrb[0].mxu0 %v3960
  %v4694 = vpop.f32.mrb[0].mxu0
  %v4695 = vadd.f32 %v4293, %v4694
  %v4696 = vpop.f32.mrb[0].mxu0
  %v4697 = vadd.f32 %v4295, %v4696
  %v4698 = vpop.f32.mrb[0].mxu0
  %v4699 = vpop.f32.mrb[0].mxu0
  %4700 = vdwg.mxu0
  %v4701 = vld [vmem:[%s9] sm:$0xf]
  %v4703 = vlaneseq
  %v4704 = vshrl.u32 %v4703, 7
  %v4705 = vsub.s32 0, %v4704
  %v4706 = vrot.slane %v4701, %v4705
  %v4707 = vlaneseq
  %v4708 = vshrl.u32 %v4707, 7
  %v4709 = vsub.s32 1, %v4708
  %v4710 = vrot.slane %v4701, %v4709
  %v4711 = vlaneseq
  %v4712 = vshrl.u32 %v4711, 7
  %v4713 = vsub.s32 2, %v4712
  %v4714 = vrot.slane %v4701, %v4713
  %v4715 = vlaneseq
  %v4716 = vshrl.u32 %v4715, 7
  %v4717 = vsub.s32 3, %v4716
  %v4718 = vrot.slane %v4701, %v4717
  %v4723 = vadd.f32 %v4654, %v4706
  %v4724 = vadd.f32 %v4656, %v4710
  %v4725 = vadd.f32 %v4695, %v4714
  %v4726 = vadd.f32 %v4697, %v4718
  %v4727 = vxor.u32 %v4723, 2147483648
  %v4728 = vmul.f32 %v4727, 1.442695
  %v4729 = vpow.pop %v4728
  %v4730 = vadd.f32 %v4729, 1.0
  %v4731 = vrcp.pop %v4730
  %v4732 = vmul.f32 1.0, %v4731
  %v4733 = vxor.u32 %v4724, 2147483648
  %v4734 = vmul.f32 %v4733, 1.442695
  %v4735 = vpow.pop %v4734
  %v4736 = vadd.f32 %v4735, 1.0
  %v4737 = vrcp.pop %v4736
  %v4738 = vmul.f32 1.0, %v4737
  %v4739 = vtanh.pop %v4725
  %v4740 = vxor.u32 %v4726, 2147483648
  %v4741 = vmul.f32 %v4740, 1.442695
  %v4742 = vpow.pop %v4741
  %v4743 = vadd.f32 %v4742, 1.0
  %v4744 = vrcp.pop %v4743
  %v4745 = vmul.f32 1.0, %v4744
  %v4746 = vmul.f32 %v4738, 0.0
  %v4747 = vmul.f32 %v4732, %v4739
  %v4748 = vadd.f32 %v4746, %v4747
  %v4749 = vtanh.pop %v4748
  %v4750 = vmul.f32 %v4745, %v4749
  %v4751 = vpack.c.bf16 %v4750, %v4750
  %4752 = vmatprep.subr.bf16.mxu0 %v4154
  %4753 = vmatpush1.bf16.msra.mxu0 %v4153
  %4754 = vmatprep.subr.bf16.mxu0 %v4158
  %4755 = vmatpush1.bf16.msra.mxu0 %v4157
  %4756 = vmatprep.subr.bf16.mxu0 %v4162
  %4757 = vmatpush1.bf16.msra.mxu0 %v4161
  %4758 = vmatprep.subr.bf16.mxu0 %v4166
  %4759 = vmatpush1.bf16.msra.mxu0 %v4165
  %4760 = vmatprep.subr.bf16.mxu0 %v4170
  %4761 = vmatpush1.bf16.msra.mxu0 %v4169
  %4762 = vmatprep.subr.bf16.mxu0 %v4174
  %4763 = vmatpush1.bf16.msra.mxu0 %v4173
  %4764 = vmatprep.subr.bf16.mxu0 %v4178
  %4765 = vmatpush1.bf16.msra.mxu0 %v4177
  %4766 = vmatprep.subr.bf16.mxu0 %v4182
  %4767 = vmatpush1.bf16.msra.mxu0 %v4181
  %4768 = vmatprep.subr.bf16.mxu0 0
  %4769 = vmatpush1.bf16.msra.mxu0 0
  %4770 = vmatprep.subr.bf16.mxu0 0
  %4771 = vmatpush1.bf16.msra.mxu0 0
  %4772 = vmatprep.subr.bf16.mxu0 0
  %4773 = vmatpush1.bf16.msra.mxu0 0
  %4774 = vmatprep.subr.bf16.mxu0 0
  %4775 = vmatpush1.bf16.msra.mxu0 0
  %4776 = vmatprep.subr.bf16.mxu0 0
  %4777 = vmatpush1.bf16.msra.mxu0 0
  %4778 = vmatprep.subr.bf16.mxu0 0
  %4779 = vmatpush1.bf16.msra.mxu0 0
  %4780 = vmatprep.subr.bf16.mxu0 0
  %4781 = vmatpush1.bf16.msra.mxu0 0
  %4782 = vmatprep.subr.bf16.mxu0 0
  %4783 = vmatpush1.bf16.msra.mxu0 0
  %4784 = vmatprep.mubr.bf16.mxu0 0
  %4785 = vmatmul.mubr.bf16.gmra.mrb[0].mxu0 %v4751
  %v4786 = vpop.f32.mrb[0].mxu0
  %v4787 = vadd.f32 0.0, %v4786
  %v4788 = vpop.f32.mrb[0].mxu0
  %v4789 = vadd.f32 0.0, %v4788
  %v4790 = vpop.f32.mrb[0].mxu0
  %v4791 = vpop.f32.mrb[0].mxu0
  %4792 = vdwg.mxu0
  %4793 = vmatprep.subr.bf16.mxu0 %v4156
  %4794 = vmatpush1.bf16.msra.mxu0 %v4155
  %4795 = vmatprep.subr.bf16.mxu0 %v4160
  %4796 = vmatpush1.bf16.msra.mxu0 %v4159
  %4797 = vmatprep.subr.bf16.mxu0 %v4164
  %4798 = vmatpush1.bf16.msra.mxu0 %v4163
  %4799 = vmatprep.subr.bf16.mxu0 %v4168
  %4800 = vmatpush1.bf16.msra.mxu0 %v4167
  %4801 = vmatprep.subr.bf16.mxu0 %v4172
  %4802 = vmatpush1.bf16.msra.mxu0 %v4171
  %4803 = vmatprep.subr.bf16.mxu0 %v4176
  %4804 = vmatpush1.bf16.msra.mxu0 %v4175
  %4805 = vmatprep.subr.bf16.mxu0 %v4180
  %4806 = vmatpush1.bf16.msra.mxu0 %v4179
  %4807 = vmatprep.subr.bf16.mxu0 %v4184
  %4808 = vmatpush1.bf16.msra.mxu0 %v4183
  %4809 = vmatprep.subr.bf16.mxu0 0
  %4810 = vmatpush1.bf16.msra.mxu0 0
  %4811 = vmatprep.subr.bf16.mxu0 0
  %4812 = vmatpush1.bf16.msra.mxu0 0
  %4813 = vmatprep.subr.bf16.mxu0 0
  %4814 = vmatpush1.bf16.msra.mxu0 0
  %4815 = vmatprep.subr.bf16.mxu0 0
  %4816 = vmatpush1.bf16.msra.mxu0 0
  %4817 = vmatprep.subr.bf16.mxu0 0
  %4818 = vmatpush1.bf16.msra.mxu0 0
  %4819 = vmatprep.subr.bf16.mxu0 0
  %4820 = vmatpush1.bf16.msra.mxu0 0
  %4821 = vmatprep.subr.bf16.mxu0 0
  %4822 = vmatpush1.bf16.msra.mxu0 0
  %4823 = vmatprep.subr.bf16.mxu0 0
  %4824 = vmatpush1.bf16.msra.mxu0 0
  %4825 = vmatprep.mubr.bf16.mxu0 0
  %4826 = vmatmul.mubr.bf16.gmra.mrb[0].mxu0 %v4751
  %v4827 = vpop.f32.mrb[0].mxu0
  %v4828 = vadd.f32 0.0, %v4827
  %v4829 = vpop.f32.mrb[0].mxu0
  %v4830 = vadd.f32 0.0, %v4829
  %v4831 = vpop.f32.mrb[0].mxu0
  %v4832 = vpop.f32.mrb[0].mxu0
  %4833 = vdwg.mxu0
  %4834 = vmatprep.subr.bf16.mxu0 %v4492
  %4835 = vmatpush1.bf16.msra.mxu0 %v4491
  %4836 = vmatprep.subr.bf16.mxu0 %v4496
  %4837 = vmatpush1.bf16.msra.mxu0 %v4495
  %4838 = vmatprep.subr.bf16.mxu0 %v4500
  %4839 = vmatpush1.bf16.msra.mxu0 %v4499
  %4840 = vmatprep.subr.bf16.mxu0 %v4504
  %4841 = vmatpush1.bf16.msra.mxu0 %v4503
  %4842 = vmatprep.subr.bf16.mxu0 %v4508
  %4843 = vmatpush1.bf16.msra.mxu0 %v4507
  %4844 = vmatprep.subr.bf16.mxu0 %v4512
  %4845 = vmatpush1.bf16.msra.mxu0 %v4511
  %4846 = vmatprep.subr.bf16.mxu0 %v4516
  %4847 = vmatpush1.bf16.msra.mxu0 %v4515
  %4848 = vmatprep.subr.bf16.mxu0 %v4520
  %4849 = vmatpush1.bf16.msra.mxu0 %v4519
  %4850 = vmatprep.subr.bf16.mxu0 %v4524
  %4851 = vmatpush1.bf16.msra.mxu0 %v4523
  %4852 = vmatprep.subr.bf16.mxu0 %v4528
  %4853 = vmatpush1.bf16.msra.mxu0 %v4527
  %4854 = vmatprep.subr.bf16.mxu0 %v4532
  %4855 = vmatpush1.bf16.msra.mxu0 %v4531
  %4856 = vmatprep.subr.bf16.mxu0 %v4536
  %4857 = vmatpush1.bf16.msra.mxu0 %v4535
  %4858 = vmatprep.subr.bf16.mxu0 %v4540
  %4859 = vmatpush1.bf16.msra.mxu0 %v4539
  %4860 = vmatprep.subr.bf16.mxu0 %v4544
  %4861 = vmatpush1.bf16.msra.mxu0 %v4543
  %4862 = vmatprep.subr.bf16.mxu0 %v4548
  %4863 = vmatpush1.bf16.msra.mxu0 %v4547
  %4864 = vmatprep.subr.bf16.mxu0 %v4552
  %4865 = vmatpush1.bf16.msra.mxu0 %v4551
  %4866 = vmatprep.mubr.bf16.mxu0 %v2802
  %4867 = vmatmul.mubr.bf16.gmra.mrb[0].mxu0 %v1818
  %v4868 = vpop.f32.mrb[0].mxu0
  %v4869 = vadd.f32 %v4787, %v4868
  %v4870 = vpop.f32.mrb[0].mxu0
  %v4871 = vadd.f32 %v4789, %v4870
  %v4872 = vpop.f32.mrb[0].mxu0
  %v4873 = vpop.f32.mrb[0].mxu0
  %4874 = vdwg.mxu0
  %4875 = vmatprep.subr.bf16.mxu0 %v4494
  %4876 = vmatpush1.bf16.msra.mxu0 %v4493
  %4877 = vmatprep.subr.bf16.mxu0 %v4498
  %4878 = vmatpush1.bf16.msra.mxu0 %v4497
  %4879 = vmatprep.subr.bf16.mxu0 %v4502
  %4880 = vmatpush1.bf16.msra.mxu0 %v4501
  %4881 = vmatprep.subr.bf16.mxu0 %v4506
  %4882 = vmatpush1.bf16.msra.mxu0 %v4505
  %4883 = vmatprep.subr.bf16.mxu0 %v4510
  %4884 = vmatpush1.bf16.msra.mxu0 %v4509
  %4885 = vmatprep.subr.bf16.mxu0 %v4514
  %4886 = vmatpush1.bf16.msra.mxu0 %v4513
  %4887 = vmatprep.subr.bf16.mxu0 %v4518
  %4888 = vmatpush1.bf16.msra.mxu0 %v4517
  %4889 = vmatprep.subr.bf16.mxu0 %v4522
  %4890 = vmatpush1.bf16.msra.mxu0 %v4521
  %4891 = vmatprep.subr.bf16.mxu0 %v4526
  %4892 = vmatpush1.bf16.msra.mxu0 %v4525
  %4893 = vmatprep.subr.bf16.mxu0 %v4530
  %4894 = vmatpush1.bf16.msra.mxu0 %v4529
  %4895 = vmatprep.subr.bf16.mxu0 %v4534
  %4896 = vmatpush1.bf16.msra.mxu0 %v4533
  %4897 = vmatprep.subr.bf16.mxu0 %v4538
  %4898 = vmatpush1.bf16.msra.mxu0 %v4537
  %4899 = vmatprep.subr.bf16.mxu0 %v4542
  %4900 = vmatpush1.bf16.msra.mxu0 %v4541
  %4901 = vmatprep.subr.bf16.mxu0 %v4546
  %4902 = vmatpush1.bf16.msra.mxu0 %v4545
  %4903 = vmatprep.subr.bf16.mxu0 %v4550
  %4904 = vmatpush1.bf16.msra.mxu0 %v4549
  %4905 = vmatprep.subr.bf16.mxu0 %v4554
  %4906 = vmatpush1.bf16.msra.mxu0 %v4553
  %4907 = vmatprep.mubr.bf16.mxu0 %v2802
  %4908 = vmatmul.mubr.bf16.gmra.mrb[0].mxu0 %v1818
  %v4909 = vpop.f32.mrb[0].mxu0
  %v4910 = vadd.f32 %v4828, %v4909
  %v4911 = vpop.f32.mrb[0].mxu0
  %v4912 = vadd.f32 %v4830, %v4911
  %v4913 = vpop.f32.mrb[0].mxu0
  %v4914 = vpop.f32.mrb[0].mxu0
  %4915 = vdwg.mxu0
  %v4916 = vadd.f32 %v4869, %v4706
  %v4917 = vadd.f32 %v4871, %v4710
  %v4918 = vadd.f32 %v4910, %v4714
  %v4919 = vadd.f32 %v4912, %v4718
  %v4920 = vxor.u32 %v4916, 2147483648
  %v4921 = vmul.f32 %v4920, 1.442695
  %v4922 = vpow.pop %v4921
  %v4923 = vadd.f32 %v4922, 1.0
  %v4924 = vrcp.pop %v4923
  %v4925 = vmul.f32 1.0, %v4924
  %v4926 = vxor.u32 %v4917, 2147483648
  %v4927 = vmul.f32 %v4926, 1.442695
  %v4928 = vpow.pop %v4927
  %v4929 = vadd.f32 %v4928, 1.0
  %v4930 = vrcp.pop %v4929
  %v4931 = vmul.f32 1.0, %v4930
  %v4932 = vtanh.pop %v4918
  %v4933 = vxor.u32 %v4919, 2147483648
  %v4934 = vmul.f32 %v4933, 1.442695
  %v4935 = vpow.pop %v4934
  %v4936 = vadd.f32 %v4935, 1.0
  %v4937 = vrcp.pop %v4936
  %v4938 = vmul.f32 1.0, %v4937
  %v4939 = vmul.f32 %v4931, %v4748
  %v4940 = vmul.f32 %v4925, %v4932
  %v4941 = vadd.f32 %v4939, %v4940
  %v4942 = vtanh.pop %v4941
  %v4943 = vmul.f32 %v4938, %v4942
  %v4944 = vpack.c.bf16 %v4943, %v4943
  %4945 = vmatprep.subr.bf16.mxu0 %v4154
  %4946 = vmatpush1.bf16.msra.mxu0 %v4153
  %4947 = vmatprep.subr.bf16.mxu0 %v4158
  %4948 = vmatpush1.bf16.msra.mxu0 %v4157
  %4949 = vmatprep.subr.bf16.mxu0 %v4162
  %4950 = vmatpush1.bf16.msra.mxu0 %v4161
  %4951 = vmatprep.subr.bf16.mxu0 %v4166
  %4952 = vmatpush1.bf16.msra.mxu0 %v4165
  %4953 = vmatprep.subr.bf16.mxu0 %v4170
  %4954 = vmatpush1.bf16.msra.mxu0 %v4169
  %4955 = vmatprep.subr.bf16.mxu0 %v4174
  %4956 = vmatpush1.bf16.msra.mxu0 %v4173
  %4957 = vmatprep.subr.bf16.mxu0 %v4178
  %4958 = vmatpush1.bf16.msra.mxu0 %v4177
  %4959 = vmatprep.subr.bf16.mxu0 %v4182
  %4960 = vmatpush1.bf16.msra.mxu0 %v4181
  %4961 = vmatprep.subr.bf16.mxu0 0
  %4962 = vmatpush1.bf16.msra.mxu0 0
  %4963 = vmatprep.subr.bf16.mxu0 0
  %4964 = vmatpush1.bf16.msra.mxu0 0
  %4965 = vmatprep.subr.bf16.mxu0 0
  %4966 = vmatpush1.bf16.msra.mxu0 0
  %4967 = vmatprep.subr.bf16.mxu0 0
  %4968 = vmatpush1.bf16.msra.mxu0 0
  %4969 = vmatprep.subr.bf16.mxu0 0
  %4970 = vmatpush1.bf16.msra.mxu0 0
  %4971 = vmatprep.subr.bf16.mxu0 0
  %4972 = vmatpush1.bf16.msra.mxu0 0
  %4973 = vmatprep.subr.bf16.mxu0 0
  %4974 = vmatpush1.bf16.msra.mxu0 0
  %4975 = vmatprep.subr.bf16.mxu0 0
  %4976 = vmatpush1.bf16.msra.mxu0 0
  %4977 = vmatprep.mubr.bf16.mxu0 0
  %4978 = vmatmul.mubr.bf16.gmra.mrb[0].mxu0 %v4944
  %v4979 = vpop.f32.mrb[0].mxu0
  %v4980 = vadd.f32 0.0, %v4979
  %v4981 = vpop.f32.mrb[0].mxu0
  %v4982 = vadd.f32 0.0, %v4981
  %v4983 = vpop.f32.mrb[0].mxu0
  %v4984 = vpop.f32.mrb[0].mxu0
  %4985 = vdwg.mxu0
  %4986 = vmatprep.subr.bf16.mxu0 %v4156
  %4987 = vmatpush1.bf16.msra.mxu0 %v4155
  %4988 = vmatprep.subr.bf16.mxu0 %v4160
  %4989 = vmatpush1.bf16.msra.mxu0 %v4159
  %4990 = vmatprep.subr.bf16.mxu0 %v4164
  %4991 = vmatpush1.bf16.msra.mxu0 %v4163
  %4992 = vmatprep.subr.bf16.mxu0 %v4168
  %4993 = vmatpush1.bf16.msra.mxu0 %v4167
  %4994 = vmatprep.subr.bf16.mxu0 %v4172
  %4995 = vmatpush1.bf16.msra.mxu0 %v4171
  %4996 = vmatprep.subr.bf16.mxu0 %v4176
  %4997 = vmatpush1.bf16.msra.mxu0 %v4175
  %4998 = vmatprep.subr.bf16.mxu0 %v4180
  %4999 = vmatpush1.bf16.msra.mxu0 %v4179
  %5000 = vmatprep.subr.bf16.mxu0 %v4184
  %5001 = vmatpush1.bf16.msra.mxu0 %v4183
  %5002 = vmatprep.subr.bf16.mxu0 0
  %5003 = vmatpush1.bf16.msra.mxu0 0
  %5004 = vmatprep.subr.bf16.mxu0 0
  %5005 = vmatpush1.bf16.msra.mxu0 0
  %5006 = vmatprep.subr.bf16.mxu0 0
  %5007 = vmatpush1.bf16.msra.mxu0 0
  %5008 = vmatprep.subr.bf16.mxu0 0
  %5009 = vmatpush1.bf16.msra.mxu0 0
  %5010 = vmatprep.subr.bf16.mxu0 0
  %5011 = vmatpush1.bf16.msra.mxu0 0
  %5012 = vmatprep.subr.bf16.mxu0 0
  %5013 = vmatpush1.bf16.msra.mxu0 0
  %5014 = vmatprep.subr.bf16.mxu0 0
  %5015 = vmatpush1.bf16.msra.mxu0 0
  %5016 = vmatprep.subr.bf16.mxu0 0
  %5017 = vmatpush1.bf16.msra.mxu0 0
  %5018 = vmatprep.mubr.bf16.mxu0 0
  %5019 = vmatmul.mubr.bf16.gmra.mrb[0].mxu0 %v4944
  %v5020 = vpop.f32.mrb[0].mxu0
  %v5021 = vadd.f32 0.0, %v5020
  %v5022 = vpop.f32.mrb[0].mxu0
  %v5023 = vadd.f32 0.0, %v5022
  %v5024 = vpop.f32.mrb[0].mxu0
  %v5025 = vpop.f32.mrb[0].mxu0
  %5026 = vdwg.mxu0
  %5027 = vmatprep.subr.bf16.mxu0 %v4492
  %5028 = vmatpush1.bf16.msra.mxu0 %v4491
  %5029 = vmatprep.subr.bf16.mxu0 %v4496
  %5030 = vmatpush1.bf16.msra.mxu0 %v4495
  %5031 = vmatprep.subr.bf16.mxu0 %v4500
  %5032 = vmatpush1.bf16.msra.mxu0 %v4499
  %5033 = vmatprep.subr.bf16.mxu0 %v4504
  %5034 = vmatpush1.bf16.msra.mxu0 %v4503
  %5035 = vmatprep.subr.bf16.mxu0 %v4508
  %5036 = vmatpush1.bf16.msra.mxu0 %v4507
  %5037 = vmatprep.subr.bf16.mxu0 %v4512
  %5038 = vmatpush1.bf16.msra.mxu0 %v4511
  %5039 = vmatprep.subr.bf16.mxu0 %v4516
  %5040 = vmatpush1.bf16.msra.mxu0 %v4515
  %5041 = vmatprep.subr.bf16.mxu0 %v4520
  %5042 = vmatpush1.bf16.msra.mxu0 %v4519
  %5043 = vmatprep.subr.bf16.mxu0 %v4524
  %5044 = vmatpush1.bf16.msra.mxu0 %v4523
  %5045 = vmatprep.subr.bf16.mxu0 %v4528
  %5046 = vmatpush1.bf16.msra.mxu0 %v4527
  %5047 = vmatprep.subr.bf16.mxu0 %v4532
  %5048 = vmatpush1.bf16.msra.mxu0 %v4531
  %5049 = vmatprep.subr.bf16.mxu0 %v4536
  %5050 = vmatpush1.bf16.msra.mxu0 %v4535
  %5051 = vmatprep.subr.bf16.mxu0 %v4540
  %5052 = vmatpush1.bf16.msra.mxu0 %v4539
  %5053 = vmatprep.subr.bf16.mxu0 %v4544
  %5054 = vmatpush1.bf16.msra.mxu0 %v4543
  %5055 = vmatprep.subr.bf16.mxu0 %v4548
  %5056 = vmatpush1.bf16.msra.mxu0 %v4547
  %5057 = vmatprep.subr.bf16.mxu0 %v4552
  %5058 = vmatpush1.bf16.msra.mxu0 %v4551
  %5059 = vmatprep.mubr.bf16.mxu0 %v2995
  %5060 = vmatmul.mubr.bf16.gmra.mrb[0].mxu0 %v1623
  %v5061 = vpop.f32.mrb[0].mxu0
  %v5062 = vadd.f32 %v4980, %v5061
  %v5063 = vpop.f32.mrb[0].mxu0
  %v5064 = vadd.f32 %v4982, %v5063
  %v5065 = vpop.f32.mrb[0].mxu0
  %v5066 = vpop.f32.mrb[0].mxu0
  %5067 = vdwg.mxu0
  %5068 = vmatprep.subr.bf16.mxu0 %v4494
  %5069 = vmatpush1.bf16.msra.mxu0 %v4493
  %5070 = vmatprep.subr.bf16.mxu0 %v4498
  %5071 = vmatpush1.bf16.msra.mxu0 %v4497
  %5072 = vmatprep.subr.bf16.mxu0 %v4502
  %5073 = vmatpush1.bf16.msra.mxu0 %v4501
  %5074 = vmatprep.subr.bf16.mxu0 %v4506
  %5075 = vmatpush1.bf16.msra.mxu0 %v4505
  %5076 = vmatprep.subr.bf16.mxu0 %v4510
  %5077 = vmatpush1.bf16.msra.mxu0 %v4509
  %5078 = vmatprep.subr.bf16.mxu0 %v4514
  %5079 = vmatpush1.bf16.msra.mxu0 %v4513
  %5080 = vmatprep.subr.bf16.mxu0 %v4518
  %5081 = vmatpush1.bf16.msra.mxu0 %v4517
  %5082 = vmatprep.subr.bf16.mxu0 %v4522
  %5083 = vmatpush1.bf16.msra.mxu0 %v4521
  %5084 = vmatprep.subr.bf16.mxu0 %v4526
  %5085 = vmatpush1.bf16.msra.mxu0 %v4525
  %5086 = vmatprep.subr.bf16.mxu0 %v4530
  %5087 = vmatpush1.bf16.msra.mxu0 %v4529
  %5088 = vmatprep.subr.bf16.mxu0 %v4534
  %5089 = vmatpush1.bf16.msra.mxu0 %v4533
  %5090 = vmatprep.subr.bf16.mxu0 %v4538
  %5091 = vmatpush1.bf16.msra.mxu0 %v4537
  %5092 = vmatprep.subr.bf16.mxu0 %v4542
  %5093 = vmatpush1.bf16.msra.mxu0 %v4541
  %5094 = vmatprep.subr.bf16.mxu0 %v4546
  %5095 = vmatpush1.bf16.msra.mxu0 %v4545
  %5096 = vmatprep.subr.bf16.mxu0 %v4550
  %5097 = vmatpush1.bf16.msra.mxu0 %v4549
  %5098 = vmatprep.subr.bf16.mxu0 %v4554
  %5099 = vmatpush1.bf16.msra.mxu0 %v4553
  %5100 = vmatprep.mubr.bf16.mxu0 %v2995
  %5101 = vmatmul.mubr.bf16.gmra.mrb[0].mxu0 %v1623
  %v5102 = vpop.f32.mrb[0].mxu0
  %v5103 = vadd.f32 %v5021, %v5102
  %v5104 = vpop.f32.mrb[0].mxu0
  %v5105 = vadd.f32 %v5023, %v5104
  %v5106 = vpop.f32.mrb[0].mxu0
  %v5107 = vpop.f32.mrb[0].mxu0
  %5108 = vdwg.mxu0
  %v5109 = vadd.f32 %v5062, %v4706
  %v5110 = vadd.f32 %v5064, %v4710
  %v5111 = vadd.f32 %v5103, %v4714
  %v5112 = vadd.f32 %v5105, %v4718
  %v5113 = vxor.u32 %v5109, 2147483648
  %v5114 = vmul.f32 %v5113, 1.442695
  %v5115 = vpow.pop %v5114
  %v5116 = vadd.f32 %v5115, 1.0
  %v5117 = vrcp.pop %v5116
  %v5118 = vmul.f32 1.0, %v5117
  %v5119 = vxor.u32 %v5110, 2147483648
  %v5120 = vmul.f32 %v5119, 1.442695
  %v5121 = vpow.pop %v5120
  %v5122 = vadd.f32 %v5121, 1.0
  %v5123 = vrcp.pop %v5122
  %v5124 = vmul.f32 1.0, %v5123
  %v5125 = vtanh.pop %v5111
  %v5126 = vxor.u32 %v5112, 2147483648
  %v5127 = vmul.f32 %v5126, 1.442695
  %v5128 = vpow.pop %v5127
  %v5129 = vadd.f32 %v5128, 1.0
  %v5130 = vrcp.pop %v5129
  %v5131 = vmul.f32 1.0, %v5130
  %v5132 = vmul.f32 %v5124, %v4941
  %v5133 = vmul.f32 %v5118, %v5125
  %v5134 = vadd.f32 %v5132, %v5133
  %v5135 = vtanh.pop %v5134
  %v5136 = vmul.f32 %v5131, %v5135
  %v5137 = vpack.c.bf16 %v5136, %v5136
  %5138 = vmatprep.subr.bf16.mxu0 %v4154
  %5139 = vmatpush1.bf16.msra.mxu0 %v4153
  %5140 = vmatprep.subr.bf16.mxu0 %v4158
  %5141 = vmatpush1.bf16.msra.mxu0 %v4157
  %5142 = vmatprep.subr.bf16.mxu0 %v4162
  %5143 = vmatpush1.bf16.msra.mxu0 %v4161
  %5144 = vmatprep.subr.bf16.mxu0 %v4166
  %5145 = vmatpush1.bf16.msra.mxu0 %v4165
  %5146 = vmatprep.subr.bf16.mxu0 %v4170
  %5147 = vmatpush1.bf16.msra.mxu0 %v4169
  %5148 = vmatprep.subr.bf16.mxu0 %v4174
  %5149 = vmatpush1.bf16.msra.mxu0 %v4173
  %5150 = vmatprep.subr.bf16.mxu0 %v4178
  %5151 = vmatpush1.bf16.msra.mxu0 %v4177
  %5152 = vmatprep.subr.bf16.mxu0 %v4182
  %5153 = vmatpush1.bf16.msra.mxu0 %v4181
  %5154 = vmatprep.subr.bf16.mxu0 0
  %5155 = vmatpush1.bf16.msra.mxu0 0
  %5156 = vmatprep.subr.bf16.mxu0 0
  %5157 = vmatpush1.bf16.msra.mxu0 0
  %5158 = vmatprep.subr.bf16.mxu0 0
  %5159 = vmatpush1.bf16.msra.mxu0 0
  %5160 = vmatprep.subr.bf16.mxu0 0
  %5161 = vmatpush1.bf16.msra.mxu0 0
  %5162 = vmatprep.subr.bf16.mxu0 0
  %5163 = vmatpush1.bf16.msra.mxu0 0
  %5164 = vmatprep.subr.bf16.mxu0 0
  %5165 = vmatpush1.bf16.msra.mxu0 0
  %5166 = vmatprep.subr.bf16.mxu0 0
  %5167 = vmatpush1.bf16.msra.mxu0 0
  %5168 = vmatprep.subr.bf16.mxu0 0
  %5169 = vmatpush1.bf16.msra.mxu0 0
  %5170 = vmatprep.mubr.bf16.mxu0 0
  %5171 = vmatmul.mubr.bf16.gmra.mrb[0].mxu0 %v5137
  %v5172 = vpop.f32.mrb[0].mxu0
  %v5173 = vadd.f32 0.0, %v5172
  %v5174 = vpop.f32.mrb[0].mxu0
  %v5175 = vadd.f32 0.0, %v5174
  %v5176 = vpop.f32.mrb[0].mxu0
  %v5177 = vpop.f32.mrb[0].mxu0
  %5178 = vdwg.mxu0
  %5179 = vmatprep.subr.bf16.mxu0 %v4156
  %5180 = vmatpush1.bf16.msra.mxu0 %v4155
  %5181 = vmatprep.subr.bf16.mxu0 %v4160
  %5182 = vmatpush1.bf16.msra.mxu0 %v4159
  %5183 = vmatprep.subr.bf16.mxu0 %v4164
  %5184 = vmatpush1.bf16.msra.mxu0 %v4163
  %5185 = vmatprep.subr.bf16.mxu0 %v4168
  %5186 = vmatpush1.bf16.msra.mxu0 %v4167
  %5187 = vmatprep.subr.bf16.mxu0 %v4172
  %5188 = vmatpush1.bf16.msra.mxu0 %v4171
  %5189 = vmatprep.subr.bf16.mxu0 %v4176
  %5190 = vmatpush1.bf16.msra.mxu0 %v4175
  %5191 = vmatprep.subr.bf16.mxu0 %v4180
  %5192 = vmatpush1.bf16.msra.mxu0 %v4179
  %5193 = vmatprep.subr.bf16.mxu0 %v4184
  %5194 = vmatpush1.bf16.msra.mxu0 %v4183
  %5195 = vmatprep.subr.bf16.mxu0 0
  %5196 = vmatpush1.bf16.msra.mxu0 0
  %5197 = vmatprep.subr.bf16.mxu0 0
  %5198 = vmatpush1.bf16.msra.mxu0 0
  %5199 = vmatprep.subr.bf16.mxu0 0
  %5200 = vmatpush1.bf16.msra.mxu0 0
  %5201 = vmatprep.subr.bf16.mxu0 0
  %5202 = vmatpush1.bf16.msra.mxu0 0
  %5203 = vmatprep.subr.bf16.mxu0 0
  %5204 = vmatpush1.bf16.msra.mxu0 0
  %5205 = vmatprep.subr.bf16.mxu0 0
  %5206 = vmatpush1.bf16.msra.mxu0 0
  %5207 = vmatprep.subr.bf16.mxu0 0
  %5208 = vmatpush1.bf16.msra.mxu0 0
  %5209 = vmatprep.subr.bf16.mxu0 0
  %5210 = vmatpush1.bf16.msra.mxu0 0
  %5211 = vmatprep.mubr.bf16.mxu0 0
  %5212 = vmatmul.mubr.bf16.gmra.mrb[0].mxu0 %v5137
  %v5213 = vpop.f32.mrb[0].mxu0
  %v5214 = vadd.f32 0.0, %v5213
  %v5215 = vpop.f32.mrb[0].mxu0
  %v5216 = vadd.f32 0.0, %v5215
  %v5217 = vpop.f32.mrb[0].mxu0
  %v5218 = vpop.f32.mrb[0].mxu0
  %5219 = vdwg.mxu0
  %5220 = vmatprep.subr.bf16.mxu0 %v4492
  %5221 = vmatpush1.bf16.msra.mxu0 %v4491
  %5222 = vmatprep.subr.bf16.mxu0 %v4496
  %5223 = vmatpush1.bf16.msra.mxu0 %v4495
  %5224 = vmatprep.subr.bf16.mxu0 %v4500
  %5225 = vmatpush1.bf16.msra.mxu0 %v4499
  %5226 = vmatprep.subr.bf16.mxu0 %v4504
  %5227 = vmatpush1.bf16.msra.mxu0 %v4503
  %5228 = vmatprep.subr.bf16.mxu0 %v4508
  %5229 = vmatpush1.bf16.msra.mxu0 %v4507
  %5230 = vmatprep.subr.bf16.mxu0 %v4512
  %5231 = vmatpush1.bf16.msra.mxu0 %v4511
  %5232 = vmatprep.subr.bf16.mxu0 %v4516
  %5233 = vmatpush1.bf16.msra.mxu0 %v4515
  %5234 = vmatprep.subr.bf16.mxu0 %v4520
  %5235 = vmatpush1.bf16.msra.mxu0 %v4519
  %5236 = vmatprep.subr.bf16.mxu0 %v4524
  %5237 = vmatpush1.bf16.msra.mxu0 %v4523
  %5238 = vmatprep.subr.bf16.mxu0 %v4528
  %5239 = vmatpush1.bf16.msra.mxu0 %v4527
  %5240 = vmatprep.subr.bf16.mxu0 %v4532
  %5241 = vmatpush1.bf16.msra.mxu0 %v4531
  %5242 = vmatprep.subr.bf16.mxu0 %v4536
  %5243 = vmatpush1.bf16.msra.mxu0 %v4535
  %5244 = vmatprep.subr.bf16.mxu0 %v4540
  %5245 = vmatpush1.bf16.msra.mxu0 %v4539
  %5246 = vmatprep.subr.bf16.mxu0 %v4544
  %5247 = vmatpush1.bf16.msra.mxu0 %v4543
  %5248 = vmatprep.subr.bf16.mxu0 %v4548
  %5249 = vmatpush1.bf16.msra.mxu0 %v4547
  %5250 = vmatprep.subr.bf16.mxu0 %v4552
  %5251 = vmatpush1.bf16.msra.mxu0 %v4551
  %5252 = vmatprep.mubr.bf16.mxu0 %v3188
  %5253 = vmatmul.mubr.bf16.gmra.mrb[0].mxu0 %v1428
  %v5254 = vpop.f32.mrb[0].mxu0
  %v5255 = vadd.f32 %v5173, %v5254
  %v5256 = vpop.f32.mrb[0].mxu0
  %v5257 = vadd.f32 %v5175, %v5256
  %v5258 = vpop.f32.mrb[0].mxu0
  %v5259 = vpop.f32.mrb[0].mxu0
  %5260 = vdwg.mxu0
  %5261 = vmatprep.subr.bf16.mxu0 %v4494
  %5262 = vmatpush1.bf16.msra.mxu0 %v4493
  %5263 = vmatprep.subr.bf16.mxu0 %v4498
  %5264 = vmatpush1.bf16.msra.mxu0 %v4497
  %5265 = vmatprep.subr.bf16.mxu0 %v4502
  %5266 = vmatpush1.bf16.msra.mxu0 %v4501
  %5267 = vmatprep.subr.bf16.mxu0 %v4506
  %5268 = vmatpush1.bf16.msra.mxu0 %v4505
  %5269 = vmatprep.subr.bf16.mxu0 %v4510
  %5270 = vmatpush1.bf16.msra.mxu0 %v4509
  %5271 = vmatprep.subr.bf16.mxu0 %v4514
  %5272 = vmatpush1.bf16.msra.mxu0 %v4513
  %5273 = vmatprep.subr.bf16.mxu0 %v4518
  %5274 = vmatpush1.bf16.msra.mxu0 %v4517
  %5275 = vmatprep.subr.bf16.mxu0 %v4522
  %5276 = vmatpush1.bf16.msra.mxu0 %v4521
  %5277 = vmatprep.subr.bf16.mxu0 %v4526
  %5278 = vmatpush1.bf16.msra.mxu0 %v4525
  %5279 = vmatprep.subr.bf16.mxu0 %v4530
  %5280 = vmatpush1.bf16.msra.mxu0 %v4529
  %5281 = vmatprep.subr.bf16.mxu0 %v4534
  %5282 = vmatpush1.bf16.msra.mxu0 %v4533
  %5283 = vmatprep.subr.bf16.mxu0 %v4538
  %5284 = vmatpush1.bf16.msra.mxu0 %v4537
  %5285 = vmatprep.subr.bf16.mxu0 %v4542
  %5286 = vmatpush1.bf16.msra.mxu0 %v4541
  %5287 = vmatprep.subr.bf16.mxu0 %v4546
  %5288 = vmatpush1.bf16.msra.mxu0 %v4545
  %5289 = vmatprep.subr.bf16.mxu0 %v4550
  %5290 = vmatpush1.bf16.msra.mxu0 %v4549
  %5291 = vmatprep.subr.bf16.mxu0 %v4554
  %5292 = vmatpush1.bf16.msra.mxu0 %v4553
  %5293 = vmatprep.mubr.bf16.mxu0 %v3188
  %5294 = vmatmul.mubr.bf16.gmra.mrb[0].mxu0 %v1428
  %v5295 = vpop.f32.mrb[0].mxu0
  %v5296 = vadd.f32 %v5214, %v5295
  %v5297 = vpop.f32.mrb[0].mxu0
  %v5298 = vadd.f32 %v5216, %v5297
  %v5299 = vpop.f32.mrb[0].mxu0
  %v5300 = vpop.f32.mrb[0].mxu0
  %5301 = vdwg.mxu0
  %v5302 = vadd.f32 %v5255, %v4706
  %v5303 = vadd.f32 %v5257, %v4710
  %v5304 = vadd.f32 %v5296, %v4714
  %v5305 = vadd.f32 %v5298, %v4718
  %v5306 = vxor.u32 %v5302, 2147483648
  %v5307 = vmul.f32 %v5306, 1.442695
  %v5308 = vpow.pop %v5307
  %v5309 = vadd.f32 %v5308, 1.0
  %v5310 = vrcp.pop %v5309
  %v5311 = vmul.f32 1.0, %v5310
  %v5312 = vxor.u32 %v5303, 2147483648
  %v5313 = vmul.f32 %v5312, 1.442695
  %v5314 = vpow.pop %v5313
  %v5315 = vadd.f32 %v5314, 1.0
  %v5316 = vrcp.pop %v5315
  %v5317 = vmul.f32 1.0, %v5316
  %v5318 = vtanh.pop %v5304
  %v5319 = vxor.u32 %v5305, 2147483648
  %v5320 = vmul.f32 %v5319, 1.442695
  %v5321 = vpow.pop %v5320
  %v5322 = vadd.f32 %v5321, 1.0
  %v5323 = vrcp.pop %v5322
  %v5324 = vmul.f32 1.0, %v5323
  %v5325 = vmul.f32 %v5317, %v5134
  %v5326 = vmul.f32 %v5311, %v5318
  %v5327 = vadd.f32 %v5325, %v5326
  %v5328 = vtanh.pop %v5327
  %v5329 = vmul.f32 %v5324, %v5328
  %v5330 = vpack.c.bf16 %v5329, %v5329
  %5331 = vmatprep.subr.bf16.mxu0 %v4154
  %5332 = vmatpush1.bf16.msra.mxu0 %v4153
  %5333 = vmatprep.subr.bf16.mxu0 %v4158
  %5334 = vmatpush1.bf16.msra.mxu0 %v4157
  %5335 = vmatprep.subr.bf16.mxu0 %v4162
  %5336 = vmatpush1.bf16.msra.mxu0 %v4161
  %5337 = vmatprep.subr.bf16.mxu0 %v4166
  %5338 = vmatpush1.bf16.msra.mxu0 %v4165
  %5339 = vmatprep.subr.bf16.mxu0 %v4170
  %5340 = vmatpush1.bf16.msra.mxu0 %v4169
  %5341 = vmatprep.subr.bf16.mxu0 %v4174
  %5342 = vmatpush1.bf16.msra.mxu0 %v4173
  %5343 = vmatprep.subr.bf16.mxu0 %v4178
  %5344 = vmatpush1.bf16.msra.mxu0 %v4177
  %5345 = vmatprep.subr.bf16.mxu0 %v4182
  %5346 = vmatpush1.bf16.msra.mxu0 %v4181
  %5347 = vmatprep.subr.bf16.mxu0 0
  %5348 = vmatpush1.bf16.msra.mxu0 0
  %5349 = vmatprep.subr.bf16.mxu0 0
  %5350 = vmatpush1.bf16.msra.mxu0 0
  %5351 = vmatprep.subr.bf16.mxu0 0
  %5352 = vmatpush1.bf16.msra.mxu0 0
  %5353 = vmatprep.subr.bf16.mxu0 0
  %5354 = vmatpush1.bf16.msra.mxu0 0
  %5355 = vmatprep.subr.bf16.mxu0 0
  %5356 = vmatpush1.bf16.msra.mxu0 0
  %5357 = vmatprep.subr.bf16.mxu0 0
  %5358 = vmatpush1.bf16.msra.mxu0 0
  %5359 = vmatprep.subr.bf16.mxu0 0
  %5360 = vmatpush1.bf16.msra.mxu0 0
  %5361 = vmatprep.subr.bf16.mxu0 0
  %5362 = vmatpush1.bf16.msra.mxu0 0
  %5363 = vmatprep.mubr.bf16.mxu0 0
  %5364 = vmatmul.mubr.bf16.gmra.mrb[0].mxu0 %v5330
  %v5365 = vpop.f32.mrb[0].mxu0
  %v5366 = vadd.f32 0.0, %v5365
  %v5367 = vpop.f32.mrb[0].mxu0
  %v5368 = vadd.f32 0.0, %v5367
  %v5369 = vpop.f32.mrb[0].mxu0
  %v5370 = vpop.f32.mrb[0].mxu0
  %5371 = vdwg.mxu0
  %5372 = vmatprep.subr.bf16.mxu0 %v4156
  %5373 = vmatpush1.bf16.msra.mxu0 %v4155
  %5374 = vmatprep.subr.bf16.mxu0 %v4160
  %5375 = vmatpush1.bf16.msra.mxu0 %v4159
  %5376 = vmatprep.subr.bf16.mxu0 %v4164
  %5377 = vmatpush1.bf16.msra.mxu0 %v4163
  %5378 = vmatprep.subr.bf16.mxu0 %v4168
  %5379 = vmatpush1.bf16.msra.mxu0 %v4167
  %5380 = vmatprep.subr.bf16.mxu0 %v4172
  %5381 = vmatpush1.bf16.msra.mxu0 %v4171
  %5382 = vmatprep.subr.bf16.mxu0 %v4176
  %5383 = vmatpush1.bf16.msra.mxu0 %v4175
  %5384 = vmatprep.subr.bf16.mxu0 %v4180
  %5385 = vmatpush1.bf16.msra.mxu0 %v4179
  %5386 = vmatprep.subr.bf16.mxu0 %v4184
  %5387 = vmatpush1.bf16.msra.mxu0 %v4183
  %5388 = vmatprep.subr.bf16.mxu0 0
  %5389 = vmatpush1.bf16.msra.mxu0 0
  %5390 = vmatprep.subr.bf16.mxu0 0
  %5391 = vmatpush1.bf16.msra.mxu0 0
  %5392 = vmatprep.subr.bf16.mxu0 0
  %5393 = vmatpush1.bf16.msra.mxu0 0
  %5394 = vmatprep.subr.bf16.mxu0 0
  %5395 = vmatpush1.bf16.msra.mxu0 0
  %5396 = vmatprep.subr.bf16.mxu0 0
  %5397 = vmatpush1.bf16.msra.mxu0 0
  %5398 = vmatprep.subr.bf16.mxu0 0
  %5399 = vmatpush1.bf16.msra.mxu0 0
  %5400 = vmatprep.subr.bf16.mxu0 0
  %5401 = vmatpush1.bf16.msra.mxu0 0
  %5402 = vmatprep.subr.bf16.mxu0 0
  %5403 = vmatpush1.bf16.msra.mxu0 0
  %5404 = vmatprep.mubr.bf16.mxu0 0
  %5405 = vmatmul.mubr.bf16.gmra.mrb[0].mxu0 %v5330
  %v5406 = vpop.f32.mrb[0].mxu0
  %v5407 = vadd.f32 0.0, %v5406
  %v5408 = vpop.f32.mrb[0].mxu0
  %v5409 = vadd.f32 0.0, %v5408
  %v5410 = vpop.f32.mrb[0].mxu0
  %v5411 = vpop.f32.mrb[0].mxu0
  %5412 = vdwg.mxu0
  %5413 = vmatprep.subr.bf16.mxu0 %v4492
  %5414 = vmatpush1.bf16.msra.mxu0 %v4491
  %5415 = vmatprep.subr.bf16.mxu0 %v4496
  %5416 = vmatpush1.bf16.msra.mxu0 %v4495
  %5417 = vmatprep.subr.bf16.mxu0 %v4500
  %5418 = vmatpush1.bf16.msra.mxu0 %v4499
  %5419 = vmatprep.subr.bf16.mxu0 %v4504
  %5420 = vmatpush1.bf16.msra.mxu0 %v4503
  %5421 = vmatprep.subr.bf16.mxu0 %v4508
  %5422 = vmatpush1.bf16.msra.mxu0 %v4507
  %5423 = vmatprep.subr.bf16.mxu0 %v4512
  %5424 = vmatpush1.bf16.msra.mxu0 %v4511
  %5425 = vmatprep.subr.bf16.mxu0 %v4516
  %5426 = vmatpush1.bf16.msra.mxu0 %v4515
  %5427 = vmatprep.subr.bf16.mxu0 %v4520
  %5428 = vmatpush1.bf16.msra.mxu0 %v4519
  %5429 = vmatprep.subr.bf16.mxu0 %v4524
  %5430 = vmatpush1.bf16.msra.mxu0 %v4523
  %5431 = vmatprep.subr.bf16.mxu0 %v4528
  %5432 = vmatpush1.bf16.msra.mxu0 %v4527
  %5433 = vmatprep.subr.bf16.mxu0 %v4532
  %5434 = vmatpush1.bf16.msra.mxu0 %v4531
  %5435 = vmatprep.subr.bf16.mxu0 %v4536
  %5436 = vmatpush1.bf16.msra.mxu0 %v4535
  %5437 = vmatprep.subr.bf16.mxu0 %v4540
  %5438 = vmatpush1.bf16.msra.mxu0 %v4539
  %5439 = vmatprep.subr.bf16.mxu0 %v4544
  %5440 = vmatpush1.bf16.msra.mxu0 %v4543
  %5441 = vmatprep.subr.bf16.mxu0 %v4548
  %5442 = vmatpush1.bf16.msra.mxu0 %v4547
  %5443 = vmatprep.subr.bf16.mxu0 %v4552
  %5444 = vmatpush1.bf16.msra.mxu0 %v4551
  %5445 = vmatprep.mubr.bf16.mxu0 %v3381
  %5446 = vmatmul.mubr.bf16.gmra.mrb[0].mxu0 %v1233
  %v5447 = vpop.f32.mrb[0].mxu0
  %v5448 = vadd.f32 %v5366, %v5447
  %v5449 = vpop.f32.mrb[0].mxu0
  %v5450 = vadd.f32 %v5368, %v5449
  %v5451 = vpop.f32.mrb[0].mxu0
  %v5452 = vpop.f32.mrb[0].mxu0
  %5453 = vdwg.mxu0
  %5454 = vmatprep.subr.bf16.mxu0 %v4494
  %5455 = vmatpush1.bf16.msra.mxu0 %v4493
  %5456 = vmatprep.subr.bf16.mxu0 %v4498
  %5457 = vmatpush1.bf16.msra.mxu0 %v4497
  %5458 = vmatprep.subr.bf16.mxu0 %v4502
  %5459 = vmatpush1.bf16.msra.mxu0 %v4501
  %5460 = vmatprep.subr.bf16.mxu0 %v4506
  %5461 = vmatpush1.bf16.msra.mxu0 %v4505
  %5462 = vmatprep.subr.bf16.mxu0 %v4510
  %5463 = vmatpush1.bf16.msra.mxu0 %v4509
  %5464 = vmatprep.subr.bf16.mxu0 %v4514
  %5465 = vmatpush1.bf16.msra.mxu0 %v4513
  %5466 = vmatprep.subr.bf16.mxu0 %v4518
  %5467 = vmatpush1.bf16.msra.mxu0 %v4517
  %5468 = vmatprep.subr.bf16.mxu0 %v4522
  %5469 = vmatpush1.bf16.msra.mxu0 %v4521
  %5470 = vmatprep.subr.bf16.mxu0 %v4526
  %5471 = vmatpush1.bf16.msra.mxu0 %v4525
  %5472 = vmatprep.subr.bf16.mxu0 %v4530
  %5473 = vmatpush1.bf16.msra.mxu0 %v4529
  %5474 = vmatprep.subr.bf16.mxu0 %v4534
  %5475 = vmatpush1.bf16.msra.mxu0 %v4533
  %5476 = vmatprep.subr.bf16.mxu0 %v4538
  %5477 = vmatpush1.bf16.msra.mxu0 %v4537
  %5478 = vmatprep.subr.bf16.mxu0 %v4542
  %5479 = vmatpush1.bf16.msra.mxu0 %v4541
  %5480 = vmatprep.subr.bf16.mxu0 %v4546
  %5481 = vmatpush1.bf16.msra.mxu0 %v4545
  %5482 = vmatprep.subr.bf16.mxu0 %v4550
  %5483 = vmatpush1.bf16.msra.mxu0 %v4549
  %5484 = vmatprep.subr.bf16.mxu0 %v4554
  %5485 = vmatpush1.bf16.msra.mxu0 %v4553
  %5486 = vmatprep.mubr.bf16.mxu0 %v3381
  %5487 = vmatmul.mubr.bf16.gmra.mrb[0].mxu0 %v1233
  %v5488 = vpop.f32.mrb[0].mxu0
  %v5489 = vadd.f32 %v5407, %v5488
  %v5490 = vpop.f32.mrb[0].mxu0
  %v5491 = vadd.f32 %v5409, %v5490
  %v5492 = vpop.f32.mrb[0].mxu0
  %v5493 = vpop.f32.mrb[0].mxu0
  %5494 = vdwg.mxu0
  %v5495 = vadd.f32 %v5448, %v4706
  %v5496 = vadd.f32 %v5450, %v4710
  %v5497 = vadd.f32 %v5489, %v4714
  %v5498 = vadd.f32 %v5491, %v4718
  %v5499 = vxor.u32 %v5495, 2147483648
  %v5500 = vmul.f32 %v5499, 1.442695
  %v5501 = vpow.pop %v5500
  %v5502 = vadd.f32 %v5501, 1.0
  %v5503 = vrcp.pop %v5502
  %v5504 = vmul.f32 1.0, %v5503
  %v5505 = vxor.u32 %v5496, 2147483648
  %v5506 = vmul.f32 %v5505, 1.442695
  %v5507 = vpow.pop %v5506
  %v5508 = vadd.f32 %v5507, 1.0
  %v5509 = vrcp.pop %v5508
  %v5510 = vmul.f32 1.0, %v5509
  %v5511 = vtanh.pop %v5497
  %v5512 = vxor.u32 %v5498, 2147483648
  %v5513 = vmul.f32 %v5512, 1.442695
  %v5514 = vpow.pop %v5513
  %v5515 = vadd.f32 %v5514, 1.0
  %v5516 = vrcp.pop %v5515
  %v5517 = vmul.f32 1.0, %v5516
  %v5518 = vmul.f32 %v5510, %v5327
  %v5519 = vmul.f32 %v5504, %v5511
  %v5520 = vadd.f32 %v5518, %v5519
  %v5521 = vtanh.pop %v5520
  %v5522 = vmul.f32 %v5517, %v5521
  %v5523 = vpack.c.bf16 %v5522, %v5522
  %5524 = vmatprep.subr.bf16.mxu0 %v4154
  %5525 = vmatpush1.bf16.msra.mxu0 %v4153
  %5526 = vmatprep.subr.bf16.mxu0 %v4158
  %5527 = vmatpush1.bf16.msra.mxu0 %v4157
  %5528 = vmatprep.subr.bf16.mxu0 %v4162
  %5529 = vmatpush1.bf16.msra.mxu0 %v4161
  %5530 = vmatprep.subr.bf16.mxu0 %v4166
  %5531 = vmatpush1.bf16.msra.mxu0 %v4165
  %5532 = vmatprep.subr.bf16.mxu0 %v4170
  %5533 = vmatpush1.bf16.msra.mxu0 %v4169
  %5534 = vmatprep.subr.bf16.mxu0 %v4174
  %5535 = vmatpush1.bf16.msra.mxu0 %v4173
  %5536 = vmatprep.subr.bf16.mxu0 %v4178
  %5537 = vmatpush1.bf16.msra.mxu0 %v4177
  %5538 = vmatprep.subr.bf16.mxu0 %v4182
  %5539 = vmatpush1.bf16.msra.mxu0 %v4181
  %5540 = vmatprep.subr.bf16.mxu0 0
  %5541 = vmatpush1.bf16.msra.mxu0 0
  %5542 = vmatprep.subr.bf16.mxu0 0
  %5543 = vmatpush1.bf16.msra.mxu0 0
  %5544 = vmatprep.subr.bf16.mxu0 0
  %5545 = vmatpush1.bf16.msra.mxu0 0
  %5546 = vmatprep.subr.bf16.mxu0 0
  %5547 = vmatpush1.bf16.msra.mxu0 0
  %5548 = vmatprep.subr.bf16.mxu0 0
  %5549 = vmatpush1.bf16.msra.mxu0 0
  %5550 = vmatprep.subr.bf16.mxu0 0
  %5551 = vmatpush1.bf16.msra.mxu0 0
  %5552 = vmatprep.subr.bf16.mxu0 0
  %5553 = vmatpush1.bf16.msra.mxu0 0
  %5554 = vmatprep.subr.bf16.mxu0 0
  %5555 = vmatpush1.bf16.msra.mxu0 0
  %5556 = vmatprep.mubr.bf16.mxu0 0
  %5557 = vmatmul.mubr.bf16.gmra.mrb[0].mxu0 %v5523
  %v5558 = vpop.f32.mrb[0].mxu0
  %v5559 = vadd.f32 0.0, %v5558
  %v5560 = vpop.f32.mrb[0].mxu0
  %v5561 = vadd.f32 0.0, %v5560
  %v5562 = vpop.f32.mrb[0].mxu0
  %v5563 = vpop.f32.mrb[0].mxu0
  %5564 = vdwg.mxu0
  %5565 = vmatprep.subr.bf16.mxu0 %v4156
  %5566 = vmatpush1.bf16.msra.mxu0 %v4155
  %5567 = vmatprep.subr.bf16.mxu0 %v4160
  %5568 = vmatpush1.bf16.msra.mxu0 %v4159
  %5569 = vmatprep.subr.bf16.mxu0 %v4164
  %5570 = vmatpush1.bf16.msra.mxu0 %v4163
  %5571 = vmatprep.subr.bf16.mxu0 %v4168
  %5572 = vmatpush1.bf16.msra.mxu0 %v4167
  %5573 = vmatprep.subr.bf16.mxu0 %v4172
  %5574 = vmatpush1.bf16.msra.mxu0 %v4171
  %5575 = vmatprep.subr.bf16.mxu0 %v4176
  %5576 = vmatpush1.bf16.msra.mxu0 %v4175
  %5577 = vmatprep.subr.bf16.mxu0 %v4180
  %5578 = vmatpush1.bf16.msra.mxu0 %v4179
  %5579 = vmatprep.subr.bf16.mxu0 %v4184
  %5580 = vmatpush1.bf16.msra.mxu0 %v4183
  %5581 = vmatprep.subr.bf16.mxu0 0
  %5582 = vmatpush1.bf16.msra.mxu0 0
  %5583 = vmatprep.subr.bf16.mxu0 0
  %5584 = vmatpush1.bf16.msra.mxu0 0
  %5585 = vmatprep.subr.bf16.mxu0 0
  %5586 = vmatpush1.bf16.msra.mxu0 0
  %5587 = vmatprep.subr.bf16.mxu0 0
  %5588 = vmatpush1.bf16.msra.mxu0 0
  %5589 = vmatprep.subr.bf16.mxu0 0
  %5590 = vmatpush1.bf16.msra.mxu0 0
  %5591 = vmatprep.subr.bf16.mxu0 0
  %5592 = vmatpush1.bf16.msra.mxu0 0
  %5593 = vmatprep.subr.bf16.mxu0 0
  %5594 = vmatpush1.bf16.msra.mxu0 0
  %5595 = vmatprep.subr.bf16.mxu0 0
  %5596 = vmatpush1.bf16.msra.mxu0 0
  %5597 = vmatprep.mubr.bf16.mxu0 0
  %5598 = vmatmul.mubr.bf16.gmra.mrb[0].mxu0 %v5523
  %v5599 = vpop.f32.mrb[0].mxu0
  %v5600 = vadd.f32 0.0, %v5599
  %v5601 = vpop.f32.mrb[0].mxu0
  %v5602 = vadd.f32 0.0, %v5601
  %v5603 = vpop.f32.mrb[0].mxu0
  %v5604 = vpop.f32.mrb[0].mxu0
  %5605 = vdwg.mxu0
  %5606 = vmatprep.subr.bf16.mxu0 %v4492
  %5607 = vmatpush1.bf16.msra.mxu0 %v4491
  %5608 = vmatprep.subr.bf16.mxu0 %v4496
  %5609 = vmatpush1.bf16.msra.mxu0 %v4495
  %5610 = vmatprep.subr.bf16.mxu0 %v4500
  %5611 = vmatpush1.bf16.msra.mxu0 %v4499
  %5612 = vmatprep.subr.bf16.mxu0 %v4504
  %5613 = vmatpush1.bf16.msra.mxu0 %v4503
  %5614 = vmatprep.subr.bf16.mxu0 %v4508
  %5615 = vmatpush1.bf16.msra.mxu0 %v4507
  %5616 = vmatprep.subr.bf16.mxu0 %v4512
  %5617 = vmatpush1.bf16.msra.mxu0 %v4511
  %5618 = vmatprep.subr.bf16.mxu0 %v4516
  %5619 = vmatpush1.bf16.msra.mxu0 %v4515
  %5620 = vmatprep.subr.bf16.mxu0 %v4520
  %5621 = vmatpush1.bf16.msra.mxu0 %v4519
  %5622 = vmatprep.subr.bf16.mxu0 %v4524
  %5623 = vmatpush1.bf16.msra.mxu0 %v4523
  %5624 = vmatprep.subr.bf16.mxu0 %v4528
  %5625 = vmatpush1.bf16.msra.mxu0 %v4527
  %5626 = vmatprep.subr.bf16.mxu0 %v4532
  %5627 = vmatpush1.bf16.msra.mxu0 %v4531
  %5628 = vmatprep.subr.bf16.mxu0 %v4536
  %5629 = vmatpush1.bf16.msra.mxu0 %v4535
  %5630 = vmatprep.subr.bf16.mxu0 %v4540
  %5631 = vmatpush1.bf16.msra.mxu0 %v4539
  %5632 = vmatprep.subr.bf16.mxu0 %v4544
  %5633 = vmatpush1.bf16.msra.mxu0 %v4543
  %5634 = vmatprep.subr.bf16.mxu0 %v4548
  %5635 = vmatpush1.bf16.msra.mxu0 %v4547
  %5636 = vmatprep.subr.bf16.mxu0 %v4552
  %5637 = vmatpush1.bf16.msra.mxu0 %v4551
  %5638 = vmatprep.mubr.bf16.mxu0 %v3574
  %5639 = vmatmul.mubr.bf16.gmra.mrb[0].mxu0 %v1038
  %v5640 = vpop.f32.mrb[0].mxu0
  %v5641 = vadd.f32 %v5559, %v5640
  %v5642 = vpop.f32.mrb[0].mxu0
  %v5643 = vadd.f32 %v5561, %v5642
  %v5644 = vpop.f32.mrb[0].mxu0
  %v5645 = vpop.f32.mrb[0].mxu0
  %5646 = vdwg.mxu0
  %5647 = vmatprep.subr.bf16.mxu0 %v4494
  %5648 = vmatpush1.bf16.msra.mxu0 %v4493
  %5649 = vmatprep.subr.bf16.mxu0 %v4498
  %5650 = vmatpush1.bf16.msra.mxu0 %v4497
  %5651 = vmatprep.subr.bf16.mxu0 %v4502
  %5652 = vmatpush1.bf16.msra.mxu0 %v4501
  %5653 = vmatprep.subr.bf16.mxu0 %v4506
  %5654 = vmatpush1.bf16.msra.mxu0 %v4505
  %5655 = vmatprep.subr.bf16.mxu0 %v4510
  %5656 = vmatpush1.bf16.msra.mxu0 %v4509
  %5657 = vmatprep.subr.bf16.mxu0 %v4514
  %5658 = vmatpush1.bf16.msra.mxu0 %v4513
  %5659 = vmatprep.subr.bf16.mxu0 %v4518
  %5660 = vmatpush1.bf16.msra.mxu0 %v4517
  %5661 = vmatprep.subr.bf16.mxu0 %v4522
  %5662 = vmatpush1.bf16.msra.mxu0 %v4521
  %5663 = vmatprep.subr.bf16.mxu0 %v4526
  %5664 = vmatpush1.bf16.msra.mxu0 %v4525
  %5665 = vmatprep.subr.bf16.mxu0 %v4530
  %5666 = vmatpush1.bf16.msra.mxu0 %v4529
  %5667 = vmatprep.subr.bf16.mxu0 %v4534
  %5668 = vmatpush1.bf16.msra.mxu0 %v4533
  %5669 = vmatprep.subr.bf16.mxu0 %v4538
  %5670 = vmatpush1.bf16.msra.mxu0 %v4537
  %5671 = vmatprep.subr.bf16.mxu0 %v4542
  %5672 = vmatpush1.bf16.msra.mxu0 %v4541
  %5673 = vmatprep.subr.bf16.mxu0 %v4546
  %5674 = vmatpush1.bf16.msra.mxu0 %v4545
  %5675 = vmatprep.subr.bf16.mxu0 %v4550
  %5676 = vmatpush1.bf16.msra.mxu0 %v4549
  %5677 = vmatprep.subr.bf16.mxu0 %v4554
  %5678 = vmatpush1.bf16.msra.mxu0 %v4553
  %5679 = vmatprep.mubr.bf16.mxu0 %v3574
  %5680 = vmatmul.mubr.bf16.gmra.mrb[0].mxu0 %v1038
  %v5681 = vpop.f32.mrb[0].mxu0
  %v5682 = vadd.f32 %v5600, %v5681
  %v5683 = vpop.f32.mrb[0].mxu0
  %v5684 = vadd.f32 %v5602, %v5683
  %v5685 = vpop.f32.mrb[0].mxu0
  %v5686 = vpop.f32.mrb[0].mxu0
  %5687 = vdwg.mxu0
  %v5688 = vadd.f32 %v5641, %v4706
  %v5689 = vadd.f32 %v5643, %v4710
  %v5690 = vadd.f32 %v5682, %v4714
  %v5691 = vadd.f32 %v5684, %v4718
  %v5692 = vxor.u32 %v5688, 2147483648
  %v5693 = vmul.f32 %v5692, 1.442695
  %v5694 = vpow.pop %v5693
  %v5695 = vadd.f32 %v5694, 1.0
  %v5696 = vrcp.pop %v5695
  %v5697 = vmul.f32 1.0, %v5696
  %v5698 = vxor.u32 %v5689, 2147483648
  %v5699 = vmul.f32 %v5698, 1.442695
  %v5700 = vpow.pop %v5699
  %v5701 = vadd.f32 %v5700, 1.0
  %v5702 = vrcp.pop %v5701
  %v5703 = vmul.f32 1.0, %v5702
  %v5704 = vtanh.pop %v5690
  %v5705 = vxor.u32 %v5691, 2147483648
  %v5706 = vmul.f32 %v5705, 1.442695
  %v5707 = vpow.pop %v5706
  %v5708 = vadd.f32 %v5707, 1.0
  %v5709 = vrcp.pop %v5708
  %v5710 = vmul.f32 1.0, %v5709
  %v5711 = vmul.f32 %v5703, %v5520
  %v5712 = vmul.f32 %v5697, %v5704
  %v5713 = vadd.f32 %v5711, %v5712
  %v5714 = vtanh.pop %v5713
  %v5715 = vmul.f32 %v5710, %v5714
  %v5716 = vpack.c.bf16 %v5715, %v5715
  %5717 = vmatprep.subr.bf16.mxu0 %v4154
  %5718 = vmatpush1.bf16.msra.mxu0 %v4153
  %5719 = vmatprep.subr.bf16.mxu0 %v4158
  %5720 = vmatpush1.bf16.msra.mxu0 %v4157
  %5721 = vmatprep.subr.bf16.mxu0 %v4162
  %5722 = vmatpush1.bf16.msra.mxu0 %v4161
  %5723 = vmatprep.subr.bf16.mxu0 %v4166
  %5724 = vmatpush1.bf16.msra.mxu0 %v4165
  %5725 = vmatprep.subr.bf16.mxu0 %v4170
  %5726 = vmatpush1.bf16.msra.mxu0 %v4169
  %5727 = vmatprep.subr.bf16.mxu0 %v4174
  %5728 = vmatpush1.bf16.msra.mxu0 %v4173
  %5729 = vmatprep.subr.bf16.mxu0 %v4178
  %5730 = vmatpush1.bf16.msra.mxu0 %v4177
  %5731 = vmatprep.subr.bf16.mxu0 %v4182
  %5732 = vmatpush1.bf16.msra.mxu0 %v4181
  %5733 = vmatprep.subr.bf16.mxu0 0
  %5734 = vmatpush1.bf16.msra.mxu0 0
  %5735 = vmatprep.subr.bf16.mxu0 0
  %5736 = vmatpush1.bf16.msra.mxu0 0
  %5737 = vmatprep.subr.bf16.mxu0 0
  %5738 = vmatpush1.bf16.msra.mxu0 0
  %5739 = vmatprep.subr.bf16.mxu0 0
  %5740 = vmatpush1.bf16.msra.mxu0 0
  %5741 = vmatprep.subr.bf16.mxu0 0
  %5742 = vmatpush1.bf16.msra.mxu0 0
  %5743 = vmatprep.subr.bf16.mxu0 0
  %5744 = vmatpush1.bf16.msra.mxu0 0
  %5745 = vmatprep.subr.bf16.mxu0 0
  %5746 = vmatpush1.bf16.msra.mxu0 0
  %5747 = vmatprep.subr.bf16.mxu0 0
  %5748 = vmatpush1.bf16.msra.mxu0 0
  %5749 = vmatprep.mubr.bf16.mxu0 0
  %5750 = vmatmul.mubr.bf16.gmra.mrb[0].mxu0 %v5716
  %v5751 = vpop.f32.mrb[0].mxu0
  %v5752 = vadd.f32 0.0, %v5751
  %v5753 = vpop.f32.mrb[0].mxu0
  %v5754 = vadd.f32 0.0, %v5753
  %v5755 = vpop.f32.mrb[0].mxu0
  %v5756 = vpop.f32.mrb[0].mxu0
  %5757 = vdwg.mxu0
  %5758 = vmatprep.subr.bf16.mxu0 %v4156
  %5759 = vmatpush1.bf16.msra.mxu0 %v4155
  %5760 = vmatprep.subr.bf16.mxu0 %v4160
  %5761 = vmatpush1.bf16.msra.mxu0 %v4159
  %5762 = vmatprep.subr.bf16.mxu0 %v4164
  %5763 = vmatpush1.bf16.msra.mxu0 %v4163
  %5764 = vmatprep.subr.bf16.mxu0 %v4168
  %5765 = vmatpush1.bf16.msra.mxu0 %v4167
  %5766 = vmatprep.subr.bf16.mxu0 %v4172
  %5767 = vmatpush1.bf16.msra.mxu0 %v4171
  %5768 = vmatprep.subr.bf16.mxu0 %v4176
  %5769 = vmatpush1.bf16.msra.mxu0 %v4175
  %5770 = vmatprep.subr.bf16.mxu0 %v4180
  %5771 = vmatpush1.bf16.msra.mxu0 %v4179
  %5772 = vmatprep.subr.bf16.mxu0 %v4184
  %5773 = vmatpush1.bf16.msra.mxu0 %v4183
  %5774 = vmatprep.subr.bf16.mxu0 0
  %5775 = vmatpush1.bf16.msra.mxu0 0
  %5776 = vmatprep.subr.bf16.mxu0 0
  %5777 = vmatpush1.bf16.msra.mxu0 0
  %5778 = vmatprep.subr.bf16.mxu0 0
  %5779 = vmatpush1.bf16.msra.mxu0 0
  %5780 = vmatprep.subr.bf16.mxu0 0
  %5781 = vmatpush1.bf16.msra.mxu0 0
  %5782 = vmatprep.subr.bf16.mxu0 0
  %5783 = vmatpush1.bf16.msra.mxu0 0
  %5784 = vmatprep.subr.bf16.mxu0 0
  %5785 = vmatpush1.bf16.msra.mxu0 0
  %5786 = vmatprep.subr.bf16.mxu0 0
  %5787 = vmatpush1.bf16.msra.mxu0 0
  %5788 = vmatprep.subr.bf16.mxu0 0
  %5789 = vmatpush1.bf16.msra.mxu0 0
  %5790 = vmatprep.mubr.bf16.mxu0 0
  %5791 = vmatmul.mubr.bf16.gmra.mrb[0].mxu0 %v5716
  %v5792 = vpop.f32.mrb[0].mxu0
  %v5793 = vadd.f32 0.0, %v5792
  %v5794 = vpop.f32.mrb[0].mxu0
  %v5795 = vadd.f32 0.0, %v5794
  %v5796 = vpop.f32.mrb[0].mxu0
  %v5797 = vpop.f32.mrb[0].mxu0
  %5798 = vdwg.mxu0
  %5799 = vmatprep.subr.bf16.mxu0 %v4492
  %5800 = vmatpush1.bf16.msra.mxu0 %v4491
  %5801 = vmatprep.subr.bf16.mxu0 %v4496
  %5802 = vmatpush1.bf16.msra.mxu0 %v4495
  %5803 = vmatprep.subr.bf16.mxu0 %v4500
  %5804 = vmatpush1.bf16.msra.mxu0 %v4499
  %5805 = vmatprep.subr.bf16.mxu0 %v4504
  %5806 = vmatpush1.bf16.msra.mxu0 %v4503
  %5807 = vmatprep.subr.bf16.mxu0 %v4508
  %5808 = vmatpush1.bf16.msra.mxu0 %v4507
  %5809 = vmatprep.subr.bf16.mxu0 %v4512
  %5810 = vmatpush1.bf16.msra.mxu0 %v4511
  %5811 = vmatprep.subr.bf16.mxu0 %v4516
  %5812 = vmatpush1.bf16.msra.mxu0 %v4515
  %5813 = vmatprep.subr.bf16.mxu0 %v4520
  %5814 = vmatpush1.bf16.msra.mxu0 %v4519
  %5815 = vmatprep.subr.bf16.mxu0 %v4524
  %5816 = vmatpush1.bf16.msra.mxu0 %v4523
  %5817 = vmatprep.subr.bf16.mxu0 %v4528
  %5818 = vmatpush1.bf16.msra.mxu0 %v4527
  %5819 = vmatprep.subr.bf16.mxu0 %v4532
  %5820 = vmatpush1.bf16.msra.mxu0 %v4531
  %5821 = vmatprep.subr.bf16.mxu0 %v4536
  %5822 = vmatpush1.bf16.msra.mxu0 %v4535
  %5823 = vmatprep.subr.bf16.mxu0 %v4540
  %5824 = vmatpush1.bf16.msra.mxu0 %v4539
  %5825 = vmatprep.subr.bf16.mxu0 %v4544
  %5826 = vmatpush1.bf16.msra.mxu0 %v4543
  %5827 = vmatprep.subr.bf16.mxu0 %v4548
  %5828 = vmatpush1.bf16.msra.mxu0 %v4547
  %5829 = vmatprep.subr.bf16.mxu0 %v4552
  %5830 = vmatpush1.bf16.msra.mxu0 %v4551
  %5831 = vmatprep.mubr.bf16.mxu0 %v3767
  %5832 = vmatmul.mubr.bf16.gmra.mrb[0].mxu0 %v843
  %v5833 = vpop.f32.mrb[0].mxu0
  %v5834 = vadd.f32 %v5752, %v5833
  %v5835 = vpop.f32.mrb[0].mxu0
  %v5836 = vadd.f32 %v5754, %v5835
  %v5837 = vpop.f32.mrb[0].mxu0
  %v5838 = vpop.f32.mrb[0].mxu0
  %5839 = vdwg.mxu0
  %5840 = vmatprep.subr.bf16.mxu0 %v4494
  %5841 = vmatpush1.bf16.msra.mxu0 %v4493
  %5842 = vmatprep.subr.bf16.mxu0 %v4498
  %5843 = vmatpush1.bf16.msra.mxu0 %v4497
  %5844 = vmatprep.subr.bf16.mxu0 %v4502
  %5845 = vmatpush1.bf16.msra.mxu0 %v4501
  %5846 = vmatprep.subr.bf16.mxu0 %v4506
  %5847 = vmatpush1.bf16.msra.mxu0 %v4505
  %5848 = vmatprep.subr.bf16.mxu0 %v4510
  %5849 = vmatpush1.bf16.msra.mxu0 %v4509
  %5850 = vmatprep.subr.bf16.mxu0 %v4514
  %5851 = vmatpush1.bf16.msra.mxu0 %v4513
  %5852 = vmatprep.subr.bf16.mxu0 %v4518
  %5853 = vmatpush1.bf16.msra.mxu0 %v4517
  %5854 = vmatprep.subr.bf16.mxu0 %v4522
  %5855 = vmatpush1.bf16.msra.mxu0 %v4521
  %5856 = vmatprep.subr.bf16.mxu0 %v4526
  %5857 = vmatpush1.bf16.msra.mxu0 %v4525
  %5858 = vmatprep.subr.bf16.mxu0 %v4530
  %5859 = vmatpush1.bf16.msra.mxu0 %v4529
  %5860 = vmatprep.subr.bf16.mxu0 %v4534
  %5861 = vmatpush1.bf16.msra.mxu0 %v4533
  %5862 = vmatprep.subr.bf16.mxu0 %v4538
  %5863 = vmatpush1.bf16.msra.mxu0 %v4537
  %5864 = vmatprep.subr.bf16.mxu0 %v4542
  %5865 = vmatpush1.bf16.msra.mxu0 %v4541
  %5866 = vmatprep.subr.bf16.mxu0 %v4546
  %5867 = vmatpush1.bf16.msra.mxu0 %v4545
  %5868 = vmatprep.subr.bf16.mxu0 %v4550
  %5869 = vmatpush1.bf16.msra.mxu0 %v4549
  %5870 = vmatprep.subr.bf16.mxu0 %v4554
  %5871 = vmatpush1.bf16.msra.mxu0 %v4553
  %5872 = vmatprep.mubr.bf16.mxu0 %v3767
  %5873 = vmatmul.mubr.bf16.gmra.mrb[0].mxu0 %v843
  %v5874 = vpop.f32.mrb[0].mxu0
  %v5875 = vadd.f32 %v5793, %v5874
  %v5876 = vpop.f32.mrb[0].mxu0
  %v5877 = vadd.f32 %v5795, %v5876
  %v5878 = vpop.f32.mrb[0].mxu0
  %v5879 = vpop.f32.mrb[0].mxu0
  %5880 = vdwg.mxu0
  %v5881 = vadd.f32 %v5834, %v4706
  %v5882 = vadd.f32 %v5836, %v4710
  %v5883 = vadd.f32 %v5875, %v4714
  %v5884 = vadd.f32 %v5877, %v4718
  %v5885 = vxor.u32 %v5881, 2147483648
  %v5886 = vmul.f32 %v5885, 1.442695
  %v5887 = vpow.pop %v5886
  %v5888 = vadd.f32 %v5887, 1.0
  %v5889 = vrcp.pop %v5888
  %v5890 = vmul.f32 1.0, %v5889
  %v5891 = vxor.u32 %v5882, 2147483648
  %v5892 = vmul.f32 %v5891, 1.442695
  %v5893 = vpow.pop %v5892
  %v5894 = vadd.f32 %v5893, 1.0
  %v5895 = vrcp.pop %v5894
  %v5896 = vmul.f32 1.0, %v5895
  %v5897 = vtanh.pop %v5883
  %v5898 = vxor.u32 %v5884, 2147483648
  %v5899 = vmul.f32 %v5898, 1.442695
  %v5900 = vpow.pop %v5899
  %v5901 = vadd.f32 %v5900, 1.0
  %v5902 = vrcp.pop %v5901
  %v5903 = vmul.f32 1.0, %v5902
  %v5904 = vmul.f32 %v5896, %v5713
  %v5905 = vmul.f32 %v5890, %v5897
  %v5906 = vadd.f32 %v5904, %v5905
  %v5907 = vtanh.pop %v5906
  %v5908 = vmul.f32 %v5903, %v5907
  %v5909 = vpack.c.bf16 %v3959, %v3959
  %v5910 = vpack.c.bf16 %v5908, %v5908
  %5911 = vmatprep.subr.bf16.mxu0 %v4154
  %5912 = vmatpush1.bf16.msra.mxu0 %v4153
  %5913 = vmatprep.subr.bf16.mxu0 %v4158
  %5914 = vmatpush1.bf16.msra.mxu0 %v4157
  %5915 = vmatprep.subr.bf16.mxu0 %v4162
  %5916 = vmatpush1.bf16.msra.mxu0 %v4161
  %5917 = vmatprep.subr.bf16.mxu0 %v4166
  %5918 = vmatpush1.bf16.msra.mxu0 %v4165
  %5919 = vmatprep.subr.bf16.mxu0 %v4170
  %5920 = vmatpush1.bf16.msra.mxu0 %v4169
  %5921 = vmatprep.subr.bf16.mxu0 %v4174
  %5922 = vmatpush1.bf16.msra.mxu0 %v4173
  %5923 = vmatprep.subr.bf16.mxu0 %v4178
  %5924 = vmatpush1.bf16.msra.mxu0 %v4177
  %5925 = vmatprep.subr.bf16.mxu0 %v4182
  %5926 = vmatpush1.bf16.msra.mxu0 %v4181
  %5927 = vmatprep.subr.bf16.mxu0 0
  %5928 = vmatpush1.bf16.msra.mxu0 0
  %5929 = vmatprep.subr.bf16.mxu0 0
  %5930 = vmatpush1.bf16.msra.mxu0 0
  %5931 = vmatprep.subr.bf16.mxu0 0
  %5932 = vmatpush1.bf16.msra.mxu0 0
  %5933 = vmatprep.subr.bf16.mxu0 0
  %5934 = vmatpush1.bf16.msra.mxu0 0
  %5935 = vmatprep.subr.bf16.mxu0 0
  %5936 = vmatpush1.bf16.msra.mxu0 0
  %5937 = vmatprep.subr.bf16.mxu0 0
  %5938 = vmatpush1.bf16.msra.mxu0 0
  %5939 = vmatprep.subr.bf16.mxu0 0
  %5940 = vmatpush1.bf16.msra.mxu0 0
  %5941 = vmatprep.subr.bf16.mxu0 0
  %5942 = vmatpush1.bf16.msra.mxu0 0
  %5943 = vmatprep.mubr.bf16.mxu0 0
  %5944 = vmatmul.mubr.bf16.gmra.mrb[0].mxu0 %v5910
  %v5945 = vpop.f32.mrb[0].mxu0
  %v5946 = vadd.f32 0.0, %v5945
  %v5947 = vpop.f32.mrb[0].mxu0
  %v5948 = vadd.f32 0.0, %v5947
  %v5949 = vpop.f32.mrb[0].mxu0
  %v5950 = vpop.f32.mrb[0].mxu0
  %5951 = vdwg.mxu0
  %5952 = vmatprep.subr.bf16.mxu0 %v4156
  %5953 = vmatpush1.bf16.msra.mxu0 %v4155
  %5954 = vmatprep.subr.bf16.mxu0 %v4160
  %5955 = vmatpush1.bf16.msra.mxu0 %v4159
  %5956 = vmatprep.subr.bf16.mxu0 %v4164
  %5957 = vmatpush1.bf16.msra.mxu0 %v4163
  %5958 = vmatprep.subr.bf16.mxu0 %v4168
  %5959 = vmatpush1.bf16.msra.mxu0 %v4167
  %5960 = vmatprep.subr.bf16.mxu0 %v4172
  %5961 = vmatpush1.bf16.msra.mxu0 %v4171
  %5962 = vmatprep.subr.bf16.mxu0 %v4176
  %5963 = vmatpush1.bf16.msra.mxu0 %v4175
  %5964 = vmatprep.subr.bf16.mxu0 %v4180
  %5965 = vmatpush1.bf16.msra.mxu0 %v4179
  %5966 = vmatprep.subr.bf16.mxu0 %v4184
  %5967 = vmatpush1.bf16.msra.mxu0 %v4183
  %5968 = vmatprep.subr.bf16.mxu0 0
  %5969 = vmatpush1.bf16.msra.mxu0 0
  %5970 = vmatprep.subr.bf16.mxu0 0
  %5971 = vmatpush1.bf16.msra.mxu0 0
  %5972 = vmatprep.subr.bf16.mxu0 0
  %5973 = vmatpush1.bf16.msra.mxu0 0
  %5974 = vmatprep.subr.bf16.mxu0 0
  %5975 = vmatpush1.bf16.msra.mxu0 0
  %5976 = vmatprep.subr.bf16.mxu0 0
  %5977 = vmatpush1.bf16.msra.mxu0 0
  %5978 = vmatprep.subr.bf16.mxu0 0
  %5979 = vmatpush1.bf16.msra.mxu0 0
  %5980 = vmatprep.subr.bf16.mxu0 0
  %5981 = vmatpush1.bf16.msra.mxu0 0
  %5982 = vmatprep.subr.bf16.mxu0 0
  %5983 = vmatpush1.bf16.msra.mxu0 0
  %5984 = vmatprep.mubr.bf16.mxu0 0
  %5985 = vmatmul.mubr.bf16.gmra.mrb[0].mxu0 %v5910
  %v5986 = vpop.f32.mrb[0].mxu0
  %v5987 = vadd.f32 0.0, %v5986
  %v5988 = vpop.f32.mrb[0].mxu0
  %v5989 = vadd.f32 0.0, %v5988
  %v5990 = vpop.f32.mrb[0].mxu0
  %v5991 = vpop.f32.mrb[0].mxu0
  %5992 = vdwg.mxu0
  %5993 = vmatprep.subr.bf16.mxu0 %v4492
  %5994 = vmatpush1.bf16.msra.mxu0 %v4491
  %5995 = vmatprep.subr.bf16.mxu0 %v4496
  %5996 = vmatpush1.bf16.msra.mxu0 %v4495
  %5997 = vmatprep.subr.bf16.mxu0 %v4500
  %5998 = vmatpush1.bf16.msra.mxu0 %v4499
  %5999 = vmatprep.subr.bf16.mxu0 %v4504
  %6000 = vmatpush1.bf16.msra.mxu0 %v4503
  %6001 = vmatprep.subr.bf16.mxu0 %v4508
  %6002 = vmatpush1.bf16.msra.mxu0 %v4507
  %6003 = vmatprep.subr.bf16.mxu0 %v4512
  %6004 = vmatpush1.bf16.msra.mxu0 %v4511
  %6005 = vmatprep.subr.bf16.mxu0 %v4516
  %6006 = vmatpush1.bf16.msra.mxu0 %v4515
  %6007 = vmatprep.subr.bf16.mxu0 %v4520
  %6008 = vmatpush1.bf16.msra.mxu0 %v4519
  %6009 = vmatprep.subr.bf16.mxu0 %v4524
  %6010 = vmatpush1.bf16.msra.mxu0 %v4523
  %6011 = vmatprep.subr.bf16.mxu0 %v4528
  %6012 = vmatpush1.bf16.msra.mxu0 %v4527
  %6013 = vmatprep.subr.bf16.mxu0 %v4532
  %6014 = vmatpush1.bf16.msra.mxu0 %v4531
  %6015 = vmatprep.subr.bf16.mxu0 %v4536
  %6016 = vmatpush1.bf16.msra.mxu0 %v4535
  %6017 = vmatprep.subr.bf16.mxu0 %v4540
  %6018 = vmatpush1.bf16.msra.mxu0 %v4539
  %6019 = vmatprep.subr.bf16.mxu0 %v4544
  %6020 = vmatpush1.bf16.msra.mxu0 %v4543
  %6021 = vmatprep.subr.bf16.mxu0 %v4548
  %6022 = vmatpush1.bf16.msra.mxu0 %v4547
  %6023 = vmatprep.subr.bf16.mxu0 %v4552
  %6024 = vmatpush1.bf16.msra.mxu0 %v4551
  %6025 = vmatprep.mubr.bf16.mxu0 %v5909
  %6026 = vmatmul.mubr.bf16.gmra.mrb[0].mxu0 %v648
  %v6027 = vpop.f32.mrb[0].mxu0
  %v6028 = vadd.f32 %v5946, %v6027
  %v6029 = vpop.f32.mrb[0].mxu0
  %v6030 = vadd.f32 %v5948, %v6029
  %v6031 = vpop.f32.mrb[0].mxu0
  %v6032 = vpop.f32.mrb[0].mxu0
  %6033 = vdwg.mxu0
  %6034 = vmatprep.subr.bf16.mxu0 %v4494
  %6035 = vmatpush1.bf16.msra.mxu0 %v4493
  %6036 = vmatprep.subr.bf16.mxu0 %v4498
  %6037 = vmatpush1.bf16.msra.mxu0 %v4497
  %6038 = vmatprep.subr.bf16.mxu0 %v4502
  %6039 = vmatpush1.bf16.msra.mxu0 %v4501
  %6040 = vmatprep.subr.bf16.mxu0 %v4506
  %6041 = vmatpush1.bf16.msra.mxu0 %v4505
  %6042 = vmatprep.subr.bf16.mxu0 %v4510
  %6043 = vmatpush1.bf16.msra.mxu0 %v4509
  %6044 = vmatprep.subr.bf16.mxu0 %v4514
  %6045 = vmatpush1.bf16.msra.mxu0 %v4513
  %6046 = vmatprep.subr.bf16.mxu0 %v4518
  %6047 = vmatpush1.bf16.msra.mxu0 %v4517
  %6048 = vmatprep.subr.bf16.mxu0 %v4522
  %6049 = vmatpush1.bf16.msra.mxu0 %v4521
  %6050 = vmatprep.subr.bf16.mxu0 %v4526
  %6051 = vmatpush1.bf16.msra.mxu0 %v4525
  %6052 = vmatprep.subr.bf16.mxu0 %v4530
  %6053 = vmatpush1.bf16.msra.mxu0 %v4529
  %6054 = vmatprep.subr.bf16.mxu0 %v4534
  %6055 = vmatpush1.bf16.msra.mxu0 %v4533
  %6056 = vmatprep.subr.bf16.mxu0 %v4538
  %6057 = vmatpush1.bf16.msra.mxu0 %v4537
  %6058 = vmatprep.subr.bf16.mxu0 %v4542
  %6059 = vmatpush1.bf16.msra.mxu0 %v4541
  %6060 = vmatprep.subr.bf16.mxu0 %v4546
  %6061 = vmatpush1.bf16.msra.mxu0 %v4545
  %6062 = vmatprep.subr.bf16.mxu0 %v4550
  %6063 = vmatpush1.bf16.msra.mxu0 %v4549
  %6064 = vmatprep.subr.bf16.mxu0 %v4554
  %6065 = vmatpush1.bf16.msra.mxu0 %v4553
  %6066 = vmatprep.mubr.bf16.mxu0 %v5909
  %6067 = vmatmul.mubr.bf16.gmra.mrb[0].mxu0 %v648
  %v6068 = vpop.f32.mrb[0].mxu0
  %v6069 = vadd.f32 %v5987, %v6068
  %v6070 = vpop.f32.mrb[0].mxu0
  %v6071 = vadd.f32 %v5989, %v6070
  %v6072 = vpop.f32.mrb[0].mxu0
  %v6073 = vpop.f32.mrb[0].mxu0
  %6074 = vdwg.mxu0
  %v6075 = vadd.f32 %v6028, %v4706
  %v6076 = vadd.f32 %v6030, %v4710
  %v6077 = vadd.f32 %v6069, %v4714
  %v6078 = vadd.f32 %v6071, %v4718
  %v6079 = vxor.u32 %v6075, 2147483648
  %v6080 = vmul.f32 %v6079, 1.442695
  %v6081 = vpow.pop %v6080
  %v6082 = vadd.f32 %v6081, 1.0
  %v6083 = vrcp.pop %v6082
  %v6084 = vmul.f32 1.0, %v6083
  %v6085 = vxor.u32 %v6076, 2147483648
  %v6086 = vmul.f32 %v6085, 1.442695
  %v6087 = vpow.pop %v6086
  %v6088 = vadd.f32 %v6087, 1.0
  %v6089 = vrcp.pop %v6088
  %v6090 = vmul.f32 1.0, %v6089
  %v6091 = vtanh.pop %v6077
  %v6092 = vxor.u32 %v6078, 2147483648
  %v6093 = vmul.f32 %v6092, 1.442695
  %v6094 = vpow.pop %v6093
  %v6095 = vadd.f32 %v6094, 1.0
  %v6096 = vrcp.pop %v6095
  %v6097 = vmul.f32 1.0, %v6096
  %v6098 = vmul.f32 %v6090, %v5906
  %v6099 = vmul.f32 %v6084, %v6091
  %v6100 = vadd.f32 %v6098, %v6099
  %v6101 = vtanh.pop %v6100
  %v6102 = vmul.f32 %v6097, %v6101
  %6103 = vst [vmem:[%s14] sm:$0xff] %v6102
  %v6104 = vlaneseq
  %v6105 = vand.u32 %v6104, 127
  %v6106 = vpack.c.bf16 %v6102, %v6102
  %v6107 = vld [vmem:[%s11] sm:$0xff]
  %v6108 = vld [vmem:[%s11 + $0x8] sm:$0xff]
  %v6109 = vld [vmem:[%s11 + $0x10] sm:$0xf]
  %v6110 = vld [vmem:[%s11 + $0x14] sm:$0xff]
  %v6111 = vld [vmem:[%s11 + $0x1c] sm:$0xff]
  %v6112 = vld [vmem:[%s11 + $0x24] sm:$0xf]
  %v6113 = vld [vmem:[%s11 + $0x28] sm:$0xff]
  %v6114 = vld [vmem:[%s11 + $0x30] sm:$0xff]
  %v6115 = vld [vmem:[%s11 + $0x38] sm:$0xf]
  %v6116 = vld [vmem:[%s11 + $0x3c] sm:$0xff]
  %v6117 = vld [vmem:[%s11 + $0x44] sm:$0xff]
  %v6118 = vld [vmem:[%s11 + $0x4c] sm:$0xf]
  %v6119 = vld [vmem:[%s11 + $0x50] sm:$0xff]
  %v6120 = vld [vmem:[%s11 + $0x58] sm:$0xff]
  %v6121 = vld [vmem:[%s11 + $0x60] sm:$0xf]
  %v6122 = vld [vmem:[%s11 + $0x64] sm:$0xff]
  %v6123 = vld [vmem:[%s11 + $0x6c] sm:$0xff]
  %v6124 = vld [vmem:[%s11 + $0x74] sm:$0xf]
  %v6125 = vld [vmem:[%s11 + $0x78] sm:$0xff]
  %v6126 = vld [vmem:[%s11 + $0x80] sm:$0xff]
  %v6127 = vld [vmem:[%s11 + $0x88] sm:$0xf]
  %v6128 = vld [vmem:[%s11 + $0x8c] sm:$0xff]
  %v6129 = vld [vmem:[%s11 + $0x94] sm:$0xff]
  %v6130 = vld [vmem:[%s11 + $0x9c] sm:$0xf]
  %v6131 = vld [vmem:[%s11 + $0xa0] sm:$0xff]
  %v6132 = vld [vmem:[%s11 + $0xa8] sm:$0xff]
  %v6133 = vld [vmem:[%s11 + $0xb0] sm:$0xf]
  %v6134 = vld [vmem:[%s11 + $0xb4] sm:$0xff]
  %v6135 = vld [vmem:[%s11 + $0xbc] sm:$0xff]
  %v6136 = vld [vmem:[%s11 + $0xc4] sm:$0xf]
  %v6137 = vld [vmem:[%s11 + $0xc8] sm:$0xff]
  %v6138 = vld [vmem:[%s11 + $0xd0] sm:$0xff]
  %v6139 = vld [vmem:[%s11 + $0xd8] sm:$0xf]
  %v6140 = vld [vmem:[%s11 + $0xdc] sm:$0xff]
  %v6141 = vld [vmem:[%s11 + $0xe4] sm:$0xff]
  %v6142 = vld [vmem:[%s11 + $0xec] sm:$0xf]
  %v6143 = vld [vmem:[%s11 + $0xf0] sm:$0xff]
  %v6144 = vld [vmem:[%s11 + $0xf8] sm:$0xff]
  %v6145 = vld [vmem:[%s11 + $0x100] sm:$0xf]
  %v6146 = vld [vmem:[%s11 + $0x104] sm:$0xff]
  %v6147 = vld [vmem:[%s11 + $0x10c] sm:$0xff]
  %v6148 = vld [vmem:[%s11 + $0x114] sm:$0xf]
  %v6149 = vld [vmem:[%s11 + $0x118] sm:$0xff]
  %v6150 = vld [vmem:[%s11 + $0x120] sm:$0xff]
  %v6151 = vld [vmem:[%s11 + $0x128] sm:$0xf]
  %v6152 = vld [vmem:[%s11 + $0x12c] sm:$0xff]
  %v6153 = vld [vmem:[%s11 + $0x134] sm:$0xff]
  %v6154 = vld [vmem:[%s11 + $0x13c] sm:$0xf]
  %v6155 = vld [vmem:[%s12] sm:$0x1f]
  %v6157 = vlaneseq
  %v6158 = vshrl.u32 %v6157, 7
  %v6159 = vsub.s32 0, %v6158
  %v6160 = vrot.slane %v6155, %v6159
  %v6161 = vlaneseq
  %v6162 = vshrl.u32 %v6161, 7
  %v6163 = vsub.s32 1, %v6162
  %v6164 = vrot.slane %v6155, %v6163
  %v6165 = vlaneseq
  %v6166 = vshrl.u32 %v6165, 7
  %v6167 = vsub.s32 2, %v6166
  %v6168 = vrot.slane %v6155, %v6167
  %v6169 = vlaneseq
  %v6170 = vshrl.u32 %v6169, 7
  %v6171 = vsub.s32 3, %v6170
  %v6172 = vrot.slane %v6155, %v6171
  %v6173 = vlaneseq
  %v6174 = vshrl.u32 %v6173, 7
  %v6175 = vsub.s32 4, %v6174
  %v6176 = vrot.slane %v6155, %v6175
  %v6214 = vunpack.c.l.b16 %v6107
  %v6215 = vunpack.c.h.b16 %v6107
  %v6216 = vunpack.c.l.b16 %v6108
  %v6217 = vunpack.c.h.b16 %v6108
  %v6218 = vunpack.c.l.b16 %v6110
  %v6219 = vunpack.c.h.b16 %v6110
  %v6220 = vunpack.c.l.b16 %v6111
  %v6221 = vunpack.c.h.b16 %v6111
  %v6222 = vunpack.c.l.b16 %v6113
  %v6223 = vunpack.c.h.b16 %v6113
  %v6224 = vunpack.c.l.b16 %v6114
  %v6225 = vunpack.c.h.b16 %v6114
  %v6226 = vunpack.c.l.b16 %v6116
  %v6227 = vunpack.c.h.b16 %v6116
  %v6228 = vunpack.c.l.b16 %v6117
  %v6229 = vunpack.c.h.b16 %v6117
  %v6230 = vunpack.c.l.b16 %v6119
  %v6231 = vunpack.c.h.b16 %v6119
  %v6232 = vunpack.c.l.b16 %v6120
  %v6233 = vunpack.c.h.b16 %v6120
  %v6234 = vunpack.c.l.b16 %v6122
  %v6235 = vunpack.c.h.b16 %v6122
  %v6236 = vunpack.c.l.b16 %v6123
  %v6237 = vunpack.c.h.b16 %v6123
  %v6238 = vunpack.c.l.b16 %v6125
  %v6239 = vunpack.c.h.b16 %v6125
  %v6240 = vunpack.c.l.b16 %v6126
  %v6241 = vunpack.c.h.b16 %v6126
  %v6242 = vunpack.c.l.b16 %v6128
  %v6243 = vunpack.c.h.b16 %v6128
  %v6244 = vunpack.c.l.b16 %v6129
  %v6245 = vunpack.c.h.b16 %v6129
  %v6246 = vunpack.c.l.b16 %v6131
  %v6247 = vunpack.c.h.b16 %v6131
  %v6248 = vunpack.c.l.b16 %v6132
  %v6249 = vunpack.c.h.b16 %v6132
  %v6250 = vunpack.c.l.b16 %v6134
  %v6251 = vunpack.c.h.b16 %v6134
  %v6252 = vunpack.c.l.b16 %v6135
  %v6253 = vunpack.c.h.b16 %v6135
  %v6254 = vunpack.c.l.b16 %v6137
  %v6255 = vunpack.c.h.b16 %v6137
  %v6256 = vunpack.c.l.b16 %v6138
  %v6257 = vunpack.c.h.b16 %v6138
  %v6258 = vunpack.c.l.b16 %v6140
  %v6259 = vunpack.c.h.b16 %v6140
  %v6260 = vunpack.c.l.b16 %v6141
  %v6261 = vunpack.c.h.b16 %v6141
  %v6262 = vunpack.c.l.b16 %v6143
  %v6263 = vunpack.c.h.b16 %v6143
  %v6264 = vunpack.c.l.b16 %v6144
  %v6265 = vunpack.c.h.b16 %v6144
  %v6266 = vunpack.c.l.b16 %v6146
  %v6267 = vunpack.c.h.b16 %v6146
  %v6268 = vunpack.c.l.b16 %v6147
  %v6269 = vunpack.c.h.b16 %v6147
  %v6270 = vunpack.c.l.b16 %v6149
  %v6271 = vunpack.c.h.b16 %v6149
  %v6272 = vunpack.c.l.b16 %v6150
  %v6273 = vunpack.c.h.b16 %v6150
  %v6274 = vunpack.c.l.b16 %v6152
  %v6275 = vunpack.c.h.b16 %v6152
  %v6276 = vunpack.c.l.b16 %v6153
  %v6277 = vunpack.c.h.b16 %v6153
  %v6278 = vpack.c.b16 %v6218, %v6214
  %v6279 = vpack.c.b16 %v6219, %v6215
  %v6280 = vpack.c.b16 %v6220, %v6216
  %v6281 = vpack.c.b16 %v6221, %v6217
  %v6282 = vpack.c.b16 %v6226, %v6222
  %v6283 = vpack.c.b16 %v6227, %v6223
  %v6284 = vpack.c.b16 %v6228, %v6224
  %v6285 = vpack.c.b16 %v6229, %v6225
  %v6286 = vpack.c.b16 %v6234, %v6230
  %v6287 = vpack.c.b16 %v6235, %v6231
  %v6288 = vpack.c.b16 %v6236, %v6232
  %v6289 = vpack.c.b16 %v6237, %v6233
  %v6290 = vpack.c.b16 %v6242, %v6238
  %v6291 = vpack.c.b16 %v6243, %v6239
  %v6292 = vpack.c.b16 %v6244, %v6240
  %v6293 = vpack.c.b16 %v6245, %v6241
  %v6294 = vpack.c.b16 %v6250, %v6246
  %v6295 = vpack.c.b16 %v6251, %v6247
  %v6296 = vpack.c.b16 %v6252, %v6248
  %v6297 = vpack.c.b16 %v6253, %v6249
  %v6298 = vpack.c.b16 %v6258, %v6254
  %v6299 = vpack.c.b16 %v6259, %v6255
  %v6300 = vpack.c.b16 %v6260, %v6256
  %v6301 = vpack.c.b16 %v6261, %v6257
  %v6302 = vpack.c.b16 %v6266, %v6262
  %v6303 = vpack.c.b16 %v6267, %v6263
  %v6304 = vpack.c.b16 %v6268, %v6264
  %v6305 = vpack.c.b16 %v6269, %v6265
  %v6306 = vpack.c.b16 %v6274, %v6270
  %v6307 = vpack.c.b16 %v6275, %v6271
  %v6308 = vpack.c.b16 %v6276, %v6272
  %v6309 = vpack.c.b16 %v6277, %v6273
  %6342 = vmatprep.subr.bf16.mxu0 %v6279
  %6343 = vmatpush1.bf16.msra.mxu0 %v6278
  %6344 = vmatprep.subr.bf16.mxu0 %v6283
  %6345 = vmatpush1.bf16.msra.mxu0 %v6282
  %6346 = vmatprep.subr.bf16.mxu0 %v6287
  %6347 = vmatpush1.bf16.msra.mxu0 %v6286
  %6348 = vmatprep.subr.bf16.mxu0 %v6291
  %6349 = vmatpush1.bf16.msra.mxu0 %v6290
  %6350 = vmatprep.subr.bf16.mxu0 %v6295
  %6351 = vmatpush1.bf16.msra.mxu0 %v6294
  %6352 = vmatprep.subr.bf16.mxu0 %v6299
  %6353 = vmatpush1.bf16.msra.mxu0 %v6298
  %6354 = vmatprep.subr.bf16.mxu0 %v6303
  %6355 = vmatpush1.bf16.msra.mxu0 %v6302
  %6356 = vmatprep.subr.bf16.mxu0 %v6307
  %6357 = vmatpush1.bf16.msra.mxu0 %v6306
  %6358 = vmatprep.subr.bf16.mxu0 0
  %6359 = vmatpush1.bf16.msra.mxu0 0
  %6360 = vmatprep.subr.bf16.mxu0 0
  %6361 = vmatpush1.bf16.msra.mxu0 0
  %6362 = vmatprep.subr.bf16.mxu0 0
  %6363 = vmatpush1.bf16.msra.mxu0 0
  %6364 = vmatprep.subr.bf16.mxu0 0
  %6365 = vmatpush1.bf16.msra.mxu0 0
  %6366 = vmatprep.subr.bf16.mxu0 0
  %6367 = vmatpush1.bf16.msra.mxu0 0
  %6368 = vmatprep.subr.bf16.mxu0 0
  %6369 = vmatpush1.bf16.msra.mxu0 0
  %6370 = vmatprep.subr.bf16.mxu0 0
  %6371 = vmatpush1.bf16.msra.mxu0 0
  %6372 = vmatprep.subr.bf16.mxu0 0
  %6373 = vmatpush1.bf16.msra.mxu0 0
  %6374 = vmatprep.mubr.bf16.mxu0 0
  %6375 = vmatmul.mubr.bf16.gmra.mrb[0].mxu0 %v6106
  %v6376 = vpop.f32.mrb[0].mxu0
  %v6377 = vadd.f32 %v6160, %v6376
  %v6378 = vpop.f32.mrb[0].mxu0
  %v6379 = vadd.f32 %v6164, %v6378
  %v6380 = vpop.f32.mrb[0].mxu0
  %v6381 = vpop.f32.mrb[0].mxu0
  %6382 = vdwg.mxu0
  %6383 = vmatprep.subr.bf16.mxu0 %v6281
  %6384 = vmatpush1.bf16.msra.mxu0 %v6280
  %6385 = vmatprep.subr.bf16.mxu0 %v6285
  %6386 = vmatpush1.bf16.msra.mxu0 %v6284
  %6387 = vmatprep.subr.bf16.mxu0 %v6289
  %6388 = vmatpush1.bf16.msra.mxu0 %v6288
  %6389 = vmatprep.subr.bf16.mxu0 %v6293
  %6390 = vmatpush1.bf16.msra.mxu0 %v6292
  %6391 = vmatprep.subr.bf16.mxu0 %v6297
  %6392 = vmatpush1.bf16.msra.mxu0 %v6296
  %6393 = vmatprep.subr.bf16.mxu0 %v6301
  %6394 = vmatpush1.bf16.msra.mxu0 %v6300
  %6395 = vmatprep.subr.bf16.mxu0 %v6305
  %6396 = vmatpush1.bf16.msra.mxu0 %v6304
  %6397 = vmatprep.subr.bf16.mxu0 %v6309
  %6398 = vmatpush1.bf16.msra.mxu0 %v6308
  %6399 = vmatprep.subr.bf16.mxu0 0
  %6400 = vmatpush1.bf16.msra.mxu0 0
  %6401 = vmatprep.subr.bf16.mxu0 0
  %6402 = vmatpush1.bf16.msra.mxu0 0
  %6403 = vmatprep.subr.bf16.mxu0 0
  %6404 = vmatpush1.bf16.msra.mxu0 0
  %6405 = vmatprep.subr.bf16.mxu0 0
  %6406 = vmatpush1.bf16.msra.mxu0 0
  %6407 = vmatprep.subr.bf16.mxu0 0
  %6408 = vmatpush1.bf16.msra.mxu0 0
  %6409 = vmatprep.subr.bf16.mxu0 0
  %6410 = vmatpush1.bf16.msra.mxu0 0
  %6411 = vmatprep.subr.bf16.mxu0 0
  %6412 = vmatpush1.bf16.msra.mxu0 0
  %6413 = vmatprep.subr.bf16.mxu0 0
  %6414 = vmatpush1.bf16.msra.mxu0 0
  %6415 = vmatprep.mubr.bf16.mxu0 0
  %6416 = vmatmul.mubr.bf16.gmra.mrb[0].mxu0 %v6106
  %v6417 = vpop.f32.mrb[0].mxu0
  %v6418 = vadd.f32 %v6168, %v6417
  %v6419 = vpop.f32.mrb[0].mxu0
  %v6420 = vadd.f32 %v6172, %v6419
  %v6421 = vpop.f32.mrb[0].mxu0
  %v6422 = vpop.f32.mrb[0].mxu0
  %6423 = vdwg.mxu0
  %v6424 = vadd.f32 %v6377, 0.0
  %v6425 = vadd.f32 %v6379, 0.0
  %v6426 = vadd.f32 %v6418, 0.0
  %v6427 = vadd.f32 %v6420, 0.0
  %v6428 = vxor.u32 %v6424, 2147483648
  %v6429 = vmul.f32 %v6428, 1.442695
  %v6430 = vpow.pop %v6429
  %v6431 = vadd.f32 %v6430, 1.0
  %v6432 = vrcp.pop %v6431
  %v6433 = vmul.f32 1.0, %v6432
  %v6434 = vxor.u32 %v6425, 2147483648
  %v6435 = vmul.f32 %v6434, 1.442695
  %v6436 = vpow.pop %v6435
  %v6437 = vadd.f32 %v6436, 1.0
  %v6438 = vrcp.pop %v6437
  %v6439 = vmul.f32 1.0, %v6438
  %v6440 = vtanh.pop %v6426
  %v6441 = vxor.u32 %v6427, 2147483648
  %v6442 = vmul.f32 %v6441, 1.442695
  %v6443 = vpow.pop %v6442
  %v6444 = vadd.f32 %v6443, 1.0
  %v6445 = vrcp.pop %v6444
  %v6446 = vmul.f32 1.0, %v6445
  %v6447 = vmul.f32 %v6439, %v6100
  %v6448 = vmul.f32 %v6433, %v6440
  %v6449 = vadd.f32 %v6447, %v6448
  %v6450 = vtanh.pop %v6449
  %v6451 = vmul.f32 %v6446, %v6450
  %v6452 = vpack.c.bf16 %v6451, %v6451
  %v6469 = vunpack.c.l.b16 %v6109
  %v6470 = vunpack.c.l.b16 %v6112
  %v6471 = vunpack.c.l.b16 %v6115
  %v6472 = vunpack.c.l.b16 %v6118
  %v6473 = vunpack.c.l.b16 %v6121
  %v6474 = vunpack.c.l.b16 %v6124
  %v6475 = vunpack.c.l.b16 %v6127
  %v6476 = vunpack.c.l.b16 %v6130
  %v6477 = vunpack.c.l.b16 %v6133
  %v6478 = vunpack.c.l.b16 %v6136
  %v6479 = vunpack.c.l.b16 %v6139
  %v6480 = vunpack.c.l.b16 %v6142
  %v6481 = vunpack.c.l.b16 %v6145
  %v6482 = vunpack.c.l.b16 %v6148
  %v6483 = vunpack.c.l.b16 %v6151
  %v6484 = vunpack.c.l.b16 %v6154
  %v6485 = vpack.c.b16 %v6470, %v6469
  %v6486 = vpack.c.b16 %v6472, %v6471
  %v6487 = vpack.c.b16 %v6474, %v6473
  %v6488 = vpack.c.b16 %v6476, %v6475
  %v6489 = vpack.c.b16 %v6478, %v6477
  %v6490 = vpack.c.b16 %v6480, %v6479
  %v6491 = vpack.c.b16 %v6482, %v6481
  %v6492 = vpack.c.b16 %v6484, %v6483
  %6501 = vmatprep.subr.bf16.mxu0 %v6279
  %6502 = vmatpush1.bf16.msra.mxu0 %v6278
  %6503 = vmatprep.subr.bf16.mxu0 %v6283
  %6504 = vmatpush1.bf16.msra.mxu0 %v6282
  %6505 = vmatprep.subr.bf16.mxu0 %v6287
  %6506 = vmatpush1.bf16.msra.mxu0 %v6286
  %6507 = vmatprep.subr.bf16.mxu0 %v6291
  %6508 = vmatpush1.bf16.msra.mxu0 %v6290
  %6509 = vmatprep.subr.bf16.mxu0 %v6295
  %6510 = vmatpush1.bf16.msra.mxu0 %v6294
  %6511 = vmatprep.subr.bf16.mxu0 %v6299
  %6512 = vmatpush1.bf16.msra.mxu0 %v6298
  %6513 = vmatprep.subr.bf16.mxu0 %v6303
  %6514 = vmatpush1.bf16.msra.mxu0 %v6302
  %6515 = vmatprep.subr.bf16.mxu0 %v6307
  %6516 = vmatpush1.bf16.msra.mxu0 %v6306
  %6517 = vmatprep.subr.bf16.mxu0 0
  %6518 = vmatpush1.bf16.msra.mxu0 0
  %6519 = vmatprep.subr.bf16.mxu0 0
  %6520 = vmatpush1.bf16.msra.mxu0 0
  %6521 = vmatprep.subr.bf16.mxu0 0
  %6522 = vmatpush1.bf16.msra.mxu0 0
  %6523 = vmatprep.subr.bf16.mxu0 0
  %6524 = vmatpush1.bf16.msra.mxu0 0
  %6525 = vmatprep.subr.bf16.mxu0 0
  %6526 = vmatpush1.bf16.msra.mxu0 0
  %6527 = vmatprep.subr.bf16.mxu0 0
  %6528 = vmatpush1.bf16.msra.mxu0 0
  %6529 = vmatprep.subr.bf16.mxu0 0
  %6530 = vmatpush1.bf16.msra.mxu0 0
  %6531 = vmatprep.subr.bf16.mxu0 0
  %6532 = vmatpush1.bf16.msra.mxu0 0
  %6533 = vmatprep.mubr.bf16.mxu0 0
  %6534 = vmatmul.mubr.bf16.gmra.mrb[0].mxu0 %v6452
  %v6535 = vpop.f32.mrb[0].mxu0
  %v6536 = vadd.f32 %v6160, %v6535
  %v6537 = vpop.f32.mrb[0].mxu0
  %v6538 = vadd.f32 %v6164, %v6537
  %v6539 = vpop.f32.mrb[0].mxu0
  %v6540 = vpop.f32.mrb[0].mxu0
  %6541 = vdwg.mxu0
  %6542 = vmatprep.subr.bf16.mxu0 %v6281
  %6543 = vmatpush1.bf16.msra.mxu0 %v6280
  %6544 = vmatprep.subr.bf16.mxu0 %v6285
  %6545 = vmatpush1.bf16.msra.mxu0 %v6284
  %6546 = vmatprep.subr.bf16.mxu0 %v6289
  %6547 = vmatpush1.bf16.msra.mxu0 %v6288
  %6548 = vmatprep.subr.bf16.mxu0 %v6293
  %6549 = vmatpush1.bf16.msra.mxu0 %v6292
  %6550 = vmatprep.subr.bf16.mxu0 %v6297
  %6551 = vmatpush1.bf16.msra.mxu0 %v6296
  %6552 = vmatprep.subr.bf16.mxu0 %v6301
  %6553 = vmatpush1.bf16.msra.mxu0 %v6300
  %6554 = vmatprep.subr.bf16.mxu0 %v6305
  %6555 = vmatpush1.bf16.msra.mxu0 %v6304
  %6556 = vmatprep.subr.bf16.mxu0 %v6309
  %6557 = vmatpush1.bf16.msra.mxu0 %v6308
  %6558 = vmatprep.subr.bf16.mxu0 0
  %6559 = vmatpush1.bf16.msra.mxu0 0
  %6560 = vmatprep.subr.bf16.mxu0 0
  %6561 = vmatpush1.bf16.msra.mxu0 0
  %6562 = vmatprep.subr.bf16.mxu0 0
  %6563 = vmatpush1.bf16.msra.mxu0 0
  %6564 = vmatprep.subr.bf16.mxu0 0
  %6565 = vmatpush1.bf16.msra.mxu0 0
  %6566 = vmatprep.subr.bf16.mxu0 0
  %6567 = vmatpush1.bf16.msra.mxu0 0
  %6568 = vmatprep.subr.bf16.mxu0 0
  %6569 = vmatpush1.bf16.msra.mxu0 0
  %6570 = vmatprep.subr.bf16.mxu0 0
  %6571 = vmatpush1.bf16.msra.mxu0 0
  %6572 = vmatprep.subr.bf16.mxu0 0
  %6573 = vmatpush1.bf16.msra.mxu0 0
  %6574 = vmatprep.mubr.bf16.mxu0 0
  %6575 = vmatmul.mubr.bf16.gmra.mrb[0].mxu0 %v6452
  %v6576 = vpop.f32.mrb[0].mxu0
  %v6577 = vadd.f32 %v6168, %v6576
  %v6578 = vpop.f32.mrb[0].mxu0
  %v6579 = vadd.f32 %v6172, %v6578
  %v6580 = vpop.f32.mrb[0].mxu0
  %v6581 = vpop.f32.mrb[0].mxu0
  %6582 = vdwg.mxu0
  %6583 = vmatprep.subr.bf16.mxu0 0
  %6584 = vmatpush1.bf16.msra.mxu0 %v6485
  %6585 = vmatprep.subr.bf16.mxu0 0
  %6586 = vmatpush1.bf16.msra.mxu0 %v6486
  %6587 = vmatprep.subr.bf16.mxu0 0
  %6588 = vmatpush1.bf16.msra.mxu0 %v6487
  %6589 = vmatprep.subr.bf16.mxu0 0
  %6590 = vmatpush1.bf16.msra.mxu0 %v6488
  %6591 = vmatprep.subr.bf16.mxu0 0
  %6592 = vmatpush1.bf16.msra.mxu0 %v6489
  %6593 = vmatprep.subr.bf16.mxu0 0
  %6594 = vmatpush1.bf16.msra.mxu0 %v6490
  %6595 = vmatprep.subr.bf16.mxu0 0
  %6596 = vmatpush1.bf16.msra.mxu0 %v6491
  %6597 = vmatprep.subr.bf16.mxu0 0
  %6598 = vmatpush1.bf16.msra.mxu0 %v6492
  %6599 = vmatprep.subr.bf16.mxu0 0
  %6600 = vmatpush1.bf16.msra.mxu0 0
  %6601 = vmatprep.subr.bf16.mxu0 0
  %6602 = vmatpush1.bf16.msra.mxu0 0
  %6603 = vmatprep.subr.bf16.mxu0 0
  %6604 = vmatpush1.bf16.msra.mxu0 0
  %6605 = vmatprep.subr.bf16.mxu0 0
  %6606 = vmatpush1.bf16.msra.mxu0 0
  %6607 = vmatprep.subr.bf16.mxu0 0
  %6608 = vmatpush1.bf16.msra.mxu0 0
  %6609 = vmatprep.subr.bf16.mxu0 0
  %6610 = vmatpush1.bf16.msra.mxu0 0
  %6611 = vmatprep.subr.bf16.mxu0 0
  %6612 = vmatpush1.bf16.msra.mxu0 0
  %6613 = vmatprep.subr.bf16.mxu0 0
  %6614 = vmatpush1.bf16.msra.mxu0 0
  %6615 = vmatprep.mubr.bf16.mxu0 0
  %6616 = vmatmul.mubr.bf16.gmra.mrb[0].mxu0 %v6452
  %v6617 = vpop.f32.mrb[0].mxu0
  %v6618 = vadd.f32 %v6176, %v6617
  %v6619 = vpop.f32.mrb[0].mxu0
  %v6620 = vpop.f32.mrb[0].mxu0
  %v6621 = vpop.f32.mrb[0].mxu0
  %6622 = vdwg.mxu0
  %6623 = vmax.xlane.f32.xlu0 %v6618
  %v6624 = vpop.xlane.xlu0 %6623
  %vm6625 = vcmp.eq.f32.partialorder %v6618, %v6624
  %v6626 = vsel %vm6625, %v6105, 128
  %v6627 = vand.u32 %v6626, 65535
  %v6628 = vshra.s32 %v6626, 16
  %v6629 = vcvt.s32.f32 %v6627
  %v6630 = vcvt.s32.f32 %v6628
  %6631 = vmin.xlane.f32.xlu0 %v6630
  %v6632 = vpop.xlane.xlu0 %6631
  %vm6633 = vcmp.eq.f32.partialorder %v6630, %v6632
  %v6634 = vsel %vm6633, %v6629, inf
  %6635 = vmin.xlane.f32.xlu0 %v6634
  %v6636 = vpop.xlane.xlu0 %6635
  %v6637 = vcvt.f32.s32 %v6636
  %v6638 = vcvt.f32.s32 %v6632
  %v6639 = vshll.u32 %v6638, 16
  %v6640 = vadd.s32 %v6639, %v6637
  %vm6641 = vcmp.eq.s32.totalorder %v6105, %v6640
  %v6642 = vsel %vm6641, 1, 0
  %v6643 = vcvt.s32.f32 %v6642
  %v6644 = vpack.c.bf16 %v6643, %v6643
  %v6645 = vld [vmem:[%s10] sm:$0xff]
  %v6646 = vld [vmem:[%s10 + $0x8] sm:$0xff]
  %v6647 = vld [vmem:[%s10 + $0x10] sm:$0xff]
  %v6648 = vld [vmem:[%s10 + $0x18] sm:$0xff]
  %v6649 = vld [vmem:[%s10 + $0x20] sm:$0xff]
  %v6650 = vld [vmem:[%s10 + $0x28] sm:$0xff]
  %v6651 = vld [vmem:[%s10 + $0x30] sm:$0xff]
  %v6652 = vld [vmem:[%s10 + $0x38] sm:$0xff]
  %v6653 = vld [vmem:[%s10 + $0x40] sm:$0xff]
  %v6654 = vld [vmem:[%s10 + $0x48] sm:$0xff]
  %v6655 = vld [vmem:[%s10 + $0x50] sm:$0xff]
  %v6656 = vld [vmem:[%s10 + $0x58] sm:$0xff]
  %v6657 = vld [vmem:[%s10 + $0x60] sm:$0xff]
  %v6658 = vld [vmem:[%s10 + $0x68] sm:$0xff]
  %v6659 = vld [vmem:[%s10 + $0x70] sm:$0xff]
  %v6660 = vld [vmem:[%s10 + $0x78] sm:$0xff]
  %v6661 = vld [vmem:[%s10 + $0x80] sm:$0xff]
  %v6662 = vld [vmem:[%s10 + $0x88] sm:$0xff]
  %v6663 = vld [vmem:[%s10 + $0x90] sm:$0xff]
  %v6664 = vld [vmem:[%s10 + $0x98] sm:$0xff]
  %v6665 = vld [vmem:[%s10 + $0xa0] sm:$0xff]
  %v6666 = vld [vmem:[%s10 + $0xa8] sm:$0xff]
  %v6667 = vld [vmem:[%s10 + $0xb0] sm:$0xff]
  %v6668 = vld [vmem:[%s10 + $0xb8] sm:$0xff]
  %v6669 = vld [vmem:[%s10 + $0xc0] sm:$0xff]
  %v6670 = vld [vmem:[%s10 + $0xc8] sm:$0xff]
  %v6671 = vld [vmem:[%s10 + $0xd0] sm:$0xff]
  %v6672 = vld [vmem:[%s10 + $0xd8] sm:$0xff]
  %v6673 = vld [vmem:[%s10 + $0xe0] sm:$0xff]
  %v6674 = vld [vmem:[%s10 + $0xe8] sm:$0xff]
  %v6675 = vld [vmem:[%s10 + $0xf0] sm:$0xff]
  %v6676 = vld [vmem:[%s10 + $0xf8] sm:$0xff]
  %v6709 = vunpack.c.l.b16 %v6645
  %v6710 = vunpack.c.h.b16 %v6645
  %v6711 = vunpack.c.l.b16 %v6646
  %v6712 = vunpack.c.h.b16 %v6646
  %v6713 = vunpack.c.l.b16 %v6647
  %v6714 = vunpack.c.h.b16 %v6647
  %v6715 = vunpack.c.l.b16 %v6648
  %v6716 = vunpack.c.h.b16 %v6648
  %v6717 = vunpack.c.l.b16 %v6649
  %v6718 = vunpack.c.h.b16 %v6649
  %v6719 = vunpack.c.l.b16 %v6650
  %v6720 = vunpack.c.h.b16 %v6650
  %v6721 = vunpack.c.l.b16 %v6651
  %v6722 = vunpack.c.h.b16 %v6651
  %v6723 = vunpack.c.l.b16 %v6652
  %v6724 = vunpack.c.h.b16 %v6652
  %v6725 = vunpack.c.l.b16 %v6653
  %v6726 = vunpack.c.h.b16 %v6653
  %v6727 = vunpack.c.l.b16 %v6654
  %v6728 = vunpack.c.h.b16 %v6654
  %v6729 = vunpack.c.l.b16 %v6655
  %v6730 = vunpack.c.h.b16 %v6655
  %v6731 = vunpack.c.l.b16 %v6656
  %v6732 = vunpack.c.h.b16 %v6656
  %v6733 = vunpack.c.l.b16 %v6657
  %v6734 = vunpack.c.h.b16 %v6657
  %v6735 = vunpack.c.l.b16 %v6658
  %v6736 = vunpack.c.h.b16 %v6658
  %v6737 = vunpack.c.l.b16 %v6659
  %v6738 = vunpack.c.h.b16 %v6659
  %v6739 = vunpack.c.l.b16 %v6660
  %v6740 = vunpack.c.h.b16 %v6660
  %v6741 = vunpack.c.l.b16 %v6661
  %v6742 = vunpack.c.h.b16 %v6661
  %v6743 = vunpack.c.l.b16 %v6662
  %v6744 = vunpack.c.h.b16 %v6662
  %v6745 = vunpack.c.l.b16 %v6663
  %v6746 = vunpack.c.h.b16 %v6663
  %v6747 = vunpack.c.l.b16 %v6664
  %v6748 = vunpack.c.h.b16 %v6664
  %v6749 = vunpack.c.l.b16 %v6665
  %v6750 = vunpack.c.h.b16 %v6665
  %v6751 = vunpack.c.l.b16 %v6666
  %v6752 = vunpack.c.h.b16 %v6666
  %v6753 = vunpack.c.l.b16 %v6667
  %v6754 = vunpack.c.h.b16 %v6667
  %v6755 = vunpack.c.l.b16 %v6668
  %v6756 = vunpack.c.h.b16 %v6668
  %v6757 = vunpack.c.l.b16 %v6669
  %v6758 = vunpack.c.h.b16 %v6669
  %v6759 = vunpack.c.l.b16 %v6670
  %v6760 = vunpack.c.h.b16 %v6670
  %v6761 = vunpack.c.l.b16 %v6671
  %v6762 = vunpack.c.h.b16 %v6671
  %v6763 = vunpack.c.l.b16 %v6672
  %v6764 = vunpack.c.h.b16 %v6672
  %v6765 = vunpack.c.l.b16 %v6673
  %v6766 = vunpack.c.h.b16 %v6673
  %v6767 = vunpack.c.l.b16 %v6674
  %v6768 = vunpack.c.h.b16 %v6674
  %v6769 = vunpack.c.l.b16 %v6675
  %v6770 = vunpack.c.h.b16 %v6675
  %v6771 = vunpack.c.l.b16 %v6676
  %v6772 = vunpack.c.h.b16 %v6676
  %v6773 = vpack.c.b16 %v6713, %v6709
  %v6774 = vpack.c.b16 %v6714, %v6710
  %v6775 = vpack.c.b16 %v6715, %v6711
  %v6776 = vpack.c.b16 %v6716, %v6712
  %v6777 = vpack.c.b16 %v6721, %v6717
  %v6778 = vpack.c.b16 %v6722, %v6718
  %v6779 = vpack.c.b16 %v6723, %v6719
  %v6780 = vpack.c.b16 %v6724, %v6720
  %v6781 = vpack.c.b16 %v6729, %v6725
  %v6782 = vpack.c.b16 %v6730, %v6726
  %v6783 = vpack.c.b16 %v6731, %v6727
  %v6784 = vpack.c.b16 %v6732, %v6728
  %v6785 = vpack.c.b16 %v6737, %v6733
  %v6786 = vpack.c.b16 %v6738, %v6734
  %v6787 = vpack.c.b16 %v6739, %v6735
  %v6788 = vpack.c.b16 %v6740, %v6736
  %v6789 = vpack.c.b16 %v6745, %v6741
  %v6790 = vpack.c.b16 %v6746, %v6742
  %v6791 = vpack.c.b16 %v6747, %v6743
  %v6792 = vpack.c.b16 %v6748, %v6744
  %v6793 = vpack.c.b16 %v6753, %v6749
  %v6794 = vpack.c.b16 %v6754, %v6750
  %v6795 = vpack.c.b16 %v6755, %v6751
  %v6796 = vpack.c.b16 %v6756, %v6752
  %v6797 = vpack.c.b16 %v6761, %v6757
  %v6798 = vpack.c.b16 %v6762, %v6758
  %v6799 = vpack.c.b16 %v6763, %v6759
  %v6800 = vpack.c.b16 %v6764, %v6760
  %v6801 = vpack.c.b16 %v6769, %v6765
  %v6802 = vpack.c.b16 %v6770, %v6766
  %v6803 = vpack.c.b16 %v6771, %v6767
  %v6804 = vpack.c.b16 %v6772, %v6768
  %6837 = vmatprep.subr.bf16.mxu0 %v6774
  %6838 = vmatpush1.bf16.msra.mxu0 %v6773
  %6839 = vmatprep.subr.bf16.mxu0 %v6778
  %6840 = vmatpush1.bf16.msra.mxu0 %v6777
  %6841 = vmatprep.subr.bf16.mxu0 %v6782
  %6842 = vmatpush1.bf16.msra.mxu0 %v6781
  %6843 = vmatprep.subr.bf16.mxu0 %v6786
  %6844 = vmatpush1.bf16.msra.mxu0 %v6785
  %6845 = vmatprep.subr.bf16.mxu0 %v6790
  %6846 = vmatpush1.bf16.msra.mxu0 %v6789
  %6847 = vmatprep.subr.bf16.mxu0 %v6794
  %6848 = vmatpush1.bf16.msra.mxu0 %v6793
  %6849 = vmatprep.subr.bf16.mxu0 %v6798
  %6850 = vmatpush1.bf16.msra.mxu0 %v6797
  %6851 = vmatprep.subr.bf16.mxu0 %v6802
  %6852 = vmatpush1.bf16.msra.mxu0 %v6801
  %6853 = vmatprep.subr.bf16.mxu0 0
  %6854 = vmatpush1.bf16.msra.mxu0 0
  %6855 = vmatprep.subr.bf16.mxu0 0
  %6856 = vmatpush1.bf16.msra.mxu0 0
  %6857 = vmatprep.subr.bf16.mxu0 0
  %6858 = vmatpush1.bf16.msra.mxu0 0
  %6859 = vmatprep.subr.bf16.mxu0 0
  %6860 = vmatpush1.bf16.msra.mxu0 0
  %6861 = vmatprep.subr.bf16.mxu0 0
  %6862 = vmatpush1.bf16.msra.mxu0 0
  %6863 = vmatprep.subr.bf16.mxu0 0
  %6864 = vmatpush1.bf16.msra.mxu0 0
  %6865 = vmatprep.subr.bf16.mxu0 0
  %6866 = vmatpush1.bf16.msra.mxu0 0
  %6867 = vmatprep.subr.bf16.mxu0 0
  %6868 = vmatpush1.bf16.msra.mxu0 0
  %6869 = vmatprep.mubr.bf16.mxu0 0
  %6870 = vmatmul.mubr.bf16.gmra.mrb[0].mxu0 %v6644
  %v6871 = vpop.f32.mrb[0].mxu0
  %v6872 = vadd.f32 %v6536, %v6871
  %v6873 = vpop.f32.mrb[0].mxu0
  %v6874 = vadd.f32 %v6538, %v6873
  %v6875 = vpop.f32.mrb[0].mxu0
  %v6876 = vpop.f32.mrb[0].mxu0
  %6877 = vdwg.mxu0
  %6878 = vmatprep.subr.bf16.mxu0 %v6776
  %6879 = vmatpush1.bf16.msra.mxu0 %v6775
  %6880 = vmatprep.subr.bf16.mxu0 %v6780
  %6881 = vmatpush1.bf16.msra.mxu0 %v6779
  %6882 = vmatprep.subr.bf16.mxu0 %v6784
  %6883 = vmatpush1.bf16.msra.mxu0 %v6783
  %6884 = vmatprep.subr.bf16.mxu0 %v6788
  %6885 = vmatpush1.bf16.msra.mxu0 %v6787
  %6886 = vmatprep.subr.bf16.mxu0 %v6792
  %6887 = vmatpush1.bf16.msra.mxu0 %v6791
  %6888 = vmatprep.subr.bf16.mxu0 %v6796
  %6889 = vmatpush1.bf16.msra.mxu0 %v6795
  %6890 = vmatprep.subr.bf16.mxu0 %v6800
  %6891 = vmatpush1.bf16.msra.mxu0 %v6799
  %6892 = vmatprep.subr.bf16.mxu0 %v6804
  %6893 = vmatpush1.bf16.msra.mxu0 %v6803
  %6894 = vmatprep.subr.bf16.mxu0 0
  %6895 = vmatpush1.bf16.msra.mxu0 0
  %6896 = vmatprep.subr.bf16.mxu0 0
  %6897 = vmatpush1.bf16.msra.mxu0 0
  %6898 = vmatprep.subr.bf16.mxu0 0
  %6899 = vmatpush1.bf16.msra.mxu0 0
  %6900 = vmatprep.subr.bf16.mxu0 0
  %6901 = vmatpush1.bf16.msra.mxu0 0
  %6902 = vmatprep.subr.bf16.mxu0 0
  %6903 = vmatpush1.bf16.msra.mxu0 0
  %6904 = vmatprep.subr.bf16.mxu0 0
  %6905 = vmatpush1.bf16.msra.mxu0 0
  %6906 = vmatprep.subr.bf16.mxu0 0
  %6907 = vmatpush1.bf16.msra.mxu0 0
  %6908 = vmatprep.subr.bf16.mxu0 0
  %6909 = vmatpush1.bf16.msra.mxu0 0
  %6910 = vmatprep.mubr.bf16.mxu0 0
  %6911 = vmatmul.mubr.bf16.gmra.mrb[0].mxu0 %v6644
  %v6912 = vpop.f32.mrb[0].mxu0
  %v6913 = vadd.f32 %v6577, %v6912
  %v6914 = vpop.f32.mrb[0].mxu0
  %v6915 = vadd.f32 %v6579, %v6914
  %v6916 = vpop.f32.mrb[0].mxu0
  %v6917 = vpop.f32.mrb[0].mxu0
  %6918 = vdwg.mxu0
  %v6919 = vxor.u32 %v6872, 2147483648
  %v6920 = vmul.f32 %v6919, 1.442695
  %v6921 = vpow.pop %v6920
  %v6922 = vadd.f32 %v6921, 1.0
  %v6923 = vrcp.pop %v6922
  %v6924 = vmul.f32 1.0, %v6923
  %v6925 = vxor.u32 %v6874, 2147483648
  %v6926 = vmul.f32 %v6925, 1.442695
  %v6927 = vpow.pop %v6926
  %v6928 = vadd.f32 %v6927, 1.0
  %v6929 = vrcp.pop %v6928
  %v6930 = vmul.f32 1.0, %v6929
  %v6931 = vtanh.pop %v6913
  %v6932 = vxor.u32 %v6915, 2147483648
  %v6933 = vmul.f32 %v6932, 1.442695
  %v6934 = vpow.pop %v6933
  %v6935 = vadd.f32 %v6934, 1.0
  %v6936 = vrcp.pop %v6935
  %v6937 = vmul.f32 1.0, %v6936
  %v6938 = vmul.f32 %v6930, %v6449
  %v6939 = vmul.f32 %v6924, %v6931
  %v6940 = vadd.f32 %v6938, %v6939
  %v6941 = vtanh.pop %v6940
  %v6942 = vmul.f32 %v6937, %v6941
  %v6943 = vpack.c.bf16 %v6942, %v6942
  %6944 = vmatprep.subr.bf16.mxu0 %v6279
  %6945 = vmatpush1.bf16.msra.mxu0 %v6278
  %6946 = vmatprep.subr.bf16.mxu0 %v6283
  %6947 = vmatpush1.bf16.msra.mxu0 %v6282
  %6948 = vmatprep.subr.bf16.mxu0 %v6287
  %6949 = vmatpush1.bf16.msra.mxu0 %v6286
  %6950 = vmatprep.subr.bf16.mxu0 %v6291
  %6951 = vmatpush1.bf16.msra.mxu0 %v6290
  %6952 = vmatprep.subr.bf16.mxu0 %v6295
  %6953 = vmatpush1.bf16.msra.mxu0 %v6294
  %6954 = vmatprep.subr.bf16.mxu0 %v6299
  %6955 = vmatpush1.bf16.msra.mxu0 %v6298
  %6956 = vmatprep.subr.bf16.mxu0 %v6303
  %6957 = vmatpush1.bf16.msra.mxu0 %v6302
  %6958 = vmatprep.subr.bf16.mxu0 %v6307
  %6959 = vmatpush1.bf16.msra.mxu0 %v6306
  %6960 = vmatprep.subr.bf16.mxu0 0
  %6961 = vmatpush1.bf16.msra.mxu0 0
  %6962 = vmatprep.subr.bf16.mxu0 0
  %6963 = vmatpush1.bf16.msra.mxu0 0
  %6964 = vmatprep.subr.bf16.mxu0 0
  %6965 = vmatpush1.bf16.msra.mxu0 0
  %6966 = vmatprep.subr.bf16.mxu0 0
  %6967 = vmatpush1.bf16.msra.mxu0 0
  %6968 = vmatprep.subr.bf16.mxu0 0
  %6969 = vmatpush1.bf16.msra.mxu0 0
  %6970 = vmatprep.subr.bf16.mxu0 0
  %6971 = vmatpush1.bf16.msra.mxu0 0
  %6972 = vmatprep.subr.bf16.mxu0 0
  %6973 = vmatpush1.bf16.msra.mxu0 0
  %6974 = vmatprep.subr.bf16.mxu0 0
  %6975 = vmatpush1.bf16.msra.mxu0 0
  %6976 = vmatprep.mubr.bf16.mxu0 0
  %6977 = vmatmul.mubr.bf16.gmra.mrb[0].mxu0 %v6943
  %v6978 = vpop.f32.mrb[0].mxu0
  %v6979 = vadd.f32 %v6160, %v6978
  %v6980 = vpop.f32.mrb[0].mxu0
  %v6981 = vadd.f32 %v6164, %v6980
  %v6982 = vpop.f32.mrb[0].mxu0
  %v6983 = vpop.f32.mrb[0].mxu0
  %6984 = vdwg.mxu0
  %6985 = vmatprep.subr.bf16.mxu0 %v6281
  %6986 = vmatpush1.bf16.msra.mxu0 %v6280
  %6987 = vmatprep.subr.bf16.mxu0 %v6285
  %6988 = vmatpush1.bf16.msra.mxu0 %v6284
  %6989 = vmatprep.subr.bf16.mxu0 %v6289
  %6990 = vmatpush1.bf16.msra.mxu0 %v6288
  %6991 = vmatprep.subr.bf16.mxu0 %v6293
  %6992 = vmatpush1.bf16.msra.mxu0 %v6292
  %6993 = vmatprep.subr.bf16.mxu0 %v6297
  %6994 = vmatpush1.bf16.msra.mxu0 %v6296
  %6995 = vmatprep.subr.bf16.mxu0 %v6301
  %6996 = vmatpush1.bf16.msra.mxu0 %v6300
  %6997 = vmatprep.subr.bf16.mxu0 %v6305
  %6998 = vmatpush1.bf16.msra.mxu0 %v6304
  %6999 = vmatprep.subr.bf16.mxu0 %v6309
  %7000 = vmatpush1.bf16.msra.mxu0 %v6308
  %7001 = vmatprep.subr.bf16.mxu0 0
  %7002 = vmatpush1.bf16.msra.mxu0 0
  %7003 = vmatprep.subr.bf16.mxu0 0
  %7004 = vmatpush1.bf16.msra.mxu0 0
  %7005 = vmatprep.subr.bf16.mxu0 0
  %7006 = vmatpush1.bf16.msra.mxu0 0
  %7007 = vmatprep.subr.bf16.mxu0 0
  %7008 = vmatpush1.bf16.msra.mxu0 0
  %7009 = vmatprep.subr.bf16.mxu0 0
  %7010 = vmatpush1.bf16.msra.mxu0 0
  %7011 = vmatprep.subr.bf16.mxu0 0
  %7012 = vmatpush1.bf16.msra.mxu0 0
  %7013 = vmatprep.subr.bf16.mxu0 0
  %7014 = vmatpush1.bf16.msra.mxu0 0
  %7015 = vmatprep.subr.bf16.mxu0 0
  %7016 = vmatpush1.bf16.msra.mxu0 0
  %7017 = vmatprep.mubr.bf16.mxu0 0
  %7018 = vmatmul.mubr.bf16.gmra.mrb[0].mxu0 %v6943
  %v7019 = vpop.f32.mrb[0].mxu0
  %v7020 = vadd.f32 %v6168, %v7019
  %v7021 = vpop.f32.mrb[0].mxu0
  %v7022 = vadd.f32 %v6172, %v7021
  %v7023 = vpop.f32.mrb[0].mxu0
  %v7024 = vpop.f32.mrb[0].mxu0
  %7025 = vdwg.mxu0
  %7026 = vmatprep.subr.bf16.mxu0 0
  %7027 = vmatpush1.bf16.msra.mxu0 %v6485
  %7028 = vmatprep.subr.bf16.mxu0 0
  %7029 = vmatpush1.bf16.msra.mxu0 %v6486
  %7030 = vmatprep.subr.bf16.mxu0 0
  %7031 = vmatpush1.bf16.msra.mxu0 %v6487
  %7032 = vmatprep.subr.bf16.mxu0 0
  %7033 = vmatpush1.bf16.msra.mxu0 %v6488
  %7034 = vmatprep.subr.bf16.mxu0 0
  %7035 = vmatpush1.bf16.msra.mxu0 %v6489
  %7036 = vmatprep.subr.bf16.mxu0 0
  %7037 = vmatpush1.bf16.msra.mxu0 %v6490
  %7038 = vmatprep.subr.bf16.mxu0 0
  %7039 = vmatpush1.bf16.msra.mxu0 %v6491
  %7040 = vmatprep.subr.bf16.mxu0 0
  %7041 = vmatpush1.bf16.msra.mxu0 %v6492
  %7042 = vmatprep.subr.bf16.mxu0 0
  %7043 = vmatpush1.bf16.msra.mxu0 0
  %7044 = vmatprep.subr.bf16.mxu0 0
  %7045 = vmatpush1.bf16.msra.mxu0 0
  %7046 = vmatprep.subr.bf16.mxu0 0
  %7047 = vmatpush1.bf16.msra.mxu0 0
  %7048 = vmatprep.subr.bf16.mxu0 0
  %7049 = vmatpush1.bf16.msra.mxu0 0
  %7050 = vmatprep.subr.bf16.mxu0 0
  %7051 = vmatpush1.bf16.msra.mxu0 0
  %7052 = vmatprep.subr.bf16.mxu0 0
  %7053 = vmatpush1.bf16.msra.mxu0 0
  %7054 = vmatprep.subr.bf16.mxu0 0
  %7055 = vmatpush1.bf16.msra.mxu0 0
  %7056 = vmatprep.subr.bf16.mxu0 0
  %7057 = vmatpush1.bf16.msra.mxu0 0
  %7058 = vmatprep.mubr.bf16.mxu0 0
  %7059 = vmatmul.mubr.bf16.gmra.mrb[0].mxu0 %v6943
  %v7060 = vpop.f32.mrb[0].mxu0
  %v7061 = vadd.f32 %v6176, %v7060
  %v7062 = vpop.f32.mrb[0].mxu0
  %v7063 = vpop.f32.mrb[0].mxu0
  %v7064 = vpop.f32.mrb[0].mxu0
  %7065 = vdwg.mxu0
  %7066 = vmax.xlane.f32.xlu0 %v7061
  %v7067 = vpop.xlane.xlu0 %7066
  %vm7068 = vcmp.eq.f32.partialorder %v7061, %v7067
  %v7069 = vsel %vm7068, %v6105, 128
  %v7070 = vand.u32 %v7069, 65535
  %v7071 = vshra.s32 %v7069, 16
  %v7072 = vcvt.s32.f32 %v7070
  %v7073 = vcvt.s32.f32 %v7071
  %7074 = vmin.xlane.f32.xlu0 %v7073
  %v7075 = vpop.xlane.xlu0 %7074
  %vm7076 = vcmp.eq.f32.partialorder %v7073, %v7075
  %v7077 = vsel %vm7076, %v7072, inf
  %7078 = vmin.xlane.f32.xlu0 %v7077
  %v7079 = vpop.xlane.xlu0 %7078
  %v7080 = vcvt.f32.s32 %v7079
  %v7081 = vcvt.f32.s32 %v7075
  %v7082 = vshll.u32 %v7081, 16
  %v7083 = vadd.s32 %v7082, %v7080
  %vm7084 = vcmp.eq.s32.totalorder %v6105, %v7083
  %v7085 = vsel %vm7084, 1, 0
  %v7086 = vcvt.s32.f32 %v7085
  %v7087 = vpack.c.bf16 %v7086, %v7086
  %7088 = vmatprep.subr.bf16.mxu0 %v6774
  %7089 = vmatpush1.bf16.msra.mxu0 %v6773
  %7090 = vmatprep.subr.bf16.mxu0 %v6778
  %7091 = vmatpush1.bf16.msra.mxu0 %v6777
  %7092 = vmatprep.subr.bf16.mxu0 %v6782
  %7093 = vmatpush1.bf16.msra.mxu0 %v6781
  %7094 = vmatprep.subr.bf16.mxu0 %v6786
  %7095 = vmatpush1.bf16.msra.mxu0 %v6785
  %7096 = vmatprep.subr.bf16.mxu0 %v6790
  %7097 = vmatpush1.bf16.msra.mxu0 %v6789
  %7098 = vmatprep.subr.bf16.mxu0 %v6794
  %7099 = vmatpush1.bf16.msra.mxu0 %v6793
  %7100 = vmatprep.subr.bf16.mxu0 %v6798
  %7101 = vmatpush1.bf16.msra.mxu0 %v6797
  %7102 = vmatprep.subr.bf16.mxu0 %v6802
  %7103 = vmatpush1.bf16.msra.mxu0 %v6801
  %7104 = vmatprep.subr.bf16.mxu0 0
  %7105 = vmatpush1.bf16.msra.mxu0 0
  %7106 = vmatprep.subr.bf16.mxu0 0
  %7107 = vmatpush1.bf16.msra.mxu0 0
  %7108 = vmatprep.subr.bf16.mxu0 0
  %7109 = vmatpush1.bf16.msra.mxu0 0
  %7110 = vmatprep.subr.bf16.mxu0 0
  %7111 = vmatpush1.bf16.msra.mxu0 0
  %7112 = vmatprep.subr.bf16.mxu0 0
  %7113 = vmatpush1.bf16.msra.mxu0 0
  %7114 = vmatprep.subr.bf16.mxu0 0
  %7115 = vmatpush1.bf16.msra.mxu0 0
  %7116 = vmatprep.subr.bf16.mxu0 0
  %7117 = vmatpush1.bf16.msra.mxu0 0
  %7118 = vmatprep.subr.bf16.mxu0 0
  %7119 = vmatpush1.bf16.msra.mxu0 0
  %7120 = vmatprep.mubr.bf16.mxu0 0
  %7121 = vmatmul.mubr.bf16.gmra.mrb[0].mxu0 %v7087
  %v7122 = vpop.f32.mrb[0].mxu0
  %v7123 = vadd.f32 %v6979, %v7122
  %v7124 = vpop.f32.mrb[0].mxu0
  %v7125 = vadd.f32 %v6981, %v7124
  %v7126 = vpop.f32.mrb[0].mxu0
  %v7127 = vpop.f32.mrb[0].mxu0
  %7128 = vdwg.mxu0
  %7129 = vmatprep.subr.bf16.mxu0 %v6776
  %7130 = vmatpush1.bf16.msra.mxu0 %v6775
  %7131 = vmatprep.subr.bf16.mxu0 %v6780
  %7132 = vmatpush1.bf16.msra.mxu0 %v6779
  %7133 = vmatprep.subr.bf16.mxu0 %v6784
  %7134 = vmatpush1.bf16.msra.mxu0 %v6783
  %7135 = vmatprep.subr.bf16.mxu0 %v6788
  %7136 = vmatpush1.bf16.msra.mxu0 %v6787
  %7137 = vmatprep.subr.bf16.mxu0 %v6792
  %7138 = vmatpush1.bf16.msra.mxu0 %v6791
  %7139 = vmatprep.subr.bf16.mxu0 %v6796
  %7140 = vmatpush1.bf16.msra.mxu0 %v6795
  %7141 = vmatprep.subr.bf16.mxu0 %v6800
  %7142 = vmatpush1.bf16.msra.mxu0 %v6799
  %7143 = vmatprep.subr.bf16.mxu0 %v6804
  %7144 = vmatpush1.bf16.msra.mxu0 %v6803
  %7145 = vmatprep.subr.bf16.mxu0 0
  %7146 = vmatpush1.bf16.msra.mxu0 0
  %7147 = vmatprep.subr.bf16.mxu0 0
  %7148 = vmatpush1.bf16.msra.mxu0 0
  %7149 = vmatprep.subr.bf16.mxu0 0
  %7150 = vmatpush1.bf16.msra.mxu0 0
  %7151 = vmatprep.subr.bf16.mxu0 0
  %7152 = vmatpush1.bf16.msra.mxu0 0
  %7153 = vmatprep.subr.bf16.mxu0 0
  %7154 = vmatpush1.bf16.msra.mxu0 0
  %7155 = vmatprep.subr.bf16.mxu0 0
  %7156 = vmatpush1.bf16.msra.mxu0 0
  %7157 = vmatprep.subr.bf16.mxu0 0
  %7158 = vmatpush1.bf16.msra.mxu0 0
  %7159 = vmatprep.subr.bf16.mxu0 0
  %7160 = vmatpush1.bf16.msra.mxu0 0
  %7161 = vmatprep.mubr.bf16.mxu0 0
  %7162 = vmatmul.mubr.bf16.gmra.mrb[0].mxu0 %v7087
  %v7163 = vpop.f32.mrb[0].mxu0
  %v7164 = vadd.f32 %v7020, %v7163
  %v7165 = vpop.f32.mrb[0].mxu0
  %v7166 = vadd.f32 %v7022, %v7165
  %v7167 = vpop.f32.mrb[0].mxu0
  %v7168 = vpop.f32.mrb[0].mxu0
  %7169 = vdwg.mxu0
  %v7170 = vxor.u32 %v7123, 2147483648
  %v7171 = vmul.f32 %v7170, 1.442695
  %v7172 = vpow.pop %v7171
  %v7173 = vadd.f32 %v7172, 1.0
  %v7174 = vrcp.pop %v7173
  %v7175 = vmul.f32 1.0, %v7174
  %v7176 = vxor.u32 %v7125, 2147483648
  %v7177 = vmul.f32 %v7176, 1.442695
  %v7178 = vpow.pop %v7177
  %v7179 = vadd.f32 %v7178, 1.0
  %v7180 = vrcp.pop %v7179
  %v7181 = vmul.f32 1.0, %v7180
  %v7182 = vtanh.pop %v7164
  %v7183 = vxor.u32 %v7166, 2147483648
  %v7184 = vmul.f32 %v7183, 1.442695
  %v7185 = vpow.pop %v7184
  %v7186 = vadd.f32 %v7185, 1.0
  %v7187 = vrcp.pop %v7186
  %v7188 = vmul.f32 1.0, %v7187
  %v7189 = vmul.f32 %v7181, %v6940
  %v7190 = vmul.f32 %v7175, %v7182
  %v7191 = vadd.f32 %v7189, %v7190
  %v7192 = vtanh.pop %v7191
  %v7193 = vmul.f32 %v7188, %v7192
  %v7194 = vpack.c.bf16 %v7193, %v7193
  %7195 = vmatprep.subr.bf16.mxu0 %v6279
  %7196 = vmatpush1.bf16.msra.mxu0 %v6278
  %7197 = vmatprep.subr.bf16.mxu0 %v6283
  %7198 = vmatpush1.bf16.msra.mxu0 %v6282
  %7199 = vmatprep.subr.bf16.mxu0 %v6287
  %7200 = vmatpush1.bf16.msra.mxu0 %v6286
  %7201 = vmatprep.subr.bf16.mxu0 %v6291
  %7202 = vmatpush1.bf16.msra.mxu0 %v6290
  %7203 = vmatprep.subr.bf16.mxu0 %v6295
  %7204 = vmatpush1.bf16.msra.mxu0 %v6294
  %7205 = vmatprep.subr.bf16.mxu0 %v6299
  %7206 = vmatpush1.bf16.msra.mxu0 %v6298
  %7207 = vmatprep.subr.bf16.mxu0 %v6303
  %7208 = vmatpush1.bf16.msra.mxu0 %v6302
  %7209 = vmatprep.subr.bf16.mxu0 %v6307
  %7210 = vmatpush1.bf16.msra.mxu0 %v6306
  %7211 = vmatprep.subr.bf16.mxu0 0
  %7212 = vmatpush1.bf16.msra.mxu0 0
  %7213 = vmatprep.subr.bf16.mxu0 0
  %7214 = vmatpush1.bf16.msra.mxu0 0
  %7215 = vmatprep.subr.bf16.mxu0 0
  %7216 = vmatpush1.bf16.msra.mxu0 0
  %7217 = vmatprep.subr.bf16.mxu0 0
  %7218 = vmatpush1.bf16.msra.mxu0 0
  %7219 = vmatprep.subr.bf16.mxu0 0
  %7220 = vmatpush1.bf16.msra.mxu0 0
  %7221 = vmatprep.subr.bf16.mxu0 0
  %7222 = vmatpush1.bf16.msra.mxu0 0
  %7223 = vmatprep.subr.bf16.mxu0 0
  %7224 = vmatpush1.bf16.msra.mxu0 0
  %7225 = vmatprep.subr.bf16.mxu0 0
  %7226 = vmatpush1.bf16.msra.mxu0 0
  %7227 = vmatprep.mubr.bf16.mxu0 0
  %7228 = vmatmul.mubr.bf16.gmra.mrb[0].mxu0 %v7194
  %v7229 = vpop.f32.mrb[0].mxu0
  %v7230 = vadd.f32 %v6160, %v7229
  %v7231 = vpop.f32.mrb[0].mxu0
  %v7232 = vadd.f32 %v6164, %v7231
  %v7233 = vpop.f32.mrb[0].mxu0
  %v7234 = vpop.f32.mrb[0].mxu0
  %7235 = vdwg.mxu0
  %7236 = vmatprep.subr.bf16.mxu0 %v6281
  %7237 = vmatpush1.bf16.msra.mxu0 %v6280
  %7238 = vmatprep.subr.bf16.mxu0 %v6285
  %7239 = vmatpush1.bf16.msra.mxu0 %v6284
  %7240 = vmatprep.subr.bf16.mxu0 %v6289
  %7241 = vmatpush1.bf16.msra.mxu0 %v6288
  %7242 = vmatprep.subr.bf16.mxu0 %v6293
  %7243 = vmatpush1.bf16.msra.mxu0 %v6292
  %7244 = vmatprep.subr.bf16.mxu0 %v6297
  %7245 = vmatpush1.bf16.msra.mxu0 %v6296
  %7246 = vmatprep.subr.bf16.mxu0 %v6301
  %7247 = vmatpush1.bf16.msra.mxu0 %v6300
  %7248 = vmatprep.subr.bf16.mxu0 %v6305
  %7249 = vmatpush1.bf16.msra.mxu0 %v6304
  %7250 = vmatprep.subr.bf16.mxu0 %v6309
  %7251 = vmatpush1.bf16.msra.mxu0 %v6308
  %7252 = vmatprep.subr.bf16.mxu0 0
  %7253 = vmatpush1.bf16.msra.mxu0 0
  %7254 = vmatprep.subr.bf16.mxu0 0
  %7255 = vmatpush1.bf16.msra.mxu0 0
  %7256 = vmatprep.subr.bf16.mxu0 0
  %7257 = vmatpush1.bf16.msra.mxu0 0
  %7258 = vmatprep.subr.bf16.mxu0 0
  %7259 = vmatpush1.bf16.msra.mxu0 0
  %7260 = vmatprep.subr.bf16.mxu0 0
  %7261 = vmatpush1.bf16.msra.mxu0 0
  %7262 = vmatprep.subr.bf16.mxu0 0
  %7263 = vmatpush1.bf16.msra.mxu0 0
  %7264 = vmatprep.subr.bf16.mxu0 0
  %7265 = vmatpush1.bf16.msra.mxu0 0
  %7266 = vmatprep.subr.bf16.mxu0 0
  %7267 = vmatpush1.bf16.msra.mxu0 0
  %7268 = vmatprep.mubr.bf16.mxu0 0
  %7269 = vmatmul.mubr.bf16.gmra.mrb[0].mxu0 %v7194
  %v7270 = vpop.f32.mrb[0].mxu0
  %v7271 = vadd.f32 %v6168, %v7270
  %v7272 = vpop.f32.mrb[0].mxu0
  %v7273 = vadd.f32 %v6172, %v7272
  %v7274 = vpop.f32.mrb[0].mxu0
  %v7275 = vpop.f32.mrb[0].mxu0
  %7276 = vdwg.mxu0
  %7277 = vmatprep.subr.bf16.mxu0 0
  %7278 = vmatpush1.bf16.msra.mxu0 %v6485
  %7279 = vmatprep.subr.bf16.mxu0 0
  %7280 = vmatpush1.bf16.msra.mxu0 %v6486
  %7281 = vmatprep.subr.bf16.mxu0 0
  %7282 = vmatpush1.bf16.msra.mxu0 %v6487
  %7283 = vmatprep.subr.bf16.mxu0 0
  %7284 = vmatpush1.bf16.msra.mxu0 %v6488
  %7285 = vmatprep.subr.bf16.mxu0 0
  %7286 = vmatpush1.bf16.msra.mxu0 %v6489
  %7287 = vmatprep.subr.bf16.mxu0 0
  %7288 = vmatpush1.bf16.msra.mxu0 %v6490
  %7289 = vmatprep.subr.bf16.mxu0 0
  %7290 = vmatpush1.bf16.msra.mxu0 %v6491
  %7291 = vmatprep.subr.bf16.mxu0 0
  %7292 = vmatpush1.bf16.msra.mxu0 %v6492
  %7293 = vmatprep.subr.bf16.mxu0 0
  %7294 = vmatpush1.bf16.msra.mxu0 0
  %7295 = vmatprep.subr.bf16.mxu0 0
  %7296 = vmatpush1.bf16.msra.mxu0 0
  %7297 = vmatprep.subr.bf16.mxu0 0
  %7298 = vmatpush1.bf16.msra.mxu0 0
  %7299 = vmatprep.subr.bf16.mxu0 0
  %7300 = vmatpush1.bf16.msra.mxu0 0
  %7301 = vmatprep.subr.bf16.mxu0 0
  %7302 = vmatpush1.bf16.msra.mxu0 0
  %7303 = vmatprep.subr.bf16.mxu0 0
  %7304 = vmatpush1.bf16.msra.mxu0 0
  %7305 = vmatprep.subr.bf16.mxu0 0
  %7306 = vmatpush1.bf16.msra.mxu0 0
  %7307 = vmatprep.subr.bf16.mxu0 0
  %7308 = vmatpush1.bf16.msra.mxu0 0
  %7309 = vmatprep.mubr.bf16.mxu0 0
  %7310 = vmatmul.mubr.bf16.gmra.mrb[0].mxu0 %v7194
  %v7311 = vpop.f32.mrb[0].mxu0
  %v7312 = vadd.f32 %v6176, %v7311
  %v7313 = vpop.f32.mrb[0].mxu0
  %v7314 = vpop.f32.mrb[0].mxu0
  %v7315 = vpop.f32.mrb[0].mxu0
  %7316 = vdwg.mxu0
  %7317 = vmax.xlane.f32.xlu0 %v7312
  %v7318 = vpop.xlane.xlu0 %7317
  %vm7319 = vcmp.eq.f32.partialorder %v7312, %v7318
  %v7320 = vsel %vm7319, %v6105, 128
  %v7321 = vand.u32 %v7320, 65535
  %v7322 = vshra.s32 %v7320, 16
  %v7323 = vcvt.s32.f32 %v7321
  %v7324 = vcvt.s32.f32 %v7322
  %7325 = vmin.xlane.f32.xlu0 %v7324
  %v7326 = vpop.xlane.xlu0 %7325
  %vm7327 = vcmp.eq.f32.partialorder %v7324, %v7326
  %v7328 = vsel %vm7327, %v7323, inf
  %7329 = vmin.xlane.f32.xlu0 %v7328
  %v7330 = vpop.xlane.xlu0 %7329
  %v7331 = vcvt.f32.s32 %v7330
  %v7332 = vcvt.f32.s32 %v7326
  %v7333 = vshll.u32 %v7332, 16
  %v7334 = vadd.s32 %v7333, %v7331
  %vm7335 = vcmp.eq.s32.totalorder %v6105, %v7334
  %v7336 = vsel %vm7335, 1, 0
  %v7337 = vcvt.s32.f32 %v7336
  %v7338 = vpack.c.bf16 %v7337, %v7337
  %7339 = vmatprep.subr.bf16.mxu0 %v6774
  %7340 = vmatpush1.bf16.msra.mxu0 %v6773
  %7341 = vmatprep.subr.bf16.mxu0 %v6778
  %7342 = vmatpush1.bf16.msra.mxu0 %v6777
  %7343 = vmatprep.subr.bf16.mxu0 %v6782
  %7344 = vmatpush1.bf16.msra.mxu0 %v6781
  %7345 = vmatprep.subr.bf16.mxu0 %v6786
  %7346 = vmatpush1.bf16.msra.mxu0 %v6785
  %7347 = vmatprep.subr.bf16.mxu0 %v6790
  %7348 = vmatpush1.bf16.msra.mxu0 %v6789
  %7349 = vmatprep.subr.bf16.mxu0 %v6794
  %7350 = vmatpush1.bf16.msra.mxu0 %v6793
  %7351 = vmatprep.subr.bf16.mxu0 %v6798
  %7352 = vmatpush1.bf16.msra.mxu0 %v6797
  %7353 = vmatprep.subr.bf16.mxu0 %v6802
  %7354 = vmatpush1.bf16.msra.mxu0 %v6801
  %7355 = vmatprep.subr.bf16.mxu0 0
  %7356 = vmatpush1.bf16.msra.mxu0 0
  %7357 = vmatprep.subr.bf16.mxu0 0
  %7358 = vmatpush1.bf16.msra.mxu0 0
  %7359 = vmatprep.subr.bf16.mxu0 0
  %7360 = vmatpush1.bf16.msra.mxu0 0
  %7361 = vmatprep.subr.bf16.mxu0 0
  %7362 = vmatpush1.bf16.msra.mxu0 0
  %7363 = vmatprep.subr.bf16.mxu0 0
  %7364 = vmatpush1.bf16.msra.mxu0 0
  %7365 = vmatprep.subr.bf16.mxu0 0
  %7366 = vmatpush1.bf16.msra.mxu0 0
  %7367 = vmatprep.subr.bf16.mxu0 0
  %7368 = vmatpush1.bf16.msra.mxu0 0
  %7369 = vmatprep.subr.bf16.mxu0 0
  %7370 = vmatpush1.bf16.msra.mxu0 0
  %7371 = vmatprep.mubr.bf16.mxu0 0
  %7372 = vmatmul.mubr.bf16.gmra.mrb[0].mxu0 %v7338
  %v7373 = vpop.f32.mrb[0].mxu0
  %v7374 = vadd.f32 %v7230, %v7373
  %v7375 = vpop.f32.mrb[0].mxu0
  %v7376 = vadd.f32 %v7232, %v7375
  %v7377 = vpop.f32.mrb[0].mxu0
  %v7378 = vpop.f32.mrb[0].mxu0
  %7379 = vdwg.mxu0
  %7380 = vmatprep.subr.bf16.mxu0 %v6776
  %7381 = vmatpush1.bf16.msra.mxu0 %v6775
  %7382 = vmatprep.subr.bf16.mxu0 %v6780
  %7383 = vmatpush1.bf16.msra.mxu0 %v6779
  %7384 = vmatprep.subr.bf16.mxu0 %v6784
  %7385 = vmatpush1.bf16.msra.mxu0 %v6783
  %7386 = vmatprep.subr.bf16.mxu0 %v6788
  %7387 = vmatpush1.bf16.msra.mxu0 %v6787
  %7388 = vmatprep.subr.bf16.mxu0 %v6792
  %7389 = vmatpush1.bf16.msra.mxu0 %v6791
  %7390 = vmatprep.subr.bf16.mxu0 %v6796
  %7391 = vmatpush1.bf16.msra.mxu0 %v6795
  %7392 = vmatprep.subr.bf16.mxu0 %v6800
  %7393 = vmatpush1.bf16.msra.mxu0 %v6799
  %7394 = vmatprep.subr.bf16.mxu0 %v6804
  %7395 = vmatpush1.bf16.msra.mxu0 %v6803
  %7396 = vmatprep.subr.bf16.mxu0 0
  %7397 = vmatpush1.bf16.msra.mxu0 0
  %7398 = vmatprep.subr.bf16.mxu0 0
  %7399 = vmatpush1.bf16.msra.mxu0 0
  %7400 = vmatprep.subr.bf16.mxu0 0
  %7401 = vmatpush1.bf16.msra.mxu0 0
  %7402 = vmatprep.subr.bf16.mxu0 0
  %7403 = vmatpush1.bf16.msra.mxu0 0
  %7404 = vmatprep.subr.bf16.mxu0 0
  %7405 = vmatpush1.bf16.msra.mxu0 0
  %7406 = vmatprep.subr.bf16.mxu0 0
  %7407 = vmatpush1.bf16.msra.mxu0 0
  %7408 = vmatprep.subr.bf16.mxu0 0
  %7409 = vmatpush1.bf16.msra.mxu0 0
  %7410 = vmatprep.subr.bf16.mxu0 0
  %7411 = vmatpush1.bf16.msra.mxu0 0
  %7412 = vmatprep.mubr.bf16.mxu0 0
  %7413 = vmatmul.mubr.bf16.gmra.mrb[0].mxu0 %v7338
  %v7414 = vpop.f32.mrb[0].mxu0
  %v7415 = vadd.f32 %v7271, %v7414
  %v7416 = vpop.f32.mrb[0].mxu0
  %v7417 = vadd.f32 %v7273, %v7416
  %v7418 = vpop.f32.mrb[0].mxu0
  %v7419 = vpop.f32.mrb[0].mxu0
  %7420 = vdwg.mxu0
  %v7421 = vxor.u32 %v7374, 2147483648
  %v7422 = vmul.f32 %v7421, 1.442695
  %v7423 = vpow.pop %v7422
  %v7424 = vadd.f32 %v7423, 1.0
  %v7425 = vrcp.pop %v7424
  %v7426 = vmul.f32 1.0, %v7425
  %v7427 = vxor.u32 %v7376, 2147483648
  %v7428 = vmul.f32 %v7427, 1.442695
  %v7429 = vpow.pop %v7428
  %v7430 = vadd.f32 %v7429, 1.0
  %v7431 = vrcp.pop %v7430
  %v7432 = vmul.f32 1.0, %v7431
  %v7433 = vtanh.pop %v7415
  %v7434 = vxor.u32 %v7417, 2147483648
  %v7435 = vmul.f32 %v7434, 1.442695
  %v7436 = vpow.pop %v7435
  %v7437 = vadd.f32 %v7436, 1.0
  %v7438 = vrcp.pop %v7437
  %v7439 = vmul.f32 1.0, %v7438
  %v7440 = vmul.f32 %v7432, %v7191
  %v7441 = vmul.f32 %v7426, %v7433
  %v7442 = vadd.f32 %v7440, %v7441
  %v7443 = vtanh.pop %v7442
  %v7444 = vmul.f32 %v7439, %v7443
  %v7445 = vpack.c.bf16 %v7444, %v7444
  %7446 = vmatprep.subr.bf16.mxu0 %v6279
  %7447 = vmatpush1.bf16.msra.mxu0 %v6278
  %7448 = vmatprep.subr.bf16.mxu0 %v6283
  %7449 = vmatpush1.bf16.msra.mxu0 %v6282
  %7450 = vmatprep.subr.bf16.mxu0 %v6287
  %7451 = vmatpush1.bf16.msra.mxu0 %v6286
  %7452 = vmatprep.subr.bf16.mxu0 %v6291
  %7453 = vmatpush1.bf16.msra.mxu0 %v6290
  %7454 = vmatprep.subr.bf16.mxu0 %v6295
  %7455 = vmatpush1.bf16.msra.mxu0 %v6294
  %7456 = vmatprep.subr.bf16.mxu0 %v6299
  %7457 = vmatpush1.bf16.msra.mxu0 %v6298
  %7458 = vmatprep.subr.bf16.mxu0 %v6303
  %7459 = vmatpush1.bf16.msra.mxu0 %v6302
  %7460 = vmatprep.subr.bf16.mxu0 %v6307
  %7461 = vmatpush1.bf16.msra.mxu0 %v6306
  %7462 = vmatprep.subr.bf16.mxu0 0
  %7463 = vmatpush1.bf16.msra.mxu0 0
  %7464 = vmatprep.subr.bf16.mxu0 0
  %7465 = vmatpush1.bf16.msra.mxu0 0
  %7466 = vmatprep.subr.bf16.mxu0 0
  %7467 = vmatpush1.bf16.msra.mxu0 0
  %7468 = vmatprep.subr.bf16.mxu0 0
  %7469 = vmatpush1.bf16.msra.mxu0 0
  %7470 = vmatprep.subr.bf16.mxu0 0
  %7471 = vmatpush1.bf16.msra.mxu0 0
  %7472 = vmatprep.subr.bf16.mxu0 0
  %7473 = vmatpush1.bf16.msra.mxu0 0
  %7474 = vmatprep.subr.bf16.mxu0 0
  %7475 = vmatpush1.bf16.msra.mxu0 0
  %7476 = vmatprep.subr.bf16.mxu0 0
  %7477 = vmatpush1.bf16.msra.mxu0 0
  %7478 = vmatprep.mubr.bf16.mxu0 0
  %7479 = vmatmul.mubr.bf16.gmra.mrb[0].mxu0 %v7445
  %v7480 = vpop.f32.mrb[0].mxu0
  %v7481 = vadd.f32 %v6160, %v7480
  %v7482 = vpop.f32.mrb[0].mxu0
  %v7483 = vadd.f32 %v6164, %v7482
  %v7484 = vpop.f32.mrb[0].mxu0
  %v7485 = vpop.f32.mrb[0].mxu0
  %7486 = vdwg.mxu0
  %7487 = vmatprep.subr.bf16.mxu0 %v6281
  %7488 = vmatpush1.bf16.msra.mxu0 %v6280
  %7489 = vmatprep.subr.bf16.mxu0 %v6285
  %7490 = vmatpush1.bf16.msra.mxu0 %v6284
  %7491 = vmatprep.subr.bf16.mxu0 %v6289
  %7492 = vmatpush1.bf16.msra.mxu0 %v6288
  %7493 = vmatprep.subr.bf16.mxu0 %v6293
  %7494 = vmatpush1.bf16.msra.mxu0 %v6292
  %7495 = vmatprep.subr.bf16.mxu0 %v6297
  %7496 = vmatpush1.bf16.msra.mxu0 %v6296
  %7497 = vmatprep.subr.bf16.mxu0 %v6301
  %7498 = vmatpush1.bf16.msra.mxu0 %v6300
  %7499 = vmatprep.subr.bf16.mxu0 %v6305
  %7500 = vmatpush1.bf16.msra.mxu0 %v6304
  %7501 = vmatprep.subr.bf16.mxu0 %v6309
  %7502 = vmatpush1.bf16.msra.mxu0 %v6308
  %7503 = vmatprep.subr.bf16.mxu0 0
  %7504 = vmatpush1.bf16.msra.mxu0 0
  %7505 = vmatprep.subr.bf16.mxu0 0
  %7506 = vmatpush1.bf16.msra.mxu0 0
  %7507 = vmatprep.subr.bf16.mxu0 0
  %7508 = vmatpush1.bf16.msra.mxu0 0
  %7509 = vmatprep.subr.bf16.mxu0 0
  %7510 = vmatpush1.bf16.msra.mxu0 0
  %7511 = vmatprep.subr.bf16.mxu0 0
  %7512 = vmatpush1.bf16.msra.mxu0 0
  %7513 = vmatprep.subr.bf16.mxu0 0
  %7514 = vmatpush1.bf16.msra.mxu0 0
  %7515 = vmatprep.subr.bf16.mxu0 0
  %7516 = vmatpush1.bf16.msra.mxu0 0
  %7517 = vmatprep.subr.bf16.mxu0 0
  %7518 = vmatpush1.bf16.msra.mxu0 0
  %7519 = vmatprep.mubr.bf16.mxu0 0
  %7520 = vmatmul.mubr.bf16.gmra.mrb[0].mxu0 %v7445
  %v7521 = vpop.f32.mrb[0].mxu0
  %v7522 = vadd.f32 %v6168, %v7521
  %v7523 = vpop.f32.mrb[0].mxu0
  %v7524 = vadd.f32 %v6172, %v7523
  %v7525 = vpop.f32.mrb[0].mxu0
  %v7526 = vpop.f32.mrb[0].mxu0
  %7527 = vdwg.mxu0
  %7528 = vmatprep.subr.bf16.mxu0 0
  %7529 = vmatpush1.bf16.msra.mxu0 %v6485
  %7530 = vmatprep.subr.bf16.mxu0 0
  %7531 = vmatpush1.bf16.msra.mxu0 %v6486
  %7532 = vmatprep.subr.bf16.mxu0 0
  %7533 = vmatpush1.bf16.msra.mxu0 %v6487
  %7534 = vmatprep.subr.bf16.mxu0 0
  %7535 = vmatpush1.bf16.msra.mxu0 %v6488
  %7536 = vmatprep.subr.bf16.mxu0 0
  %7537 = vmatpush1.bf16.msra.mxu0 %v6489
  %7538 = vmatprep.subr.bf16.mxu0 0
  %7539 = vmatpush1.bf16.msra.mxu0 %v6490
  %7540 = vmatprep.subr.bf16.mxu0 0
  %7541 = vmatpush1.bf16.msra.mxu0 %v6491
  %7542 = vmatprep.subr.bf16.mxu0 0
  %7543 = vmatpush1.bf16.msra.mxu0 %v6492
  %7544 = vmatprep.subr.bf16.mxu0 0
  %7545 = vmatpush1.bf16.msra.mxu0 0
  %7546 = vmatprep.subr.bf16.mxu0 0
  %7547 = vmatpush1.bf16.msra.mxu0 0
  %7548 = vmatprep.subr.bf16.mxu0 0
  %7549 = vmatpush1.bf16.msra.mxu0 0
  %7550 = vmatprep.subr.bf16.mxu0 0
  %7551 = vmatpush1.bf16.msra.mxu0 0
  %7552 = vmatprep.subr.bf16.mxu0 0
  %7553 = vmatpush1.bf16.msra.mxu0 0
  %7554 = vmatprep.subr.bf16.mxu0 0
  %7555 = vmatpush1.bf16.msra.mxu0 0
  %7556 = vmatprep.subr.bf16.mxu0 0
  %7557 = vmatpush1.bf16.msra.mxu0 0
  %7558 = vmatprep.subr.bf16.mxu0 0
  %7559 = vmatpush1.bf16.msra.mxu0 0
  %7560 = vmatprep.mubr.bf16.mxu0 0
  %7561 = vmatmul.mubr.bf16.gmra.mrb[0].mxu0 %v7445
  %v7562 = vpop.f32.mrb[0].mxu0
  %v7563 = vadd.f32 %v6176, %v7562
  %v7564 = vpop.f32.mrb[0].mxu0
  %v7565 = vpop.f32.mrb[0].mxu0
  %v7566 = vpop.f32.mrb[0].mxu0
  %7567 = vdwg.mxu0
  %7568 = vmax.xlane.f32.xlu0 %v7563
  %v7569 = vpop.xlane.xlu0 %7568
  %vm7570 = vcmp.eq.f32.partialorder %v7563, %v7569
  %v7571 = vsel %vm7570, %v6105, 128
  %v7572 = vand.u32 %v7571, 65535
  %v7573 = vshra.s32 %v7571, 16
  %v7574 = vcvt.s32.f32 %v7572
  %v7575 = vcvt.s32.f32 %v7573
  %7576 = vmin.xlane.f32.xlu0 %v7575
  %v7577 = vpop.xlane.xlu0 %7576
  %vm7578 = vcmp.eq.f32.partialorder %v7575, %v7577
  %v7579 = vsel %vm7578, %v7574, inf
  %7580 = vmin.xlane.f32.xlu0 %v7579
  %v7581 = vpop.xlane.xlu0 %7580
  %v7582 = vcvt.f32.s32 %v7581
  %v7583 = vcvt.f32.s32 %v7577
  %v7584 = vshll.u32 %v7583, 16
  %v7585 = vadd.s32 %v7584, %v7582
  %vm7586 = vcmp.eq.s32.totalorder %v6105, %v7585
  %v7587 = vsel %vm7586, 1, 0
  %v7588 = vcvt.s32.f32 %v7587
  %v7589 = vpack.c.bf16 %v7588, %v7588
  %7590 = vmatprep.subr.bf16.mxu0 %v6774
  %7591 = vmatpush1.bf16.msra.mxu0 %v6773
  %7592 = vmatprep.subr.bf16.mxu0 %v6778
  %7593 = vmatpush1.bf16.msra.mxu0 %v6777
  %7594 = vmatprep.subr.bf16.mxu0 %v6782
  %7595 = vmatpush1.bf16.msra.mxu0 %v6781
  %7596 = vmatprep.subr.bf16.mxu0 %v6786
  %7597 = vmatpush1.bf16.msra.mxu0 %v6785
  %7598 = vmatprep.subr.bf16.mxu0 %v6790
  %7599 = vmatpush1.bf16.msra.mxu0 %v6789
  %7600 = vmatprep.subr.bf16.mxu0 %v6794
  %7601 = vmatpush1.bf16.msra.mxu0 %v6793
  %7602 = vmatprep.subr.bf16.mxu0 %v6798
  %7603 = vmatpush1.bf16.msra.mxu0 %v6797
  %7604 = vmatprep.subr.bf16.mxu0 %v6802
  %7605 = vmatpush1.bf16.msra.mxu0 %v6801
  %7606 = vmatprep.subr.bf16.mxu0 0
  %7607 = vmatpush1.bf16.msra.mxu0 0
  %7608 = vmatprep.subr.bf16.mxu0 0
  %7609 = vmatpush1.bf16.msra.mxu0 0
  %7610 = vmatprep.subr.bf16.mxu0 0
  %7611 = vmatpush1.bf16.msra.mxu0 0
  %7612 = vmatprep.subr.bf16.mxu0 0
  %7613 = vmatpush1.bf16.msra.mxu0 0
  %7614 = vmatprep.subr.bf16.mxu0 0
  %7615 = vmatpush1.bf16.msra.mxu0 0
  %7616 = vmatprep.subr.bf16.mxu0 0
  %7617 = vmatpush1.bf16.msra.mxu0 0
  %7618 = vmatprep.subr.bf16.mxu0 0
  %7619 = vmatpush1.bf16.msra.mxu0 0
  %7620 = vmatprep.subr.bf16.mxu0 0
  %7621 = vmatpush1.bf16.msra.mxu0 0
  %7622 = vmatprep.mubr.bf16.mxu0 0
  %7623 = vmatmul.mubr.bf16.gmra.mrb[0].mxu0 %v7589
  %v7624 = vpop.f32.mrb[0].mxu0
  %v7625 = vadd.f32 %v7481, %v7624
  %v7626 = vpop.f32.mrb[0].mxu0
  %v7627 = vadd.f32 %v7483, %v7626
  %v7628 = vpop.f32.mrb[0].mxu0
  %v7629 = vpop.f32.mrb[0].mxu0
  %7630 = vdwg.mxu0
  %7631 = vmatprep.subr.bf16.mxu0 %v6776
  %7632 = vmatpush1.bf16.msra.mxu0 %v6775
  %7633 = vmatprep.subr.bf16.mxu0 %v6780
  %7634 = vmatpush1.bf16.msra.mxu0 %v6779
  %7635 = vmatprep.subr.bf16.mxu0 %v6784
  %7636 = vmatpush1.bf16.msra.mxu0 %v6783
  %7637 = vmatprep.subr.bf16.mxu0 %v6788
  %7638 = vmatpush1.bf16.msra.mxu0 %v6787
  %7639 = vmatprep.subr.bf16.mxu0 %v6792
  %7640 = vmatpush1.bf16.msra.mxu0 %v6791
  %7641 = vmatprep.subr.bf16.mxu0 %v6796
  %7642 = vmatpush1.bf16.msra.mxu0 %v6795
  %7643 = vmatprep.subr.bf16.mxu0 %v6800
  %7644 = vmatpush1.bf16.msra.mxu0 %v6799
  %7645 = vmatprep.subr.bf16.mxu0 %v6804
  %7646 = vmatpush1.bf16.msra.mxu0 %v6803
  %7647 = vmatprep.subr.bf16.mxu0 0
  %7648 = vmatpush1.bf16.msra.mxu0 0
  %7649 = vmatprep.subr.bf16.mxu0 0
  %7650 = vmatpush1.bf16.msra.mxu0 0
  %7651 = vmatprep.subr.bf16.mxu0 0
  %7652 = vmatpush1.bf16.msra.mxu0 0
  %7653 = vmatprep.subr.bf16.mxu0 0
  %7654 = vmatpush1.bf16.msra.mxu0 0
  %7655 = vmatprep.subr.bf16.mxu0 0
  %7656 = vmatpush1.bf16.msra.mxu0 0
  %7657 = vmatprep.subr.bf16.mxu0 0
  %7658 = vmatpush1.bf16.msra.mxu0 0
  %7659 = vmatprep.subr.bf16.mxu0 0
  %7660 = vmatpush1.bf16.msra.mxu0 0
  %7661 = vmatprep.subr.bf16.mxu0 0
  %7662 = vmatpush1.bf16.msra.mxu0 0
  %7663 = vmatprep.mubr.bf16.mxu0 0
  %7664 = vmatmul.mubr.bf16.gmra.mrb[0].mxu0 %v7589
  %v7665 = vpop.f32.mrb[0].mxu0
  %v7666 = vadd.f32 %v7522, %v7665
  %v7667 = vpop.f32.mrb[0].mxu0
  %v7668 = vadd.f32 %v7524, %v7667
  %v7669 = vpop.f32.mrb[0].mxu0
  %v7670 = vpop.f32.mrb[0].mxu0
  %7671 = vdwg.mxu0
  %v7672 = vxor.u32 %v7625, 2147483648
  %v7673 = vmul.f32 %v7672, 1.442695
  %v7674 = vpow.pop %v7673
  %v7675 = vadd.f32 %v7674, 1.0
  %v7676 = vrcp.pop %v7675
  %v7677 = vmul.f32 1.0, %v7676
  %v7678 = vxor.u32 %v7627, 2147483648
  %v7679 = vmul.f32 %v7678, 1.442695
  %v7680 = vpow.pop %v7679
  %v7681 = vadd.f32 %v7680, 1.0
  %v7682 = vrcp.pop %v7681
  %v7683 = vmul.f32 1.0, %v7682
  %v7684 = vtanh.pop %v7666
  %v7685 = vxor.u32 %v7668, 2147483648
  %v7686 = vmul.f32 %v7685, 1.442695
  %v7687 = vpow.pop %v7686
  %v7688 = vadd.f32 %v7687, 1.0
  %v7689 = vrcp.pop %v7688
  %v7690 = vmul.f32 1.0, %v7689
  %v7691 = vmul.f32 %v7683, %v7442
  %v7692 = vmul.f32 %v7677, %v7684
  %v7693 = vadd.f32 %v7691, %v7692
  %v7694 = vtanh.pop %v7693
  %v7695 = vmul.f32 %v7690, %v7694
  %v7696 = vpack.c.bf16 %v7695, %v7695
  %7697 = vmatprep.subr.bf16.mxu0 %v6279
  %7698 = vmatpush1.bf16.msra.mxu0 %v6278
  %7699 = vmatprep.subr.bf16.mxu0 %v6283
  %7700 = vmatpush1.bf16.msra.mxu0 %v6282
  %7701 = vmatprep.subr.bf16.mxu0 %v6287
  %7702 = vmatpush1.bf16.msra.mxu0 %v6286
  %7703 = vmatprep.subr.bf16.mxu0 %v6291
  %7704 = vmatpush1.bf16.msra.mxu0 %v6290
  %7705 = vmatprep.subr.bf16.mxu0 %v6295
  %7706 = vmatpush1.bf16.msra.mxu0 %v6294
  %7707 = vmatprep.subr.bf16.mxu0 %v6299
  %7708 = vmatpush1.bf16.msra.mxu0 %v6298
  %7709 = vmatprep.subr.bf16.mxu0 %v6303
  %7710 = vmatpush1.bf16.msra.mxu0 %v6302
  %7711 = vmatprep.subr.bf16.mxu0 %v6307
  %7712 = vmatpush1.bf16.msra.mxu0 %v6306
  %7713 = vmatprep.subr.bf16.mxu0 0
  %7714 = vmatpush1.bf16.msra.mxu0 0
  %7715 = vmatprep.subr.bf16.mxu0 0
  %7716 = vmatpush1.bf16.msra.mxu0 0
  %7717 = vmatprep.subr.bf16.mxu0 0
  %7718 = vmatpush1.bf16.msra.mxu0 0
  %7719 = vmatprep.subr.bf16.mxu0 0
  %7720 = vmatpush1.bf16.msra.mxu0 0
  %7721 = vmatprep.subr.bf16.mxu0 0
  %7722 = vmatpush1.bf16.msra.mxu0 0
  %7723 = vmatprep.subr.bf16.mxu0 0
  %7724 = vmatpush1.bf16.msra.mxu0 0
  %7725 = vmatprep.subr.bf16.mxu0 0
  %7726 = vmatpush1.bf16.msra.mxu0 0
  %7727 = vmatprep.subr.bf16.mxu0 0
  %7728 = vmatpush1.bf16.msra.mxu0 0
  %7729 = vmatprep.mubr.bf16.mxu0 0
  %7730 = vmatmul.mubr.bf16.gmra.mrb[0].mxu0 %v7696
  %v7731 = vpop.f32.mrb[0].mxu0
  %v7732 = vadd.f32 %v6160, %v7731
  %v7733 = vpop.f32.mrb[0].mxu0
  %v7734 = vadd.f32 %v6164, %v7733
  %v7735 = vpop.f32.mrb[0].mxu0
  %v7736 = vpop.f32.mrb[0].mxu0
  %7737 = vdwg.mxu0
  %7738 = vmatprep.subr.bf16.mxu0 %v6281
  %7739 = vmatpush1.bf16.msra.mxu0 %v6280
  %7740 = vmatprep.subr.bf16.mxu0 %v6285
  %7741 = vmatpush1.bf16.msra.mxu0 %v6284
  %7742 = vmatprep.subr.bf16.mxu0 %v6289
  %7743 = vmatpush1.bf16.msra.mxu0 %v6288
  %7744 = vmatprep.subr.bf16.mxu0 %v6293
  %7745 = vmatpush1.bf16.msra.mxu0 %v6292
  %7746 = vmatprep.subr.bf16.mxu0 %v6297
  %7747 = vmatpush1.bf16.msra.mxu0 %v6296
  %7748 = vmatprep.subr.bf16.mxu0 %v6301
  %7749 = vmatpush1.bf16.msra.mxu0 %v6300
  %7750 = vmatprep.subr.bf16.mxu0 %v6305
  %7751 = vmatpush1.bf16.msra.mxu0 %v6304
  %7752 = vmatprep.subr.bf16.mxu0 %v6309
  %7753 = vmatpush1.bf16.msra.mxu0 %v6308
  %7754 = vmatprep.subr.bf16.mxu0 0
  %7755 = vmatpush1.bf16.msra.mxu0 0
  %7756 = vmatprep.subr.bf16.mxu0 0
  %7757 = vmatpush1.bf16.msra.mxu0 0
  %7758 = vmatprep.subr.bf16.mxu0 0
  %7759 = vmatpush1.bf16.msra.mxu0 0
  %7760 = vmatprep.subr.bf16.mxu0 0
  %7761 = vmatpush1.bf16.msra.mxu0 0
  %7762 = vmatprep.subr.bf16.mxu0 0
  %7763 = vmatpush1.bf16.msra.mxu0 0
  %7764 = vmatprep.subr.bf16.mxu0 0
  %7765 = vmatpush1.bf16.msra.mxu0 0
  %7766 = vmatprep.subr.bf16.mxu0 0
  %7767 = vmatpush1.bf16.msra.mxu0 0
  %7768 = vmatprep.subr.bf16.mxu0 0
  %7769 = vmatpush1.bf16.msra.mxu0 0
  %7770 = vmatprep.mubr.bf16.mxu0 0
  %7771 = vmatmul.mubr.bf16.gmra.mrb[0].mxu0 %v7696
  %v7772 = vpop.f32.mrb[0].mxu0
  %v7773 = vadd.f32 %v6168, %v7772
  %v7774 = vpop.f32.mrb[0].mxu0
  %v7775 = vadd.f32 %v6172, %v7774
  %v7776 = vpop.f32.mrb[0].mxu0
  %v7777 = vpop.f32.mrb[0].mxu0
  %7778 = vdwg.mxu0
  %7779 = vmatprep.subr.bf16.mxu0 0
  %7780 = vmatpush1.bf16.msra.mxu0 %v6485
  %7781 = vmatprep.subr.bf16.mxu0 0
  %7782 = vmatpush1.bf16.msra.mxu0 %v6486
  %7783 = vmatprep.subr.bf16.mxu0 0
  %7784 = vmatpush1.bf16.msra.mxu0 %v6487
  %7785 = vmatprep.subr.bf16.mxu0 0
  %7786 = vmatpush1.bf16.msra.mxu0 %v6488
  %7787 = vmatprep.subr.bf16.mxu0 0
  %7788 = vmatpush1.bf16.msra.mxu0 %v6489
  %7789 = vmatprep.subr.bf16.mxu0 0
  %7790 = vmatpush1.bf16.msra.mxu0 %v6490
  %7791 = vmatprep.subr.bf16.mxu0 0
  %7792 = vmatpush1.bf16.msra.mxu0 %v6491
  %7793 = vmatprep.subr.bf16.mxu0 0
  %7794 = vmatpush1.bf16.msra.mxu0 %v6492
  %7795 = vmatprep.subr.bf16.mxu0 0
  %7796 = vmatpush1.bf16.msra.mxu0 0
  %7797 = vmatprep.subr.bf16.mxu0 0
  %7798 = vmatpush1.bf16.msra.mxu0 0
  %7799 = vmatprep.subr.bf16.mxu0 0
  %7800 = vmatpush1.bf16.msra.mxu0 0
  %7801 = vmatprep.subr.bf16.mxu0 0
  %7802 = vmatpush1.bf16.msra.mxu0 0
  %7803 = vmatprep.subr.bf16.mxu0 0
  %7804 = vmatpush1.bf16.msra.mxu0 0
  %7805 = vmatprep.subr.bf16.mxu0 0
  %7806 = vmatpush1.bf16.msra.mxu0 0
  %7807 = vmatprep.subr.bf16.mxu0 0
  %7808 = vmatpush1.bf16.msra.mxu0 0
  %7809 = vmatprep.subr.bf16.mxu0 0
  %7810 = vmatpush1.bf16.msra.mxu0 0
  %7811 = vmatprep.mubr.bf16.mxu0 0
  %7812 = vmatmul.mubr.bf16.gmra.mrb[0].mxu0 %v7696
  %v7813 = vpop.f32.mrb[0].mxu0
  %v7814 = vadd.f32 %v6176, %v7813
  %v7815 = vpop.f32.mrb[0].mxu0
  %v7816 = vpop.f32.mrb[0].mxu0
  %v7817 = vpop.f32.mrb[0].mxu0
  %7818 = vdwg.mxu0
  %7819 = vmax.xlane.f32.xlu0 %v7814
  %v7820 = vpop.xlane.xlu0 %7819
  %vm7821 = vcmp.eq.f32.partialorder %v7814, %v7820
  %v7822 = vsel %vm7821, %v6105, 128
  %v7823 = vand.u32 %v7822, 65535
  %v7824 = vshra.s32 %v7822, 16
  %v7825 = vcvt.s32.f32 %v7823
  %v7826 = vcvt.s32.f32 %v7824
  %7827 = vmin.xlane.f32.xlu0 %v7826
  %v7828 = vpop.xlane.xlu0 %7827
  %vm7829 = vcmp.eq.f32.partialorder %v7826, %v7828
  %v7830 = vsel %vm7829, %v7825, inf
  %7831 = vmin.xlane.f32.xlu0 %v7830
  %v7832 = vpop.xlane.xlu0 %7831
  %v7833 = vcvt.f32.s32 %v7832
  %v7834 = vcvt.f32.s32 %v7828
  %v7835 = vshll.u32 %v7834, 16
  %v7836 = vadd.s32 %v7835, %v7833
  %vm7837 = vcmp.eq.s32.totalorder %v6105, %v7836
  %v7838 = vsel %vm7837, 1, 0
  %v7839 = vcvt.s32.f32 %v7838
  %v7840 = vpack.c.bf16 %v7839, %v7839
  %7841 = vmatprep.subr.bf16.mxu0 %v6774
  %7842 = vmatpush1.bf16.msra.mxu0 %v6773
  %7843 = vmatprep.subr.bf16.mxu0 %v6778
  %7844 = vmatpush1.bf16.msra.mxu0 %v6777
  %7845 = vmatprep.subr.bf16.mxu0 %v6782
  %7846 = vmatpush1.bf16.msra.mxu0 %v6781
  %7847 = vmatprep.subr.bf16.mxu0 %v6786
  %7848 = vmatpush1.bf16.msra.mxu0 %v6785
  %7849 = vmatprep.subr.bf16.mxu0 %v6790
  %7850 = vmatpush1.bf16.msra.mxu0 %v6789
  %7851 = vmatprep.subr.bf16.mxu0 %v6794
  %7852 = vmatpush1.bf16.msra.mxu0 %v6793
  %7853 = vmatprep.subr.bf16.mxu0 %v6798
  %7854 = vmatpush1.bf16.msra.mxu0 %v6797
  %7855 = vmatprep.subr.bf16.mxu0 %v6802
  %7856 = vmatpush1.bf16.msra.mxu0 %v6801
  %7857 = vmatprep.subr.bf16.mxu0 0
  %7858 = vmatpush1.bf16.msra.mxu0 0
  %7859 = vmatprep.subr.bf16.mxu0 0
  %7860 = vmatpush1.bf16.msra.mxu0 0
  %7861 = vmatprep.subr.bf16.mxu0 0
  %7862 = vmatpush1.bf16.msra.mxu0 0
  %7863 = vmatprep.subr.bf16.mxu0 0
  %7864 = vmatpush1.bf16.msra.mxu0 0
  %7865 = vmatprep.subr.bf16.mxu0 0
  %7866 = vmatpush1.bf16.msra.mxu0 0
  %7867 = vmatprep.subr.bf16.mxu0 0
  %7868 = vmatpush1.bf16.msra.mxu0 0
  %7869 = vmatprep.subr.bf16.mxu0 0
  %7870 = vmatpush1.bf16.msra.mxu0 0
  %7871 = vmatprep.subr.bf16.mxu0 0
  %7872 = vmatpush1.bf16.msra.mxu0 0
  %7873 = vmatprep.mubr.bf16.mxu0 0
  %7874 = vmatmul.mubr.bf16.gmra.mrb[0].mxu0 %v7840
  %v7875 = vpop.f32.mrb[0].mxu0
  %v7876 = vadd.f32 %v7732, %v7875
  %v7877 = vpop.f32.mrb[0].mxu0
  %v7878 = vadd.f32 %v7734, %v7877
  %v7879 = vpop.f32.mrb[0].mxu0
  %v7880 = vpop.f32.mrb[0].mxu0
  %7881 = vdwg.mxu0
  %7882 = vmatprep.subr.bf16.mxu0 %v6776
  %7883 = vmatpush1.bf16.msra.mxu0 %v6775
  %7884 = vmatprep.subr.bf16.mxu0 %v6780
  %7885 = vmatpush1.bf16.msra.mxu0 %v6779
  %7886 = vmatprep.subr.bf16.mxu0 %v6784
  %7887 = vmatpush1.bf16.msra.mxu0 %v6783
  %7888 = vmatprep.subr.bf16.mxu0 %v6788
  %7889 = vmatpush1.bf16.msra.mxu0 %v6787
  %7890 = vmatprep.subr.bf16.mxu0 %v6792
  %7891 = vmatpush1.bf16.msra.mxu0 %v6791
  %7892 = vmatprep.subr.bf16.mxu0 %v6796
  %7893 = vmatpush1.bf16.msra.mxu0 %v6795
  %7894 = vmatprep.subr.bf16.mxu0 %v6800
  %7895 = vmatpush1.bf16.msra.mxu0 %v6799
  %7896 = vmatprep.subr.bf16.mxu0 %v6804
  %7897 = vmatpush1.bf16.msra.mxu0 %v6803
  %7898 = vmatprep.subr.bf16.mxu0 0
  %7899 = vmatpush1.bf16.msra.mxu0 0
  %7900 = vmatprep.subr.bf16.mxu0 0
  %7901 = vmatpush1.bf16.msra.mxu0 0
  %7902 = vmatprep.subr.bf16.mxu0 0
  %7903 = vmatpush1.bf16.msra.mxu0 0
  %7904 = vmatprep.subr.bf16.mxu0 0
  %7905 = vmatpush1.bf16.msra.mxu0 0
  %7906 = vmatprep.subr.bf16.mxu0 0
  %7907 = vmatpush1.bf16.msra.mxu0 0
  %7908 = vmatprep.subr.bf16.mxu0 0
  %7909 = vmatpush1.bf16.msra.mxu0 0
  %7910 = vmatprep.subr.bf16.mxu0 0
  %7911 = vmatpush1.bf16.msra.mxu0 0
  %7912 = vmatprep.subr.bf16.mxu0 0
  %7913 = vmatpush1.bf16.msra.mxu0 0
  %7914 = vmatprep.mubr.bf16.mxu0 0
  %7915 = vmatmul.mubr.bf16.gmra.mrb[0].mxu0 %v7840
  %v7916 = vpop.f32.mrb[0].mxu0
  %v7917 = vadd.f32 %v7773, %v7916
  %v7918 = vpop.f32.mrb[0].mxu0
  %v7919 = vadd.f32 %v7775, %v7918
  %v7920 = vpop.f32.mrb[0].mxu0
  %v7921 = vpop.f32.mrb[0].mxu0
  %7922 = vdwg.mxu0
  %v7923 = vxor.u32 %v7876, 2147483648
  %v7924 = vmul.f32 %v7923, 1.442695
  %v7925 = vpow.pop %v7924
  %v7926 = vadd.f32 %v7925, 1.0
  %v7927 = vrcp.pop %v7926
  %v7928 = vmul.f32 1.0, %v7927
  %v7929 = vxor.u32 %v7878, 2147483648
  %v7930 = vmul.f32 %v7929, 1.442695
  %v7931 = vpow.pop %v7930
  %v7932 = vadd.f32 %v7931, 1.0
  %v7933 = vrcp.pop %v7932
  %v7934 = vmul.f32 1.0, %v7933
  %v7935 = vtanh.pop %v7917
  %v7936 = vxor.u32 %v7919, 2147483648
  %v7937 = vmul.f32 %v7936, 1.442695
  %v7938 = vpow.pop %v7937
  %v7939 = vadd.f32 %v7938, 1.0
  %v7940 = vrcp.pop %v7939
  %v7941 = vmul.f32 1.0, %v7940
  %v7942 = vmul.f32 %v7934, %v7693
  %v7943 = vmul.f32 %v7928, %v7935
  %v7944 = vadd.f32 %v7942, %v7943
  %v7945 = vtanh.pop %v7944
  %v7946 = vmul.f32 %v7941, %v7945
  %v7947 = vpack.c.bf16 %v7946, %v7946
  %7948 = vmatprep.subr.bf16.mxu0 %v6279
  %7949 = vmatpush1.bf16.msra.mxu0 %v6278
  %7950 = vmatprep.subr.bf16.mxu0 %v6283
  %7951 = vmatpush1.bf16.msra.mxu0 %v6282
  %7952 = vmatprep.subr.bf16.mxu0 %v6287
  %7953 = vmatpush1.bf16.msra.mxu0 %v6286
  %7954 = vmatprep.subr.bf16.mxu0 %v6291
  %7955 = vmatpush1.bf16.msra.mxu0 %v6290
  %7956 = vmatprep.subr.bf16.mxu0 %v6295
  %7957 = vmatpush1.bf16.msra.mxu0 %v6294
  %7958 = vmatprep.subr.bf16.mxu0 %v6299
  %7959 = vmatpush1.bf16.msra.mxu0 %v6298
  %7960 = vmatprep.subr.bf16.mxu0 %v6303
  %7961 = vmatpush1.bf16.msra.mxu0 %v6302
  %7962 = vmatprep.subr.bf16.mxu0 %v6307
  %7963 = vmatpush1.bf16.msra.mxu0 %v6306
  %7964 = vmatprep.subr.bf16.mxu0 0
  %7965 = vmatpush1.bf16.msra.mxu0 0
  %7966 = vmatprep.subr.bf16.mxu0 0
  %7967 = vmatpush1.bf16.msra.mxu0 0
  %7968 = vmatprep.subr.bf16.mxu0 0
  %7969 = vmatpush1.bf16.msra.mxu0 0
  %7970 = vmatprep.subr.bf16.mxu0 0
  %7971 = vmatpush1.bf16.msra.mxu0 0
  %7972 = vmatprep.subr.bf16.mxu0 0
  %7973 = vmatpush1.bf16.msra.mxu0 0
  %7974 = vmatprep.subr.bf16.mxu0 0
  %7975 = vmatpush1.bf16.msra.mxu0 0
  %7976 = vmatprep.subr.bf16.mxu0 0
  %7977 = vmatpush1.bf16.msra.mxu0 0
  %7978 = vmatprep.subr.bf16.mxu0 0
  %7979 = vmatpush1.bf16.msra.mxu0 0
  %7980 = vmatprep.mubr.bf16.mxu0 0
  %7981 = vmatmul.mubr.bf16.gmra.mrb[0].mxu0 %v7947
  %v7982 = vpop.f32.mrb[0].mxu0
  %v7983 = vadd.f32 %v6160, %v7982
  %v7984 = vpop.f32.mrb[0].mxu0
  %v7985 = vadd.f32 %v6164, %v7984
  %v7986 = vpop.f32.mrb[0].mxu0
  %v7987 = vpop.f32.mrb[0].mxu0
  %7988 = vdwg.mxu0
  %7989 = vmatprep.subr.bf16.mxu0 %v6281
  %7990 = vmatpush1.bf16.msra.mxu0 %v6280
  %7991 = vmatprep.subr.bf16.mxu0 %v6285
  %7992 = vmatpush1.bf16.msra.mxu0 %v6284
  %7993 = vmatprep.subr.bf16.mxu0 %v6289
  %7994 = vmatpush1.bf16.msra.mxu0 %v6288
  %7995 = vmatprep.subr.bf16.mxu0 %v6293
  %7996 = vmatpush1.bf16.msra.mxu0 %v6292
  %7997 = vmatprep.subr.bf16.mxu0 %v6297
  %7998 = vmatpush1.bf16.msra.mxu0 %v6296
  %7999 = vmatprep.subr.bf16.mxu0 %v6301
  %8000 = vmatpush1.bf16.msra.mxu0 %v6300
  %8001 = vmatprep.subr.bf16.mxu0 %v6305
  %8002 = vmatpush1.bf16.msra.mxu0 %v6304
  %8003 = vmatprep.subr.bf16.mxu0 %v6309
  %8004 = vmatpush1.bf16.msra.mxu0 %v6308
  %8005 = vmatprep.subr.bf16.mxu0 0
  %8006 = vmatpush1.bf16.msra.mxu0 0
  %8007 = vmatprep.subr.bf16.mxu0 0
  %8008 = vmatpush1.bf16.msra.mxu0 0
  %8009 = vmatprep.subr.bf16.mxu0 0
  %8010 = vmatpush1.bf16.msra.mxu0 0
  %8011 = vmatprep.subr.bf16.mxu0 0
  %8012 = vmatpush1.bf16.msra.mxu0 0
  %8013 = vmatprep.subr.bf16.mxu0 0
  %8014 = vmatpush1.bf16.msra.mxu0 0
  %8015 = vmatprep.subr.bf16.mxu0 0
  %8016 = vmatpush1.bf16.msra.mxu0 0
  %8017 = vmatprep.subr.bf16.mxu0 0
  %8018 = vmatpush1.bf16.msra.mxu0 0
  %8019 = vmatprep.subr.bf16.mxu0 0
  %8020 = vmatpush1.bf16.msra.mxu0 0
  %8021 = vmatprep.mubr.bf16.mxu0 0
  %8022 = vmatmul.mubr.bf16.gmra.mrb[0].mxu0 %v7947
  %v8023 = vpop.f32.mrb[0].mxu0
  %v8024 = vadd.f32 %v6168, %v8023
  %v8025 = vpop.f32.mrb[0].mxu0
  %v8026 = vadd.f32 %v6172, %v8025
  %v8027 = vpop.f32.mrb[0].mxu0
  %v8028 = vpop.f32.mrb[0].mxu0
  %8029 = vdwg.mxu0
  %8030 = vmatprep.subr.bf16.mxu0 0
  %8031 = vmatpush1.bf16.msra.mxu0 %v6485
  %8032 = vmatprep.subr.bf16.mxu0 0
  %8033 = vmatpush1.bf16.msra.mxu0 %v6486
  %8034 = vmatprep.subr.bf16.mxu0 0
  %8035 = vmatpush1.bf16.msra.mxu0 %v6487
  %8036 = vmatprep.subr.bf16.mxu0 0
  %8037 = vmatpush1.bf16.msra.mxu0 %v6488
  %8038 = vmatprep.subr.bf16.mxu0 0
  %8039 = vmatpush1.bf16.msra.mxu0 %v6489
  %8040 = vmatprep.subr.bf16.mxu0 0
  %8041 = vmatpush1.bf16.msra.mxu0 %v6490
  %8042 = vmatprep.subr.bf16.mxu0 0
  %8043 = vmatpush1.bf16.msra.mxu0 %v6491
  %8044 = vmatprep.subr.bf16.mxu0 0
  %8045 = vmatpush1.bf16.msra.mxu0 %v6492
  %8046 = vmatprep.subr.bf16.mxu0 0
  %8047 = vmatpush1.bf16.msra.mxu0 0
  %8048 = vmatprep.subr.bf16.mxu0 0
  %8049 = vmatpush1.bf16.msra.mxu0 0
  %8050 = vmatprep.subr.bf16.mxu0 0
  %8051 = vmatpush1.bf16.msra.mxu0 0
  %8052 = vmatprep.subr.bf16.mxu0 0
  %8053 = vmatpush1.bf16.msra.mxu0 0
  %8054 = vmatprep.subr.bf16.mxu0 0
  %8055 = vmatpush1.bf16.msra.mxu0 0
  %8056 = vmatprep.subr.bf16.mxu0 0
  %8057 = vmatpush1.bf16.msra.mxu0 0
  %8058 = vmatprep.subr.bf16.mxu0 0
  %8059 = vmatpush1.bf16.msra.mxu0 0
  %8060 = vmatprep.subr.bf16.mxu0 0
  %8061 = vmatpush1.bf16.msra.mxu0 0
  %8062 = vmatprep.mubr.bf16.mxu0 0
  %8063 = vmatmul.mubr.bf16.gmra.mrb[0].mxu0 %v7947
  %v8064 = vpop.f32.mrb[0].mxu0
  %v8065 = vadd.f32 %v6176, %v8064
  %v8066 = vpop.f32.mrb[0].mxu0
  %v8067 = vpop.f32.mrb[0].mxu0
  %v8068 = vpop.f32.mrb[0].mxu0
  %8069 = vdwg.mxu0
  %8070 = vmax.xlane.f32.xlu0 %v8065
  %v8071 = vpop.xlane.xlu0 %8070
  %vm8072 = vcmp.eq.f32.partialorder %v8065, %v8071
  %v8073 = vsel %vm8072, %v6105, 128
  %v8074 = vand.u32 %v8073, 65535
  %v8075 = vshra.s32 %v8073, 16
  %v8076 = vcvt.s32.f32 %v8074
  %v8077 = vcvt.s32.f32 %v8075
  %8078 = vmin.xlane.f32.xlu0 %v8077
  %v8079 = vpop.xlane.xlu0 %8078
  %vm8080 = vcmp.eq.f32.partialorder %v8077, %v8079
  %v8081 = vsel %vm8080, %v8076, inf
  %8082 = vmin.xlane.f32.xlu0 %v8081
  %v8083 = vpop.xlane.xlu0 %8082
  %v8084 = vcvt.f32.s32 %v8083
  %v8085 = vcvt.f32.s32 %v8079
  %v8086 = vshll.u32 %v8085, 16
  %v8087 = vadd.s32 %v8086, %v8084
  %vm8088 = vcmp.eq.s32.totalorder %v6105, %v8087
  %v8089 = vsel %vm8088, 1, 0
  %v8090 = vcvt.s32.f32 %v8089
  %v8091 = vpack.c.bf16 %v8090, %v8090
  %8092 = vmatprep.subr.bf16.mxu0 %v6774
  %8093 = vmatpush1.bf16.msra.mxu0 %v6773
  %8094 = vmatprep.subr.bf16.mxu0 %v6778
  %8095 = vmatpush1.bf16.msra.mxu0 %v6777
  %8096 = vmatprep.subr.bf16.mxu0 %v6782
  %8097 = vmatpush1.bf16.msra.mxu0 %v6781
  %8098 = vmatprep.subr.bf16.mxu0 %v6786
  %8099 = vmatpush1.bf16.msra.mxu0 %v6785
  %8100 = vmatprep.subr.bf16.mxu0 %v6790
  %8101 = vmatpush1.bf16.msra.mxu0 %v6789
  %8102 = vmatprep.subr.bf16.mxu0 %v6794
  %8103 = vmatpush1.bf16.msra.mxu0 %v6793
  %8104 = vmatprep.subr.bf16.mxu0 %v6798
  %8105 = vmatpush1.bf16.msra.mxu0 %v6797
  %8106 = vmatprep.subr.bf16.mxu0 %v6802
  %8107 = vmatpush1.bf16.msra.mxu0 %v6801
  %8108 = vmatprep.subr.bf16.mxu0 0
  %8109 = vmatpush1.bf16.msra.mxu0 0
  %8110 = vmatprep.subr.bf16.mxu0 0
  %8111 = vmatpush1.bf16.msra.mxu0 0
  %8112 = vmatprep.subr.bf16.mxu0 0
  %8113 = vmatpush1.bf16.msra.mxu0 0
  %8114 = vmatprep.subr.bf16.mxu0 0
  %8115 = vmatpush1.bf16.msra.mxu0 0
  %8116 = vmatprep.subr.bf16.mxu0 0
  %8117 = vmatpush1.bf16.msra.mxu0 0
  %8118 = vmatprep.subr.bf16.mxu0 0
  %8119 = vmatpush1.bf16.msra.mxu0 0
  %8120 = vmatprep.subr.bf16.mxu0 0
  %8121 = vmatpush1.bf16.msra.mxu0 0
  %8122 = vmatprep.subr.bf16.mxu0 0
  %8123 = vmatpush1.bf16.msra.mxu0 0
  %8124 = vmatprep.mubr.bf16.mxu0 0
  %8125 = vmatmul.mubr.bf16.gmra.mrb[0].mxu0 %v8091
  %v8126 = vpop.f32.mrb[0].mxu0
  %v8127 = vadd.f32 %v7983, %v8126
  %v8128 = vpop.f32.mrb[0].mxu0
  %v8129 = vadd.f32 %v7985, %v8128
  %v8130 = vpop.f32.mrb[0].mxu0
  %v8131 = vpop.f32.mrb[0].mxu0
  %8132 = vdwg.mxu0
  %8133 = vmatprep.subr.bf16.mxu0 %v6776
  %8134 = vmatpush1.bf16.msra.mxu0 %v6775
  %8135 = vmatprep.subr.bf16.mxu0 %v6780
  %8136 = vmatpush1.bf16.msra.mxu0 %v6779
  %8137 = vmatprep.subr.bf16.mxu0 %v6784
  %8138 = vmatpush1.bf16.msra.mxu0 %v6783
  %8139 = vmatprep.subr.bf16.mxu0 %v6788
  %8140 = vmatpush1.bf16.msra.mxu0 %v6787
  %8141 = vmatprep.subr.bf16.mxu0 %v6792
  %8142 = vmatpush1.bf16.msra.mxu0 %v6791
  %8143 = vmatprep.subr.bf16.mxu0 %v6796
  %8144 = vmatpush1.bf16.msra.mxu0 %v6795
  %8145 = vmatprep.subr.bf16.mxu0 %v6800
  %8146 = vmatpush1.bf16.msra.mxu0 %v6799
  %8147 = vmatprep.subr.bf16.mxu0 %v6804
  %8148 = vmatpush1.bf16.msra.mxu0 %v6803
  %8149 = vmatprep.subr.bf16.mxu0 0
  %8150 = vmatpush1.bf16.msra.mxu0 0
  %8151 = vmatprep.subr.bf16.mxu0 0
  %8152 = vmatpush1.bf16.msra.mxu0 0
  %8153 = vmatprep.subr.bf16.mxu0 0
  %8154 = vmatpush1.bf16.msra.mxu0 0
  %8155 = vmatprep.subr.bf16.mxu0 0
  %8156 = vmatpush1.bf16.msra.mxu0 0
  %8157 = vmatprep.subr.bf16.mxu0 0
  %8158 = vmatpush1.bf16.msra.mxu0 0
  %8159 = vmatprep.subr.bf16.mxu0 0
  %8160 = vmatpush1.bf16.msra.mxu0 0
  %8161 = vmatprep.subr.bf16.mxu0 0
  %8162 = vmatpush1.bf16.msra.mxu0 0
  %8163 = vmatprep.subr.bf16.mxu0 0
  %8164 = vmatpush1.bf16.msra.mxu0 0
  %8165 = vmatprep.mubr.bf16.mxu0 0
  %8166 = vmatmul.mubr.bf16.gmra.mrb[0].mxu0 %v8091
  %v8167 = vpop.f32.mrb[0].mxu0
  %v8168 = vadd.f32 %v8024, %v8167
  %v8169 = vpop.f32.mrb[0].mxu0
  %v8170 = vadd.f32 %v8026, %v8169
  %v8171 = vpop.f32.mrb[0].mxu0
  %v8172 = vpop.f32.mrb[0].mxu0
  %8173 = vdwg.mxu0
  %v8174 = vxor.u32 %v8127, 2147483648
  %v8175 = vmul.f32 %v8174, 1.442695
  %v8176 = vpow.pop %v8175
  %v8177 = vadd.f32 %v8176, 1.0
  %v8178 = vrcp.pop %v8177
  %v8179 = vmul.f32 1.0, %v8178
  %v8180 = vxor.u32 %v8129, 2147483648
  %v8181 = vmul.f32 %v8180, 1.442695
  %v8182 = vpow.pop %v8181
  %v8183 = vadd.f32 %v8182, 1.0
  %v8184 = vrcp.pop %v8183
  %v8185 = vmul.f32 1.0, %v8184
  %v8186 = vtanh.pop %v8168
  %v8187 = vxor.u32 %v8170, 2147483648
  %v8188 = vmul.f32 %v8187, 1.442695
  %v8189 = vpow.pop %v8188
  %v8190 = vadd.f32 %v8189, 1.0
  %v8191 = vrcp.pop %v8190
  %v8192 = vmul.f32 1.0, %v8191
  %v8193 = vmul.f32 %v8185, %v7944
  %v8194 = vmul.f32 %v8179, %v8186
  %v8195 = vadd.f32 %v8193, %v8194
  %v8196 = vtanh.pop %v8195
  %v8197 = vmul.f32 %v8192, %v8196
  %v8198 = vpack.c.bf16 %v8197, %v8197
  %8199 = vmatprep.subr.bf16.mxu0 %v6279
  %8200 = vmatpush1.bf16.msra.mxu0 %v6278
  %8201 = vmatprep.subr.bf16.mxu0 %v6283
  %8202 = vmatpush1.bf16.msra.mxu0 %v6282
  %8203 = vmatprep.subr.bf16.mxu0 %v6287
  %8204 = vmatpush1.bf16.msra.mxu0 %v6286
  %8205 = vmatprep.subr.bf16.mxu0 %v6291
  %8206 = vmatpush1.bf16.msra.mxu0 %v6290
  %8207 = vmatprep.subr.bf16.mxu0 %v6295
  %8208 = vmatpush1.bf16.msra.mxu0 %v6294
  %8209 = vmatprep.subr.bf16.mxu0 %v6299
  %8210 = vmatpush1.bf16.msra.mxu0 %v6298
  %8211 = vmatprep.subr.bf16.mxu0 %v6303
  %8212 = vmatpush1.bf16.msra.mxu0 %v6302
  %8213 = vmatprep.subr.bf16.mxu0 %v6307
  %8214 = vmatpush1.bf16.msra.mxu0 %v6306
  %8215 = vmatprep.subr.bf16.mxu0 0
  %8216 = vmatpush1.bf16.msra.mxu0 0
  %8217 = vmatprep.subr.bf16.mxu0 0
  %8218 = vmatpush1.bf16.msra.mxu0 0
  %8219 = vmatprep.subr.bf16.mxu0 0
  %8220 = vmatpush1.bf16.msra.mxu0 0
  %8221 = vmatprep.subr.bf16.mxu0 0
  %8222 = vmatpush1.bf16.msra.mxu0 0
  %8223 = vmatprep.subr.bf16.mxu0 0
  %8224 = vmatpush1.bf16.msra.mxu0 0
  %8225 = vmatprep.subr.bf16.mxu0 0
  %8226 = vmatpush1.bf16.msra.mxu0 0
  %8227 = vmatprep.subr.bf16.mxu0 0
  %8228 = vmatpush1.bf16.msra.mxu0 0
  %8229 = vmatprep.subr.bf16.mxu0 0
  %8230 = vmatpush1.bf16.msra.mxu0 0
  %8231 = vmatprep.mubr.bf16.mxu0 0
  %8232 = vmatmul.mubr.bf16.gmra.mrb[0].mxu0 %v8198
  %v8233 = vpop.f32.mrb[0].mxu0
  %v8234 = vadd.f32 %v6160, %v8233
  %v8235 = vpop.f32.mrb[0].mxu0
  %v8236 = vadd.f32 %v6164, %v8235
  %v8237 = vpop.f32.mrb[0].mxu0
  %v8238 = vpop.f32.mrb[0].mxu0
  %8239 = vdwg.mxu0
  %8240 = vmatprep.subr.bf16.mxu0 %v6281
  %8241 = vmatpush1.bf16.msra.mxu0 %v6280
  %8242 = vmatprep.subr.bf16.mxu0 %v6285
  %8243 = vmatpush1.bf16.msra.mxu0 %v6284
  %8244 = vmatprep.subr.bf16.mxu0 %v6289
  %8245 = vmatpush1.bf16.msra.mxu0 %v6288
  %8246 = vmatprep.subr.bf16.mxu0 %v6293
  %8247 = vmatpush1.bf16.msra.mxu0 %v6292
  %8248 = vmatprep.subr.bf16.mxu0 %v6297
  %8249 = vmatpush1.bf16.msra.mxu0 %v6296
  %8250 = vmatprep.subr.bf16.mxu0 %v6301
  %8251 = vmatpush1.bf16.msra.mxu0 %v6300
  %8252 = vmatprep.subr.bf16.mxu0 %v6305
  %8253 = vmatpush1.bf16.msra.mxu0 %v6304
  %8254 = vmatprep.subr.bf16.mxu0 %v6309
  %8255 = vmatpush1.bf16.msra.mxu0 %v6308
  %8256 = vmatprep.subr.bf16.mxu0 0
  %8257 = vmatpush1.bf16.msra.mxu0 0
  %8258 = vmatprep.subr.bf16.mxu0 0
  %8259 = vmatpush1.bf16.msra.mxu0 0
  %8260 = vmatprep.subr.bf16.mxu0 0
  %8261 = vmatpush1.bf16.msra.mxu0 0
  %8262 = vmatprep.subr.bf16.mxu0 0
  %8263 = vmatpush1.bf16.msra.mxu0 0
  %8264 = vmatprep.subr.bf16.mxu0 0
  %8265 = vmatpush1.bf16.msra.mxu0 0
  %8266 = vmatprep.subr.bf16.mxu0 0
  %8267 = vmatpush1.bf16.msra.mxu0 0
  %8268 = vmatprep.subr.bf16.mxu0 0
  %8269 = vmatpush1.bf16.msra.mxu0 0
  %8270 = vmatprep.subr.bf16.mxu0 0
  %8271 = vmatpush1.bf16.msra.mxu0 0
  %8272 = vmatprep.mubr.bf16.mxu0 0
  %8273 = vmatmul.mubr.bf16.gmra.mrb[0].mxu0 %v8198
  %v8274 = vpop.f32.mrb[0].mxu0
  %v8275 = vadd.f32 %v6168, %v8274
  %v8276 = vpop.f32.mrb[0].mxu0
  %v8277 = vadd.f32 %v6172, %v8276
  %v8278 = vpop.f32.mrb[0].mxu0
  %v8279 = vpop.f32.mrb[0].mxu0
  %8280 = vdwg.mxu0
  %8281 = vmatprep.subr.bf16.mxu0 0
  %8282 = vmatpush1.bf16.msra.mxu0 %v6485
  %8283 = vmatprep.subr.bf16.mxu0 0
  %8284 = vmatpush1.bf16.msra.mxu0 %v6486
  %8285 = vmatprep.subr.bf16.mxu0 0
  %8286 = vmatpush1.bf16.msra.mxu0 %v6487
  %8287 = vmatprep.subr.bf16.mxu0 0
  %8288 = vmatpush1.bf16.msra.mxu0 %v6488
  %8289 = vmatprep.subr.bf16.mxu0 0
  %8290 = vmatpush1.bf16.msra.mxu0 %v6489
  %8291 = vmatprep.subr.bf16.mxu0 0
  %8292 = vmatpush1.bf16.msra.mxu0 %v6490
  %8293 = vmatprep.subr.bf16.mxu0 0
  %8294 = vmatpush1.bf16.msra.mxu0 %v6491
  %8295 = vmatprep.subr.bf16.mxu0 0
  %8296 = vmatpush1.bf16.msra.mxu0 %v6492
  %8297 = vmatprep.subr.bf16.mxu0 0
  %8298 = vmatpush1.bf16.msra.mxu0 0
  %8299 = vmatprep.subr.bf16.mxu0 0
  %8300 = vmatpush1.bf16.msra.mxu0 0
  %8301 = vmatprep.subr.bf16.mxu0 0
  %8302 = vmatpush1.bf16.msra.mxu0 0
  %8303 = vmatprep.subr.bf16.mxu0 0
  %8304 = vmatpush1.bf16.msra.mxu0 0
  %8305 = vmatprep.subr.bf16.mxu0 0
  %8306 = vmatpush1.bf16.msra.mxu0 0
  %8307 = vmatprep.subr.bf16.mxu0 0
  %8308 = vmatpush1.bf16.msra.mxu0 0
  %8309 = vmatprep.subr.bf16.mxu0 0
  %8310 = vmatpush1.bf16.msra.mxu0 0
  %8311 = vmatprep.subr.bf16.mxu0 0
  %8312 = vmatpush1.bf16.msra.mxu0 0
  %8313 = vmatprep.mubr.bf16.mxu0 0
  %8314 = vmatmul.mubr.bf16.gmra.mrb[0].mxu0 %v8198
  %v8315 = vpop.f32.mrb[0].mxu0
  %v8316 = vadd.f32 %v6176, %v8315
  %v8317 = vpop.f32.mrb[0].mxu0
  %v8318 = vpop.f32.mrb[0].mxu0
  %v8319 = vpop.f32.mrb[0].mxu0
  %8320 = vdwg.mxu0
  %8321 = vmax.xlane.f32.xlu0 %v8316
  %v8322 = vpop.xlane.xlu0 %8321
  %vm8323 = vcmp.eq.f32.partialorder %v8316, %v8322
  %v8324 = vsel %vm8323, %v6105, 128
  %v8325 = vand.u32 %v8324, 65535
  %v8326 = vshra.s32 %v8324, 16
  %v8327 = vcvt.s32.f32 %v8325
  %v8328 = vcvt.s32.f32 %v8326
  %8329 = vmin.xlane.f32.xlu0 %v8328
  %v8330 = vpop.xlane.xlu0 %8329
  %vm8331 = vcmp.eq.f32.partialorder %v8328, %v8330
  %v8332 = vsel %vm8331, %v8327, inf
  %8333 = vmin.xlane.f32.xlu0 %v8332
  %v8334 = vpop.xlane.xlu0 %8333
  %v8335 = vcvt.f32.s32 %v8334
  %v8336 = vcvt.f32.s32 %v8330
  %v8337 = vshll.u32 %v8336, 16
  %v8338 = vadd.s32 %v8337, %v8335
  %vm8339 = vcmp.eq.s32.totalorder %v6105, %v8338
  %v8340 = vsel %vm8339, 1, 0
  %v8341 = vcvt.s32.f32 %v8340
  %v8342 = vpack.c.bf16 %v8341, %v8341
  %8343 = vmatprep.subr.bf16.mxu0 %v6774
  %8344 = vmatpush1.bf16.msra.mxu0 %v6773
  %8345 = vmatprep.subr.bf16.mxu0 %v6778
  %8346 = vmatpush1.bf16.msra.mxu0 %v6777
  %8347 = vmatprep.subr.bf16.mxu0 %v6782
  %8348 = vmatpush1.bf16.msra.mxu0 %v6781
  %8349 = vmatprep.subr.bf16.mxu0 %v6786
  %8350 = vmatpush1.bf16.msra.mxu0 %v6785
  %8351 = vmatprep.subr.bf16.mxu0 %v6790
  %8352 = vmatpush1.bf16.msra.mxu0 %v6789
  %8353 = vmatprep.subr.bf16.mxu0 %v6794
  %8354 = vmatpush1.bf16.msra.mxu0 %v6793
  %8355 = vmatprep.subr.bf16.mxu0 %v6798
  %8356 = vmatpush1.bf16.msra.mxu0 %v6797
  %8357 = vmatprep.subr.bf16.mxu0 %v6802
  %8358 = vmatpush1.bf16.msra.mxu0 %v6801
  %8359 = vmatprep.subr.bf16.mxu0 0
  %8360 = vmatpush1.bf16.msra.mxu0 0
  %8361 = vmatprep.subr.bf16.mxu0 0
  %8362 = vmatpush1.bf16.msra.mxu0 0
  %8363 = vmatprep.subr.bf16.mxu0 0
  %8364 = vmatpush1.bf16.msra.mxu0 0
  %8365 = vmatprep.subr.bf16.mxu0 0
  %8366 = vmatpush1.bf16.msra.mxu0 0
  %8367 = vmatprep.subr.bf16.mxu0 0
  %8368 = vmatpush1.bf16.msra.mxu0 0
  %8369 = vmatprep.subr.bf16.mxu0 0
  %8370 = vmatpush1.bf16.msra.mxu0 0
  %8371 = vmatprep.subr.bf16.mxu0 0
  %8372 = vmatpush1.bf16.msra.mxu0 0
  %8373 = vmatprep.subr.bf16.mxu0 0
  %8374 = vmatpush1.bf16.msra.mxu0 0
  %8375 = vmatprep.mubr.bf16.mxu0 0
  %8376 = vmatmul.mubr.bf16.gmra.mrb[0].mxu0 %v8342
  %v8377 = vpop.f32.mrb[0].mxu0
  %v8378 = vadd.f32 %v8234, %v8377
  %v8379 = vpop.f32.mrb[0].mxu0
  %v8380 = vadd.f32 %v8236, %v8379
  %v8381 = vpop.f32.mrb[0].mxu0
  %v8382 = vpop.f32.mrb[0].mxu0
  %8383 = vdwg.mxu0
  %8384 = vmatprep.subr.bf16.mxu0 %v6776
  %8385 = vmatpush1.bf16.msra.mxu0 %v6775
  %8386 = vmatprep.subr.bf16.mxu0 %v6780
  %8387 = vmatpush1.bf16.msra.mxu0 %v6779
  %8388 = vmatprep.subr.bf16.mxu0 %v6784
  %8389 = vmatpush1.bf16.msra.mxu0 %v6783
  %8390 = vmatprep.subr.bf16.mxu0 %v6788
  %8391 = vmatpush1.bf16.msra.mxu0 %v6787
  %8392 = vmatprep.subr.bf16.mxu0 %v6792
  %8393 = vmatpush1.bf16.msra.mxu0 %v6791
  %8394 = vmatprep.subr.bf16.mxu0 %v6796
  %8395 = vmatpush1.bf16.msra.mxu0 %v6795
  %8396 = vmatprep.subr.bf16.mxu0 %v6800
  %8397 = vmatpush1.bf16.msra.mxu0 %v6799
  %8398 = vmatprep.subr.bf16.mxu0 %v6804
  %8399 = vmatpush1.bf16.msra.mxu0 %v6803
  %8400 = vmatprep.subr.bf16.mxu0 0
  %8401 = vmatpush1.bf16.msra.mxu0 0
  %8402 = vmatprep.subr.bf16.mxu0 0
  %8403 = vmatpush1.bf16.msra.mxu0 0
  %8404 = vmatprep.subr.bf16.mxu0 0
  %8405 = vmatpush1.bf16.msra.mxu0 0
  %8406 = vmatprep.subr.bf16.mxu0 0
  %8407 = vmatpush1.bf16.msra.mxu0 0
  %8408 = vmatprep.subr.bf16.mxu0 0
  %8409 = vmatpush1.bf16.msra.mxu0 0
  %8410 = vmatprep.subr.bf16.mxu0 0
  %8411 = vmatpush1.bf16.msra.mxu0 0
  %8412 = vmatprep.subr.bf16.mxu0 0
  %8413 = vmatpush1.bf16.msra.mxu0 0
  %8414 = vmatprep.subr.bf16.mxu0 0
  %8415 = vmatpush1.bf16.msra.mxu0 0
  %8416 = vmatprep.mubr.bf16.mxu0 0
  %8417 = vmatmul.mubr.bf16.gmra.mrb[0].mxu0 %v8342
  %v8418 = vpop.f32.mrb[0].mxu0
  %v8419 = vadd.f32 %v8275, %v8418
  %v8420 = vpop.f32.mrb[0].mxu0
  %v8421 = vadd.f32 %v8277, %v8420
  %v8422 = vpop.f32.mrb[0].mxu0
  %v8423 = vpop.f32.mrb[0].mxu0
  %8424 = vdwg.mxu0
  %v8425 = vxor.u32 %v8378, 2147483648
  %v8426 = vmul.f32 %v8425, 1.442695
  %v8427 = vpow.pop %v8426
  %v8428 = vadd.f32 %v8427, 1.0
  %v8429 = vrcp.pop %v8428
  %v8430 = vmul.f32 1.0, %v8429
  %v8431 = vxor.u32 %v8380, 2147483648
  %v8432 = vmul.f32 %v8431, 1.442695
  %v8433 = vpow.pop %v8432
  %v8434 = vadd.f32 %v8433, 1.0
  %v8435 = vrcp.pop %v8434
  %v8436 = vmul.f32 1.0, %v8435
  %v8437 = vtanh.pop %v8419
  %v8438 = vxor.u32 %v8421, 2147483648
  %v8439 = vmul.f32 %v8438, 1.442695
  %v8440 = vpow.pop %v8439
  %v8441 = vadd.f32 %v8440, 1.0
  %v8442 = vrcp.pop %v8441
  %v8443 = vmul.f32 1.0, %v8442
  %v8444 = vmul.f32 %v8436, %v8195
  %v8445 = vmul.f32 %v8430, %v8437
  %v8446 = vadd.f32 %v8444, %v8445
  %v8447 = vtanh.pop %v8446
  %v8448 = vmul.f32 %v8443, %v8447
  %v8449 = vpack.c.bf16 %v8448, %v8448
  %8450 = vmatprep.subr.bf16.mxu0 0
  %8451 = vmatpush1.bf16.msra.mxu0 %v6485
  %8452 = vmatprep.subr.bf16.mxu0 0
  %8453 = vmatpush1.bf16.msra.mxu0 %v6486
  %8454 = vmatprep.subr.bf16.mxu0 0
  %8455 = vmatpush1.bf16.msra.mxu0 %v6487
  %8456 = vmatprep.subr.bf16.mxu0 0
  %8457 = vmatpush1.bf16.msra.mxu0 %v6488
  %8458 = vmatprep.subr.bf16.mxu0 0
  %8459 = vmatpush1.bf16.msra.mxu0 %v6489
  %8460 = vmatprep.subr.bf16.mxu0 0
  %8461 = vmatpush1.bf16.msra.mxu0 %v6490
  %8462 = vmatprep.subr.bf16.mxu0 0
  %8463 = vmatpush1.bf16.msra.mxu0 %v6491
  %8464 = vmatprep.subr.bf16.mxu0 0
  %8465 = vmatpush1.bf16.msra.mxu0 %v6492
  %8466 = vmatprep.subr.bf16.mxu0 0
  %8467 = vmatpush1.bf16.msra.mxu0 0
  %8468 = vmatprep.subr.bf16.mxu0 0
  %8469 = vmatpush1.bf16.msra.mxu0 0
  %8470 = vmatprep.subr.bf16.mxu0 0
  %8471 = vmatpush1.bf16.msra.mxu0 0
  %8472 = vmatprep.subr.bf16.mxu0 0
  %8473 = vmatpush1.bf16.msra.mxu0 0
  %8474 = vmatprep.subr.bf16.mxu0 0
  %8475 = vmatpush1.bf16.msra.mxu0 0
  %8476 = vmatprep.subr.bf16.mxu0 0
  %8477 = vmatpush1.bf16.msra.mxu0 0
  %8478 = vmatprep.subr.bf16.mxu0 0
  %8479 = vmatpush1.bf16.msra.mxu0 0
  %8480 = vmatprep.subr.bf16.mxu0 0
  %8481 = vmatpush1.bf16.msra.mxu0 0
  %8482 = vmatprep.mubr.bf16.mxu0 0
  %8483 = vmatmul.mubr.bf16.gmra.mrb[0].mxu0 %v8449
  %v8484 = vpop.f32.mrb[0].mxu0
  %v8485 = vadd.f32 %v6176, %v8484
  %v8486 = vpop.f32.mrb[0].mxu0
  %v8487 = vpop.f32.mrb[0].mxu0
  %v8488 = vpop.f32.mrb[0].mxu0
  %8489 = vdwg.mxu0
  %8490 = vst [vmem:[%s13] sm:$0xff] %v6618
  %8491 = vst [vmem:[%s13 + $0x8] sm:$0xff] %v7061
  %8492 = vst [vmem:[%s13 + $0x10] sm:$0xff] %v7312
  %8493 = vst [vmem:[%s13 + $0x18] sm:$0xff] %v7563
  %8494 = vst [vmem:[%s13 + $0x20] sm:$0xff] %v7814
  %8495 = vst [vmem:[%s13 + $0x28] sm:$0xff] %v8065
  %8496 = vst [vmem:[%s13 + $0x30] sm:$0xff] %v8316
  %8497 = vst [vmem:[%s13 + $0x38] sm:$0xff] %v8485
  // Predicated region
  $region54: #{recurrent_autoencoder_forward.1} parent=0 // pred_check
    _
  $region55: #{recurrent_autoencoder_forward.1} parent=0 // pred_check_branch
    %8499 = sbr.rel (0) target = $region57
  $region56: #{recurrent_autoencoder_forward.1} parent=0 // pred_region
    _
  $region57: #{recurrent_autoencoder_forward.1} parent=0 // pred_fallthru
    _
  // Predicated region
  $region58: #{recurrent_autoencoder_forward.1} parent=0 // pred_check
    _
  $region59: #{recurrent_autoencoder_forward.1} parent=0 // pred_check_branch
    %8501 = sbr.rel (0) target = $region61
  $region60: #{recurrent_autoencoder_forward.1} parent=0 // pred_region
    _
  $region61: #{recurrent_autoencoder_forward.1} parent=0 // pred_fallthru
    _
  // Predicated region
  $region62: #{recurrent_autoencoder_forward.1} parent=0 // pred_check
    _
  $region63: #{recurrent_autoencoder_forward.1} parent=0 // pred_check_branch
    %8503 = sbr.rel (0) target = $region65
  $region64: #{recurrent_autoencoder_forward.1} parent=0 // pred_region
    _
  $region65: #{recurrent_autoencoder_forward.1} parent=0 // pred_fallthru
    _
  // Predicated region
  $region66: #{recurrent_autoencoder_forward.1} parent=0 // pred_check
    _
  $region67: #{recurrent_autoencoder_forward.1} parent=0 // pred_check_branch
    %8505 = sbr.rel (0) target = $region69
  $region68: #{recurrent_autoencoder_forward.1} parent=0 // pred_region
    _
  $region69: #{recurrent_autoencoder_forward.1} parent=0 // pred_fallthru
    _

</llo_original>
